<compile_context>
chip_gen: v7x
topology: tpu7x:2x2x1
jax: 0.10.0
libtpu: 0.0.40
codegen_flags: <defaults>
</compile_context>

<pallas_src>
import math

import jax
import jax.numpy as jnp
from jax import lax
from jax.experimental import pallas as pl
from jax.experimental.pallas import tpu as pltpu

H0, H1, H2 = 64, 512, 512          # CriticConfig.hidden_sizes = (64, 512, 512), head -> 1
_STATIC_UNROLL_MAX = 16            # python-unroll the per-batch loop up to this TB


def _choose_tb(batch, n_prey, target_rows=256):
    """Batch-block size: ~target_rows flattened FFN rows per grid step, >=2 grid steps."""
    tb = max(1, min(batch, -(-target_rows // max(1, n_prey))))
    while tb > 1 and -(-batch // tb) < 2:      # keep both v7x TensorCores busy
        tb = (tb + 1) // 2
    return tb


# ----------------------------------------------------------------------------
# Fused kernel: one grid step == TB batch elements.
# ----------------------------------------------------------------------------
def _make_kernel(TB, n_pred, n_prey, n_obst):
    n_tot = n_pred + n_prey + n_obst
    tbn = TB * n_prey
    prey_sl = slice(n_pred, n_pred + n_prey)

    def kernel(packed_ref, emb_ref,
               w_obst_ref, b_obst_ref, w_act_ref, b_act_ref, w_pos_ref, b_pos_ref,
               w_rel1_ref, b_rel1_ref, w_out1_ref, b_out1_ref,
               w_rel2_ref, b_rel2_ref, w_out2_ref, b_out2_ref,
               w1_ref, b1_ref, w2_ref, b2_ref, w3_ref, b3_ref,
               out_ref,
               agg1_s, agg2_s, extra_s, alive_s):
        # ---- VPU-side weights, loaded once (resident across the whole grid) ----
        emb = emb_ref[...]
        w_obst, b_obst = w_obst_ref[...], b_obst_ref[...]
        w_act, b_act = w_act_ref[...], b_act_ref[...]
        w_pos, b_pos = w_pos_ref[...], b_pos_ref[...]
        w_rel1, b_rel1 = w_rel1_ref[...], b_rel1_ref[...]
        w_rel2, b_rel2 = w_rel2_ref[...], b_rel2_ref[...]

        # static row-group masks (identical for every batch element)
        row = lax.broadcasted_iota(jnp.int32, (n_tot, 1), 0)
        is_pred = (row < n_pred).astype(jnp.float32)
        is_prey = jnp.logical_and(row >= n_pred,
                                  row < n_pred + n_prey).astype(jnp.float32)
        is_obst = (row >= n_pred + n_prey).astype(jnp.float32)

        def unpack(t):
            """One batch element of the packed rows: cols = [x, y, alive|radius, action]."""
            data = packed_ref[t]                              # (n_tot, 4)
            px, py = data[:, 0:1], data[:, 1:2]
            c2, c3 = data[:, 2:3], data[:, 3:4]
            ang = c3 * math.pi
            # Linear(2, H0) on [sin, cos]: K=2 stays on the VPU as broadcast FMAs
            x_act = jnp.sin(ang) * w_act[0:1, :] + jnp.cos(ang) * w_act[1:2, :] + b_act
            alive_full = is_prey * c2 + (1.0 - is_prey)       # alive on prey rows, 1 elsewhere
            # relative positions, separate x/y components, (n_tot, n_tot, 1)
            dx = px[None, :, :] - px[:, None, :]
            dy = py[None, :, :] - py[:, None, :]
            return px, py, c2, x_act, alive_full, dx, dy

        def conv_w(dx, dy, w_rel, b_rel):
            # relu(Linear(rel_pos)), K=2 on the VPU -> (Nt, Ns, H0)
            return jnp.maximum(dx * w_rel[0:1, :] + dy * w_rel[1:2, :] + b_rel, 0.0)

        # ---- pass 1: entity embeddings + conv1 aggregation (all targets stacked) ----
        def body_a(t):
            px, py, c2, x_act, _alive_full, dx, dy = unpack(t)
            x_obst_e = c2 * w_obst + b_obst
            x_all = (is_pred * emb[0:1, :]
                     + is_prey * (emb[1:2, :] + x_act) * c2          # dead prey -> 0
                     + is_obst * (emb[2:3, :] + x_obst_e))
            wgt1 = conv_w(dx, dy, w_rel1, b_rel1)                    # (n_tot, n_tot, H0)
            agg1 = jnp.sum(wgt1 * x_all[None, :, :], axis=1)         # (n_tot, H0)
            agg1_s[pl.ds(t * n_tot, n_tot), :] = agg1
            # prey-row extras for the final combine (independent of the conv outputs)
            alive_p = c2[prey_sl, :]
            pos_emb = (px[prey_sl, :] * w_pos[0:1, :]
                       + py[prey_sl, :] * w_pos[1:2, :] + b_pos)
            extra_s[pl.ds(t * n_prey, n_prey), :] = x_act[prey_sl, :] * alive_p + pos_emb
            alive_s[pl.ds(t * n_prey, n_prey), :] = alive_p

        # ---- pass 2: conv2 aggregation over the conv1 outputs ----
        def body_b(t):
            _px, _py, _c2, x_act, alive_full, dx, dy = unpack(t)
            out1 = agg1_s[pl.ds(t * n_tot, n_tot), :]                # conv1 out, batch t
            src2 = (out1 + is_prey * x_act) * alive_full             # prey src: (out+act)*alive
            wgt2 = conv_w(dx[prey_sl], dy[prey_sl], w_rel2, b_rel2)  # (n_prey, n_tot, H0)
            agg2_s[pl.ds(t * n_prey, n_prey), :] = jnp.sum(
                wgt2 * src2[None, :, :], axis=1)

        def run(body):
            if TB <= _STATIC_UNROLL_MAX:                             # static slice offsets
                for t in range(TB):
                    body(t)
            else:                                                    # scalable dynamic path
                def wrapped(t, carry):
                    body(t)
                    return carry
                lax.fori_loop(0, TB, wrapped, 0)

        run(body_a)

        # conv1 output projection: ONE (TB*n_tot, H0) @ (H0, H0) bf16 matmul
        out1_all = jnp.maximum(
            jnp.dot(agg1_s[...].astype(jnp.bfloat16), w_out1_ref[...],
                    preferred_element_type=jnp.float32) + b_out1_ref[...], 0.0)
        agg1_s[...] = out1_all                                       # reuse the scratch

        run(body_b)

        # conv2 output projection: ONE (TB*n_prey, H0) @ (H0, H0) bf16 matmul
        out2 = jnp.maximum(
            jnp.dot(agg2_s[...].astype(jnp.bfloat16), w_out2_ref[...],
                    preferred_element_type=jnp.float32) + b_out2_ref[...], 0.0)
        # (out2 + x_action) * alive + pos_embedding, flattened over the batch block
        feat = out2 * alive_s[...] + extra_s[...]

        # ---- FFN head on the flattened (TB*n_prey, .) block: large MXU matmuls ----
        h = jnp.maximum(
            jnp.dot(feat.astype(jnp.bfloat16), w1_ref[...],
                    preferred_element_type=jnp.float32) + b1_ref[...], 0.0)
        h = jnp.maximum(
            jnp.dot(h.astype(jnp.bfloat16), w2_ref[...],
                    preferred_element_type=jnp.float32) + b2_ref[...], 0.0)
        # (., 512) @ (512, 1) head as VPU multiply + lane reduction (no N=1 MXU push).
        # (tbn,) + (1,1) broadcasts straight to the lane-dense (1, tbn) row we store.
        val = jnp.sum(h * w3_ref[...], axis=-1) + b3_ref[...]
        out_ref[...] = val.reshape(1, 1, tbn)

    return kernel


# ----------------------------------------------------------------------------
# Wrapper: single pallas_call, grid over batch blocks ("parallel" -> v7x megacore).
# ----------------------------------------------------------------------------
def prey_critic_forward(params, pred_state, prey_state, obst_state,
                        prey_is_alive, action):
    B, n_pred, _ = pred_state.shape
    n_prey = prey_state.shape[1]
    n_obst = obst_state.shape[1]
    n_tot = n_pred + n_prey + n_obst

    TB = _choose_tb(B, n_prey)
    n_blocks = -(-B // TB)
    b_pad = n_blocks * TB
    tbn = TB * n_prey

    # ---- pack all five per-batch inputs into ONE (b_pad, n_tot, 4) array ----
    # rows: [pred | prey | obst], cols: [x, y, alive|radius, action]
    alive_f = prey_is_alive.astype(jnp.float32)[..., None]
    pred_rows = jnp.pad(pred_state.astype(jnp.float32), ((0, 0), (0, 0), (0, 2)))
    prey_rows = jnp.concatenate(
        [prey_state.astype(jnp.float32), alive_f, action.astype(jnp.float32)], axis=-1)
    obst_rows = jnp.pad(obst_state.astype(jnp.float32), ((0, 0), (0, 0), (0, 1)))
    packed = jnp.concatenate([pred_rows, prey_rows, obst_rows], axis=1)
    packed = jnp.pad(packed, ((0, b_pad - B), (0, 0), (0, 0)))

    w_rel1, b_rel1, w_out1, b_out1 = params["conv1"]
    w_rel2, b_rel2, w_out2, b_out2 = params["conv2"]
    w1, b1, w2, b2, w3, b3 = params["ffn"]
    w3_row = w3.reshape(1, H2)          # head runs on the VPU; keep it f32

    def const(shape):                    # weights: resident in VMEM across the grid
        return pl.BlockSpec(shape, lambda i: (0, 0))

    kernel = _make_kernel(TB, n_pred, n_prey, n_obst)
    out = pl.pallas_call(
        kernel,
        out_shape=jax.ShapeDtypeStruct((n_blocks, 1, tbn), jnp.float32),
        grid=(n_blocks,),
        in_specs=[
            pl.BlockSpec((TB, n_tot, 4), lambda i: (i, 0, 0)),        # packed per-batch data
            const((3, H0)),                                           # nn.Embedding(3, H0)
            const((1, H0)), const((1, H0)),                           # obst_embedding
            const((2, H0)), const((1, H0)),                           # action_embedding
            const((2, H0)), const((1, H0)),                           # pos_embedding
            const((2, H0)), const((1, H0)), const((H0, H0)), const((1, H0)),   # conv1
            const((2, H0)), const((1, H0)), const((H0, H0)), const((1, H0)),   # conv2
            const((H0, H1)), const((1, H1)),                          # FFN layer 1
            const((H1, H2)), const((1, H2)),                          # FFN layer 2
            const((1, H2)), const((1, 1)),                            # FFN head row + bias
        ],
        out_specs=pl.BlockSpec((1, 1, tbn), lambda i: (i, 0, 0)),     # lane-dense output
        scratch_shapes=[
            pltpu.VMEM((TB * n_tot, H0), jnp.float32),                # conv1 agg / conv1 out
            pltpu.VMEM((TB * n_prey, H0), jnp.float32),               # conv2 agg
            pltpu.VMEM((TB * n_prey, H0), jnp.float32),               # x_act*alive + pos_emb
            pltpu.VMEM((TB * n_prey, 1), jnp.float32),                # alive mask
        ],
        compiler_params=pltpu.CompilerParams(
            dimension_semantics=("parallel",)),
    )(packed, params["embedding"],
      params["obst_emb_w"], params["obst_emb_b"],
      params["action_emb_w"], params["action_emb_b"],
      params["pos_emb_w"], params["pos_emb_b"],
      w_rel1, b_rel1, w_out1, b_out1,
      w_rel2, b_rel2, w_out2, b_out2,
      w1, b1, w2, b2, w3_row, b3)

    return out.reshape(b_pad, n_prey)[:B][..., None]


# ----------------------------------------------------------------------------
# Parameter init (deterministic, xavier-normal-ish, matches __init__ shapes)
# ----------------------------------------------------------------------------
def xavier(key, shape):
    fan_in, fan_out = shape[0], shape[-1]
    std = math.sqrt(2.0 / (fan_in + fan_out))
    return std * jax.random.normal(key, shape, dtype=jnp.float32)


def init_params(key):
    ks = jax.random.split(key, 12)
    bf16 = jnp.bfloat16
    p = {}
    p["embedding"] = xavier(ks[0], (3, H0))                            # nn.Embedding(3, H0)
    p["obst_emb_w"] = xavier(ks[1], (1, H0))                           # Linear(1, H0)
    p["obst_emb_b"] = jnp.zeros((1, H0), jnp.float32)
    p["action_emb_w"] = xavier(ks[2], (2, H0))                         # Linear(2, H0)
    p["action_emb_b"] = jnp.zeros((1, H0), jnp.float32)
    p["pos_emb_w"] = xavier(ks[3], (2, H0))                            # Linear(2, H0)
    p["pos_emb_b"] = jnp.zeros((1, H0), jnp.float32)
    # PointConv: rel-pos projection stays f32 (VPU); output projection bf16 (MXU)
    p["conv1"] = (xavier(ks[4], (2, H0)), jnp.zeros((1, H0), jnp.float32),
                  xavier(ks[5], (H0, H0)).astype(bf16), jnp.zeros((1, H0), jnp.float32))
    p["conv2"] = (xavier(ks[6], (2, H0)), jnp.zeros((1, H0), jnp.float32),
                  xavier(ks[7], (H0, H0)).astype(bf16), jnp.zeros((1, H0), jnp.float32))
    # FFN([H0, H1, H2, 1]); last-layer weight ~ U(-0.01, 0.01) (kept f32 for the VPU head)
    p["ffn"] = (xavier(ks[8], (H0, H1)).astype(bf16), jnp.zeros((1, H1), jnp.float32),
                xavier(ks[9], (H1, H2)).astype(bf16), jnp.zeros((1, H2), jnp.float32),
                jax.random.uniform(ks[10], (H2, 1), jnp.float32, -0.01, 0.01),
                jnp.zeros((1, 1), jnp.float32))
    return p


if __name__ == "__main__":
    key = jax.random.PRNGKey(0)
    kp, k1, k2, k3, k4, k5 = jax.random.split(key, 6)

    B, n_pred, n_prey, n_obst = 8, 3, 5, 4
    pred_state = jax.random.normal(k1, (B, n_pred, 2), jnp.float32)
    prey_state = jax.random.normal(k2, (B, n_prey, 2), jnp.float32)
    obst_state = jax.random.normal(k3, (B, n_obst, 3), jnp.float32)
    prey_is_alive = jax.random.bernoulli(k4, 0.8, (B, n_prey))
    action = jax.random.uniform(k5, (B, n_prey, 1), jnp.float32, -1.0, 1.0)

    params = init_params(kp)

    fwd = jax.jit(prey_critic_forward)
    out = jax.block_until_ready(
        fwd(params, pred_state, prey_state, obst_state, prey_is_alive, action))
    assert out.shape == (B, n_prey, 1)
    assert bool(jnp.all(jnp.isfinite(out)))
    print("KERNEL_OK")
</pallas_src>

<mosaic_0001>
module attributes {stable_mosaic.version = 11 : i64} {
  func.func @kernel(%arg0: i32, %arg1: memref<4x12x4xf32, #tpu.memory_space<vmem>>, %arg2: memref<3x64xf32, #tpu.memory_space<vmem>>, %arg3: memref<1x64xf32, #tpu.memory_space<vmem>>, %arg4: memref<1x64xf32, #tpu.memory_space<vmem>>, %arg5: memref<2x64xf32, #tpu.memory_space<vmem>>, %arg6: memref<1x64xf32, #tpu.memory_space<vmem>>, %arg7: memref<2x64xf32, #tpu.memory_space<vmem>>, %arg8: memref<1x64xf32, #tpu.memory_space<vmem>>, %arg9: memref<2x64xf32, #tpu.memory_space<vmem>>, %arg10: memref<1x64xf32, #tpu.memory_space<vmem>>, %arg11: memref<64x64xbf16, #tpu.memory_space<vmem>>, %arg12: memref<1x64xf32, #tpu.memory_space<vmem>>, %arg13: memref<2x64xf32, #tpu.memory_space<vmem>>, %arg14: memref<1x64xf32, #tpu.memory_space<vmem>>, %arg15: memref<64x64xbf16, #tpu.memory_space<vmem>>, %arg16: memref<1x64xf32, #tpu.memory_space<vmem>>, %arg17: memref<64x512xbf16, #tpu.memory_space<vmem>>, %arg18: memref<1x512xf32, #tpu.memory_space<vmem>>, %arg19: memref<512x512xbf16, #tpu.memory_space<vmem>>, %arg20: memref<1x512xf32, #tpu.memory_space<vmem>>, %arg21: memref<1x512xf32, #tpu.memory_space<vmem>>, %arg22: memref<1x1xf32, #tpu.memory_space<vmem>>, %arg23: memref<1x1x20xf32, #tpu.memory_space<vmem>>, %arg24: memref<48x64xf32, #tpu.memory_space<vmem>>, %arg25: memref<20x64xf32, #tpu.memory_space<vmem>>, %arg26: memref<20x64xf32, #tpu.memory_space<vmem>>, %arg27: memref<20x1xf32, #tpu.memory_space<vmem>>) attributes {dimension_semantics = [#tpu.dimension_semantics<parallel>], iteration_bounds = array<i64: 2>, scalar_prefetch = 0 : i64, scratch_operands = 4 : i64, tpu.core_type = #tpu.core_type<tc>, window_params = [{transform_indices = @transform_0, window_bounds = array<i64: 4, 12, 4>}, {pipeline_mode = #tpu.pipeline_mode<synchronous>, transform_indices = @transform_1, window_bounds = array<i64: 3, 64>}, {pipeline_mode = #tpu.pipeline_mode<synchronous>, transform_indices = @transform_2, window_bounds = array<i64: 1, 64>}, {pipeline_mode = #tpu.pipeline_mode<synchronous>, transform_indices = @transform_3, window_bounds = array<i64: 1, 64>}, {pipeline_mode = #tpu.pipeline_mode<synchronous>, transform_indices = @transform_4, window_bounds = array<i64: 2, 64>}, {pipeline_mode = #tpu.pipeline_mode<synchronous>, transform_indices = @transform_5, window_bounds = array<i64: 1, 64>}, {pipeline_mode = #tpu.pipeline_mode<synchronous>, transform_indices = @transform_6, window_bounds = array<i64: 2, 64>}, {pipeline_mode = #tpu.pipeline_mode<synchronous>, transform_indices = @transform_7, window_bounds = array<i64: 1, 64>}, {pipeline_mode = #tpu.pipeline_mode<synchronous>, transform_indices = @transform_8, window_bounds = array<i64: 2, 64>}, {pipeline_mode = #tpu.pipeline_mode<synchronous>, transform_indices = @transform_9, window_bounds = array<i64: 1, 64>}, {pipeline_mode = #tpu.pipeline_mode<synchronous>, transform_indices = @transform_10, window_bounds = array<i64: 64, 64>}, {pipeline_mode = #tpu.pipeline_mode<synchronous>, transform_indices = @transform_11, window_bounds = array<i64: 1, 64>}, {pipeline_mode = #tpu.pipeline_mode<synchronous>, transform_indices = @transform_12, window_bounds = array<i64: 2, 64>}, {pipeline_mode = #tpu.pipeline_mode<synchronous>, transform_indices = @transform_13, window_bounds = array<i64: 1, 64>}, {pipeline_mode = #tpu.pipeline_mode<synchronous>, transform_indices = @transform_14, window_bounds = array<i64: 64, 64>}, {pipeline_mode = #tpu.pipeline_mode<synchronous>, transform_indices = @transform_15, window_bounds = array<i64: 1, 64>}, {pipeline_mode = #tpu.pipeline_mode<synchronous>, transform_indices = @transform_16, window_bounds = array<i64: 64, 512>}, {pipeline_mode = #tpu.pipeline_mode<synchronous>, transform_indices = @transform_17, window_bounds = array<i64: 1, 512>}, {pipeline_mode = #tpu.pipeline_mode<synchronous>, transform_indices = @transform_18, window_bounds = array<i64: 512, 512>}, {pipeline_mode = #tpu.pipeline_mode<synchronous>, transform_indices = @transform_19, window_bounds = array<i64: 1, 512>}, {pipeline_mode = #tpu.pipeline_mode<synchronous>, transform_indices = @transform_20, window_bounds = array<i64: 1, 512>}, {pipeline_mode = #tpu.pipeline_mode<synchronous>, transform_indices = @transform_21, window_bounds = array<i64: 1, 1>}, {transform_indices = @transform_22, window_bounds = array<i64: 1, 1, 20>}]} {
    %c0 = arith.constant 0 : index
    %c0_0 = arith.constant 0 : index
    %0 = vector.load %arg2[%c0, %c0_0] : memref<3x64xf32, #tpu.memory_space<vmem>>, vector<3x64xf32>
    %c0_1 = arith.constant 0 : index
    %c0_2 = arith.constant 0 : index
    %1 = vector.load %arg3[%c0_1, %c0_2] : memref<1x64xf32, #tpu.memory_space<vmem>>, vector<1x64xf32>
    %c0_3 = arith.constant 0 : index
    %c0_4 = arith.constant 0 : index
    %2 = vector.load %arg4[%c0_3, %c0_4] : memref<1x64xf32, #tpu.memory_space<vmem>>, vector<1x64xf32>
    %c0_5 = arith.constant 0 : index
    %c0_6 = arith.constant 0 : index
    %3 = vector.load %arg5[%c0_5, %c0_6] : memref<2x64xf32, #tpu.memory_space<vmem>>, vector<2x64xf32>
    %c0_7 = arith.constant 0 : index
    %c0_8 = arith.constant 0 : index
    %4 = vector.load %arg6[%c0_7, %c0_8] : memref<1x64xf32, #tpu.memory_space<vmem>>, vector<1x64xf32>
    %c0_9 = arith.constant 0 : index
    %c0_10 = arith.constant 0 : index
    %5 = vector.load %arg7[%c0_9, %c0_10] : memref<2x64xf32, #tpu.memory_space<vmem>>, vector<2x64xf32>
    %c0_11 = arith.constant 0 : index
    %c0_12 = arith.constant 0 : index
    %6 = vector.load %arg8[%c0_11, %c0_12] : memref<1x64xf32, #tpu.memory_space<vmem>>, vector<1x64xf32>
    %c0_13 = arith.constant 0 : index
    %c0_14 = arith.constant 0 : index
    %7 = vector.load %arg9[%c0_13, %c0_14] : memref<2x64xf32, #tpu.memory_space<vmem>>, vector<2x64xf32>
    %c0_15 = arith.constant 0 : index
    %c0_16 = arith.constant 0 : index
    %8 = vector.load %arg10[%c0_15, %c0_16] : memref<1x64xf32, #tpu.memory_space<vmem>>, vector<1x64xf32>
    %c0_17 = arith.constant 0 : index
    %c0_18 = arith.constant 0 : index
    %9 = vector.load %arg13[%c0_17, %c0_18] : memref<2x64xf32, #tpu.memory_space<vmem>>, vector<2x64xf32>
    %c0_19 = arith.constant 0 : index
    %c0_20 = arith.constant 0 : index
    %10 = vector.load %arg14[%c0_19, %c0_20] : memref<1x64xf32, #tpu.memory_space<vmem>>, vector<1x64xf32>
    %11 = tpu.iota {dimensions = array<i32: 0>} : vector<12x1xi32>
    %c3_i32 = arith.constant 3 : i32
    %12 = vector.broadcast %c3_i32 : i32 to vector<12x1xi32>
    %13 = arith.cmpi slt, %11, %12 : vector<12x1xi32>
    %14 = arith.extui %13 : vector<12x1xi1> to vector<12x1xi32>
    %15 = arith.sitofp %14 : vector<12x1xi32> to vector<12x1xf32>
    %c3_i32_21 = arith.constant 3 : i32
    %16 = vector.broadcast %c3_i32_21 : i32 to vector<12x1xi32>
    %17 = arith.cmpi sge, %11, %16 : vector<12x1xi32>
    %c8_i32 = arith.constant 8 : i32
    %18 = vector.broadcast %c8_i32 : i32 to vector<12x1xi32>
    %19 = arith.cmpi slt, %11, %18 : vector<12x1xi32>
    %20 = arith.andi %17, %19 : vector<12x1xi1>
    %21 = arith.extui %20 : vector<12x1xi1> to vector<12x1xi32>
    %22 = arith.sitofp %21 : vector<12x1xi32> to vector<12x1xf32>
    %c8_i32_22 = arith.constant 8 : i32
    %23 = vector.broadcast %c8_i32_22 : i32 to vector<12x1xi32>
    %24 = arith.cmpi sge, %11, %23 : vector<12x1xi32>
    %25 = arith.extui %24 : vector<12x1xi1> to vector<12x1xi32>
    %26 = arith.sitofp %25 : vector<12x1xi32> to vector<12x1xf32>
    %c0_23 = arith.constant 0 : index
    %c0_24 = arith.constant 0 : index
    %c0_25 = arith.constant 0 : index
    %27 = vector.load %arg1[%c0_23, %c0_24, %c0_25] : memref<4x12x4xf32, #tpu.memory_space<vmem>>, vector<1x12x4xf32>
    %28 = vector.shape_cast %27 : vector<1x12x4xf32> to vector<12x4xf32>
    %29 = vector.extract_strided_slice %28 {offsets = [0, 0], sizes = [12, 1], strides = [1, 1]} : vector<12x4xf32> to vector<12x1xf32>
    %30 = vector.extract_strided_slice %28 {offsets = [0, 1], sizes = [12, 1], strides = [1, 1]} : vector<12x4xf32> to vector<12x1xf32>
    %31 = vector.extract_strided_slice %28 {offsets = [0, 2], sizes = [12, 1], strides = [1, 1]} : vector<12x4xf32> to vector<12x1xf32>
    %32 = vector.extract_strided_slice %28 {offsets = [0, 3], sizes = [12, 1], strides = [1, 1]} : vector<12x4xf32> to vector<12x1xf32>
    %cst = arith.constant 3.14159274 : f32
    %33 = vector.broadcast %cst : f32 to vector<12x1xf32>
    %34 = arith.mulf %32, %33 : vector<12x1xf32>
    %35 = math.sin %34 : vector<12x1xf32>
    %36 = vector.extract_strided_slice %3 {offsets = [0, 0], sizes = [1, 64], strides = [1, 1]} : vector<2x64xf32> to vector<1x64xf32>
    %37 = vector.broadcast %35 : vector<12x1xf32> to vector<12x64xf32>
    %38 = vector.broadcast %36 : vector<1x64xf32> to vector<12x64xf32>
    %39 = arith.mulf %37, %38 : vector<12x64xf32>
    %40 = math.cos %34 : vector<12x1xf32>
    %41 = vector.extract_strided_slice %3 {offsets = [1, 0], sizes = [1, 64], strides = [1, 1]} : vector<2x64xf32> to vector<1x64xf32>
    %42 = vector.broadcast %40 : vector<12x1xf32> to vector<12x64xf32>
    %43 = vector.broadcast %41 : vector<1x64xf32> to vector<12x64xf32>
    %44 = arith.mulf %42, %43 : vector<12x64xf32>
    %45 = arith.addf %39, %44 : vector<12x64xf32>
    %46 = vector.broadcast %4 : vector<1x64xf32> to vector<12x64xf32>
    %47 = arith.addf %45, %46 : vector<12x64xf32>
    %48 = vector.shape_cast %29 : vector<12x1xf32> to vector<1x12x1xf32>
    %49 = vector.shape_cast %29 : vector<12x1xf32> to vector<12x1x1xf32>
    %50 = vector.broadcast %48 : vector<1x12x1xf32> to vector<12x12x1xf32>
    %51 = vector.broadcast %49 : vector<12x1x1xf32> to vector<12x12x1xf32>
    %52 = arith.subf %50, %51 : vector<12x12x1xf32>
    %53 = vector.shape_cast %30 : vector<12x1xf32> to vector<1x12x1xf32>
    %54 = vector.shape_cast %30 : vector<12x1xf32> to vector<12x1x1xf32>
    %55 = vector.broadcast %53 : vector<1x12x1xf32> to vector<12x12x1xf32>
    %56 = vector.broadcast %54 : vector<12x1x1xf32> to vector<12x12x1xf32>
    %57 = arith.subf %55, %56 : vector<12x12x1xf32>
    %58 = vector.broadcast %31 : vector<12x1xf32> to vector<12x64xf32>
    %59 = vector.broadcast %1 : vector<1x64xf32> to vector<12x64xf32>
    %60 = arith.mulf %58, %59 : vector<12x64xf32>
    %61 = vector.broadcast %2 : vector<1x64xf32> to vector<12x64xf32>
    %62 = arith.addf %60, %61 : vector<12x64xf32>
    %63 = vector.extract_strided_slice %0 {offsets = [0, 0], sizes = [1, 64], strides = [1, 1]} : vector<3x64xf32> to vector<1x64xf32>
    %64 = vector.broadcast %15 : vector<12x1xf32> to vector<12x64xf32>
    %65 = vector.broadcast %63 : vector<1x64xf32> to vector<12x64xf32>
    %66 = arith.mulf %64, %65 : vector<12x64xf32>
    %67 = vector.extract_strided_slice %0 {offsets = [1, 0], sizes = [1, 64], strides = [1, 1]} : vector<3x64xf32> to vector<1x64xf32>
    %68 = vector.broadcast %67 : vector<1x64xf32> to vector<12x64xf32>
    %69 = arith.addf %68, %47 : vector<12x64xf32>
    %70 = vector.broadcast %22 : vector<12x1xf32> to vector<12x64xf32>
    %71 = arith.mulf %70, %69 : vector<12x64xf32>
    %72 = vector.broadcast %31 : vector<12x1xf32> to vector<12x64xf32>
    %73 = arith.mulf %71, %72 : vector<12x64xf32>
    %74 = arith.addf %66, %73 : vector<12x64xf32>
    %75 = vector.extract_strided_slice %0 {offsets = [2, 0], sizes = [1, 64], strides = [1, 1]} : vector<3x64xf32> to vector<1x64xf32>
    %76 = vector.broadcast %75 : vector<1x64xf32> to vector<12x64xf32>
    %77 = arith.addf %76, %62 : vector<12x64xf32>
    %78 = vector.broadcast %26 : vector<12x1xf32> to vector<12x64xf32>
    %79 = arith.mulf %78, %77 : vector<12x64xf32>
    %80 = arith.addf %74, %79 : vector<12x64xf32>
    %81 = vector.extract_strided_slice %7 {offsets = [0, 0], sizes = [1, 64], strides = [1, 1]} : vector<2x64xf32> to vector<1x64xf32>
    %82 = vector.shape_cast %81 : vector<1x64xf32> to vector<1x1x64xf32>
    %83 = vector.broadcast %52 : vector<12x12x1xf32> to vector<12x12x64xf32>
    %84 = vector.broadcast %82 : vector<1x1x64xf32> to vector<12x12x64xf32>
    %85 = arith.mulf %83, %84 : vector<12x12x64xf32>
    %86 = vector.extract_strided_slice %7 {offsets = [1, 0], sizes = [1, 64], strides = [1, 1]} : vector<2x64xf32> to vector<1x64xf32>
    %87 = vector.shape_cast %86 : vector<1x64xf32> to vector<1x1x64xf32>
    %88 = vector.broadcast %57 : vector<12x12x1xf32> to vector<12x12x64xf32>
    %89 = vector.broadcast %87 : vector<1x1x64xf32> to vector<12x12x64xf32>
    %90 = arith.mulf %88, %89 : vector<12x12x64xf32>
    %91 = arith.addf %85, %90 : vector<12x12x64xf32>
    %92 = vector.shape_cast %8 : vector<1x64xf32> to vector<1x1x64xf32>
    %93 = vector.broadcast %92 : vector<1x1x64xf32> to vector<12x12x64xf32>
    %94 = arith.addf %91, %93 : vector<12x12x64xf32>
    %cst_26 = arith.constant 0.000000e+00 : f32
    %95 = vector.broadcast %cst_26 : f32 to vector<12x12x64xf32>
    %96 = arith.maximumf %94, %95 : vector<12x12x64xf32>
    %97 = vector.shape_cast %80 : vector<12x64xf32> to vector<1x12x64xf32>
    %98 = vector.broadcast %97 : vector<1x12x64xf32> to vector<12x12x64xf32>
    %99 = arith.mulf %96, %98 : vector<12x12x64xf32>
    %cst_27 = arith.constant dense<0.000000e+00> : vector<12x64xf32>
    %100 = vector.multi_reduction <add>, %99, %cst_27 [1] : vector<12x12x64xf32> to vector<12x64xf32>
    %c0_28 = arith.constant 0 : index
    %c0_29 = arith.constant 0 : index
    %101 = vector.load %arg24[%c0_28, %c0_29] : memref<48x64xf32, #tpu.memory_space<vmem>>, vector<12x64xf32>
    tpu.vector_store %arg24[%c0_28, %c0_29], %100 {strides = array<i32>} : memref<48x64xf32, #tpu.memory_space<vmem>>, vector<12x64xf32>,
    %102 = vector.extract_strided_slice %31 {offsets = [3, 0], sizes = [5, 1], strides = [1, 1]} : vector<12x1xf32> to vector<5x1xf32>
    %103 = vector.extract_strided_slice %29 {offsets = [3, 0], sizes = [5, 1], strides = [1, 1]} : vector<12x1xf32> to vector<5x1xf32>
    %104 = vector.extract_strided_slice %5 {offsets = [0, 0], sizes = [1, 64], strides = [1, 1]} : vector<2x64xf32> to vector<1x64xf32>
    %105 = vector.broadcast %103 : vector<5x1xf32> to vector<5x64xf32>
    %106 = vector.broadcast %104 : vector<1x64xf32> to vector<5x64xf32>
    %107 = arith.mulf %105, %106 : vector<5x64xf32>
    %108 = vector.extract_strided_slice %30 {offsets = [3, 0], sizes = [5, 1], strides = [1, 1]} : vector<12x1xf32> to vector<5x1xf32>
    %109 = vector.extract_strided_slice %5 {offsets = [1, 0], sizes = [1, 64], strides = [1, 1]} : vector<2x64xf32> to vector<1x64xf32>
    %110 = vector.broadcast %108 : vector<5x1xf32> to vector<5x64xf32>
    %111 = vector.broadcast %109 : vector<1x64xf32> to vector<5x64xf32>
    %112 = arith.mulf %110, %111 : vector<5x64xf32>
    %113 = arith.addf %107, %112 : vector<5x64xf32>
    %114 = vector.broadcast %6 : vector<1x64xf32> to vector<5x64xf32>
    %115 = arith.addf %113, %114 : vector<5x64xf32>
    %116 = vector.extract_strided_slice %47 {offsets = [3, 0], sizes = [5, 64], strides = [1, 1]} : vector<12x64xf32> to vector<5x64xf32>
    %117 = vector.broadcast %102 : vector<5x1xf32> to vector<5x64xf32>
    %118 = arith.mulf %116, %117 : vector<5x64xf32>
    %119 = arith.addf %118, %115 : vector<5x64xf32>
    %c0_30 = arith.constant 0 : index
    %c0_31 = arith.constant 0 : index
    %120 = vector.load %arg26[%c0_30, %c0_31] : memref<20x64xf32, #tpu.memory_space<vmem>>, vector<5x64xf32>
    tpu.vector_store %arg26[%c0_30, %c0_31], %119 {strides = array<i32>} : memref<20x64xf32, #tpu.memory_space<vmem>>, vector<5x64xf32>,
    %c0_32 = arith.constant 0 : index
    %c0_33 = arith.constant 0 : index
    %121 = vector.load %arg27[%c0_32, %c0_33] : memref<20x1xf32, #tpu.memory_space<vmem>>, vector<5x1xf32>
    tpu.vector_store %arg27[%c0_32, %c0_33], %102 {strides = array<i32>} : memref<20x1xf32, #tpu.memory_space<vmem>>, vector<5x1xf32>,
    %c1 = arith.constant 1 : index
    %c0_34 = arith.constant 0 : index
    %c0_35 = arith.constant 0 : index
    %122 = vector.load %arg1[%c1, %c0_34, %c0_35] : memref<4x12x4xf32, #tpu.memory_space<vmem>>, vector<1x12x4xf32>
    %123 = vector.shape_cast %122 : vector<1x12x4xf32> to vector<12x4xf32>
    %124 = vector.extract_strided_slice %123 {offsets = [0, 0], sizes = [12, 1], strides = [1, 1]} : vector<12x4xf32> to vector<12x1xf32>
    %125 = vector.extract_strided_slice %123 {offsets = [0, 1], sizes = [12, 1], strides = [1, 1]} : vector<12x4xf32> to vector<12x1xf32>
    %126 = vector.extract_strided_slice %123 {offsets = [0, 2], sizes = [12, 1], strides = [1, 1]} : vector<12x4xf32> to vector<12x1xf32>
    %127 = vector.extract_strided_slice %123 {offsets = [0, 3], sizes = [12, 1], strides = [1, 1]} : vector<12x4xf32> to vector<12x1xf32>
    %cst_36 = arith.constant 3.14159274 : f32
    %128 = vector.broadcast %cst_36 : f32 to vector<12x1xf32>
    %129 = arith.mulf %127, %128 : vector<12x1xf32>
    %130 = math.sin %129 : vector<12x1xf32>
    %131 = vector.extract_strided_slice %3 {offsets = [0, 0], sizes = [1, 64], strides = [1, 1]} : vector<2x64xf32> to vector<1x64xf32>
    %132 = vector.broadcast %130 : vector<12x1xf32> to vector<12x64xf32>
    %133 = vector.broadcast %131 : vector<1x64xf32> to vector<12x64xf32>
    %134 = arith.mulf %132, %133 : vector<12x64xf32>
    %135 = math.cos %129 : vector<12x1xf32>
    %136 = vector.extract_strided_slice %3 {offsets = [1, 0], sizes = [1, 64], strides = [1, 1]} : vector<2x64xf32> to vector<1x64xf32>
    %137 = vector.broadcast %135 : vector<12x1xf32> to vector<12x64xf32>
    %138 = vector.broadcast %136 : vector<1x64xf32> to vector<12x64xf32>
    %139 = arith.mulf %137, %138 : vector<12x64xf32>
    %140 = arith.addf %134, %139 : vector<12x64xf32>
    %141 = vector.broadcast %4 : vector<1x64xf32> to vector<12x64xf32>
    %142 = arith.addf %140, %141 : vector<12x64xf32>
    %143 = vector.shape_cast %124 : vector<12x1xf32> to vector<1x12x1xf32>
    %144 = vector.shape_cast %124 : vector<12x1xf32> to vector<12x1x1xf32>
    %145 = vector.broadcast %143 : vector<1x12x1xf32> to vector<12x12x1xf32>
    %146 = vector.broadcast %144 : vector<12x1x1xf32> to vector<12x12x1xf32>
    %147 = arith.subf %145, %146 : vector<12x12x1xf32>
    %148 = vector.shape_cast %125 : vector<12x1xf32> to vector<1x12x1xf32>
    %149 = vector.shape_cast %125 : vector<12x1xf32> to vector<12x1x1xf32>
    %150 = vector.broadcast %148 : vector<1x12x1xf32> to vector<12x12x1xf32>
    %151 = vector.broadcast %149 : vector<12x1x1xf32> to vector<12x12x1xf32>
    %152 = arith.subf %150, %151 : vector<12x12x1xf32>
    %153 = vector.broadcast %126 : vector<12x1xf32> to vector<12x64xf32>
    %154 = vector.broadcast %1 : vector<1x64xf32> to vector<12x64xf32>
    %155 = arith.mulf %153, %154 : vector<12x64xf32>
    %156 = vector.broadcast %2 : vector<1x64xf32> to vector<12x64xf32>
    %157 = arith.addf %155, %156 : vector<12x64xf32>
    %158 = vector.extract_strided_slice %0 {offsets = [0, 0], sizes = [1, 64], strides = [1, 1]} : vector<3x64xf32> to vector<1x64xf32>
    %159 = vector.broadcast %15 : vector<12x1xf32> to vector<12x64xf32>
    %160 = vector.broadcast %158 : vector<1x64xf32> to vector<12x64xf32>
    %161 = arith.mulf %159, %160 : vector<12x64xf32>
    %162 = vector.extract_strided_slice %0 {offsets = [1, 0], sizes = [1, 64], strides = [1, 1]} : vector<3x64xf32> to vector<1x64xf32>
    %163 = vector.broadcast %162 : vector<1x64xf32> to vector<12x64xf32>
    %164 = arith.addf %163, %142 : vector<12x64xf32>
    %165 = vector.broadcast %22 : vector<12x1xf32> to vector<12x64xf32>
    %166 = arith.mulf %165, %164 : vector<12x64xf32>
    %167 = vector.broadcast %126 : vector<12x1xf32> to vector<12x64xf32>
    %168 = arith.mulf %166, %167 : vector<12x64xf32>
    %169 = arith.addf %161, %168 : vector<12x64xf32>
    %170 = vector.extract_strided_slice %0 {offsets = [2, 0], sizes = [1, 64], strides = [1, 1]} : vector<3x64xf32> to vector<1x64xf32>
    %171 = vector.broadcast %170 : vector<1x64xf32> to vector<12x64xf32>
    %172 = arith.addf %171, %157 : vector<12x64xf32>
    %173 = vector.broadcast %26 : vector<12x1xf32> to vector<12x64xf32>
    %174 = arith.mulf %173, %172 : vector<12x64xf32>
    %175 = arith.addf %169, %174 : vector<12x64xf32>
    %176 = vector.extract_strided_slice %7 {offsets = [0, 0], sizes = [1, 64], strides = [1, 1]} : vector<2x64xf32> to vector<1x64xf32>
    %177 = vector.shape_cast %176 : vector<1x64xf32> to vector<1x1x64xf32>
    %178 = vector.broadcast %147 : vector<12x12x1xf32> to vector<12x12x64xf32>
    %179 = vector.broadcast %177 : vector<1x1x64xf32> to vector<12x12x64xf32>
    %180 = arith.mulf %178, %179 : vector<12x12x64xf32>
    %181 = vector.extract_strided_slice %7 {offsets = [1, 0], sizes = [1, 64], strides = [1, 1]} : vector<2x64xf32> to vector<1x64xf32>
    %182 = vector.shape_cast %181 : vector<1x64xf32> to vector<1x1x64xf32>
    %183 = vector.broadcast %152 : vector<12x12x1xf32> to vector<12x12x64xf32>
    %184 = vector.broadcast %182 : vector<1x1x64xf32> to vector<12x12x64xf32>
    %185 = arith.mulf %183, %184 : vector<12x12x64xf32>
    %186 = arith.addf %180, %185 : vector<12x12x64xf32>
    %187 = vector.shape_cast %8 : vector<1x64xf32> to vector<1x1x64xf32>
    %188 = vector.broadcast %187 : vector<1x1x64xf32> to vector<12x12x64xf32>
    %189 = arith.addf %186, %188 : vector<12x12x64xf32>
    %cst_37 = arith.constant 0.000000e+00 : f32
    %190 = vector.broadcast %cst_37 : f32 to vector<12x12x64xf32>
    %191 = arith.maximumf %189, %190 : vector<12x12x64xf32>
    %192 = vector.shape_cast %175 : vector<12x64xf32> to vector<1x12x64xf32>
    %193 = vector.broadcast %192 : vector<1x12x64xf32> to vector<12x12x64xf32>
    %194 = arith.mulf %191, %193 : vector<12x12x64xf32>
    %cst_38 = arith.constant dense<0.000000e+00> : vector<12x64xf32>
    %195 = vector.multi_reduction <add>, %194, %cst_38 [1] : vector<12x12x64xf32> to vector<12x64xf32>
    %c12 = arith.constant 12 : index
    %c0_39 = arith.constant 0 : index
    %196 = vector.load %arg24[%c12, %c0_39] : memref<48x64xf32, #tpu.memory_space<vmem>>, vector<12x64xf32>
    tpu.vector_store %arg24[%c12, %c0_39], %195 {strides = array<i32>} : memref<48x64xf32, #tpu.memory_space<vmem>>, vector<12x64xf32>,
    %197 = vector.extract_strided_slice %126 {offsets = [3, 0], sizes = [5, 1], strides = [1, 1]} : vector<12x1xf32> to vector<5x1xf32>
    %198 = vector.extract_strided_slice %124 {offsets = [3, 0], sizes = [5, 1], strides = [1, 1]} : vector<12x1xf32> to vector<5x1xf32>
    %199 = vector.extract_strided_slice %5 {offsets = [0, 0], sizes = [1, 64], strides = [1, 1]} : vector<2x64xf32> to vector<1x64xf32>
    %200 = vector.broadcast %198 : vector<5x1xf32> to vector<5x64xf32>
    %201 = vector.broadcast %199 : vector<1x64xf32> to vector<5x64xf32>
    %202 = arith.mulf %200, %201 : vector<5x64xf32>
    %203 = vector.extract_strided_slice %125 {offsets = [3, 0], sizes = [5, 1], strides = [1, 1]} : vector<12x1xf32> to vector<5x1xf32>
    %204 = vector.extract_strided_slice %5 {offsets = [1, 0], sizes = [1, 64], strides = [1, 1]} : vector<2x64xf32> to vector<1x64xf32>
    %205 = vector.broadcast %203 : vector<5x1xf32> to vector<5x64xf32>
    %206 = vector.broadcast %204 : vector<1x64xf32> to vector<5x64xf32>
    %207 = arith.mulf %205, %206 : vector<5x64xf32>
    %208 = arith.addf %202, %207 : vector<5x64xf32>
    %209 = vector.broadcast %6 : vector<1x64xf32> to vector<5x64xf32>
    %210 = arith.addf %208, %209 : vector<5x64xf32>
    %211 = vector.extract_strided_slice %142 {offsets = [3, 0], sizes = [5, 64], strides = [1, 1]} : vector<12x64xf32> to vector<5x64xf32>
    %212 = vector.broadcast %197 : vector<5x1xf32> to vector<5x64xf32>
    %213 = arith.mulf %211, %212 : vector<5x64xf32>
    %214 = arith.addf %213, %210 : vector<5x64xf32>
    %c5 = arith.constant 5 : index
    %c0_40 = arith.constant 0 : index
    %215 = vector.load %arg26[%c5, %c0_40] : memref<20x64xf32, #tpu.memory_space<vmem>>, vector<5x64xf32>
    tpu.vector_store %arg26[%c5, %c0_40], %214 {strides = array<i32>} : memref<20x64xf32, #tpu.memory_space<vmem>>, vector<5x64xf32>,
    %c5_41 = arith.constant 5 : index
    %c0_42 = arith.constant 0 : index
    %216 = vector.load %arg27[%c5_41, %c0_42] : memref<20x1xf32, #tpu.memory_space<vmem>>, vector<5x1xf32>
    tpu.vector_store %arg27[%c5_41, %c0_42], %197 {strides = array<i32>} : memref<20x1xf32, #tpu.memory_space<vmem>>, vector<5x1xf32>,
    %c2 = arith.constant 2 : index
    %c0_43 = arith.constant 0 : index
    %c0_44 = arith.constant 0 : index
    %217 = vector.load %arg1[%c2, %c0_43, %c0_44] : memref<4x12x4xf32, #tpu.memory_space<vmem>>, vector<1x12x4xf32>
    %218 = vector.shape_cast %217 : vector<1x12x4xf32> to vector<12x4xf32>
    %219 = vector.extract_strided_slice %218 {offsets = [0, 0], sizes = [12, 1], strides = [1, 1]} : vector<12x4xf32> to vector<12x1xf32>
    %220 = vector.extract_strided_slice %218 {offsets = [0, 1], sizes = [12, 1], strides = [1, 1]} : vector<12x4xf32> to vector<12x1xf32>
    %221 = vector.extract_strided_slice %218 {offsets = [0, 2], sizes = [12, 1], strides = [1, 1]} : vector<12x4xf32> to vector<12x1xf32>
    %222 = vector.extract_strided_slice %218 {offsets = [0, 3], sizes = [12, 1], strides = [1, 1]} : vector<12x4xf32> to vector<12x1xf32>
    %cst_45 = arith.constant 3.14159274 : f32
    %223 = vector.broadcast %cst_45 : f32 to vector<12x1xf32>
    %224 = arith.mulf %222, %223 : vector<12x1xf32>
    %225 = math.sin %224 : vector<12x1xf32>
    %226 = vector.extract_strided_slice %3 {offsets = [0, 0], sizes = [1, 64], strides = [1, 1]} : vector<2x64xf32> to vector<1x64xf32>
    %227 = vector.broadcast %225 : vector<12x1xf32> to vector<12x64xf32>
    %228 = vector.broadcast %226 : vector<1x64xf32> to vector<12x64xf32>
    %229 = arith.mulf %227, %228 : vector<12x64xf32>
    %230 = math.cos %224 : vector<12x1xf32>
    %231 = vector.extract_strided_slice %3 {offsets = [1, 0], sizes = [1, 64], strides = [1, 1]} : vector<2x64xf32> to vector<1x64xf32>
    %232 = vector.broadcast %230 : vector<12x1xf32> to vector<12x64xf32>
    %233 = vector.broadcast %231 : vector<1x64xf32> to vector<12x64xf32>
    %234 = arith.mulf %232, %233 : vector<12x64xf32>
    %235 = arith.addf %229, %234 : vector<12x64xf32>
    %236 = vector.broadcast %4 : vector<1x64xf32> to vector<12x64xf32>
    %237 = arith.addf %235, %236 : vector<12x64xf32>
    %238 = vector.shape_cast %219 : vector<12x1xf32> to vector<1x12x1xf32>
    %239 = vector.shape_cast %219 : vector<12x1xf32> to vector<12x1x1xf32>
    %240 = vector.broadcast %238 : vector<1x12x1xf32> to vector<12x12x1xf32>
    %241 = vector.broadcast %239 : vector<12x1x1xf32> to vector<12x12x1xf32>
    %242 = arith.subf %240, %241 : vector<12x12x1xf32>
    %243 = vector.shape_cast %220 : vector<12x1xf32> to vector<1x12x1xf32>
    %244 = vector.shape_cast %220 : vector<12x1xf32> to vector<12x1x1xf32>
    %245 = vector.broadcast %243 : vector<1x12x1xf32> to vector<12x12x1xf32>
    %246 = vector.broadcast %244 : vector<12x1x1xf32> to vector<12x12x1xf32>
    %247 = arith.subf %245, %246 : vector<12x12x1xf32>
    %248 = vector.broadcast %221 : vector<12x1xf32> to vector<12x64xf32>
    %249 = vector.broadcast %1 : vector<1x64xf32> to vector<12x64xf32>
    %250 = arith.mulf %248, %249 : vector<12x64xf32>
    %251 = vector.broadcast %2 : vector<1x64xf32> to vector<12x64xf32>
    %252 = arith.addf %250, %251 : vector<12x64xf32>
    %253 = vector.extract_strided_slice %0 {offsets = [0, 0], sizes = [1, 64], strides = [1, 1]} : vector<3x64xf32> to vector<1x64xf32>
    %254 = vector.broadcast %15 : vector<12x1xf32> to vector<12x64xf32>
    %255 = vector.broadcast %253 : vector<1x64xf32> to vector<12x64xf32>
    %256 = arith.mulf %254, %255 : vector<12x64xf32>
    %257 = vector.extract_strided_slice %0 {offsets = [1, 0], sizes = [1, 64], strides = [1, 1]} : vector<3x64xf32> to vector<1x64xf32>
    %258 = vector.broadcast %257 : vector<1x64xf32> to vector<12x64xf32>
    %259 = arith.addf %258, %237 : vector<12x64xf32>
    %260 = vector.broadcast %22 : vector<12x1xf32> to vector<12x64xf32>
    %261 = arith.mulf %260, %259 : vector<12x64xf32>
    %262 = vector.broadcast %221 : vector<12x1xf32> to vector<12x64xf32>
    %263 = arith.mulf %261, %262 : vector<12x64xf32>
    %264 = arith.addf %256, %263 : vector<12x64xf32>
    %265 = vector.extract_strided_slice %0 {offsets = [2, 0], sizes = [1, 64], strides = [1, 1]} : vector<3x64xf32> to vector<1x64xf32>
    %266 = vector.broadcast %265 : vector<1x64xf32> to vector<12x64xf32>
    %267 = arith.addf %266, %252 : vector<12x64xf32>
    %268 = vector.broadcast %26 : vector<12x1xf32> to vector<12x64xf32>
    %269 = arith.mulf %268, %267 : vector<12x64xf32>
    %270 = arith.addf %264, %269 : vector<12x64xf32>
    %271 = vector.extract_strided_slice %7 {offsets = [0, 0], sizes = [1, 64], strides = [1, 1]} : vector<2x64xf32> to vector<1x64xf32>
    %272 = vector.shape_cast %271 : vector<1x64xf32> to vector<1x1x64xf32>
    %273 = vector.broadcast %242 : vector<12x12x1xf32> to vector<12x12x64xf32>
    %274 = vector.broadcast %272 : vector<1x1x64xf32> to vector<12x12x64xf32>
    %275 = arith.mulf %273, %274 : vector<12x12x64xf32>
    %276 = vector.extract_strided_slice %7 {offsets = [1, 0], sizes = [1, 64], strides = [1, 1]} : vector<2x64xf32> to vector<1x64xf32>
    %277 = vector.shape_cast %276 : vector<1x64xf32> to vector<1x1x64xf32>
    %278 = vector.broadcast %247 : vector<12x12x1xf32> to vector<12x12x64xf32>
    %279 = vector.broadcast %277 : vector<1x1x64xf32> to vector<12x12x64xf32>
    %280 = arith.mulf %278, %279 : vector<12x12x64xf32>
    %281 = arith.addf %275, %280 : vector<12x12x64xf32>
    %282 = vector.shape_cast %8 : vector<1x64xf32> to vector<1x1x64xf32>
    %283 = vector.broadcast %282 : vector<1x1x64xf32> to vector<12x12x64xf32>
    %284 = arith.addf %281, %283 : vector<12x12x64xf32>
    %cst_46 = arith.constant 0.000000e+00 : f32
    %285 = vector.broadcast %cst_46 : f32 to vector<12x12x64xf32>
    %286 = arith.maximumf %284, %285 : vector<12x12x64xf32>
    %287 = vector.shape_cast %270 : vector<12x64xf32> to vector<1x12x64xf32>
    %288 = vector.broadcast %287 : vector<1x12x64xf32> to vector<12x12x64xf32>
    %289 = arith.mulf %286, %288 : vector<12x12x64xf32>
    %cst_47 = arith.constant dense<0.000000e+00> : vector<12x64xf32>
    %290 = vector.multi_reduction <add>, %289, %cst_47 [1] : vector<12x12x64xf32> to vector<12x64xf32>
    %c24 = arith.constant 24 : index
    %c0_48 = arith.constant 0 : index
    %291 = vector.load %arg24[%c24, %c0_48] : memref<48x64xf32, #tpu.memory_space<vmem>>, vector<12x64xf32>
    tpu.vector_store %arg24[%c24, %c0_48], %290 {strides = array<i32>} : memref<48x64xf32, #tpu.memory_space<vmem>>, vector<12x64xf32>,
    %292 = vector.extract_strided_slice %221 {offsets = [3, 0], sizes = [5, 1], strides = [1, 1]} : vector<12x1xf32> to vector<5x1xf32>
    %293 = vector.extract_strided_slice %219 {offsets = [3, 0], sizes = [5, 1], strides = [1, 1]} : vector<12x1xf32> to vector<5x1xf32>
    %294 = vector.extract_strided_slice %5 {offsets = [0, 0], sizes = [1, 64], strides = [1, 1]} : vector<2x64xf32> to vector<1x64xf32>
    %295 = vector.broadcast %293 : vector<5x1xf32> to vector<5x64xf32>
    %296 = vector.broadcast %294 : vector<1x64xf32> to vector<5x64xf32>
    %297 = arith.mulf %295, %296 : vector<5x64xf32>
    %298 = vector.extract_strided_slice %220 {offsets = [3, 0], sizes = [5, 1], strides = [1, 1]} : vector<12x1xf32> to vector<5x1xf32>
    %299 = vector.extract_strided_slice %5 {offsets = [1, 0], sizes = [1, 64], strides = [1, 1]} : vector<2x64xf32> to vector<1x64xf32>
    %300 = vector.broadcast %298 : vector<5x1xf32> to vector<5x64xf32>
    %301 = vector.broadcast %299 : vector<1x64xf32> to vector<5x64xf32>
    %302 = arith.mulf %300, %301 : vector<5x64xf32>
    %303 = arith.addf %297, %302 : vector<5x64xf32>
    %304 = vector.broadcast %6 : vector<1x64xf32> to vector<5x64xf32>
    %305 = arith.addf %303, %304 : vector<5x64xf32>
    %306 = vector.extract_strided_slice %237 {offsets = [3, 0], sizes = [5, 64], strides = [1, 1]} : vector<12x64xf32> to vector<5x64xf32>
    %307 = vector.broadcast %292 : vector<5x1xf32> to vector<5x64xf32>
    %308 = arith.mulf %306, %307 : vector<5x64xf32>
    %309 = arith.addf %308, %305 : vector<5x64xf32>
    %c10 = arith.constant 10 : index
    %c0_49 = arith.constant 0 : index
    %310 = vector.load %arg26[%c10, %c0_49] : memref<20x64xf32, #tpu.memory_space<vmem>>, vector<5x64xf32>
    tpu.vector_store %arg26[%c10, %c0_49], %309 {strides = array<i32>} : memref<20x64xf32, #tpu.memory_space<vmem>>, vector<5x64xf32>,
    %c10_50 = arith.constant 10 : index
    %c0_51 = arith.constant 0 : index
    %311 = vector.load %arg27[%c10_50, %c0_51] : memref<20x1xf32, #tpu.memory_space<vmem>>, vector<5x1xf32>
    tpu.vector_store %arg27[%c10_50, %c0_51], %292 {strides = array<i32>} : memref<20x1xf32, #tpu.memory_space<vmem>>, vector<5x1xf32>,
    %c3 = arith.constant 3 : index
    %c0_52 = arith.constant 0 : index
    %c0_53 = arith.constant 0 : index
    %312 = vector.load %arg1[%c3, %c0_52, %c0_53] : memref<4x12x4xf32, #tpu.memory_space<vmem>>, vector<1x12x4xf32>
    %313 = vector.shape_cast %312 : vector<1x12x4xf32> to vector<12x4xf32>
    %314 = vector.extract_strided_slice %313 {offsets = [0, 0], sizes = [12, 1], strides = [1, 1]} : vector<12x4xf32> to vector<12x1xf32>
    %315 = vector.extract_strided_slice %313 {offsets = [0, 1], sizes = [12, 1], strides = [1, 1]} : vector<12x4xf32> to vector<12x1xf32>
    %316 = vector.extract_strided_slice %313 {offsets = [0, 2], sizes = [12, 1], strides = [1, 1]} : vector<12x4xf32> to vector<12x1xf32>
    %317 = vector.extract_strided_slice %313 {offsets = [0, 3], sizes = [12, 1], strides = [1, 1]} : vector<12x4xf32> to vector<12x1xf32>
    %cst_54 = arith.constant 3.14159274 : f32
    %318 = vector.broadcast %cst_54 : f32 to vector<12x1xf32>
    %319 = arith.mulf %317, %318 : vector<12x1xf32>
    %320 = math.sin %319 : vector<12x1xf32>
    %321 = vector.extract_strided_slice %3 {offsets = [0, 0], sizes = [1, 64], strides = [1, 1]} : vector<2x64xf32> to vector<1x64xf32>
    %322 = vector.broadcast %320 : vector<12x1xf32> to vector<12x64xf32>
    %323 = vector.broadcast %321 : vector<1x64xf32> to vector<12x64xf32>
    %324 = arith.mulf %322, %323 : vector<12x64xf32>
    %325 = math.cos %319 : vector<12x1xf32>
    %326 = vector.extract_strided_slice %3 {offsets = [1, 0], sizes = [1, 64], strides = [1, 1]} : vector<2x64xf32> to vector<1x64xf32>
    %327 = vector.broadcast %325 : vector<12x1xf32> to vector<12x64xf32>
    %328 = vector.broadcast %326 : vector<1x64xf32> to vector<12x64xf32>
    %329 = arith.mulf %327, %328 : vector<12x64xf32>
    %330 = arith.addf %324, %329 : vector<12x64xf32>
    %331 = vector.broadcast %4 : vector<1x64xf32> to vector<12x64xf32>
    %332 = arith.addf %330, %331 : vector<12x64xf32>
    %333 = vector.shape_cast %314 : vector<12x1xf32> to vector<1x12x1xf32>
    %334 = vector.shape_cast %314 : vector<12x1xf32> to vector<12x1x1xf32>
    %335 = vector.broadcast %333 : vector<1x12x1xf32> to vector<12x12x1xf32>
    %336 = vector.broadcast %334 : vector<12x1x1xf32> to vector<12x12x1xf32>
    %337 = arith.subf %335, %336 : vector<12x12x1xf32>
    %338 = vector.shape_cast %315 : vector<12x1xf32> to vector<1x12x1xf32>
    %339 = vector.shape_cast %315 : vector<12x1xf32> to vector<12x1x1xf32>
    %340 = vector.broadcast %338 : vector<1x12x1xf32> to vector<12x12x1xf32>
    %341 = vector.broadcast %339 : vector<12x1x1xf32> to vector<12x12x1xf32>
    %342 = arith.subf %340, %341 : vector<12x12x1xf32>
    %343 = vector.broadcast %316 : vector<12x1xf32> to vector<12x64xf32>
    %344 = vector.broadcast %1 : vector<1x64xf32> to vector<12x64xf32>
    %345 = arith.mulf %343, %344 : vector<12x64xf32>
    %346 = vector.broadcast %2 : vector<1x64xf32> to vector<12x64xf32>
    %347 = arith.addf %345, %346 : vector<12x64xf32>
    %348 = vector.extract_strided_slice %0 {offsets = [0, 0], sizes = [1, 64], strides = [1, 1]} : vector<3x64xf32> to vector<1x64xf32>
    %349 = vector.broadcast %15 : vector<12x1xf32> to vector<12x64xf32>
    %350 = vector.broadcast %348 : vector<1x64xf32> to vector<12x64xf32>
    %351 = arith.mulf %349, %350 : vector<12x64xf32>
    %352 = vector.extract_strided_slice %0 {offsets = [1, 0], sizes = [1, 64], strides = [1, 1]} : vector<3x64xf32> to vector<1x64xf32>
    %353 = vector.broadcast %352 : vector<1x64xf32> to vector<12x64xf32>
    %354 = arith.addf %353, %332 : vector<12x64xf32>
    %355 = vector.broadcast %22 : vector<12x1xf32> to vector<12x64xf32>
    %356 = arith.mulf %355, %354 : vector<12x64xf32>
    %357 = vector.broadcast %316 : vector<12x1xf32> to vector<12x64xf32>
    %358 = arith.mulf %356, %357 : vector<12x64xf32>
    %359 = arith.addf %351, %358 : vector<12x64xf32>
    %360 = vector.extract_strided_slice %0 {offsets = [2, 0], sizes = [1, 64], strides = [1, 1]} : vector<3x64xf32> to vector<1x64xf32>
    %361 = vector.broadcast %360 : vector<1x64xf32> to vector<12x64xf32>
    %362 = arith.addf %361, %347 : vector<12x64xf32>
    %363 = vector.broadcast %26 : vector<12x1xf32> to vector<12x64xf32>
    %364 = arith.mulf %363, %362 : vector<12x64xf32>
    %365 = arith.addf %359, %364 : vector<12x64xf32>
    %366 = vector.extract_strided_slice %7 {offsets = [0, 0], sizes = [1, 64], strides = [1, 1]} : vector<2x64xf32> to vector<1x64xf32>
    %367 = vector.shape_cast %366 : vector<1x64xf32> to vector<1x1x64xf32>
    %368 = vector.broadcast %337 : vector<12x12x1xf32> to vector<12x12x64xf32>
    %369 = vector.broadcast %367 : vector<1x1x64xf32> to vector<12x12x64xf32>
    %370 = arith.mulf %368, %369 : vector<12x12x64xf32>
    %371 = vector.extract_strided_slice %7 {offsets = [1, 0], sizes = [1, 64], strides = [1, 1]} : vector<2x64xf32> to vector<1x64xf32>
    %372 = vector.shape_cast %371 : vector<1x64xf32> to vector<1x1x64xf32>
    %373 = vector.broadcast %342 : vector<12x12x1xf32> to vector<12x12x64xf32>
    %374 = vector.broadcast %372 : vector<1x1x64xf32> to vector<12x12x64xf32>
    %375 = arith.mulf %373, %374 : vector<12x12x64xf32>
    %376 = arith.addf %370, %375 : vector<12x12x64xf32>
    %377 = vector.shape_cast %8 : vector<1x64xf32> to vector<1x1x64xf32>
    %378 = vector.broadcast %377 : vector<1x1x64xf32> to vector<12x12x64xf32>
    %379 = arith.addf %376, %378 : vector<12x12x64xf32>
    %cst_55 = arith.constant 0.000000e+00 : f32
    %380 = vector.broadcast %cst_55 : f32 to vector<12x12x64xf32>
    %381 = arith.maximumf %379, %380 : vector<12x12x64xf32>
    %382 = vector.shape_cast %365 : vector<12x64xf32> to vector<1x12x64xf32>
    %383 = vector.broadcast %382 : vector<1x12x64xf32> to vector<12x12x64xf32>
    %384 = arith.mulf %381, %383 : vector<12x12x64xf32>
    %cst_56 = arith.constant dense<0.000000e+00> : vector<12x64xf32>
    %385 = vector.multi_reduction <add>, %384, %cst_56 [1] : vector<12x12x64xf32> to vector<12x64xf32>
    %c36 = arith.constant 36 : index
    %c0_57 = arith.constant 0 : index
    %386 = vector.load %arg24[%c36, %c0_57] : memref<48x64xf32, #tpu.memory_space<vmem>>, vector<12x64xf32>
    tpu.vector_store %arg24[%c36, %c0_57], %385 {strides = array<i32>} : memref<48x64xf32, #tpu.memory_space<vmem>>, vector<12x64xf32>,
    %387 = vector.extract_strided_slice %316 {offsets = [3, 0], sizes = [5, 1], strides = [1, 1]} : vector<12x1xf32> to vector<5x1xf32>
    %388 = vector.extract_strided_slice %314 {offsets = [3, 0], sizes = [5, 1], strides = [1, 1]} : vector<12x1xf32> to vector<5x1xf32>
    %389 = vector.extract_strided_slice %5 {offsets = [0, 0], sizes = [1, 64], strides = [1, 1]} : vector<2x64xf32> to vector<1x64xf32>
    %390 = vector.broadcast %388 : vector<5x1xf32> to vector<5x64xf32>
    %391 = vector.broadcast %389 : vector<1x64xf32> to vector<5x64xf32>
    %392 = arith.mulf %390, %391 : vector<5x64xf32>
    %393 = vector.extract_strided_slice %315 {offsets = [3, 0], sizes = [5, 1], strides = [1, 1]} : vector<12x1xf32> to vector<5x1xf32>
    %394 = vector.extract_strided_slice %5 {offsets = [1, 0], sizes = [1, 64], strides = [1, 1]} : vector<2x64xf32> to vector<1x64xf32>
    %395 = vector.broadcast %393 : vector<5x1xf32> to vector<5x64xf32>
    %396 = vector.broadcast %394 : vector<1x64xf32> to vector<5x64xf32>
    %397 = arith.mulf %395, %396 : vector<5x64xf32>
    %398 = arith.addf %392, %397 : vector<5x64xf32>
    %399 = vector.broadcast %6 : vector<1x64xf32> to vector<5x64xf32>
    %400 = arith.addf %398, %399 : vector<5x64xf32>
    %401 = vector.extract_strided_slice %332 {offsets = [3, 0], sizes = [5, 64], strides = [1, 1]} : vector<12x64xf32> to vector<5x64xf32>
    %402 = vector.broadcast %387 : vector<5x1xf32> to vector<5x64xf32>
    %403 = arith.mulf %401, %402 : vector<5x64xf32>
    %404 = arith.addf %403, %400 : vector<5x64xf32>
    %c15 = arith.constant 15 : index
    %c0_58 = arith.constant 0 : index
    %405 = vector.load %arg26[%c15, %c0_58] : memref<20x64xf32, #tpu.memory_space<vmem>>, vector<5x64xf32>
    tpu.vector_store %arg26[%c15, %c0_58], %404 {strides = array<i32>} : memref<20x64xf32, #tpu.memory_space<vmem>>, vector<5x64xf32>,
    %c15_59 = arith.constant 15 : index
    %c0_60 = arith.constant 0 : index
    %406 = vector.load %arg27[%c15_59, %c0_60] : memref<20x1xf32, #tpu.memory_space<vmem>>, vector<5x1xf32>
    tpu.vector_store %arg27[%c15_59, %c0_60], %387 {strides = array<i32>} : memref<20x1xf32, #tpu.memory_space<vmem>>, vector<5x1xf32>,
    %c0_61 = arith.constant 0 : index
    %c0_62 = arith.constant 0 : index
    %407 = vector.load %arg24[%c0_61, %c0_62] : memref<48x64xf32, #tpu.memory_space<vmem>>, vector<48x64xf32>
    %408 = arith.truncf %407 : vector<48x64xf32> to vector<48x64xbf16>
    %c0_63 = arith.constant 0 : index
    %c0_64 = arith.constant 0 : index
    %409 = vector.load %arg11[%c0_63, %c0_64] : memref<64x64xbf16, #tpu.memory_space<vmem>>, vector<64x64xbf16>
    %cst_65 = arith.constant dense<0.000000e+00> : vector<48x64xf32>
    %410 = tpu.matmul %408, %409, %cst_65 {dimension_numbers = #tpu.dot_dimension_numbers<[1], [0], [0], [1], [0, 0, 1, 1], [], []>} : vector<48x64xbf16>, vector<64x64xbf16>, vector<48x64xf32> -> vector<48x64xf32>
    %c0_66 = arith.constant 0 : index
    %c0_67 = arith.constant 0 : index
    %411 = vector.load %arg12[%c0_66, %c0_67] : memref<1x64xf32, #tpu.memory_space<vmem>>, vector<1x64xf32>
    %412 = vector.broadcast %411 : vector<1x64xf32> to vector<48x64xf32>
    %413 = arith.addf %410, %412 : vector<48x64xf32>
    %cst_68 = arith.constant 0.000000e+00 : f32
    %414 = vector.broadcast %cst_68 : f32 to vector<48x64xf32>
    %415 = arith.maximumf %413, %414 : vector<48x64xf32>
    %c0_69 = arith.constant 0 : index
    %c0_70 = arith.constant 0 : index
    %416 = vector.load %arg24[%c0_69, %c0_70] : memref<48x64xf32, #tpu.memory_space<vmem>>, vector<48x64xf32>
    tpu.vector_store %arg24[%c0_69, %c0_70], %415 {strides = array<i32>} : memref<48x64xf32, #tpu.memory_space<vmem>>, vector<48x64xf32>,
    %c0_71 = arith.constant 0 : index
    %c0_72 = arith.constant 0 : index
    %c0_73 = arith.constant 0 : index
    %417 = vector.load %arg1[%c0_71, %c0_72, %c0_73] : memref<4x12x4xf32, #tpu.memory_space<vmem>>, vector<1x12x4xf32>
    %418 = vector.shape_cast %417 : vector<1x12x4xf32> to vector<12x4xf32>
    %419 = vector.extract_strided_slice %418 {offsets = [0, 0], sizes = [12, 1], strides = [1, 1]} : vector<12x4xf32> to vector<12x1xf32>
    %420 = vector.extract_strided_slice %418 {offsets = [0, 1], sizes = [12, 1], strides = [1, 1]} : vector<12x4xf32> to vector<12x1xf32>
    %421 = vector.extract_strided_slice %418 {offsets = [0, 2], sizes = [12, 1], strides = [1, 1]} : vector<12x4xf32> to vector<12x1xf32>
    %422 = vector.extract_strided_slice %418 {offsets = [0, 3], sizes = [12, 1], strides = [1, 1]} : vector<12x4xf32> to vector<12x1xf32>
    %cst_74 = arith.constant 3.14159274 : f32
    %423 = vector.broadcast %cst_74 : f32 to vector<12x1xf32>
    %424 = arith.mulf %422, %423 : vector<12x1xf32>
    %425 = math.sin %424 : vector<12x1xf32>
    %426 = vector.extract_strided_slice %3 {offsets = [0, 0], sizes = [1, 64], strides = [1, 1]} : vector<2x64xf32> to vector<1x64xf32>
    %427 = vector.broadcast %425 : vector<12x1xf32> to vector<12x64xf32>
    %428 = vector.broadcast %426 : vector<1x64xf32> to vector<12x64xf32>
    %429 = arith.mulf %427, %428 : vector<12x64xf32>
    %430 = math.cos %424 : vector<12x1xf32>
    %431 = vector.extract_strided_slice %3 {offsets = [1, 0], sizes = [1, 64], strides = [1, 1]} : vector<2x64xf32> to vector<1x64xf32>
    %432 = vector.broadcast %430 : vector<12x1xf32> to vector<12x64xf32>
    %433 = vector.broadcast %431 : vector<1x64xf32> to vector<12x64xf32>
    %434 = arith.mulf %432, %433 : vector<12x64xf32>
    %435 = arith.addf %429, %434 : vector<12x64xf32>
    %436 = vector.broadcast %4 : vector<1x64xf32> to vector<12x64xf32>
    %437 = arith.addf %435, %436 : vector<12x64xf32>
    %438 = arith.mulf %22, %421 : vector<12x1xf32>
    %cst_75 = arith.constant 1.000000e+00 : f32
    %439 = vector.broadcast %cst_75 : f32 to vector<12x1xf32>
    %440 = arith.subf %439, %22 : vector<12x1xf32>
    %441 = arith.addf %438, %440 : vector<12x1xf32>
    %442 = vector.shape_cast %419 : vector<12x1xf32> to vector<1x12x1xf32>
    %443 = vector.shape_cast %419 : vector<12x1xf32> to vector<12x1x1xf32>
    %444 = vector.broadcast %442 : vector<1x12x1xf32> to vector<12x12x1xf32>
    %445 = vector.broadcast %443 : vector<12x1x1xf32> to vector<12x12x1xf32>
    %446 = arith.subf %444, %445 : vector<12x12x1xf32>
    %447 = vector.shape_cast %420 : vector<12x1xf32> to vector<1x12x1xf32>
    %448 = vector.shape_cast %420 : vector<12x1xf32> to vector<12x1x1xf32>
    %449 = vector.broadcast %447 : vector<1x12x1xf32> to vector<12x12x1xf32>
    %450 = vector.broadcast %448 : vector<12x1x1xf32> to vector<12x12x1xf32>
    %451 = arith.subf %449, %450 : vector<12x12x1xf32>
    %c0_76 = arith.constant 0 : index
    %c0_77 = arith.constant 0 : index
    %452 = vector.load %arg24[%c0_76, %c0_77] : memref<48x64xf32, #tpu.memory_space<vmem>>, vector<12x64xf32>
    %453 = vector.broadcast %22 : vector<12x1xf32> to vector<12x64xf32>
    %454 = arith.mulf %453, %437 : vector<12x64xf32>
    %455 = arith.addf %452, %454 : vector<12x64xf32>
    %456 = vector.broadcast %441 : vector<12x1xf32> to vector<12x64xf32>
    %457 = arith.mulf %455, %456 : vector<12x64xf32>
    %458 = vector.extract_strided_slice %446 {offsets = [3, 0, 0], sizes = [5, 12, 1], strides = [1, 1, 1]} : vector<12x12x1xf32> to vector<5x12x1xf32>
    %459 = vector.extract_strided_slice %451 {offsets = [3, 0, 0], sizes = [5, 12, 1], strides = [1, 1, 1]} : vector<12x12x1xf32> to vector<5x12x1xf32>
    %460 = vector.extract_strided_slice %9 {offsets = [0, 0], sizes = [1, 64], strides = [1, 1]} : vector<2x64xf32> to vector<1x64xf32>
    %461 = vector.shape_cast %460 : vector<1x64xf32> to vector<1x1x64xf32>
    %462 = vector.broadcast %458 : vector<5x12x1xf32> to vector<5x12x64xf32>
    %463 = vector.broadcast %461 : vector<1x1x64xf32> to vector<5x12x64xf32>
    %464 = arith.mulf %462, %463 : vector<5x12x64xf32>
    %465 = vector.extract_strided_slice %9 {offsets = [1, 0], sizes = [1, 64], strides = [1, 1]} : vector<2x64xf32> to vector<1x64xf32>
    %466 = vector.shape_cast %465 : vector<1x64xf32> to vector<1x1x64xf32>
    %467 = vector.broadcast %459 : vector<5x12x1xf32> to vector<5x12x64xf32>
    %468 = vector.broadcast %466 : vector<1x1x64xf32> to vector<5x12x64xf32>
    %469 = arith.mulf %467, %468 : vector<5x12x64xf32>
    %470 = arith.addf %464, %469 : vector<5x12x64xf32>
    %471 = vector.shape_cast %10 : vector<1x64xf32> to vector<1x1x64xf32>
    %472 = vector.broadcast %471 : vector<1x1x64xf32> to vector<5x12x64xf32>
    %473 = arith.addf %470, %472 : vector<5x12x64xf32>
    %cst_78 = arith.constant 0.000000e+00 : f32
    %474 = vector.broadcast %cst_78 : f32 to vector<5x12x64xf32>
    %475 = arith.maximumf %473, %474 : vector<5x12x64xf32>
    %476 = vector.shape_cast %457 : vector<12x64xf32> to vector<1x12x64xf32>
    %477 = vector.broadcast %476 : vector<1x12x64xf32> to vector<5x12x64xf32>
    %478 = arith.mulf %475, %477 : vector<5x12x64xf32>
    %cst_79 = arith.constant dense<0.000000e+00> : vector<5x64xf32>
    %479 = vector.multi_reduction <add>, %478, %cst_79 [1] : vector<5x12x64xf32> to vector<5x64xf32>
    %c0_80 = arith.constant 0 : index
    %c0_81 = arith.constant 0 : index
    %480 = vector.load %arg25[%c0_80, %c0_81] : memref<20x64xf32, #tpu.memory_space<vmem>>, vector<5x64xf32>
    tpu.vector_store %arg25[%c0_80, %c0_81], %479 {strides = array<i32>} : memref<20x64xf32, #tpu.memory_space<vmem>>, vector<5x64xf32>,
    %c1_82 = arith.constant 1 : index
    %c0_83 = arith.constant 0 : index
    %c0_84 = arith.constant 0 : index
    %481 = vector.load %arg1[%c1_82, %c0_83, %c0_84] : memref<4x12x4xf32, #tpu.memory_space<vmem>>, vector<1x12x4xf32>
    %482 = vector.shape_cast %481 : vector<1x12x4xf32> to vector<12x4xf32>
    %483 = vector.extract_strided_slice %482 {offsets = [0, 0], sizes = [12, 1], strides = [1, 1]} : vector<12x4xf32> to vector<12x1xf32>
    %484 = vector.extract_strided_slice %482 {offsets = [0, 1], sizes = [12, 1], strides = [1, 1]} : vector<12x4xf32> to vector<12x1xf32>
    %485 = vector.extract_strided_slice %482 {offsets = [0, 2], sizes = [12, 1], strides = [1, 1]} : vector<12x4xf32> to vector<12x1xf32>
    %486 = vector.extract_strided_slice %482 {offsets = [0, 3], sizes = [12, 1], strides = [1, 1]} : vector<12x4xf32> to vector<12x1xf32>
    %cst_85 = arith.constant 3.14159274 : f32
    %487 = vector.broadcast %cst_85 : f32 to vector<12x1xf32>
    %488 = arith.mulf %486, %487 : vector<12x1xf32>
    %489 = math.sin %488 : vector<12x1xf32>
    %490 = vector.extract_strided_slice %3 {offsets = [0, 0], sizes = [1, 64], strides = [1, 1]} : vector<2x64xf32> to vector<1x64xf32>
    %491 = vector.broadcast %489 : vector<12x1xf32> to vector<12x64xf32>
    %492 = vector.broadcast %490 : vector<1x64xf32> to vector<12x64xf32>
    %493 = arith.mulf %491, %492 : vector<12x64xf32>
    %494 = math.cos %488 : vector<12x1xf32>
    %495 = vector.extract_strided_slice %3 {offsets = [1, 0], sizes = [1, 64], strides = [1, 1]} : vector<2x64xf32> to vector<1x64xf32>
    %496 = vector.broadcast %494 : vector<12x1xf32> to vector<12x64xf32>
    %497 = vector.broadcast %495 : vector<1x64xf32> to vector<12x64xf32>
    %498 = arith.mulf %496, %497 : vector<12x64xf32>
    %499 = arith.addf %493, %498 : vector<12x64xf32>
    %500 = vector.broadcast %4 : vector<1x64xf32> to vector<12x64xf32>
    %501 = arith.addf %499, %500 : vector<12x64xf32>
    %502 = arith.mulf %22, %485 : vector<12x1xf32>
    %cst_86 = arith.constant 1.000000e+00 : f32
    %503 = vector.broadcast %cst_86 : f32 to vector<12x1xf32>
    %504 = arith.subf %503, %22 : vector<12x1xf32>
    %505 = arith.addf %502, %504 : vector<12x1xf32>
    %506 = vector.shape_cast %483 : vector<12x1xf32> to vector<1x12x1xf32>
    %507 = vector.shape_cast %483 : vector<12x1xf32> to vector<12x1x1xf32>
    %508 = vector.broadcast %506 : vector<1x12x1xf32> to vector<12x12x1xf32>
    %509 = vector.broadcast %507 : vector<12x1x1xf32> to vector<12x12x1xf32>
    %510 = arith.subf %508, %509 : vector<12x12x1xf32>
    %511 = vector.shape_cast %484 : vector<12x1xf32> to vector<1x12x1xf32>
    %512 = vector.shape_cast %484 : vector<12x1xf32> to vector<12x1x1xf32>
    %513 = vector.broadcast %511 : vector<1x12x1xf32> to vector<12x12x1xf32>
    %514 = vector.broadcast %512 : vector<12x1x1xf32> to vector<12x12x1xf32>
    %515 = arith.subf %513, %514 : vector<12x12x1xf32>
    %c12_87 = arith.constant 12 : index
    %c0_88 = arith.constant 0 : index
    %516 = vector.load %arg24[%c12_87, %c0_88] : memref<48x64xf32, #tpu.memory_space<vmem>>, vector<12x64xf32>
    %517 = vector.broadcast %22 : vector<12x1xf32> to vector<12x64xf32>
    %518 = arith.mulf %517, %501 : vector<12x64xf32>
    %519 = arith.addf %516, %518 : vector<12x64xf32>
    %520 = vector.broadcast %505 : vector<12x1xf32> to vector<12x64xf32>
    %521 = arith.mulf %519, %520 : vector<12x64xf32>
    %522 = vector.extract_strided_slice %510 {offsets = [3, 0, 0], sizes = [5, 12, 1], strides = [1, 1, 1]} : vector<12x12x1xf32> to vector<5x12x1xf32>
    %523 = vector.extract_strided_slice %515 {offsets = [3, 0, 0], sizes = [5, 12, 1], strides = [1, 1, 1]} : vector<12x12x1xf32> to vector<5x12x1xf32>
    %524 = vector.extract_strided_slice %9 {offsets = [0, 0], sizes = [1, 64], strides = [1, 1]} : vector<2x64xf32> to vector<1x64xf32>
    %525 = vector.shape_cast %524 : vector<1x64xf32> to vector<1x1x64xf32>
    %526 = vector.broadcast %522 : vector<5x12x1xf32> to vector<5x12x64xf32>
    %527 = vector.broadcast %525 : vector<1x1x64xf32> to vector<5x12x64xf32>
    %528 = arith.mulf %526, %527 : vector<5x12x64xf32>
    %529 = vector.extract_strided_slice %9 {offsets = [1, 0], sizes = [1, 64], strides = [1, 1]} : vector<2x64xf32> to vector<1x64xf32>
    %530 = vector.shape_cast %529 : vector<1x64xf32> to vector<1x1x64xf32>
    %531 = vector.broadcast %523 : vector<5x12x1xf32> to vector<5x12x64xf32>
    %532 = vector.broadcast %530 : vector<1x1x64xf32> to vector<5x12x64xf32>
    %533 = arith.mulf %531, %532 : vector<5x12x64xf32>
    %534 = arith.addf %528, %533 : vector<5x12x64xf32>
    %535 = vector.shape_cast %10 : vector<1x64xf32> to vector<1x1x64xf32>
    %536 = vector.broadcast %535 : vector<1x1x64xf32> to vector<5x12x64xf32>
    %537 = arith.addf %534, %536 : vector<5x12x64xf32>
    %cst_89 = arith.constant 0.000000e+00 : f32
    %538 = vector.broadcast %cst_89 : f32 to vector<5x12x64xf32>
    %539 = arith.maximumf %537, %538 : vector<5x12x64xf32>
    %540 = vector.shape_cast %521 : vector<12x64xf32> to vector<1x12x64xf32>
    %541 = vector.broadcast %540 : vector<1x12x64xf32> to vector<5x12x64xf32>
    %542 = arith.mulf %539, %541 : vector<5x12x64xf32>
    %cst_90 = arith.constant dense<0.000000e+00> : vector<5x64xf32>
    %543 = vector.multi_reduction <add>, %542, %cst_90 [1] : vector<5x12x64xf32> to vector<5x64xf32>
    %c5_91 = arith.constant 5 : index
    %c0_92 = arith.constant 0 : index
    %544 = vector.load %arg25[%c5_91, %c0_92] : memref<20x64xf32, #tpu.memory_space<vmem>>, vector<5x64xf32>
    tpu.vector_store %arg25[%c5_91, %c0_92], %543 {strides = array<i32>} : memref<20x64xf32, #tpu.memory_space<vmem>>, vector<5x64xf32>,
    %c2_93 = arith.constant 2 : index
    %c0_94 = arith.constant 0 : index
    %c0_95 = arith.constant 0 : index
    %545 = vector.load %arg1[%c2_93, %c0_94, %c0_95] : memref<4x12x4xf32, #tpu.memory_space<vmem>>, vector<1x12x4xf32>
    %546 = vector.shape_cast %545 : vector<1x12x4xf32> to vector<12x4xf32>
    %547 = vector.extract_strided_slice %546 {offsets = [0, 0], sizes = [12, 1], strides = [1, 1]} : vector<12x4xf32> to vector<12x1xf32>
    %548 = vector.extract_strided_slice %546 {offsets = [0, 1], sizes = [12, 1], strides = [1, 1]} : vector<12x4xf32> to vector<12x1xf32>
    %549 = vector.extract_strided_slice %546 {offsets = [0, 2], sizes = [12, 1], strides = [1, 1]} : vector<12x4xf32> to vector<12x1xf32>
    %550 = vector.extract_strided_slice %546 {offsets = [0, 3], sizes = [12, 1], strides = [1, 1]} : vector<12x4xf32> to vector<12x1xf32>
    %cst_96 = arith.constant 3.14159274 : f32
    %551 = vector.broadcast %cst_96 : f32 to vector<12x1xf32>
    %552 = arith.mulf %550, %551 : vector<12x1xf32>
    %553 = math.sin %552 : vector<12x1xf32>
    %554 = vector.extract_strided_slice %3 {offsets = [0, 0], sizes = [1, 64], strides = [1, 1]} : vector<2x64xf32> to vector<1x64xf32>
    %555 = vector.broadcast %553 : vector<12x1xf32> to vector<12x64xf32>
    %556 = vector.broadcast %554 : vector<1x64xf32> to vector<12x64xf32>
    %557 = arith.mulf %555, %556 : vector<12x64xf32>
    %558 = math.cos %552 : vector<12x1xf32>
    %559 = vector.extract_strided_slice %3 {offsets = [1, 0], sizes = [1, 64], strides = [1, 1]} : vector<2x64xf32> to vector<1x64xf32>
    %560 = vector.broadcast %558 : vector<12x1xf32> to vector<12x64xf32>
    %561 = vector.broadcast %559 : vector<1x64xf32> to vector<12x64xf32>
    %562 = arith.mulf %560, %561 : vector<12x64xf32>
    %563 = arith.addf %557, %562 : vector<12x64xf32>
    %564 = vector.broadcast %4 : vector<1x64xf32> to vector<12x64xf32>
    %565 = arith.addf %563, %564 : vector<12x64xf32>
    %566 = arith.mulf %22, %549 : vector<12x1xf32>
    %cst_97 = arith.constant 1.000000e+00 : f32
    %567 = vector.broadcast %cst_97 : f32 to vector<12x1xf32>
    %568 = arith.subf %567, %22 : vector<12x1xf32>
    %569 = arith.addf %566, %568 : vector<12x1xf32>
    %570 = vector.shape_cast %547 : vector<12x1xf32> to vector<1x12x1xf32>
    %571 = vector.shape_cast %547 : vector<12x1xf32> to vector<12x1x1xf32>
    %572 = vector.broadcast %570 : vector<1x12x1xf32> to vector<12x12x1xf32>
    %573 = vector.broadcast %571 : vector<12x1x1xf32> to vector<12x12x1xf32>
    %574 = arith.subf %572, %573 : vector<12x12x1xf32>
    %575 = vector.shape_cast %548 : vector<12x1xf32> to vector<1x12x1xf32>
    %576 = vector.shape_cast %548 : vector<12x1xf32> to vector<12x1x1xf32>
    %577 = vector.broadcast %575 : vector<1x12x1xf32> to vector<12x12x1xf32>
    %578 = vector.broadcast %576 : vector<12x1x1xf32> to vector<12x12x1xf32>
    %579 = arith.subf %577, %578 : vector<12x12x1xf32>
    %c24_98 = arith.constant 24 : index
    %c0_99 = arith.constant 0 : index
    %580 = vector.load %arg24[%c24_98, %c0_99] : memref<48x64xf32, #tpu.memory_space<vmem>>, vector<12x64xf32>
    %581 = vector.broadcast %22 : vector<12x1xf32> to vector<12x64xf32>
    %582 = arith.mulf %581, %565 : vector<12x64xf32>
    %583 = arith.addf %580, %582 : vector<12x64xf32>
    %584 = vector.broadcast %569 : vector<12x1xf32> to vector<12x64xf32>
    %585 = arith.mulf %583, %584 : vector<12x64xf32>
    %586 = vector.extract_strided_slice %574 {offsets = [3, 0, 0], sizes = [5, 12, 1], strides = [1, 1, 1]} : vector<12x12x1xf32> to vector<5x12x1xf32>
    %587 = vector.extract_strided_slice %579 {offsets = [3, 0, 0], sizes = [5, 12, 1], strides = [1, 1, 1]} : vector<12x12x1xf32> to vector<5x12x1xf32>
    %588 = vector.extract_strided_slice %9 {offsets = [0, 0], sizes = [1, 64], strides = [1, 1]} : vector<2x64xf32> to vector<1x64xf32>
    %589 = vector.shape_cast %588 : vector<1x64xf32> to vector<1x1x64xf32>
    %590 = vector.broadcast %586 : vector<5x12x1xf32> to vector<5x12x64xf32>
    %591 = vector.broadcast %589 : vector<1x1x64xf32> to vector<5x12x64xf32>
    %592 = arith.mulf %590, %591 : vector<5x12x64xf32>
    %593 = vector.extract_strided_slice %9 {offsets = [1, 0], sizes = [1, 64], strides = [1, 1]} : vector<2x64xf32> to vector<1x64xf32>
    %594 = vector.shape_cast %593 : vector<1x64xf32> to vector<1x1x64xf32>
    %595 = vector.broadcast %587 : vector<5x12x1xf32> to vector<5x12x64xf32>
    %596 = vector.broadcast %594 : vector<1x1x64xf32> to vector<5x12x64xf32>
    %597 = arith.mulf %595, %596 : vector<5x12x64xf32>
    %598 = arith.addf %592, %597 : vector<5x12x64xf32>
    %599 = vector.shape_cast %10 : vector<1x64xf32> to vector<1x1x64xf32>
    %600 = vector.broadcast %599 : vector<1x1x64xf32> to vector<5x12x64xf32>
    %601 = arith.addf %598, %600 : vector<5x12x64xf32>
    %cst_100 = arith.constant 0.000000e+00 : f32
    %602 = vector.broadcast %cst_100 : f32 to vector<5x12x64xf32>
    %603 = arith.maximumf %601, %602 : vector<5x12x64xf32>
    %604 = vector.shape_cast %585 : vector<12x64xf32> to vector<1x12x64xf32>
    %605 = vector.broadcast %604 : vector<1x12x64xf32> to vector<5x12x64xf32>
    %606 = arith.mulf %603, %605 : vector<5x12x64xf32>
    %cst_101 = arith.constant dense<0.000000e+00> : vector<5x64xf32>
    %607 = vector.multi_reduction <add>, %606, %cst_101 [1] : vector<5x12x64xf32> to vector<5x64xf32>
    %c10_102 = arith.constant 10 : index
    %c0_103 = arith.constant 0 : index
    %608 = vector.load %arg25[%c10_102, %c0_103] : memref<20x64xf32, #tpu.memory_space<vmem>>, vector<5x64xf32>
    tpu.vector_store %arg25[%c10_102, %c0_103], %607 {strides = array<i32>} : memref<20x64xf32, #tpu.memory_space<vmem>>, vector<5x64xf32>,
    %c3_104 = arith.constant 3 : index
    %c0_105 = arith.constant 0 : index
    %c0_106 = arith.constant 0 : index
    %609 = vector.load %arg1[%c3_104, %c0_105, %c0_106] : memref<4x12x4xf32, #tpu.memory_space<vmem>>, vector<1x12x4xf32>
    %610 = vector.shape_cast %609 : vector<1x12x4xf32> to vector<12x4xf32>
    %611 = vector.extract_strided_slice %610 {offsets = [0, 0], sizes = [12, 1], strides = [1, 1]} : vector<12x4xf32> to vector<12x1xf32>
    %612 = vector.extract_strided_slice %610 {offsets = [0, 1], sizes = [12, 1], strides = [1, 1]} : vector<12x4xf32> to vector<12x1xf32>
    %613 = vector.extract_strided_slice %610 {offsets = [0, 2], sizes = [12, 1], strides = [1, 1]} : vector<12x4xf32> to vector<12x1xf32>
    %614 = vector.extract_strided_slice %610 {offsets = [0, 3], sizes = [12, 1], strides = [1, 1]} : vector<12x4xf32> to vector<12x1xf32>
    %cst_107 = arith.constant 3.14159274 : f32
    %615 = vector.broadcast %cst_107 : f32 to vector<12x1xf32>
    %616 = arith.mulf %614, %615 : vector<12x1xf32>
    %617 = math.sin %616 : vector<12x1xf32>
    %618 = vector.extract_strided_slice %3 {offsets = [0, 0], sizes = [1, 64], strides = [1, 1]} : vector<2x64xf32> to vector<1x64xf32>
    %619 = vector.broadcast %617 : vector<12x1xf32> to vector<12x64xf32>
    %620 = vector.broadcast %618 : vector<1x64xf32> to vector<12x64xf32>
    %621 = arith.mulf %619, %620 : vector<12x64xf32>
    %622 = math.cos %616 : vector<12x1xf32>
    %623 = vector.extract_strided_slice %3 {offsets = [1, 0], sizes = [1, 64], strides = [1, 1]} : vector<2x64xf32> to vector<1x64xf32>
    %624 = vector.broadcast %622 : vector<12x1xf32> to vector<12x64xf32>
    %625 = vector.broadcast %623 : vector<1x64xf32> to vector<12x64xf32>
    %626 = arith.mulf %624, %625 : vector<12x64xf32>
    %627 = arith.addf %621, %626 : vector<12x64xf32>
    %628 = vector.broadcast %4 : vector<1x64xf32> to vector<12x64xf32>
    %629 = arith.addf %627, %628 : vector<12x64xf32>
    %630 = arith.mulf %22, %613 : vector<12x1xf32>
    %cst_108 = arith.constant 1.000000e+00 : f32
    %631 = vector.broadcast %cst_108 : f32 to vector<12x1xf32>
    %632 = arith.subf %631, %22 : vector<12x1xf32>
    %633 = arith.addf %630, %632 : vector<12x1xf32>
    %634 = vector.shape_cast %611 : vector<12x1xf32> to vector<1x12x1xf32>
    %635 = vector.shape_cast %611 : vector<12x1xf32> to vector<12x1x1xf32>
    %636 = vector.broadcast %634 : vector<1x12x1xf32> to vector<12x12x1xf32>
    %637 = vector.broadcast %635 : vector<12x1x1xf32> to vector<12x12x1xf32>
    %638 = arith.subf %636, %637 : vector<12x12x1xf32>
    %639 = vector.shape_cast %612 : vector<12x1xf32> to vector<1x12x1xf32>
    %640 = vector.shape_cast %612 : vector<12x1xf32> to vector<12x1x1xf32>
    %641 = vector.broadcast %639 : vector<1x12x1xf32> to vector<12x12x1xf32>
    %642 = vector.broadcast %640 : vector<12x1x1xf32> to vector<12x12x1xf32>
    %643 = arith.subf %641, %642 : vector<12x12x1xf32>
    %c36_109 = arith.constant 36 : index
    %c0_110 = arith.constant 0 : index
    %644 = vector.load %arg24[%c36_109, %c0_110] : memref<48x64xf32, #tpu.memory_space<vmem>>, vector<12x64xf32>
    %645 = vector.broadcast %22 : vector<12x1xf32> to vector<12x64xf32>
    %646 = arith.mulf %645, %629 : vector<12x64xf32>
    %647 = arith.addf %644, %646 : vector<12x64xf32>
    %648 = vector.broadcast %633 : vector<12x1xf32> to vector<12x64xf32>
    %649 = arith.mulf %647, %648 : vector<12x64xf32>
    %650 = vector.extract_strided_slice %638 {offsets = [3, 0, 0], sizes = [5, 12, 1], strides = [1, 1, 1]} : vector<12x12x1xf32> to vector<5x12x1xf32>
    %651 = vector.extract_strided_slice %643 {offsets = [3, 0, 0], sizes = [5, 12, 1], strides = [1, 1, 1]} : vector<12x12x1xf32> to vector<5x12x1xf32>
    %652 = vector.extract_strided_slice %9 {offsets = [0, 0], sizes = [1, 64], strides = [1, 1]} : vector<2x64xf32> to vector<1x64xf32>
    %653 = vector.shape_cast %652 : vector<1x64xf32> to vector<1x1x64xf32>
    %654 = vector.broadcast %650 : vector<5x12x1xf32> to vector<5x12x64xf32>
    %655 = vector.broadcast %653 : vector<1x1x64xf32> to vector<5x12x64xf32>
    %656 = arith.mulf %654, %655 : vector<5x12x64xf32>
    %657 = vector.extract_strided_slice %9 {offsets = [1, 0], sizes = [1, 64], strides = [1, 1]} : vector<2x64xf32> to vector<1x64xf32>
    %658 = vector.shape_cast %657 : vector<1x64xf32> to vector<1x1x64xf32>
    %659 = vector.broadcast %651 : vector<5x12x1xf32> to vector<5x12x64xf32>
    %660 = vector.broadcast %658 : vector<1x1x64xf32> to vector<5x12x64xf32>
    %661 = arith.mulf %659, %660 : vector<5x12x64xf32>
    %662 = arith.addf %656, %661 : vector<5x12x64xf32>
    %663 = vector.shape_cast %10 : vector<1x64xf32> to vector<1x1x64xf32>
    %664 = vector.broadcast %663 : vector<1x1x64xf32> to vector<5x12x64xf32>
    %665 = arith.addf %662, %664 : vector<5x12x64xf32>
    %cst_111 = arith.constant 0.000000e+00 : f32
    %666 = vector.broadcast %cst_111 : f32 to vector<5x12x64xf32>
    %667 = arith.maximumf %665, %666 : vector<5x12x64xf32>
    %668 = vector.shape_cast %649 : vector<12x64xf32> to vector<1x12x64xf32>
    %669 = vector.broadcast %668 : vector<1x12x64xf32> to vector<5x12x64xf32>
    %670 = arith.mulf %667, %669 : vector<5x12x64xf32>
    %cst_112 = arith.constant dense<0.000000e+00> : vector<5x64xf32>
    %671 = vector.multi_reduction <add>, %670, %cst_112 [1] : vector<5x12x64xf32> to vector<5x64xf32>
    %c15_113 = arith.constant 15 : index
    %c0_114 = arith.constant 0 : index
    %672 = vector.load %arg25[%c15_113, %c0_114] : memref<20x64xf32, #tpu.memory_space<vmem>>, vector<5x64xf32>
    tpu.vector_store %arg25[%c15_113, %c0_114], %671 {strides = array<i32>} : memref<20x64xf32, #tpu.memory_space<vmem>>, vector<5x64xf32>,
    %c0_115 = arith.constant 0 : index
    %c0_116 = arith.constant 0 : index
    %673 = vector.load %arg25[%c0_115, %c0_116] : memref<20x64xf32, #tpu.memory_space<vmem>>, vector<20x64xf32>
    %674 = arith.truncf %673 : vector<20x64xf32> to vector<20x64xbf16>
    %c0_117 = arith.constant 0 : index
    %c0_118 = arith.constant 0 : index
    %675 = vector.load %arg15[%c0_117, %c0_118] : memref<64x64xbf16, #tpu.memory_space<vmem>>, vector<64x64xbf16>
    %cst_119 = arith.constant dense<0.000000e+00> : vector<20x64xf32>
    %676 = tpu.matmul %674, %675, %cst_119 {dimension_numbers = #tpu.dot_dimension_numbers<[1], [0], [0], [1], [0, 0, 1, 1], [], []>} : vector<20x64xbf16>, vector<64x64xbf16>, vector<20x64xf32> -> vector<20x64xf32>
    %c0_120 = arith.constant 0 : index
    %c0_121 = arith.constant 0 : index
    %677 = vector.load %arg16[%c0_120, %c0_121] : memref<1x64xf32, #tpu.memory_space<vmem>>, vector<1x64xf32>
    %678 = vector.broadcast %677 : vector<1x64xf32> to vector<20x64xf32>
    %679 = arith.addf %676, %678 : vector<20x64xf32>
    %cst_122 = arith.constant 0.000000e+00 : f32
    %680 = vector.broadcast %cst_122 : f32 to vector<20x64xf32>
    %681 = arith.maximumf %679, %680 : vector<20x64xf32>
    %c0_123 = arith.constant 0 : index
    %c0_124 = arith.constant 0 : index
    %682 = vector.load %arg27[%c0_123, %c0_124] : memref<20x1xf32, #tpu.memory_space<vmem>>, vector<20x1xf32>
    %683 = vector.broadcast %682 : vector<20x1xf32> to vector<20x64xf32>
    %684 = arith.mulf %681, %683 : vector<20x64xf32>
    %c0_125 = arith.constant 0 : index
    %c0_126 = arith.constant 0 : index
    %685 = vector.load %arg26[%c0_125, %c0_126] : memref<20x64xf32, #tpu.memory_space<vmem>>, vector<20x64xf32>
    %686 = arith.addf %684, %685 : vector<20x64xf32>
    %687 = arith.truncf %686 : vector<20x64xf32> to vector<20x64xbf16>
    %c0_127 = arith.constant 0 : index
    %c0_128 = arith.constant 0 : index
    %688 = vector.load %arg17[%c0_127, %c0_128] : memref<64x512xbf16, #tpu.memory_space<vmem>>, vector<64x512xbf16>
    %cst_129 = arith.constant dense<0.000000e+00> : vector<20x512xf32>
    %689 = tpu.matmul %687, %688, %cst_129 {dimension_numbers = #tpu.dot_dimension_numbers<[1], [0], [0], [1], [0, 0, 1, 1], [], []>} : vector<20x64xbf16>, vector<64x512xbf16>, vector<20x512xf32> -> vector<20x512xf32>
    %c0_130 = arith.constant 0 : index
    %c0_131 = arith.constant 0 : index
    %690 = vector.load %arg18[%c0_130, %c0_131] : memref<1x512xf32, #tpu.memory_space<vmem>>, vector<1x512xf32>
    %691 = vector.broadcast %690 : vector<1x512xf32> to vector<20x512xf32>
    %692 = arith.addf %689, %691 : vector<20x512xf32>
    %cst_132 = arith.constant 0.000000e+00 : f32
    %693 = vector.broadcast %cst_132 : f32 to vector<20x512xf32>
    %694 = arith.maximumf %692, %693 : vector<20x512xf32>
    %695 = arith.truncf %694 : vector<20x512xf32> to vector<20x512xbf16>
    %c0_133 = arith.constant 0 : index
    %c0_134 = arith.constant 0 : index
    %696 = vector.load %arg19[%c0_133, %c0_134] : memref<512x512xbf16, #tpu.memory_space<vmem>>, vector<512x512xbf16>
    %cst_135 = arith.constant dense<0.000000e+00> : vector<20x512xf32>
    %697 = tpu.matmul %695, %696, %cst_135 {dimension_numbers = #tpu.dot_dimension_numbers<[1], [0], [0], [1], [0, 0, 1, 1], [], []>} : vector<20x512xbf16>, vector<512x512xbf16>, vector<20x512xf32> -> vector<20x512xf32>
    %c0_136 = arith.constant 0 : index
    %c0_137 = arith.constant 0 : index
    %698 = vector.load %arg20[%c0_136, %c0_137] : memref<1x512xf32, #tpu.memory_space<vmem>>, vector<1x512xf32>
    %699 = vector.broadcast %698 : vector<1x512xf32> to vector<20x512xf32>
    %700 = arith.addf %697, %699 : vector<20x512xf32>
    %cst_138 = arith.constant 0.000000e+00 : f32
    %701 = vector.broadcast %cst_138 : f32 to vector<20x512xf32>
    %702 = arith.maximumf %700, %701 : vector<20x512xf32>
    %c0_139 = arith.constant 0 : index
    %c0_140 = arith.constant 0 : index
    %703 = vector.load %arg21[%c0_139, %c0_140] : memref<1x512xf32, #tpu.memory_space<vmem>>, vector<1x512xf32>
    %704 = vector.broadcast %703 : vector<1x512xf32> to vector<20x512xf32>
    %705 = arith.mulf %702, %704 : vector<20x512xf32>
    %cst_141 = arith.constant dense<0.000000e+00> : vector<20xf32>
    %706 = vector.multi_reduction <add>, %705, %cst_141 [1] : vector<20x512xf32> to vector<20xf32>
    %c0_142 = arith.constant 0 : index
    %c0_143 = arith.constant 0 : index
    %707 = vector.load %arg22[%c0_142, %c0_143] : memref<1x1xf32, #tpu.memory_space<vmem>>, vector<1x1xf32>
    %708 = vector.shape_cast %706 : vector<20xf32> to vector<1x20xf32>
    %709 = vector.broadcast %707 : vector<1x1xf32> to vector<1x20xf32>
    %710 = arith.addf %708, %709 : vector<1x20xf32>
    %711 = vector.shape_cast %710 : vector<1x20xf32> to vector<1x1x20xf32>
    %c0_144 = arith.constant 0 : index
    %c0_145 = arith.constant 0 : index
    %c0_146 = arith.constant 0 : index
    %712 = vector.load %arg23[%c0_144, %c0_145, %c0_146] : memref<1x1x20xf32, #tpu.memory_space<vmem>>, vector<1x1x20xf32>
    tpu.vector_store %arg23[%c0_144, %c0_145, %c0_146], %711 {strides = array<i32>} : memref<1x1x20xf32, #tpu.memory_space<vmem>>, vector<1x1x20xf32>,
    return
  }
  func.func @transform_0(%arg0: i32) -> (i32, i32, i32) {
    %c0_i32 = arith.constant 0 : i32
    %c0_i32_0 = arith.constant 0 : i32
    %c0_i32_1 = arith.constant 0 : i32
    return %arg0, %c0_i32, %c0_i32_0 : i32, i32, i32
  }
  func.func @transform_1(%arg0: i32) -> (i32, i32) {
    %c0_i32 = arith.constant 0 : i32
    %c0_i32_0 = arith.constant 0 : i32
    %c0_i32_1 = arith.constant 0 : i32
    return %c0_i32, %c0_i32_0 : i32, i32
  }
  func.func @transform_2(%arg0: i32) -> (i32, i32) {
    %c0_i32 = arith.constant 0 : i32
    %c0_i32_0 = arith.constant 0 : i32
    %c0_i32_1 = arith.constant 0 : i32
    return %c0_i32, %c0_i32_0 : i32, i32
  }
  func.func @transform_3(%arg0: i32) -> (i32, i32) {
    %c0_i32 = arith.constant 0 : i32
    %c0_i32_0 = arith.constant 0 : i32
    %c0_i32_1 = arith.constant 0 : i32
    return %c0_i32, %c0_i32_0 : i32, i32
  }
  func.func @transform_4(%arg0: i32) -> (i32, i32) {
    %c0_i32 = arith.constant 0 : i32
    %c0_i32_0 = arith.constant 0 : i32
    %c0_i32_1 = arith.constant 0 : i32
    return %c0_i32, %c0_i32_0 : i32, i32
  }
  func.func @transform_5(%arg0: i32) -> (i32, i32) {
    %c0_i32 = arith.constant 0 : i32
    %c0_i32_0 = arith.constant 0 : i32
    %c0_i32_1 = arith.constant 0 : i32
    return %c0_i32, %c0_i32_0 : i32, i32
  }
  func.func @transform_6(%arg0: i32) -> (i32, i32) {
    %c0_i32 = arith.constant 0 : i32
    %c0_i32_0 = arith.constant 0 : i32
    %c0_i32_1 = arith.constant 0 : i32
    return %c0_i32, %c0_i32_0 : i32, i32
  }
  func.func @transform_7(%arg0: i32) -> (i32, i32) {
    %c0_i32 = arith.constant 0 : i32
    %c0_i32_0 = arith.constant 0 : i32
    %c0_i32_1 = arith.constant 0 : i32
    return %c0_i32, %c0_i32_0 : i32, i32
  }
  func.func @transform_8(%arg0: i32) -> (i32, i32) {
    %c0_i32 = arith.constant 0 : i32
    %c0_i32_0 = arith.constant 0 : i32
    %c0_i32_1 = arith.constant 0 : i32
    return %c0_i32, %c0_i32_0 : i32, i32
  }
  func.func @transform_9(%arg0: i32) -> (i32, i32) {
    %c0_i32 = arith.constant 0 : i32
    %c0_i32_0 = arith.constant 0 : i32
    %c0_i32_1 = arith.constant 0 : i32
    return %c0_i32, %c0_i32_0 : i32, i32
  }
  func.func @transform_10(%arg0: i32) -> (i32, i32) {
    %c0_i32 = arith.constant 0 : i32
    %c0_i32_0 = arith.constant 0 : i32
    %c0_i32_1 = arith.constant 0 : i32
    return %c0_i32, %c0_i32_0 : i32, i32
  }
  func.func @transform_11(%arg0: i32) -> (i32, i32) {
    %c0_i32 = arith.constant 0 : i32
    %c0_i32_0 = arith.constant 0 : i32
    %c0_i32_1 = arith.constant 0 : i32
    return %c0_i32, %c0_i32_0 : i32, i32
  }
  func.func @transform_12(%arg0: i32) -> (i32, i32) {
    %c0_i32 = arith.constant 0 : i32
    %c0_i32_0 = arith.constant 0 : i32
    %c0_i32_1 = arith.constant 0 : i32
    return %c0_i32, %c0_i32_0 : i32, i32
  }
  func.func @transform_13(%arg0: i32) -> (i32, i32) {
    %c0_i32 = arith.constant 0 : i32
    %c0_i32_0 = arith.constant 0 : i32
    %c0_i32_1 = arith.constant 0 : i32
    return %c0_i32, %c0_i32_0 : i32, i32
  }
  func.func @transform_14(%arg0: i32) -> (i32, i32) {
    %c0_i32 = arith.constant 0 : i32
    %c0_i32_0 = arith.constant 0 : i32
    %c0_i32_1 = arith.constant 0 : i32
    return %c0_i32, %c0_i32_0 : i32, i32
  }
  func.func @transform_15(%arg0: i32) -> (i32, i32) {
    %c0_i32 = arith.constant 0 : i32
    %c0_i32_0 = arith.constant 0 : i32
    %c0_i32_1 = arith.constant 0 : i32
    return %c0_i32, %c0_i32_0 : i32, i32
  }
  func.func @transform_16(%arg0: i32) -> (i32, i32) {
    %c0_i32 = arith.constant 0 : i32
    %c0_i32_0 = arith.constant 0 : i32
    %c0_i32_1 = arith.constant 0 : i32
    return %c0_i32, %c0_i32_0 : i32, i32
  }
  func.func @transform_17(%arg0: i32) -> (i32, i32) {
    %c0_i32 = arith.constant 0 : i32
    %c0_i32_0 = arith.constant 0 : i32
    %c0_i32_1 = arith.constant 0 : i32
    return %c0_i32, %c0_i32_0 : i32, i32
  }
  func.func @transform_18(%arg0: i32) -> (i32, i32) {
    %c0_i32 = arith.constant 0 : i32
    %c0_i32_0 = arith.constant 0 : i32
    %c0_i32_1 = arith.constant 0 : i32
    return %c0_i32, %c0_i32_0 : i32, i32
  }
  func.func @transform_19(%arg0: i32) -> (i32, i32) {
    %c0_i32 = arith.constant 0 : i32
    %c0_i32_0 = arith.constant 0 : i32
    %c0_i32_1 = arith.constant 0 : i32
    return %c0_i32, %c0_i32_0 : i32, i32
  }
  func.func @transform_20(%arg0: i32) -> (i32, i32) {
    %c0_i32 = arith.constant 0 : i32
    %c0_i32_0 = arith.constant 0 : i32
    %c0_i32_1 = arith.constant 0 : i32
    return %c0_i32, %c0_i32_0 : i32, i32
  }
  func.func @transform_21(%arg0: i32) -> (i32, i32) {
    %c0_i32 = arith.constant 0 : i32
    %c0_i32_0 = arith.constant 0 : i32
    %c0_i32_1 = arith.constant 0 : i32
    return %c0_i32, %c0_i32_0 : i32, i32
  }
  func.func @transform_22(%arg0: i32) -> (i32, i32, i32) {
    %c0_i32 = arith.constant 0 : i32
    %c0_i32_0 = arith.constant 0 : i32
    %c0_i32_1 = arith.constant 0 : i32
    return %arg0, %c0_i32, %c0_i32_0 : i32, i32, i32
  }
}

</mosaic_0001>

<llo_original>
// kernel: prey_critic_forward.1
$region0: #{prey_critic_forward.1}
  #allocation0 [shape = 'u32[]', space=smem, size = 0x4, offset = 0x4, fixed_abs, tag = 'smem constant byte address 0x4 - core index']
  #allocation1 [shape = 'u32[144,128]{1,0:T(1,128)}', space=vmem, size = 0x12000, scoped, tag = 'internal scratch']
  #allocation2 [shape = 'f32[48,64]{1,0:T(8,128)}', space=vmem, size = 0x6000, scoped, tag = 'scratch operand']
  #allocation3 [shape = 'f32[20,64]{1,0:T(8,128)}', space=vmem, size = 0x3000, scoped, tag = 'scratch operand']
  #allocation4 [shape = 'f32[20,64]{1,0:T(8,128)}', space=vmem, size = 0x3000, scoped, tag = 'scratch operand']
  #allocation5 [shape = 'f32[20,1]{1,0:T(8,128)}', space=vmem, size = 0x3000, scoped, tag = 'scratch operand']
  #allocation6 [shape = 'f32[1,1]{1,0:T(1,128)S(1)}', space=vmem, size = 0x200, scoped, tag = 'scoped memory for prey_critic_forward.1']
  %s0 = inlined_call_operand.vmem [shape: f32[8,12,4], index: 0, kind: input, shape index: {}]
  %s1 = inlined_call_operand.vmem [shape: f32[3,64], index: 1, kind: input, shape index: {}]
  %s2 = inlined_call_operand.vmem [shape: f32[1,64], index: 2, kind: input, shape index: {}]
  %s3 = inlined_call_operand.vmem [shape: f32[1,64], index: 3, kind: input, shape index: {}]
  %s4 = inlined_call_operand.vmem [shape: f32[2,64], index: 4, kind: input, shape index: {}]
  %s5 = inlined_call_operand.vmem [shape: f32[1,64], index: 5, kind: input, shape index: {}]
  %s6 = inlined_call_operand.vmem [shape: f32[2,64], index: 6, kind: input, shape index: {}]
  %s7 = inlined_call_operand.vmem [shape: f32[1,64], index: 7, kind: input, shape index: {}]
  %s8 = inlined_call_operand.vmem [shape: f32[2,64], index: 8, kind: input, shape index: {}]
  %s9 = inlined_call_operand.vmem [shape: f32[1,64], index: 9, kind: input, shape index: {}]
  %s10 = inlined_call_operand.vmem [shape: bf16[64,64], index: 10, kind: input, shape index: {}]
  %s11 = inlined_call_operand.vmem [shape: f32[1,64], index: 11, kind: input, shape index: {}]
  %s12 = inlined_call_operand.vmem [shape: f32[2,64], index: 12, kind: input, shape index: {}]
  %s13 = inlined_call_operand.vmem [shape: f32[1,64], index: 13, kind: input, shape index: {}]
  %s14 = inlined_call_operand.vmem [shape: bf16[64,64], index: 14, kind: input, shape index: {}]
  %s15 = inlined_call_operand.vmem [shape: f32[1,64], index: 15, kind: input, shape index: {}]
  %s16 = inlined_call_operand.vmem [shape: bf16[64,512], index: 16, kind: input, shape index: {}]
  %s17 = inlined_call_operand.vmem [shape: f32[1,512], index: 17, kind: input, shape index: {}]
  %s18 = inlined_call_operand.hbm [shape: bf16[512,512], index: 18, kind: input, shape index: {}]
  %s19 = inlined_call_operand.vmem [shape: f32[1,512], index: 19, kind: input, shape index: {}]
  %s20 = inlined_call_operand.vmem [shape: f32[1,512], index: 20, kind: input, shape index: {}]
  %s21 = inlined_call_operand.<no memory space> [shape: f32[1,1], index: 21, kind: input, shape index: {}]
  %s22 = inlined_call_operand.vmem [shape: f32[2,1,20], index: 22, kind: output, shape index: {}]
  %s23 = sld [smem:[#allocation0]]
  $region125: #{prey_critic_forward.1} parent=0
    _
  %s25 = ssub.s32 1, %s23
  %s26 = scalar_select 0, %s25, %s23
  %v27 = vstv %s21
  %28 = vst [vmem:[#allocation6] sm:$0x1] %v27
  $region1: #{prey_critic_forward.1} parent=0
    #allocation7 [shape = 'u8[524288]{0}', space=vmem, size = 0x80000, scoped, tag = 'input window, operand 18, single buffered']
    #allocation8 [shape = 's32[2]{0}', space=sflag, size = 0x8, scoped, tag = 'scoped memory for prey_critic_forward.1']
    %29 = vsyncpa [#allocation8], 0
    loop: start=0, step=1, limit=4
    $region2: #{prey_critic_forward.1} parent=1 // loop_pre_header
      _
    $region3: #{prey_critic_forward.1} parent=1 // loop_header
      %s31 = sphi 0, %s35
      %p32 = scmp.ge.s32.totalorder %s31, 4
      %s41 = sphi 0, %s43
      %s44 = sphi 0, %s41
      %s45 = sphi 0, %s44
      %s61 = sphi 0, %s45
      %s65 = sphi 0, %s65
      %s67 = sphi 0, %s65
      %s68 = sphi 0, %s67
      %s82 = sphi 0, %s68
      %s86 = sphi 0, %s86
      %s88 = sphi 0, %s86
      %s89 = sphi 0, %s88
      %s103 = sphi 0, %s89
      %s107 = sphi 0, %s107
      %s109 = sphi 0, %s107
      %s110 = sphi 0, %s109
      %s124 = sphi 0, %s110
      %s128 = sphi 0, %s128
      %s130 = sphi 0, %s128
      %s131 = sphi 0, %s130
      %s145 = sphi 0, %s131
      %s149 = sphi 0, %s149
      %s151 = sphi 0, %s149
      %s152 = sphi 0, %s151
      %s166 = sphi 0, %s152
      %s170 = sphi 0, %s170
      %s172 = sphi 0, %s170
      %s173 = sphi 0, %s172
      %s187 = sphi 0, %s173
      %s191 = sphi 0, %s191
      %s193 = sphi 0, %s191
      %s194 = sphi 0, %s193
      %s208 = sphi 0, %s194
      %s212 = sphi 0, %s212
      %s214 = sphi 0, %s212
      %s215 = sphi 0, %s214
      %s229 = sphi 0, %s215
      %s233 = sphi 0, %s233
      %s235 = sphi 0, %s233
      %s236 = sphi 0, %s235
      %s250 = sphi 0, %s236
      %s254 = sphi 0, %s254
      %s256 = sphi 0, %s254
      %s257 = sphi 0, %s256
      %s271 = sphi 0, %s257
      %s275 = sphi 0, %s275
      %s277 = sphi 0, %s275
      %s278 = sphi 0, %s277
      %s292 = sphi 0, %s278
      %s296 = sphi 0, %s296
      %s298 = sphi 0, %s296
      %s299 = sphi 0, %s298
      %s313 = sphi 0, %s299
      %s317 = sphi 0, %s317
      %s319 = sphi 0, %s317
      %s320 = sphi 0, %s319
      %s334 = sphi 0, %s320
      %s338 = sphi 0, %s338
      %s340 = sphi 0, %s338
      %s341 = sphi 0, %s340
      %s355 = sphi 0, %s341
      %s359 = sphi 0, %s359
      %s361 = sphi 0, %s359
      %s362 = sphi 0, %s361
      %s376 = sphi 0, %s362
      %s380 = sphi 0, %s380
      %s382 = sphi 0, %s380
      %s383 = sphi 0, %s382
      %s397 = sphi 0, %s383
      %s401 = sphi 0, %s401
      %s403 = sphi 0, %s401
      %s404 = sphi 0, %s403
      %s418 = sphi 0, %s404
      %s422 = sphi 0, %s422
      %s424 = sphi 0, %s422
      %s425 = sphi 0, %s424
      %s439 = sphi 0, %s425
      %s443 = sphi 0, %s443
      %s445 = sphi 0, %s443
      %s446 = sphi 0, %s445
      %s460 = sphi 0, %s446
      %s464 = sphi 0, %s464
      %s466 = sphi 0, %s464
      %s467 = sphi 0, %s466
      %s481 = sphi 0, %s467
      %s485 = sphi 0, %s485
      %s487 = sphi 0, %s485
      %s488 = sphi 0, %s487
      %s502 = sphi 0, %s488
      %s508 = sphi 0, %s510
      %s511 = sphi 0, %s508
      %s512 = sphi 0, %s511
      %s528 = sphi 0, %s512
    $region4: #{prey_critic_forward.1} parent=1 // loop_header_branch
      %34 = sbr.rel (%p32) target = $region8
    $region5: #{prey_critic_forward.1} parent=1 // loop_body
      %s36 = ssub.s32 %s31, 1
      %s37 = ssub.s32 %s31, 2
      %s38 = sadd.s32 %s31, 1
      %s39 = ssub.s32 %s31, %s38
      %p40 = scmp.eq.s32.totalorder %s39, 0
      %s42 = sadd.s32 %s41, 1
      %s43 = scalar_select %p40, %s41, %s42
      %p46 = pneg %p40
      %p47 = scmp.eq.s32.totalorder %s31, 1
      %p48 = por %p46, %p47
      %p49 = scmp.ne.s32.totalorder %s41, %s44
      %p50 = scmp.eq.s32.totalorder %s31, 0
      %p51 = por %p49, %p50
      %p52 = scmp.ne.s32.totalorder %s41, %s44
      %p53 = scmp.eq.s32.totalorder %s36, 1
      %p54 = por %p52, %p53
      %p55 = scmp.ne.s32.totalorder %s44, %s45
      %p56 = scmp.eq.s32.totalorder %s36, 0
      %p57 = por %p55, %p56
      %p58 = scmp.ne.s32.totalorder %s44, %s45
      %p59 = scmp.eq.s32.totalorder %s37, 1
      %p60 = por %p58, %p59
      %p62 = scmp.ne.s32.totalorder %s45, %s61
      %p63 = scmp.eq.s32.totalorder %s37, 0
      %p64 = por %p62, %p63
      %s66 = sadd.s32 %s65, 1
      %p69 = scmp.eq.s32.totalorder %s31, 1
      %p70 = scmp.ne.s32.totalorder %s65, %s67
      %p71 = scmp.eq.s32.totalorder %s31, 0
      %p72 = por %p70, %p71
      %p73 = scmp.ne.s32.totalorder %s65, %s67
      %p74 = scmp.eq.s32.totalorder %s36, 1
      %p75 = por %p73, %p74
      %p76 = scmp.ne.s32.totalorder %s67, %s68
      %p77 = scmp.eq.s32.totalorder %s36, 0
      %p78 = por %p76, %p77
      %p79 = scmp.ne.s32.totalorder %s67, %s68
      %p80 = scmp.eq.s32.totalorder %s37, 1
      %p81 = por %p79, %p80
      %p83 = scmp.ne.s32.totalorder %s68, %s82
      %p84 = scmp.eq.s32.totalorder %s37, 0
      %p85 = por %p83, %p84
      %s87 = sadd.s32 %s86, 1
      %p90 = scmp.eq.s32.totalorder %s31, 1
      %p91 = scmp.ne.s32.totalorder %s86, %s88
      %p92 = scmp.eq.s32.totalorder %s31, 0
      %p93 = por %p91, %p92
      %p94 = scmp.ne.s32.totalorder %s86, %s88
      %p95 = scmp.eq.s32.totalorder %s36, 1
      %p96 = por %p94, %p95
      %p97 = scmp.ne.s32.totalorder %s88, %s89
      %p98 = scmp.eq.s32.totalorder %s36, 0
      %p99 = por %p97, %p98
      %p100 = scmp.ne.s32.totalorder %s88, %s89
      %p101 = scmp.eq.s32.totalorder %s37, 1
      %p102 = por %p100, %p101
      %p104 = scmp.ne.s32.totalorder %s89, %s103
      %p105 = scmp.eq.s32.totalorder %s37, 0
      %p106 = por %p104, %p105
      %s108 = sadd.s32 %s107, 1
      %p111 = scmp.eq.s32.totalorder %s31, 1
      %p112 = scmp.ne.s32.totalorder %s107, %s109
      %p113 = scmp.eq.s32.totalorder %s31, 0
      %p114 = por %p112, %p113
      %p115 = scmp.ne.s32.totalorder %s107, %s109
      %p116 = scmp.eq.s32.totalorder %s36, 1
      %p117 = por %p115, %p116
      %p118 = scmp.ne.s32.totalorder %s109, %s110
      %p119 = scmp.eq.s32.totalorder %s36, 0
      %p120 = por %p118, %p119
      %p121 = scmp.ne.s32.totalorder %s109, %s110
      %p122 = scmp.eq.s32.totalorder %s37, 1
      %p123 = por %p121, %p122
      %p125 = scmp.ne.s32.totalorder %s110, %s124
      %p126 = scmp.eq.s32.totalorder %s37, 0
      %p127 = por %p125, %p126
      %s129 = sadd.s32 %s128, 1
      %p132 = scmp.eq.s32.totalorder %s31, 1
      %p133 = scmp.ne.s32.totalorder %s128, %s130
      %p134 = scmp.eq.s32.totalorder %s31, 0
      %p135 = por %p133, %p134
      %p136 = scmp.ne.s32.totalorder %s128, %s130
      %p137 = scmp.eq.s32.totalorder %s36, 1
      %p138 = por %p136, %p137
      %p139 = scmp.ne.s32.totalorder %s130, %s131
      %p140 = scmp.eq.s32.totalorder %s36, 0
      %p141 = por %p139, %p140
      %p142 = scmp.ne.s32.totalorder %s130, %s131
      %p143 = scmp.eq.s32.totalorder %s37, 1
      %p144 = por %p142, %p143
      %p146 = scmp.ne.s32.totalorder %s131, %s145
      %p147 = scmp.eq.s32.totalorder %s37, 0
      %p148 = por %p146, %p147
      %s150 = sadd.s32 %s149, 1
      %p153 = scmp.eq.s32.totalorder %s31, 1
      %p154 = scmp.ne.s32.totalorder %s149, %s151
      %p155 = scmp.eq.s32.totalorder %s31, 0
      %p156 = por %p154, %p155
      %p157 = scmp.ne.s32.totalorder %s149, %s151
      %p158 = scmp.eq.s32.totalorder %s36, 1
      %p159 = por %p157, %p158
      %p160 = scmp.ne.s32.totalorder %s151, %s152
      %p161 = scmp.eq.s32.totalorder %s36, 0
      %p162 = por %p160, %p161
      %p163 = scmp.ne.s32.totalorder %s151, %s152
      %p164 = scmp.eq.s32.totalorder %s37, 1
      %p165 = por %p163, %p164
      %p167 = scmp.ne.s32.totalorder %s152, %s166
      %p168 = scmp.eq.s32.totalorder %s37, 0
      %p169 = por %p167, %p168
      %s171 = sadd.s32 %s170, 1
      %p174 = scmp.eq.s32.totalorder %s31, 1
      %p175 = scmp.ne.s32.totalorder %s170, %s172
      %p176 = scmp.eq.s32.totalorder %s31, 0
      %p177 = por %p175, %p176
      %p178 = scmp.ne.s32.totalorder %s170, %s172
      %p179 = scmp.eq.s32.totalorder %s36, 1
      %p180 = por %p178, %p179
      %p181 = scmp.ne.s32.totalorder %s172, %s173
      %p182 = scmp.eq.s32.totalorder %s36, 0
      %p183 = por %p181, %p182
      %p184 = scmp.ne.s32.totalorder %s172, %s173
      %p185 = scmp.eq.s32.totalorder %s37, 1
      %p186 = por %p184, %p185
      %p188 = scmp.ne.s32.totalorder %s173, %s187
      %p189 = scmp.eq.s32.totalorder %s37, 0
      %p190 = por %p188, %p189
      %s192 = sadd.s32 %s191, 1
      %p195 = scmp.eq.s32.totalorder %s31, 1
      %p196 = scmp.ne.s32.totalorder %s191, %s193
      %p197 = scmp.eq.s32.totalorder %s31, 0
      %p198 = por %p196, %p197
      %p199 = scmp.ne.s32.totalorder %s191, %s193
      %p200 = scmp.eq.s32.totalorder %s36, 1
      %p201 = por %p199, %p200
      %p202 = scmp.ne.s32.totalorder %s193, %s194
      %p203 = scmp.eq.s32.totalorder %s36, 0
      %p204 = por %p202, %p203
      %p205 = scmp.ne.s32.totalorder %s193, %s194
      %p206 = scmp.eq.s32.totalorder %s37, 1
      %p207 = por %p205, %p206
      %p209 = scmp.ne.s32.totalorder %s194, %s208
      %p210 = scmp.eq.s32.totalorder %s37, 0
      %p211 = por %p209, %p210
      %s213 = sadd.s32 %s212, 1
      %p216 = scmp.eq.s32.totalorder %s31, 1
      %p217 = scmp.ne.s32.totalorder %s212, %s214
      %p218 = scmp.eq.s32.totalorder %s31, 0
      %p219 = por %p217, %p218
      %p220 = scmp.ne.s32.totalorder %s212, %s214
      %p221 = scmp.eq.s32.totalorder %s36, 1
      %p222 = por %p220, %p221
      %p223 = scmp.ne.s32.totalorder %s214, %s215
      %p224 = scmp.eq.s32.totalorder %s36, 0
      %p225 = por %p223, %p224
      %p226 = scmp.ne.s32.totalorder %s214, %s215
      %p227 = scmp.eq.s32.totalorder %s37, 1
      %p228 = por %p226, %p227
      %p230 = scmp.ne.s32.totalorder %s215, %s229
      %p231 = scmp.eq.s32.totalorder %s37, 0
      %p232 = por %p230, %p231
      %s234 = sadd.s32 %s233, 1
      %p237 = scmp.eq.s32.totalorder %s31, 1
      %p238 = scmp.ne.s32.totalorder %s233, %s235
      %p239 = scmp.eq.s32.totalorder %s31, 0
      %p240 = por %p238, %p239
      %p241 = scmp.ne.s32.totalorder %s233, %s235
      %p242 = scmp.eq.s32.totalorder %s36, 1
      %p243 = por %p241, %p242
      %p244 = scmp.ne.s32.totalorder %s235, %s236
      %p245 = scmp.eq.s32.totalorder %s36, 0
      %p246 = por %p244, %p245
      %p247 = scmp.ne.s32.totalorder %s235, %s236
      %p248 = scmp.eq.s32.totalorder %s37, 1
      %p249 = por %p247, %p248
      %p251 = scmp.ne.s32.totalorder %s236, %s250
      %p252 = scmp.eq.s32.totalorder %s37, 0
      %p253 = por %p251, %p252
      %s255 = sadd.s32 %s254, 1
      %p258 = scmp.eq.s32.totalorder %s31, 1
      %p259 = scmp.ne.s32.totalorder %s254, %s256
      %p260 = scmp.eq.s32.totalorder %s31, 0
      %p261 = por %p259, %p260
      %p262 = scmp.ne.s32.totalorder %s254, %s256
      %p263 = scmp.eq.s32.totalorder %s36, 1
      %p264 = por %p262, %p263
      %p265 = scmp.ne.s32.totalorder %s256, %s257
      %p266 = scmp.eq.s32.totalorder %s36, 0
      %p267 = por %p265, %p266
      %p268 = scmp.ne.s32.totalorder %s256, %s257
      %p269 = scmp.eq.s32.totalorder %s37, 1
      %p270 = por %p268, %p269
      %p272 = scmp.ne.s32.totalorder %s257, %s271
      %p273 = scmp.eq.s32.totalorder %s37, 0
      %p274 = por %p272, %p273
      %s276 = sadd.s32 %s275, 1
      %p279 = scmp.eq.s32.totalorder %s31, 1
      %p280 = scmp.ne.s32.totalorder %s275, %s277
      %p281 = scmp.eq.s32.totalorder %s31, 0
      %p282 = por %p280, %p281
      %p283 = scmp.ne.s32.totalorder %s275, %s277
      %p284 = scmp.eq.s32.totalorder %s36, 1
      %p285 = por %p283, %p284
      %p286 = scmp.ne.s32.totalorder %s277, %s278
      %p287 = scmp.eq.s32.totalorder %s36, 0
      %p288 = por %p286, %p287
      %p289 = scmp.ne.s32.totalorder %s277, %s278
      %p290 = scmp.eq.s32.totalorder %s37, 1
      %p291 = por %p289, %p290
      %p293 = scmp.ne.s32.totalorder %s278, %s292
      %p294 = scmp.eq.s32.totalorder %s37, 0
      %p295 = por %p293, %p294
      %s297 = sadd.s32 %s296, 1
      %p300 = scmp.eq.s32.totalorder %s31, 1
      %p301 = scmp.ne.s32.totalorder %s296, %s298
      %p302 = scmp.eq.s32.totalorder %s31, 0
      %p303 = por %p301, %p302
      %p304 = scmp.ne.s32.totalorder %s296, %s298
      %p305 = scmp.eq.s32.totalorder %s36, 1
      %p306 = por %p304, %p305
      %p307 = scmp.ne.s32.totalorder %s298, %s299
      %p308 = scmp.eq.s32.totalorder %s36, 0
      %p309 = por %p307, %p308
      %p310 = scmp.ne.s32.totalorder %s298, %s299
      %p311 = scmp.eq.s32.totalorder %s37, 1
      %p312 = por %p310, %p311
      %p314 = scmp.ne.s32.totalorder %s299, %s313
      %p315 = scmp.eq.s32.totalorder %s37, 0
      %p316 = por %p314, %p315
      %s318 = sadd.s32 %s317, 1
      %p321 = scmp.eq.s32.totalorder %s31, 1
      %p322 = scmp.ne.s32.totalorder %s317, %s319
      %p323 = scmp.eq.s32.totalorder %s31, 0
      %p324 = por %p322, %p323
      %p325 = scmp.ne.s32.totalorder %s317, %s319
      %p326 = scmp.eq.s32.totalorder %s36, 1
      %p327 = por %p325, %p326
      %p328 = scmp.ne.s32.totalorder %s319, %s320
      %p329 = scmp.eq.s32.totalorder %s36, 0
      %p330 = por %p328, %p329
      %p331 = scmp.ne.s32.totalorder %s319, %s320
      %p332 = scmp.eq.s32.totalorder %s37, 1
      %p333 = por %p331, %p332
      %p335 = scmp.ne.s32.totalorder %s320, %s334
      %p336 = scmp.eq.s32.totalorder %s37, 0
      %p337 = por %p335, %p336
      %s339 = sadd.s32 %s338, 1
      %p342 = scmp.eq.s32.totalorder %s31, 1
      %p343 = scmp.ne.s32.totalorder %s338, %s340
      %p344 = scmp.eq.s32.totalorder %s31, 0
      %p345 = por %p343, %p344
      %p346 = scmp.ne.s32.totalorder %s338, %s340
      %p347 = scmp.eq.s32.totalorder %s36, 1
      %p348 = por %p346, %p347
      %p349 = scmp.ne.s32.totalorder %s340, %s341
      %p350 = scmp.eq.s32.totalorder %s36, 0
      %p351 = por %p349, %p350
      %p352 = scmp.ne.s32.totalorder %s340, %s341
      %p353 = scmp.eq.s32.totalorder %s37, 1
      %p354 = por %p352, %p353
      %p356 = scmp.ne.s32.totalorder %s341, %s355
      %p357 = scmp.eq.s32.totalorder %s37, 0
      %p358 = por %p356, %p357
      %s360 = sadd.s32 %s359, 1
      %p363 = scmp.eq.s32.totalorder %s31, 1
      %p364 = scmp.ne.s32.totalorder %s359, %s361
      %p365 = scmp.eq.s32.totalorder %s31, 0
      %p366 = por %p364, %p365
      %p367 = scmp.ne.s32.totalorder %s359, %s361
      %p368 = scmp.eq.s32.totalorder %s36, 1
      %p369 = por %p367, %p368
      %p370 = scmp.ne.s32.totalorder %s361, %s362
      %p371 = scmp.eq.s32.totalorder %s36, 0
      %p372 = por %p370, %p371
      %p373 = scmp.ne.s32.totalorder %s361, %s362
      %p374 = scmp.eq.s32.totalorder %s37, 1
      %p375 = por %p373, %p374
      %p377 = scmp.ne.s32.totalorder %s362, %s376
      %p378 = scmp.eq.s32.totalorder %s37, 0
      %p379 = por %p377, %p378
      %s381 = sadd.s32 %s380, 1
      %p384 = scmp.eq.s32.totalorder %s31, 1
      %p385 = scmp.ne.s32.totalorder %s380, %s382
      %p386 = scmp.eq.s32.totalorder %s31, 0
      %p387 = por %p385, %p386
      %p388 = scmp.ne.s32.totalorder %s380, %s382
      %p389 = scmp.eq.s32.totalorder %s36, 1
      %p390 = por %p388, %p389
      %p391 = scmp.ne.s32.totalorder %s382, %s383
      %p392 = scmp.eq.s32.totalorder %s36, 0
      %p393 = por %p391, %p392
      %p394 = scmp.ne.s32.totalorder %s382, %s383
      %p395 = scmp.eq.s32.totalorder %s37, 1
      %p396 = por %p394, %p395
      %p398 = scmp.ne.s32.totalorder %s383, %s397
      %p399 = scmp.eq.s32.totalorder %s37, 0
      %p400 = por %p398, %p399
      %s402 = sadd.s32 %s401, 1
      %p405 = scmp.eq.s32.totalorder %s31, 1
      %p406 = scmp.ne.s32.totalorder %s401, %s403
      %p407 = scmp.eq.s32.totalorder %s31, 0
      %p408 = por %p406, %p407
      %p409 = scmp.ne.s32.totalorder %s401, %s403
      %p410 = scmp.eq.s32.totalorder %s36, 1
      %p411 = por %p409, %p410
      %p412 = scmp.ne.s32.totalorder %s403, %s404
      %p413 = scmp.eq.s32.totalorder %s36, 0
      %p414 = por %p412, %p413
      %p415 = scmp.ne.s32.totalorder %s403, %s404
      %p416 = scmp.eq.s32.totalorder %s37, 1
      %p417 = por %p415, %p416
      %p419 = scmp.ne.s32.totalorder %s404, %s418
      %p420 = scmp.eq.s32.totalorder %s37, 0
      %p421 = por %p419, %p420
      %s423 = sadd.s32 %s422, 1
      %p426 = scmp.eq.s32.totalorder %s31, 1
      %p427 = scmp.ne.s32.totalorder %s422, %s424
      %p428 = scmp.eq.s32.totalorder %s31, 0
      %p429 = por %p427, %p428
      %p430 = scmp.ne.s32.totalorder %s422, %s424
      %p431 = scmp.eq.s32.totalorder %s36, 1
      %p432 = por %p430, %p431
      %p433 = scmp.ne.s32.totalorder %s424, %s425
      %p434 = scmp.eq.s32.totalorder %s36, 0
      %p435 = por %p433, %p434
      %p436 = scmp.ne.s32.totalorder %s424, %s425
      %p437 = scmp.eq.s32.totalorder %s37, 1
      %p438 = por %p436, %p437
      %p440 = scmp.ne.s32.totalorder %s425, %s439
      %p441 = scmp.eq.s32.totalorder %s37, 0
      %p442 = por %p440, %p441
      %s444 = sadd.s32 %s443, 1
      %p447 = scmp.eq.s32.totalorder %s31, 1
      %p448 = scmp.ne.s32.totalorder %s443, %s445
      %p449 = scmp.eq.s32.totalorder %s31, 0
      %p450 = por %p448, %p449
      %p451 = scmp.ne.s32.totalorder %s443, %s445
      %p452 = scmp.eq.s32.totalorder %s36, 1
      %p453 = por %p451, %p452
      %p454 = scmp.ne.s32.totalorder %s445, %s446
      %p455 = scmp.eq.s32.totalorder %s36, 0
      %p456 = por %p454, %p455
      %p457 = scmp.ne.s32.totalorder %s445, %s446
      %p458 = scmp.eq.s32.totalorder %s37, 1
      %p459 = por %p457, %p458
      %p461 = scmp.ne.s32.totalorder %s446, %s460
      %p462 = scmp.eq.s32.totalorder %s37, 0
      %p463 = por %p461, %p462
      %s465 = sadd.s32 %s464, 1
      %p468 = scmp.eq.s32.totalorder %s31, 1
      %p469 = scmp.ne.s32.totalorder %s464, %s466
      %p470 = scmp.eq.s32.totalorder %s31, 0
      %p471 = por %p469, %p470
      %p472 = scmp.ne.s32.totalorder %s464, %s466
      %p473 = scmp.eq.s32.totalorder %s36, 1
      %p474 = por %p472, %p473
      %p475 = scmp.ne.s32.totalorder %s466, %s467
      %p476 = scmp.eq.s32.totalorder %s36, 0
      %p477 = por %p475, %p476
      %p478 = scmp.ne.s32.totalorder %s466, %s467
      %p479 = scmp.eq.s32.totalorder %s37, 1
      %p480 = por %p478, %p479
      %p482 = scmp.ne.s32.totalorder %s467, %s481
      %p483 = scmp.eq.s32.totalorder %s37, 0
      %p484 = por %p482, %p483
      %s486 = sadd.s32 %s485, 1
      %p489 = scmp.eq.s32.totalorder %s31, 1
      %p490 = scmp.ne.s32.totalorder %s485, %s487
      %p491 = scmp.eq.s32.totalorder %s31, 0
      %p492 = por %p490, %p491
      %p493 = scmp.ne.s32.totalorder %s485, %s487
      %p494 = scmp.eq.s32.totalorder %s36, 1
      %p495 = por %p493, %p494
      %p496 = scmp.ne.s32.totalorder %s487, %s488
      %p497 = scmp.eq.s32.totalorder %s36, 0
      %p498 = por %p496, %p497
      %p499 = scmp.ne.s32.totalorder %s487, %s488
      %p500 = scmp.eq.s32.totalorder %s37, 1
      %p501 = por %p499, %p500
      %p503 = scmp.ne.s32.totalorder %s488, %s502
      %p504 = scmp.eq.s32.totalorder %s37, 0
      %p505 = por %p503, %p504
      %s506 = ssub.s32 %s31, %s38
      %p507 = scmp.eq.s32.totalorder %s506, 0
      %s509 = sadd.s32 %s508, 1
      %s510 = scalar_select %p507, %s508, %s509
      %p513 = pneg %p507
      %p514 = scmp.eq.s32.totalorder %s31, 1
      %p515 = por %p513, %p514
      %p516 = scmp.ne.s32.totalorder %s508, %s511
      %p517 = scmp.eq.s32.totalorder %s31, 0
      %p518 = por %p516, %p517
      %p519 = scmp.ne.s32.totalorder %s508, %s511
      %p520 = scmp.eq.s32.totalorder %s36, 1
      %p521 = por %p519, %p520
      %p522 = scmp.ne.s32.totalorder %s511, %s512
      %p523 = scmp.eq.s32.totalorder %s36, 0
      %p524 = por %p522, %p523
      %p525 = scmp.ne.s32.totalorder %s511, %s512
      %p526 = scmp.eq.s32.totalorder %s37, 1
      %p527 = por %p525, %p526
      %p529 = scmp.ne.s32.totalorder %s512, %s528
      %p530 = scmp.eq.s32.totalorder %s37, 0
      %p531 = por %p529, %p530
      %p532 = scmp.le.s32.totalorder 1, %s31
      %p533 = scmp.lt.s32.totalorder %s31, 3
      %p534 = pnand %p532, %p533
      %p535 = pneg %p534
      // Predicated region
      $region9: #{prey_critic_forward.1} parent=5 // pred_check
        _
      $region10: #{prey_critic_forward.1} parent=5 // pred_check_branch
        %537 = sbr.rel (%p534) target = $region12
      $region11: #{prey_critic_forward.1} parent=5 // pred_region
        %s538 = ssub.s32 %s31, 1
        // Predicated region
        $region13: #{prey_critic_forward.1} parent=11 // pred_check
          %p539 = pneg %p78
        $region14: #{prey_critic_forward.1} parent=11 // pred_check_branch
          %541 = sbr.rel (%p539) target = $region16
        $region15: #{prey_critic_forward.1} parent=11 // pred_region
          _
        $region16: #{prey_critic_forward.1} parent=11 // pred_fallthru
          _
        // Predicated region
        $region17: #{prey_critic_forward.1} parent=11 // pred_check
          %p542 = pneg %p99
        $region18: #{prey_critic_forward.1} parent=11 // pred_check_branch
          %544 = sbr.rel (%p542) target = $region20
        $region19: #{prey_critic_forward.1} parent=11 // pred_region
          _
        $region20: #{prey_critic_forward.1} parent=11 // pred_fallthru
          _
        // Predicated region
        $region21: #{prey_critic_forward.1} parent=11 // pred_check
          %p545 = pneg %p120
        $region22: #{prey_critic_forward.1} parent=11 // pred_check_branch
          %547 = sbr.rel (%p545) target = $region24
        $region23: #{prey_critic_forward.1} parent=11 // pred_region
          _
        $region24: #{prey_critic_forward.1} parent=11 // pred_fallthru
          _
        // Predicated region
        $region25: #{prey_critic_forward.1} parent=11 // pred_check
          %p548 = pneg %p141
        $region26: #{prey_critic_forward.1} parent=11 // pred_check_branch
          %550 = sbr.rel (%p548) target = $region28
        $region27: #{prey_critic_forward.1} parent=11 // pred_region
          _
        $region28: #{prey_critic_forward.1} parent=11 // pred_fallthru
          _
        // Predicated region
        $region29: #{prey_critic_forward.1} parent=11 // pred_check
          %p551 = pneg %p162
        $region30: #{prey_critic_forward.1} parent=11 // pred_check_branch
          %553 = sbr.rel (%p551) target = $region32
        $region31: #{prey_critic_forward.1} parent=11 // pred_region
          _
        $region32: #{prey_critic_forward.1} parent=11 // pred_fallthru
          _
        // Predicated region
        $region33: #{prey_critic_forward.1} parent=11 // pred_check
          %p554 = pneg %p183
        $region34: #{prey_critic_forward.1} parent=11 // pred_check_branch
          %556 = sbr.rel (%p554) target = $region36
        $region35: #{prey_critic_forward.1} parent=11 // pred_region
          _
        $region36: #{prey_critic_forward.1} parent=11 // pred_fallthru
          _
        // Predicated region
        $region37: #{prey_critic_forward.1} parent=11 // pred_check
          %p557 = pneg %p204
        $region38: #{prey_critic_forward.1} parent=11 // pred_check_branch
          %559 = sbr.rel (%p557) target = $region40
        $region39: #{prey_critic_forward.1} parent=11 // pred_region
          _
        $region40: #{prey_critic_forward.1} parent=11 // pred_fallthru
          _
        // Predicated region
        $region41: #{prey_critic_forward.1} parent=11 // pred_check
          %p560 = pneg %p225
        $region42: #{prey_critic_forward.1} parent=11 // pred_check_branch
          %562 = sbr.rel (%p560) target = $region44
        $region43: #{prey_critic_forward.1} parent=11 // pred_region
          _
        $region44: #{prey_critic_forward.1} parent=11 // pred_fallthru
          _
        // Predicated region
        $region45: #{prey_critic_forward.1} parent=11 // pred_check
          %p563 = pneg %p246
        $region46: #{prey_critic_forward.1} parent=11 // pred_check_branch
          %565 = sbr.rel (%p563) target = $region48
        $region47: #{prey_critic_forward.1} parent=11 // pred_region
          _
        $region48: #{prey_critic_forward.1} parent=11 // pred_fallthru
          _
        // Predicated region
        $region49: #{prey_critic_forward.1} parent=11 // pred_check
          %p566 = pneg %p267
        $region50: #{prey_critic_forward.1} parent=11 // pred_check_branch
          %568 = sbr.rel (%p566) target = $region52
        $region51: #{prey_critic_forward.1} parent=11 // pred_region
          _
        $region52: #{prey_critic_forward.1} parent=11 // pred_fallthru
          _
        // Predicated region
        $region53: #{prey_critic_forward.1} parent=11 // pred_check
          %p569 = pneg %p288
        $region54: #{prey_critic_forward.1} parent=11 // pred_check_branch
          %571 = sbr.rel (%p569) target = $region56
        $region55: #{prey_critic_forward.1} parent=11 // pred_region
          _
        $region56: #{prey_critic_forward.1} parent=11 // pred_fallthru
          _
        // Predicated region
        $region57: #{prey_critic_forward.1} parent=11 // pred_check
          %p572 = pneg %p309
        $region58: #{prey_critic_forward.1} parent=11 // pred_check_branch
          %574 = sbr.rel (%p572) target = $region60
        $region59: #{prey_critic_forward.1} parent=11 // pred_region
          _
        $region60: #{prey_critic_forward.1} parent=11 // pred_fallthru
          _
        // Predicated region
        $region61: #{prey_critic_forward.1} parent=11 // pred_check
          %p575 = pneg %p330
        $region62: #{prey_critic_forward.1} parent=11 // pred_check_branch
          %577 = sbr.rel (%p575) target = $region64
        $region63: #{prey_critic_forward.1} parent=11 // pred_region
          _
        $region64: #{prey_critic_forward.1} parent=11 // pred_fallthru
          _
        // Predicated region
        $region65: #{prey_critic_forward.1} parent=11 // pred_check
          %p578 = pneg %p351
        $region66: #{prey_critic_forward.1} parent=11 // pred_check_branch
          %580 = sbr.rel (%p578) target = $region68
        $region67: #{prey_critic_forward.1} parent=11 // pred_region
          _
        $region68: #{prey_critic_forward.1} parent=11 // pred_fallthru
          _
        // Predicated region
        $region69: #{prey_critic_forward.1} parent=11 // pred_check
          %p581 = pneg %p372
        $region70: #{prey_critic_forward.1} parent=11 // pred_check_branch
          %583 = sbr.rel (%p581) target = $region72
        $region71: #{prey_critic_forward.1} parent=11 // pred_region
          _
        $region72: #{prey_critic_forward.1} parent=11 // pred_fallthru
          _
        // Predicated region
        $region73: #{prey_critic_forward.1} parent=11 // pred_check
          %p584 = pneg %p393
        $region74: #{prey_critic_forward.1} parent=11 // pred_check_branch
          %586 = sbr.rel (%p584) target = $region76
        $region75: #{prey_critic_forward.1} parent=11 // pred_region
          _
        $region76: #{prey_critic_forward.1} parent=11 // pred_fallthru
          _
        // Predicated region
        $region77: #{prey_critic_forward.1} parent=11 // pred_check
          %p587 = pneg %p414
        $region78: #{prey_critic_forward.1} parent=11 // pred_check_branch
          %589 = sbr.rel (%p587) target = $region80
        $region79: #{prey_critic_forward.1} parent=11 // pred_region
          _
        $region80: #{prey_critic_forward.1} parent=11 // pred_fallthru
          _
        // Predicated region
        $region81: #{prey_critic_forward.1} parent=11 // pred_check
          %p590 = pneg %p435
        $region82: #{prey_critic_forward.1} parent=11 // pred_check_branch
          %592 = sbr.rel (%p590) target = $region84
        $region83: #{prey_critic_forward.1} parent=11 // pred_region
          %s594 = ssub.s32 16384, 16384
          %595 = vsyncadd [#allocation8], %s594
          %s596 = sshll.u32 [#allocation7], 4
          %s597 = int_to_ptr.vmem [resolvable:$true] %s596
          %602 = dma.hbm_to_vmem [thread:$0]  %s18, 16384, %s597, [#allocation8], 256, 256, 16
        $region84: #{prey_critic_forward.1} parent=11 // pred_fallthru
          _
        // Predicated region
        $region85: #{prey_critic_forward.1} parent=11 // pred_check
          %p603 = pneg %p456
        $region86: #{prey_critic_forward.1} parent=11 // pred_check_branch
          %605 = sbr.rel (%p603) target = $region88
        $region87: #{prey_critic_forward.1} parent=11 // pred_region
          _
        $region88: #{prey_critic_forward.1} parent=11 // pred_fallthru
          _
        // Predicated region
        $region89: #{prey_critic_forward.1} parent=11 // pred_check
          %p606 = pneg %p477
        $region90: #{prey_critic_forward.1} parent=11 // pred_check_branch
          %608 = sbr.rel (%p606) target = $region92
        $region91: #{prey_critic_forward.1} parent=11 // pred_region
          _
        $region92: #{prey_critic_forward.1} parent=11 // pred_fallthru
          _
        // Predicated region
        $region93: #{prey_critic_forward.1} parent=11 // pred_check
          %p609 = pneg %p498
        $region94: #{prey_critic_forward.1} parent=11 // pred_check_branch
          %611 = sbr.rel (%p609) target = $region96
        $region95: #{prey_critic_forward.1} parent=11 // pred_region
          _
        $region96: #{prey_critic_forward.1} parent=11 // pred_fallthru
          _
      $region12: #{prey_critic_forward.1} parent=5 // pred_fallthru
        _
      %p612 = scmp.lt.s32.totalorder %s31, 2
      // Predicated region
      $region97: #{prey_critic_forward.1} parent=5 // pred_check
        %p613 = pneg %p612
      $region98: #{prey_critic_forward.1} parent=5 // pred_check_branch
        %615 = sbr.rel (%p613) target = $region100
      $region99: #{prey_critic_forward.1} parent=5 // pred_region
        // Predicated region
        $region101: #{prey_critic_forward.1} parent=99 // pred_check
          %p616 = pneg %p51
        $region102: #{prey_critic_forward.1} parent=99 // pred_check_branch
          %618 = sbr.rel (%p616) target = $region104
        $region103: #{prey_critic_forward.1} parent=99 // pred_region
          %s619 = smul.u32 4, %s31
          %p620 = scmp.lt.s32.totalorder %s619, 7
          %s621 = scalar_select %p620, %s619, 7
          %s622 = smul.addr %s621, 2
          %s623 = smul.addr %s622, 8
          %s624 = scalar_lea.vmem %s0, %s623
          %s625 = smul.u32 4, %s31
        $region104: #{prey_critic_forward.1} parent=99 // pred_fallthru
          _
      $region100: #{prey_critic_forward.1} parent=5 // pred_fallthru
        _
      %p626 = scmp.le.s32.totalorder 1, %s31
      %p627 = scmp.lt.s32.totalorder %s31, 3
      %p628 = pnand %p626, %p627
      %p629 = pneg %p628
      // Predicated region
      $region105: #{prey_critic_forward.1} parent=5 // pred_check
        _
      $region106: #{prey_critic_forward.1} parent=5 // pred_check_branch
        %631 = sbr.rel (%p628) target = $region108
      $region107: #{prey_critic_forward.1} parent=5 // pred_region
        %s632 = ssub.s32 %s31, 1
        // Predicated region
        $region109: #{prey_critic_forward.1} parent=107 // pred_check
          %p633 = pneg %p435
        $region110: #{prey_critic_forward.1} parent=107 // pred_check_branch
          %635 = sbr.rel (%p633) target = $region112
        $region111: #{prey_critic_forward.1} parent=107 // pred_region
          %636 = dma.done [#allocation8], 16384
        $region112: #{prey_critic_forward.1} parent=107 // pred_fallthru
          _
        %s637 = smul.u32 4, %s36
        %p638 = scmp.lt.s32.totalorder %s637, 7
        %s639 = scalar_select %p638, %s637, 7
        %s640 = smul.addr %s639, 2
        %s641 = smul.addr %s640, 8
        %s642 = scalar_lea.vmem %s0, %s641
        %p643 = pneg %p57
        %p644 = pneg %p54
        %p645 = pneg %p78
        %p646 = pneg %p75
        %p647 = pneg %p99
        %p648 = pneg %p96
        %p649 = pneg %p120
        %p650 = pneg %p117
        %p651 = pneg %p141
        %p652 = pneg %p138
        %p653 = pneg %p162
        %p654 = pneg %p159
        %p655 = pneg %p183
        %p656 = pneg %p180
        %p657 = pneg %p204
        %p658 = pneg %p201
        %p659 = pneg %p225
        %p660 = pneg %p222
        %p661 = pneg %p246
        %p662 = pneg %p243
        %p663 = pneg %p267
        %p664 = pneg %p264
        %p665 = pneg %p288
        %p666 = pneg %p285
        %p667 = pneg %p309
        %p668 = pneg %p306
        %p669 = pneg %p330
        %p670 = pneg %p327
        %p671 = pneg %p351
        %p672 = pneg %p348
        %p673 = pneg %p372
        %p674 = pneg %p369
        %p675 = pneg %p393
        %p676 = pneg %p390
        %p677 = pneg %p414
        %p678 = pneg %p411
        %p679 = pneg %p435
        %p680 = pneg %p432
        %p681 = pneg %p456
        %p682 = pneg %p453
        %p683 = pneg %p477
        %p684 = pneg %p474
        %p685 = pneg %p498
        %p686 = pneg %p495
        %p687 = pneg %p524
        %p688 = pneg %p521
        %p689 = scmp.lt.s32.totalorder %s36, 1
        %s690 = scalar_select %p689, %s36, 1
        %s691 = scalar_lea.vmem %s22, %s690
        %s692 = smul.u32 4, %s36
        %p693 = scmp.lt.s32.totalorder %s692, 7
        %s694 = scalar_select %p693, %s692, 7
        %s695 = smul.addr %s694, 2
        %s696 = smul.addr %s695, 8
        %s697 = scalar_lea.vmem %s0, %s696
        %s698 = smul.u32 4, %s36
        %p699 = scmp.lt.s32.totalorder %s36, 1
        %s700 = scalar_select %p699, %s36, 1
        %s701 = scalar_lea.vmem %s22, %s700
        %v703 = vld [vmem:[%s1] sm:$0x7]
        %v704 = vld [vmem:[%s2] sm:$0x1]
        %v705 = vld [vmem:[%s3] sm:$0x1]
        %v706 = vld [vmem:[%s4] sm:$0x3]
        %v707 = vld [vmem:[%s5] sm:$0x1]
        %v708 = vld [vmem:[%s6] sm:$0x3]
        %v709 = vld [vmem:[%s7] sm:$0x1]
        %v710 = vld [vmem:[%s8] sm:$0x3]
        %v711 = vld [vmem:[%s9] sm:$0x1]
        %v712 = vld [vmem:[%s12] sm:$0x3]
        %v713 = vld [vmem:[%s13] sm:$0x1]
        %v714 = vlaneseq
        %v715 = vshrl.u32 %v714, 7
        %v716 = vadd.s32 %v715, 8
        %vm717 = vcmp.lt.s32.totalorder %v715, 3
        %vm718 = vcmp.lt.s32.totalorder %v716, 3
        %v719 = vsel %vm717, 1, 0
        %v720 = vsel %vm718, 1, 0
        %v721 = vcvt.s32.f32 %v719
        %v722 = vcvt.s32.f32 %v720
        %vm723 = vcmp.ge.s32.totalorder %v715, 3
        %vm724 = vcmp.ge.s32.totalorder %v716, 3
        %vm725 = vcmp.lt.s32.totalorder %v715, 8
        %vm726 = vcmp.lt.s32.totalorder %v716, 8
        %vm727 = vmand %vm723, %vm725
        %vm728 = vmand %vm724, %vm726
        %v729 = vsel %vm727, 1, 0
        %v730 = vsel %vm728, 1, 0
        %v731 = vcvt.s32.f32 %v729
        %v732 = vcvt.s32.f32 %v730
        %vm733 = vcmp.ge.s32.totalorder %v715, 8
        %vm734 = vcmp.ge.s32.totalorder %v716, 8
        %v735 = vsel %vm733, 1, 0
        %v736 = vsel %vm734, 1, 0
        %v737 = vcvt.s32.f32 %v735
        %v738 = vcvt.s32.f32 %v736
        %v739 = vld [vmem:[%s697] sm:$0xff]
        %v740 = vld [vmem:[%s697 + $0x8] sm:$0xf]
        %v741 = vmul.f32 %v739, 3.1415927
        %v742 = vmul.f32 %v740, 3.1415927
        %v743 = vand.u32 2147483647, %v741
        %vm744 = vcmp.le.f32.partialorder %v743, 0.7853982
        %vm745 = vcmp.lt.s32.totalorder %v741, 0
        %v746 = vand.u32 %v741, 2139095040
        %v747 = vshrl.u32 %v746, 23
        %v748 = vsub.s32 %v747, 127
        %v749 = vand.u32 2147483647, %v741
        %v750 = vand.u32 %v749, 8388607
        %v751 = vor.u32 %v750, 8388608
        %v752 = vsub.s32 0, %v751
        %v753 = vadd.s32 %v748, 1
        %vm754 = vcmp.gt.s32.totalorder %v753, 0
        %v755 = vsel %vm754, %v753, 0
        %v756 = vshrl.u32 %v755, 5
        %v757 = vand.u32 %v755, 31
        %v758 = vsub.s32 32, %v757
        %v759 = vshrl.u32 683565275, %v758
        %v760 = vshll.u32 683565275, %v757
        %v761 = vshrl.u32 2475754826, %v758
        %v762 = vor.u32 %v760, %v761
        %v763 = vshll.u32 2475754826, %v757
        %v764 = vshrl.u32 2131351028, %v758
        %v765 = vor.u32 %v763, %v764
        %v766 = vshll.u32 2131351028, %v757
        %v767 = vshrl.u32 2102212464, %v758
        %v768 = vor.u32 %v766, %v767
        %v769 = vshll.u32 2102212464, %v757
        %v770 = vshrl.u32 920167782, %v758
        %v771 = vor.u32 %v769, %v770
        %v772 = vshll.u32 920167782, %v757
        %v773 = vshrl.u32 1326507024, %v758
        %v774 = vor.u32 %v772, %v773
        %vm775 = vcmp.lt.s32.totalorder %v756, 1
        %vm776 = vcmp.lt.s32.totalorder %v756, 2
        %vm777 = vcmp.lt.s32.totalorder %v756, 3
        %vm778 = vcmp.lt.s32.totalorder %v756, 4
        %v779 = vsel %vm775, %v759, %v762
        %v780 = vsel %vm778, %v768, 2102212464
        %v781 = vsel %vm777, %v765, %v780
        %v782 = vsel %vm776, %v779, %v781
        %v783 = vsel %vm775, %v762, %v765
        %v784 = vsel %vm778, %v771, 920167782
        %v785 = vsel %vm777, %v768, %v784
        %v786 = vsel %vm776, %v783, %v785
        %v787 = vsel %vm775, %v765, %v768
        %v788 = vsel %vm778, %v774, 1326507024
        %v789 = vsel %vm777, %v771, %v788
        %v790 = vsel %vm776, %v787, %v789
        %v791 = vshll.u32 %v751, 8
        %v792 = vmul.u32.u64.compose %v791, %v790
        %v793 = vextract.low.u32 %v792
        %v794 = vextract.high.u32 %v792
        %v795 = vmul.u32.u64.compose %v791, %v786
        %v796 = vextract.low.u32 %v795
        %v797 = vextract.high.u32 %v795
        %v798 = vmul.u32 %v791, %v782
        %v799 = vadd.s32 %v794, %v796
        %vm800 = vc.u32 %v794, %v796
        %v801 = vadd.s32 %v797, 1
        %v802 = vsel %vm800, %v801, %v797
        %v803 = vadd.s32 %v798, %v802
        %v804 = vadd.s32 %v803, 536870912
        %v805 = vshrl.u32 %v804, 30
        %v806 = vshll.u32 %v805, 30
        %v807 = vsub.s32 %v803, %v806
        %vm808 = vcmp.lt.s32.totalorder %v807, 0
        %v809 = vsub.s32 0, %v807
        %v810 = vsel %vm808, %v809, %v807
        %v811 = vclz %v810
        %v812 = vsub.s32 %v811, 2
        %vm813 = vcmp.gt.s32.totalorder 0, %v812
        %v814 = vsel %vm813, 0, %v812
        %v815 = vsub.s32 32, %v814
        %v816 = vshll.u32 %v807, %v814
        %v817 = vshrl.u32 %v799, %v815
        %v818 = vor.u32 %v816, %v817
        %v819 = vsub.s32 4294967266, %v814
        %v820 = vadd.s32 %v819, 127
        %v821 = vshll.u32 %v820, 23
        %v822 = vor.u32 4788187, %v821
        %v823 = vand.u32 2147483647, %v822
        %v825 = vcvt.s32.f32 %v818
        %v826 = vmul.f32 %v825, %v823
        %v827 = vxor.u32 %v826, 2147483648
        %v828 = vsel %vm745, %v827, %v826
        %v829 = vsub.s32 4, %v805
        %v830 = vsel %vm745, %v829, %v805
        %v831 = vsel %vm744, %v741, %v828
        %v832 = vsel %vm744, 0, %v830
        %v833 = vcosq.f32.pop %v831
        %v834 = vsinq.f32.pop %v831
        %vm835 = vweird.f32 %v741
        %v836 = vadd.s32 %v832, 3
        %v837 = vand.u32 %v836, 3
        %vm838 = vcmp.lt.s32.totalorder %v837, 2
        %vm839 = vcmp.eq.s32.totalorder %v837, 0
        %v840 = vxor.u32 %v834, 2147483648
        %v841 = vsel %vm839, %v833, %v840
        %vm842 = vcmp.eq.s32.totalorder %v837, 2
        %v843 = vxor.u32 %v833, 2147483648
        %v844 = vsel %vm842, %v843, %v834
        %v845 = vsel %vm838, %v841, %v844
        %v846 = vsel %vm835, nan, %v845
        %v847 = vand.u32 2147483647, %v742
        %vm848 = vcmp.le.f32.partialorder %v847, 0.7853982
        %vm849 = vcmp.lt.s32.totalorder %v742, 0
        %v850 = vand.u32 %v742, 2139095040
        %v851 = vshrl.u32 %v850, 23
        %v852 = vsub.s32 %v851, 127
        %v853 = vand.u32 2147483647, %v742
        %v854 = vand.u32 %v853, 8388607
        %v855 = vor.u32 %v854, 8388608
        %v856 = vsub.s32 0, %v855
        %v857 = vadd.s32 %v852, 1
        %vm858 = vcmp.gt.s32.totalorder %v857, 0
        %v859 = vsel %vm858, %v857, 0
        %v860 = vshrl.u32 %v859, 5
        %v861 = vand.u32 %v859, 31
        %v862 = vsub.s32 32, %v861
        %v863 = vshrl.u32 683565275, %v862
        %v864 = vshll.u32 683565275, %v861
        %v865 = vshrl.u32 2475754826, %v862
        %v866 = vor.u32 %v864, %v865
        %v867 = vshll.u32 2475754826, %v861
        %v868 = vshrl.u32 2131351028, %v862
        %v869 = vor.u32 %v867, %v868
        %v870 = vshll.u32 2131351028, %v861
        %v871 = vshrl.u32 2102212464, %v862
        %v872 = vor.u32 %v870, %v871
        %v873 = vshll.u32 2102212464, %v861
        %v874 = vshrl.u32 920167782, %v862
        %v875 = vor.u32 %v873, %v874
        %v876 = vshll.u32 920167782, %v861
        %v877 = vshrl.u32 1326507024, %v862
        %v878 = vor.u32 %v876, %v877
        %vm879 = vcmp.lt.s32.totalorder %v860, 1
        %vm880 = vcmp.lt.s32.totalorder %v860, 2
        %vm881 = vcmp.lt.s32.totalorder %v860, 3
        %vm882 = vcmp.lt.s32.totalorder %v860, 4
        %v883 = vsel %vm879, %v863, %v866
        %v884 = vsel %vm882, %v872, 2102212464
        %v885 = vsel %vm881, %v869, %v884
        %v886 = vsel %vm880, %v883, %v885
        %v887 = vsel %vm879, %v866, %v869
        %v888 = vsel %vm882, %v875, 920167782
        %v889 = vsel %vm881, %v872, %v888
        %v890 = vsel %vm880, %v887, %v889
        %v891 = vsel %vm879, %v869, %v872
        %v892 = vsel %vm882, %v878, 1326507024
        %v893 = vsel %vm881, %v875, %v892
        %v894 = vsel %vm880, %v891, %v893
        %v895 = vshll.u32 %v855, 8
        %v896 = vmul.u32.u64.compose %v895, %v894
        %v897 = vextract.low.u32 %v896
        %v898 = vextract.high.u32 %v896
        %v899 = vmul.u32.u64.compose %v895, %v890
        %v900 = vextract.low.u32 %v899
        %v901 = vextract.high.u32 %v899
        %v902 = vmul.u32 %v895, %v886
        %v903 = vadd.s32 %v898, %v900
        %vm904 = vc.u32 %v898, %v900
        %v905 = vadd.s32 %v901, 1
        %v906 = vsel %vm904, %v905, %v901
        %v907 = vadd.s32 %v902, %v906
        %v908 = vadd.s32 %v907, 536870912
        %v909 = vshrl.u32 %v908, 30
        %v910 = vshll.u32 %v909, 30
        %v911 = vsub.s32 %v907, %v910
        %vm912 = vcmp.lt.s32.totalorder %v911, 0
        %v913 = vsub.s32 0, %v911
        %v914 = vsel %vm912, %v913, %v911
        %v915 = vclz %v914
        %v916 = vsub.s32 %v915, 2
        %vm917 = vcmp.gt.s32.totalorder 0, %v916
        %v918 = vsel %vm917, 0, %v916
        %v919 = vsub.s32 32, %v918
        %v920 = vshll.u32 %v911, %v918
        %v921 = vshrl.u32 %v903, %v919
        %v922 = vor.u32 %v920, %v921
        %v923 = vsub.s32 4294967266, %v918
        %v924 = vadd.s32 %v923, 127
        %v925 = vshll.u32 %v924, 23
        %v926 = vor.u32 4788187, %v925
        %v927 = vand.u32 2147483647, %v926
        %v929 = vcvt.s32.f32 %v922
        %v930 = vmul.f32 %v929, %v927
        %v931 = vxor.u32 %v930, 2147483648
        %v932 = vsel %vm849, %v931, %v930
        %v933 = vsub.s32 4, %v909
        %v934 = vsel %vm849, %v933, %v909
        %v935 = vsel %vm848, %v742, %v932
        %v936 = vsel %vm848, 0, %v934
        %v937 = vcosq.f32.pop %v935
        %v938 = vsinq.f32.pop %v935
        %vm939 = vweird.f32 %v742
        %v940 = vadd.s32 %v936, 3
        %v941 = vand.u32 %v940, 3
        %vm942 = vcmp.lt.s32.totalorder %v941, 2
        %vm943 = vcmp.eq.s32.totalorder %v941, 0
        %v944 = vxor.u32 %v938, 2147483648
        %v945 = vsel %vm943, %v937, %v944
        %vm946 = vcmp.eq.s32.totalorder %v941, 2
        %v947 = vxor.u32 %v937, 2147483648
        %v948 = vsel %vm946, %v947, %v938
        %v949 = vsel %vm942, %v945, %v948
        %v950 = vsel %vm939, nan, %v949
        %952 = vset.pattern.permute.xlu0 3
        %953 = vperm.xlu0 %952, %v846
        %v954 = vpop.permute.xlu0 %953
        %957 = vset.pattern.permute.xlu0 3
        %958 = vperm.xlu0 %957, %v950
        %v959 = vpop.permute.xlu0 %958
        %v961 = vlaneseq
        %v962 = vshrl.u32 %v961, 7
        %v963 = vsub.s32 0, %v962
        %v964 = vrot.slane %v706, %v963
        %v965 = vmul.f32 %v954, %v964
        %v966 = vmul.f32 %v959, %v964
        %v967 = vand.u32 2147483647, %v741
        %vm968 = vcmp.le.f32.partialorder %v967, 0.7853982
        %vm969 = vcmp.lt.s32.totalorder %v741, 0
        %v970 = vand.u32 %v741, 2139095040
        %v971 = vshrl.u32 %v970, 23
        %v972 = vsub.s32 %v971, 127
        %v973 = vand.u32 2147483647, %v741
        %v974 = vand.u32 %v973, 8388607
        %v975 = vor.u32 %v974, 8388608
        %v976 = vsub.s32 0, %v975
        %v977 = vadd.s32 %v972, 1
        %vm978 = vcmp.gt.s32.totalorder %v977, 0
        %v979 = vsel %vm978, %v977, 0
        %v980 = vshrl.u32 %v979, 5
        %v981 = vand.u32 %v979, 31
        %v982 = vsub.s32 32, %v981
        %v983 = vshrl.u32 683565275, %v982
        %v984 = vshll.u32 683565275, %v981
        %v985 = vshrl.u32 2475754826, %v982
        %v986 = vor.u32 %v984, %v985
        %v987 = vshll.u32 2475754826, %v981
        %v988 = vshrl.u32 2131351028, %v982
        %v989 = vor.u32 %v987, %v988
        %v990 = vshll.u32 2131351028, %v981
        %v991 = vshrl.u32 2102212464, %v982
        %v992 = vor.u32 %v990, %v991
        %v993 = vshll.u32 2102212464, %v981
        %v994 = vshrl.u32 920167782, %v982
        %v995 = vor.u32 %v993, %v994
        %v996 = vshll.u32 920167782, %v981
        %v997 = vshrl.u32 1326507024, %v982
        %v998 = vor.u32 %v996, %v997
        %vm999 = vcmp.lt.s32.totalorder %v980, 1
        %vm1000 = vcmp.lt.s32.totalorder %v980, 2
        %vm1001 = vcmp.lt.s32.totalorder %v980, 3
        %vm1002 = vcmp.lt.s32.totalorder %v980, 4
        %v1003 = vsel %vm999, %v983, %v986
        %v1004 = vsel %vm1002, %v992, 2102212464
        %v1005 = vsel %vm1001, %v989, %v1004
        %v1006 = vsel %vm1000, %v1003, %v1005
        %v1007 = vsel %vm999, %v986, %v989
        %v1008 = vsel %vm1002, %v995, 920167782
        %v1009 = vsel %vm1001, %v992, %v1008
        %v1010 = vsel %vm1000, %v1007, %v1009
        %v1011 = vsel %vm999, %v989, %v992
        %v1012 = vsel %vm1002, %v998, 1326507024
        %v1013 = vsel %vm1001, %v995, %v1012
        %v1014 = vsel %vm1000, %v1011, %v1013
        %v1015 = vshll.u32 %v975, 8
        %v1016 = vmul.u32.u64.compose %v1015, %v1014
        %v1017 = vextract.low.u32 %v1016
        %v1018 = vextract.high.u32 %v1016
        %v1019 = vmul.u32.u64.compose %v1015, %v1010
        %v1020 = vextract.low.u32 %v1019
        %v1021 = vextract.high.u32 %v1019
        %v1022 = vmul.u32 %v1015, %v1006
        %v1023 = vadd.s32 %v1018, %v1020
        %vm1024 = vc.u32 %v1018, %v1020
        %v1025 = vadd.s32 %v1021, 1
        %v1026 = vsel %vm1024, %v1025, %v1021
        %v1027 = vadd.s32 %v1022, %v1026
        %v1028 = vadd.s32 %v1027, 536870912
        %v1029 = vshrl.u32 %v1028, 30
        %v1030 = vshll.u32 %v1029, 30
        %v1031 = vsub.s32 %v1027, %v1030
        %vm1032 = vcmp.lt.s32.totalorder %v1031, 0
        %v1033 = vsub.s32 0, %v1031
        %v1034 = vsel %vm1032, %v1033, %v1031
        %v1035 = vclz %v1034
        %v1036 = vsub.s32 %v1035, 2
        %vm1037 = vcmp.gt.s32.totalorder 0, %v1036
        %v1038 = vsel %vm1037, 0, %v1036
        %v1039 = vsub.s32 32, %v1038
        %v1040 = vshll.u32 %v1031, %v1038
        %v1041 = vshrl.u32 %v1023, %v1039
        %v1042 = vor.u32 %v1040, %v1041
        %v1043 = vsub.s32 4294967266, %v1038
        %v1044 = vadd.s32 %v1043, 127
        %v1045 = vshll.u32 %v1044, 23
        %v1046 = vor.u32 4788187, %v1045
        %v1047 = vand.u32 2147483647, %v1046
        %v1049 = vcvt.s32.f32 %v1042
        %v1050 = vmul.f32 %v1049, %v1047
        %v1051 = vxor.u32 %v1050, 2147483648
        %v1052 = vsel %vm969, %v1051, %v1050
        %v1053 = vsub.s32 4, %v1029
        %v1054 = vsel %vm969, %v1053, %v1029
        %v1055 = vsel %vm968, %v741, %v1052
        %v1056 = vsel %vm968, 0, %v1054
        %v1057 = vcosq.f32.pop %v1055
        %v1058 = vsinq.f32.pop %v1055
        %vm1059 = vweird.f32 %v741
        %v1060 = vand.u32 %v1056, 3
        %vm1061 = vcmp.lt.s32.totalorder %v1060, 2
        %vm1062 = vcmp.eq.s32.totalorder %v1060, 0
        %v1063 = vxor.u32 %v1058, 2147483648
        %v1064 = vsel %vm1062, %v1057, %v1063
        %vm1065 = vcmp.eq.s32.totalorder %v1060, 2
        %v1066 = vxor.u32 %v1057, 2147483648
        %v1067 = vsel %vm1065, %v1066, %v1058
        %v1068 = vsel %vm1061, %v1064, %v1067
        %v1069 = vsel %vm1059, nan, %v1068
        %v1070 = vand.u32 2147483647, %v742
        %vm1071 = vcmp.le.f32.partialorder %v1070, 0.7853982
        %vm1072 = vcmp.lt.s32.totalorder %v742, 0
        %v1073 = vand.u32 %v742, 2139095040
        %v1074 = vshrl.u32 %v1073, 23
        %v1075 = vsub.s32 %v1074, 127
        %v1076 = vand.u32 2147483647, %v742
        %v1077 = vand.u32 %v1076, 8388607
        %v1078 = vor.u32 %v1077, 8388608
        %v1079 = vsub.s32 0, %v1078
        %v1080 = vadd.s32 %v1075, 1
        %vm1081 = vcmp.gt.s32.totalorder %v1080, 0
        %v1082 = vsel %vm1081, %v1080, 0
        %v1083 = vshrl.u32 %v1082, 5
        %v1084 = vand.u32 %v1082, 31
        %v1085 = vsub.s32 32, %v1084
        %v1086 = vshrl.u32 683565275, %v1085
        %v1087 = vshll.u32 683565275, %v1084
        %v1088 = vshrl.u32 2475754826, %v1085
        %v1089 = vor.u32 %v1087, %v1088
        %v1090 = vshll.u32 2475754826, %v1084
        %v1091 = vshrl.u32 2131351028, %v1085
        %v1092 = vor.u32 %v1090, %v1091
        %v1093 = vshll.u32 2131351028, %v1084
        %v1094 = vshrl.u32 2102212464, %v1085
        %v1095 = vor.u32 %v1093, %v1094
        %v1096 = vshll.u32 2102212464, %v1084
        %v1097 = vshrl.u32 920167782, %v1085
        %v1098 = vor.u32 %v1096, %v1097
        %v1099 = vshll.u32 920167782, %v1084
        %v1100 = vshrl.u32 1326507024, %v1085
        %v1101 = vor.u32 %v1099, %v1100
        %vm1102 = vcmp.lt.s32.totalorder %v1083, 1
        %vm1103 = vcmp.lt.s32.totalorder %v1083, 2
        %vm1104 = vcmp.lt.s32.totalorder %v1083, 3
        %vm1105 = vcmp.lt.s32.totalorder %v1083, 4
        %v1106 = vsel %vm1102, %v1086, %v1089
        %v1107 = vsel %vm1105, %v1095, 2102212464
        %v1108 = vsel %vm1104, %v1092, %v1107
        %v1109 = vsel %vm1103, %v1106, %v1108
        %v1110 = vsel %vm1102, %v1089, %v1092
        %v1111 = vsel %vm1105, %v1098, 920167782
        %v1112 = vsel %vm1104, %v1095, %v1111
        %v1113 = vsel %vm1103, %v1110, %v1112
        %v1114 = vsel %vm1102, %v1092, %v1095
        %v1115 = vsel %vm1105, %v1101, 1326507024
        %v1116 = vsel %vm1104, %v1098, %v1115
        %v1117 = vsel %vm1103, %v1114, %v1116
        %v1118 = vshll.u32 %v1078, 8
        %v1119 = vmul.u32.u64.compose %v1118, %v1117
        %v1120 = vextract.low.u32 %v1119
        %v1121 = vextract.high.u32 %v1119
        %v1122 = vmul.u32.u64.compose %v1118, %v1113
        %v1123 = vextract.low.u32 %v1122
        %v1124 = vextract.high.u32 %v1122
        %v1125 = vmul.u32 %v1118, %v1109
        %v1126 = vadd.s32 %v1121, %v1123
        %vm1127 = vc.u32 %v1121, %v1123
        %v1128 = vadd.s32 %v1124, 1
        %v1129 = vsel %vm1127, %v1128, %v1124
        %v1130 = vadd.s32 %v1125, %v1129
        %v1131 = vadd.s32 %v1130, 536870912
        %v1132 = vshrl.u32 %v1131, 30
        %v1133 = vshll.u32 %v1132, 30
        %v1134 = vsub.s32 %v1130, %v1133
        %vm1135 = vcmp.lt.s32.totalorder %v1134, 0
        %v1136 = vsub.s32 0, %v1134
        %v1137 = vsel %vm1135, %v1136, %v1134
        %v1138 = vclz %v1137
        %v1139 = vsub.s32 %v1138, 2
        %vm1140 = vcmp.gt.s32.totalorder 0, %v1139
        %v1141 = vsel %vm1140, 0, %v1139
        %v1142 = vsub.s32 32, %v1141
        %v1143 = vshll.u32 %v1134, %v1141
        %v1144 = vshrl.u32 %v1126, %v1142
        %v1145 = vor.u32 %v1143, %v1144
        %v1146 = vsub.s32 4294967266, %v1141
        %v1147 = vadd.s32 %v1146, 127
        %v1148 = vshll.u32 %v1147, 23
        %v1149 = vor.u32 4788187, %v1148
        %v1150 = vand.u32 2147483647, %v1149
        %v1152 = vcvt.s32.f32 %v1145
        %v1153 = vmul.f32 %v1152, %v1150
        %v1154 = vxor.u32 %v1153, 2147483648
        %v1155 = vsel %vm1072, %v1154, %v1153
        %v1156 = vsub.s32 4, %v1132
        %v1157 = vsel %vm1072, %v1156, %v1132
        %v1158 = vsel %vm1071, %v742, %v1155
        %v1159 = vsel %vm1071, 0, %v1157
        %v1160 = vcosq.f32.pop %v1158
        %v1161 = vsinq.f32.pop %v1158
        %vm1162 = vweird.f32 %v742
        %v1163 = vand.u32 %v1159, 3
        %vm1164 = vcmp.lt.s32.totalorder %v1163, 2
        %vm1165 = vcmp.eq.s32.totalorder %v1163, 0
        %v1166 = vxor.u32 %v1161, 2147483648
        %v1167 = vsel %vm1165, %v1160, %v1166
        %vm1168 = vcmp.eq.s32.totalorder %v1163, 2
        %v1169 = vxor.u32 %v1160, 2147483648
        %v1170 = vsel %vm1168, %v1169, %v1161
        %v1171 = vsel %vm1164, %v1167, %v1170
        %v1172 = vsel %vm1162, nan, %v1171
        %1174 = vset.pattern.permute.xlu0 3
        %1175 = vperm.xlu0 %1174, %v1069
        %v1176 = vpop.permute.xlu0 %1175
        %1179 = vset.pattern.permute.xlu0 3
        %1180 = vperm.xlu0 %1179, %v1172
        %v1181 = vpop.permute.xlu0 %1180
        %v1183 = vlaneseq
        %v1184 = vshrl.u32 %v1183, 7
        %v1185 = vsub.s32 1, %v1184
        %v1186 = vrot.slane %v706, %v1185
        %v1187 = vmul.f32 %v1176, %v1186
        %v1188 = vmul.f32 %v1181, %v1186
        %v1189 = vadd.f32 %v965, %v1187
        %v1190 = vadd.f32 %v966, %v1188
        %v1192 = vlaneseq
        %v1193 = vshrl.u32 %v1192, 7
        %v1194 = vsub.s32 0, %v1193
        %v1195 = vrot.slane %v707, %v1194
        %v1197 = vadd.f32 %v1189, %v1195
        %v1198 = vadd.f32 %v1190, %v1195
        %v1201 = vcombine.high %v739, %v739
        %v1203 = vunpack.c.l.s4 1966171168
        %v1204 = vunpack.c.0.s8 %v1203
        %v1205 = vlaneseq
        %v1206 = vshrl.u32 %v1205, 7
        %v1207 = vsub.s32 %v1204, %v1206
        %v1208 = vrot.slane %v739, %v1207
        %v1210 = vunpack.c.l.s4 1966171168
        %v1211 = vunpack.c.0.s8 %v1210
        %v1212 = vlaneseq
        %v1213 = vshrl.u32 %v1212, 7
        %v1214 = vsub.s32 %v1211, %v1213
        %v1215 = vrot.slane %v1201, %v1214
        %v1216 = vcombine.high %v1208, %v1208
        %v1217 = vcombine.high %v1215, %v1215
        %v1219 = vunpack.c.l.s4 1966171168
        %v1220 = vunpack.c.0.s8 %v1219
        %v1221 = vlaneseq
        %v1222 = vshrl.u32 %v1221, 7
        %v1223 = vsub.s32 %v1220, %v1222
        %v1224 = vrot.slane %v1208, %v1223
        %v1226 = vunpack.c.l.s4 1966171168
        %v1227 = vunpack.c.0.s8 %v1226
        %v1228 = vlaneseq
        %v1229 = vshrl.u32 %v1228, 7
        %v1230 = vsub.s32 %v1227, %v1229
        %v1231 = vrot.slane %v1215, %v1230
        %v1233 = vunpack.c.l.s4 1966171168
        %v1234 = vunpack.c.0.s8 %v1233
        %v1235 = vlaneseq
        %v1236 = vshrl.u32 %v1235, 7
        %v1237 = vsub.s32 %v1234, %v1236
        %v1238 = vrot.slane %v1216, %v1237
        %v1240 = vunpack.c.l.s4 1966171168
        %v1241 = vunpack.c.0.s8 %v1240
        %v1242 = vlaneseq
        %v1243 = vshrl.u32 %v1242, 7
        %v1244 = vsub.s32 %v1241, %v1243
        %v1245 = vrot.slane %v1217, %v1244
        %v1246 = vcombine.high %v1224, %v1224
        %v1247 = vcombine.high %v1231, %v1231
        %v1248 = vcombine.high %v1238, %v1238
        %v1249 = vcombine.high %v1245, %v1245
        %v1251 = vunpack.c.l.s4 1966171168
        %v1252 = vunpack.c.0.s8 %v1251
        %v1253 = vlaneseq
        %v1254 = vshrl.u32 %v1253, 7
        %v1255 = vsub.s32 %v1252, %v1254
        %v1256 = vrot.slane %v740, %v1255
        %v1257 = vcombine.high %v1256, %v1256
        %v1259 = vunpack.c.l.s4 1966171168
        %v1260 = vunpack.c.0.s8 %v1259
        %v1261 = vlaneseq
        %v1262 = vshrl.u32 %v1261, 7
        %v1263 = vsub.s32 %v1260, %v1262
        %v1264 = vrot.slane %v1256, %v1263
        %v1266 = vunpack.c.l.s4 1966171168
        %v1267 = vunpack.c.0.s8 %v1266
        %v1268 = vlaneseq
        %v1269 = vshrl.u32 %v1268, 7
        %v1270 = vsub.s32 %v1267, %v1269
        %v1271 = vrot.slane %v1257, %v1270
        %v1272 = vcombine.high %v1264, %v1264
        %v1273 = vcombine.high %v1271, %v1271
        %v1274 = vlaneseq
        %v1275 = vshrl.u32 %v1274, 7
        %v1276 = vsub.s32 0, %v1275
        %v1277 = vrot.slane %v1224, %v1276
        %v1278 = vlaneseq
        %v1279 = vshrl.u32 %v1278, 7
        %v1280 = vsub.s32 0, %v1279
        %v1281 = vrot.slane %v1238, %v1280
        %v1282 = vlaneseq
        %v1283 = vshrl.u32 %v1282, 7
        %v1284 = vsub.s32 0, %v1283
        %v1285 = vrot.slane %v1246, %v1284
        %v1286 = vlaneseq
        %v1287 = vshrl.u32 %v1286, 7
        %v1288 = vsub.s32 0, %v1287
        %v1289 = vrot.slane %v1248, %v1288
        %v1290 = vlaneseq
        %v1291 = vshrl.u32 %v1290, 7
        %v1292 = vsub.s32 0, %v1291
        %v1293 = vrot.slane %v1231, %v1292
        %v1294 = vlaneseq
        %v1295 = vshrl.u32 %v1294, 7
        %v1296 = vsub.s32 0, %v1295
        %v1297 = vrot.slane %v1245, %v1296
        %v1298 = vlaneseq
        %v1299 = vshrl.u32 %v1298, 7
        %v1300 = vsub.s32 0, %v1299
        %v1301 = vrot.slane %v1247, %v1300
        %v1302 = vlaneseq
        %v1303 = vshrl.u32 %v1302, 7
        %v1304 = vsub.s32 0, %v1303
        %v1305 = vrot.slane %v1249, %v1304
        %v1306 = vlaneseq
        %v1307 = vshrl.u32 %v1306, 7
        %v1308 = vsub.s32 0, %v1307
        %v1309 = vrot.slane %v1264, %v1308
        %v1310 = vlaneseq
        %v1311 = vshrl.u32 %v1310, 7
        %v1312 = vsub.s32 0, %v1311
        %v1313 = vrot.slane %v1271, %v1312
        %v1314 = vlaneseq
        %v1315 = vshrl.u32 %v1314, 7
        %v1316 = vsub.s32 0, %v1315
        %v1317 = vrot.slane %v1272, %v1316
        %v1318 = vlaneseq
        %v1319 = vshrl.u32 %v1318, 7
        %v1320 = vsub.s32 0, %v1319
        %v1321 = vrot.slane %v1273, %v1320
        %v1334 = vsub.f32 %v739, %v1277
        %v1335 = vsub.f32 %v740, %v1277
        %v1336 = vsub.f32 %v739, %v1281
        %v1337 = vsub.f32 %v740, %v1281
        %v1338 = vsub.f32 %v739, %v1285
        %v1339 = vsub.f32 %v740, %v1285
        %v1340 = vsub.f32 %v739, %v1289
        %v1341 = vsub.f32 %v740, %v1289
        %v1342 = vsub.f32 %v739, %v1293
        %v1343 = vsub.f32 %v740, %v1293
        %v1344 = vsub.f32 %v739, %v1297
        %v1345 = vsub.f32 %v740, %v1297
        %v1346 = vsub.f32 %v739, %v1301
        %v1347 = vsub.f32 %v740, %v1301
        %v1348 = vsub.f32 %v739, %v1305
        %v1349 = vsub.f32 %v740, %v1305
        %v1350 = vsub.f32 %v739, %v1309
        %v1351 = vsub.f32 %v740, %v1309
        %v1352 = vsub.f32 %v739, %v1313
        %v1353 = vsub.f32 %v740, %v1313
        %v1354 = vsub.f32 %v739, %v1317
        %v1355 = vsub.f32 %v740, %v1317
        %v1356 = vsub.f32 %v739, %v1321
        %v1357 = vsub.f32 %v740, %v1321
        %1358 = vset.pattern.permute.xlu0 2
        %1359 = vperm.xlu0 %1358, %v739
        %v1360 = vpop.permute.xlu0 %1359
        %1362 = vset.pattern.permute.xlu0 2
        %1363 = vperm.xlu0 %1362, %v740
        %v1364 = vpop.permute.xlu0 %1363
        %v1367 = vlaneseq
        %v1368 = vshrl.u32 %v1367, 7
        %v1369 = vsub.s32 0, %v1368
        %v1370 = vrot.slane %v704, %v1369
        %v1372 = vmul.f32 %v1360, %v1370
        %v1373 = vmul.f32 %v1364, %v1370
        %v1375 = vlaneseq
        %v1376 = vshrl.u32 %v1375, 7
        %v1377 = vsub.s32 0, %v1376
        %v1378 = vrot.slane %v705, %v1377
        %v1380 = vadd.f32 %v1372, %v1378
        %v1381 = vadd.f32 %v1373, %v1378
        %v1382 = vlaneseq
        %v1383 = vshrl.u32 %v1382, 7
        %v1384 = vsub.s32 0, %v1383
        %v1385 = vrot.slane %v703, %v1384
        %v1386 = vmul.f32 %v721, %v1385
        %v1387 = vmul.f32 %v722, %v1385
        %v1388 = vlaneseq
        %v1389 = vshrl.u32 %v1388, 7
        %v1390 = vsub.s32 1, %v1389
        %v1391 = vrot.slane %v703, %v1390
        %v1392 = vadd.f32 %v1391, %v1197
        %v1393 = vadd.f32 %v1391, %v1198
        %v1394 = vmul.f32 %v731, %v1392
        %v1395 = vmul.f32 %v732, %v1393
        %v1396 = vmul.f32 %v1394, %v1360
        %v1397 = vmul.f32 %v1395, %v1364
        %v1398 = vadd.f32 %v1386, %v1396
        %v1399 = vadd.f32 %v1387, %v1397
        %v1400 = vlaneseq
        %v1401 = vshrl.u32 %v1400, 7
        %v1402 = vsub.s32 2, %v1401
        %v1403 = vrot.slane %v703, %v1402
        %v1404 = vadd.f32 %v1403, %v1380
        %v1405 = vadd.f32 %v1403, %v1381
        %v1406 = vmul.f32 %v737, %v1404
        %v1407 = vmul.f32 %v738, %v1405
        %v1408 = vadd.f32 %v1398, %v1406
        %v1409 = vadd.f32 %v1399, %v1407
        %1411 = vset.pattern.permute.xlu0 0
        %1412 = vperm.xlu0 %1411, %v1334
        %v1413 = vpop.permute.xlu0 %1412
        %1416 = vset.pattern.permute.xlu0 0
        %1417 = vperm.xlu0 %1416, %v1335
        %v1418 = vpop.permute.xlu0 %1417
        %1421 = vset.pattern.permute.xlu0 0
        %1422 = vperm.xlu0 %1421, %v1336
        %v1423 = vpop.permute.xlu0 %1422
        %1426 = vset.pattern.permute.xlu0 0
        %1427 = vperm.xlu0 %1426, %v1337
        %v1428 = vpop.permute.xlu0 %1427
        %1431 = vset.pattern.permute.xlu0 0
        %1432 = vperm.xlu0 %1431, %v1338
        %v1433 = vpop.permute.xlu0 %1432
        %1436 = vset.pattern.permute.xlu0 0
        %1437 = vperm.xlu0 %1436, %v1339
        %v1438 = vpop.permute.xlu0 %1437
        %1441 = vset.pattern.permute.xlu0 0
        %1442 = vperm.xlu0 %1441, %v1340
        %v1443 = vpop.permute.xlu0 %1442
        %1446 = vset.pattern.permute.xlu0 0
        %1447 = vperm.xlu0 %1446, %v1341
        %v1448 = vpop.permute.xlu0 %1447
        %1451 = vset.pattern.permute.xlu0 0
        %1452 = vperm.xlu0 %1451, %v1342
        %v1453 = vpop.permute.xlu0 %1452
        %1456 = vset.pattern.permute.xlu0 0
        %1457 = vperm.xlu0 %1456, %v1343
        %v1458 = vpop.permute.xlu0 %1457
        %1461 = vset.pattern.permute.xlu0 0
        %1462 = vperm.xlu0 %1461, %v1344
        %v1463 = vpop.permute.xlu0 %1462
        %1466 = vset.pattern.permute.xlu0 0
        %1467 = vperm.xlu0 %1466, %v1345
        %v1468 = vpop.permute.xlu0 %1467
        %1471 = vset.pattern.permute.xlu0 0
        %1472 = vperm.xlu0 %1471, %v1346
        %v1473 = vpop.permute.xlu0 %1472
        %1476 = vset.pattern.permute.xlu0 0
        %1477 = vperm.xlu0 %1476, %v1347
        %v1478 = vpop.permute.xlu0 %1477
        %1481 = vset.pattern.permute.xlu0 0
        %1482 = vperm.xlu0 %1481, %v1348
        %v1483 = vpop.permute.xlu0 %1482
        %1486 = vset.pattern.permute.xlu0 0
        %1487 = vperm.xlu0 %1486, %v1349
        %v1488 = vpop.permute.xlu0 %1487
        %1491 = vset.pattern.permute.xlu0 0
        %1492 = vperm.xlu0 %1491, %v1350
        %v1493 = vpop.permute.xlu0 %1492
        %1496 = vset.pattern.permute.xlu0 0
        %1497 = vperm.xlu0 %1496, %v1351
        %v1498 = vpop.permute.xlu0 %1497
        %1501 = vset.pattern.permute.xlu0 0
        %1502 = vperm.xlu0 %1501, %v1352
        %v1503 = vpop.permute.xlu0 %1502
        %1506 = vset.pattern.permute.xlu0 0
        %1507 = vperm.xlu0 %1506, %v1353
        %v1508 = vpop.permute.xlu0 %1507
        %1511 = vset.pattern.permute.xlu0 0
        %1512 = vperm.xlu0 %1511, %v1354
        %v1513 = vpop.permute.xlu0 %1512
        %1516 = vset.pattern.permute.xlu0 0
        %1517 = vperm.xlu0 %1516, %v1355
        %v1518 = vpop.permute.xlu0 %1517
        %1521 = vset.pattern.permute.xlu0 0
        %1522 = vperm.xlu0 %1521, %v1356
        %v1523 = vpop.permute.xlu0 %1522
        %1526 = vset.pattern.permute.xlu0 0
        %1527 = vperm.xlu0 %1526, %v1357
        %v1528 = vpop.permute.xlu0 %1527
        %v1530 = vlaneseq
        %v1531 = vshrl.u32 %v1530, 7
        %v1532 = vsub.s32 0, %v1531
        %v1533 = vrot.slane %v710, %v1532
        %v1534 = vmul.f32 %v1413, %v1533
        %v1535 = vmul.f32 %v1418, %v1533
        %v1536 = vmul.f32 %v1423, %v1533
        %v1537 = vmul.f32 %v1428, %v1533
        %v1538 = vmul.f32 %v1433, %v1533
        %v1539 = vmul.f32 %v1438, %v1533
        %v1540 = vmul.f32 %v1443, %v1533
        %v1541 = vmul.f32 %v1448, %v1533
        %v1542 = vmul.f32 %v1453, %v1533
        %v1543 = vmul.f32 %v1458, %v1533
        %v1544 = vmul.f32 %v1463, %v1533
        %v1545 = vmul.f32 %v1468, %v1533
        %v1546 = vmul.f32 %v1473, %v1533
        %v1547 = vmul.f32 %v1478, %v1533
        %v1548 = vmul.f32 %v1483, %v1533
        %v1549 = vmul.f32 %v1488, %v1533
        %v1550 = vmul.f32 %v1493, %v1533
        %v1551 = vmul.f32 %v1498, %v1533
        %v1552 = vmul.f32 %v1503, %v1533
        %v1553 = vmul.f32 %v1508, %v1533
        %v1554 = vmul.f32 %v1513, %v1533
        %v1555 = vmul.f32 %v1518, %v1533
        %v1556 = vmul.f32 %v1523, %v1533
        %v1557 = vmul.f32 %v1528, %v1533
        %1558 = vset.pattern.permute.xlu0 1
        %1559 = vperm.xlu0 %1558, %v1334
        %v1560 = vpop.permute.xlu0 %1559
        %1562 = vset.pattern.permute.xlu0 1
        %1563 = vperm.xlu0 %1562, %v1335
        %v1564 = vpop.permute.xlu0 %1563
        %1566 = vset.pattern.permute.xlu0 1
        %1567 = vperm.xlu0 %1566, %v1336
        %v1568 = vpop.permute.xlu0 %1567
        %1570 = vset.pattern.permute.xlu0 1
        %1571 = vperm.xlu0 %1570, %v1337
        %v1572 = vpop.permute.xlu0 %1571
        %1574 = vset.pattern.permute.xlu0 1
        %1575 = vperm.xlu0 %1574, %v1338
        %v1576 = vpop.permute.xlu0 %1575
        %1578 = vset.pattern.permute.xlu0 1
        %1579 = vperm.xlu0 %1578, %v1339
        %v1580 = vpop.permute.xlu0 %1579
        %1582 = vset.pattern.permute.xlu0 1
        %1583 = vperm.xlu0 %1582, %v1340
        %v1584 = vpop.permute.xlu0 %1583
        %1586 = vset.pattern.permute.xlu0 1
        %1587 = vperm.xlu0 %1586, %v1341
        %v1588 = vpop.permute.xlu0 %1587
        %1590 = vset.pattern.permute.xlu0 1
        %1591 = vperm.xlu0 %1590, %v1342
        %v1592 = vpop.permute.xlu0 %1591
        %1594 = vset.pattern.permute.xlu0 1
        %1595 = vperm.xlu0 %1594, %v1343
        %v1596 = vpop.permute.xlu0 %1595
        %1598 = vset.pattern.permute.xlu0 1
        %1599 = vperm.xlu0 %1598, %v1344
        %v1600 = vpop.permute.xlu0 %1599
        %1602 = vset.pattern.permute.xlu0 1
        %1603 = vperm.xlu0 %1602, %v1345
        %v1604 = vpop.permute.xlu0 %1603
        %1606 = vset.pattern.permute.xlu0 1
        %1607 = vperm.xlu0 %1606, %v1346
        %v1608 = vpop.permute.xlu0 %1607
        %1610 = vset.pattern.permute.xlu0 1
        %1611 = vperm.xlu0 %1610, %v1347
        %v1612 = vpop.permute.xlu0 %1611
        %1614 = vset.pattern.permute.xlu0 1
        %1615 = vperm.xlu0 %1614, %v1348
        %v1616 = vpop.permute.xlu0 %1615
        %1618 = vset.pattern.permute.xlu0 1
        %1619 = vperm.xlu0 %1618, %v1349
        %v1620 = vpop.permute.xlu0 %1619
        %1622 = vset.pattern.permute.xlu0 1
        %1623 = vperm.xlu0 %1622, %v1350
        %v1624 = vpop.permute.xlu0 %1623
        %1626 = vset.pattern.permute.xlu0 1
        %1627 = vperm.xlu0 %1626, %v1351
        %v1628 = vpop.permute.xlu0 %1627
        %1630 = vset.pattern.permute.xlu0 1
        %1631 = vperm.xlu0 %1630, %v1352
        %v1632 = vpop.permute.xlu0 %1631
        %1634 = vset.pattern.permute.xlu0 1
        %1635 = vperm.xlu0 %1634, %v1353
        %v1636 = vpop.permute.xlu0 %1635
        %1638 = vset.pattern.permute.xlu0 1
        %1639 = vperm.xlu0 %1638, %v1354
        %v1640 = vpop.permute.xlu0 %1639
        %1642 = vset.pattern.permute.xlu0 1
        %1643 = vperm.xlu0 %1642, %v1355
        %v1644 = vpop.permute.xlu0 %1643
        %1646 = vset.pattern.permute.xlu0 1
        %1647 = vperm.xlu0 %1646, %v1356
        %v1648 = vpop.permute.xlu0 %1647
        %1650 = vset.pattern.permute.xlu0 1
        %1651 = vperm.xlu0 %1650, %v1357
        %v1652 = vpop.permute.xlu0 %1651
        %v1654 = vlaneseq
        %v1655 = vshrl.u32 %v1654, 7
        %v1656 = vsub.s32 1, %v1655
        %v1657 = vrot.slane %v710, %v1656
        %v1658 = vmul.f32 %v1560, %v1657
        %v1659 = vmul.f32 %v1564, %v1657
        %v1660 = vmul.f32 %v1568, %v1657
        %v1661 = vmul.f32 %v1572, %v1657
        %v1662 = vmul.f32 %v1576, %v1657
        %v1663 = vmul.f32 %v1580, %v1657
        %v1664 = vmul.f32 %v1584, %v1657
        %v1665 = vmul.f32 %v1588, %v1657
        %v1666 = vmul.f32 %v1592, %v1657
        %v1667 = vmul.f32 %v1596, %v1657
        %v1668 = vmul.f32 %v1600, %v1657
        %v1669 = vmul.f32 %v1604, %v1657
        %v1670 = vmul.f32 %v1608, %v1657
        %v1671 = vmul.f32 %v1612, %v1657
        %v1672 = vmul.f32 %v1616, %v1657
        %v1673 = vmul.f32 %v1620, %v1657
        %v1674 = vmul.f32 %v1624, %v1657
        %v1675 = vmul.f32 %v1628, %v1657
        %v1676 = vmul.f32 %v1632, %v1657
        %v1677 = vmul.f32 %v1636, %v1657
        %v1678 = vmul.f32 %v1640, %v1657
        %v1679 = vmul.f32 %v1644, %v1657
        %v1680 = vmul.f32 %v1648, %v1657
        %v1681 = vmul.f32 %v1652, %v1657
        %v1682 = vadd.f32 %v1534, %v1658
        %v1683 = vadd.f32 %v1535, %v1659
        %v1684 = vadd.f32 %v1536, %v1660
        %v1685 = vadd.f32 %v1537, %v1661
        %v1686 = vadd.f32 %v1538, %v1662
        %v1687 = vadd.f32 %v1539, %v1663
        %v1688 = vadd.f32 %v1540, %v1664
        %v1689 = vadd.f32 %v1541, %v1665
        %v1690 = vadd.f32 %v1542, %v1666
        %v1691 = vadd.f32 %v1543, %v1667
        %v1692 = vadd.f32 %v1544, %v1668
        %v1693 = vadd.f32 %v1545, %v1669
        %v1694 = vadd.f32 %v1546, %v1670
        %v1695 = vadd.f32 %v1547, %v1671
        %v1696 = vadd.f32 %v1548, %v1672
        %v1697 = vadd.f32 %v1549, %v1673
        %v1698 = vadd.f32 %v1550, %v1674
        %v1699 = vadd.f32 %v1551, %v1675
        %v1700 = vadd.f32 %v1552, %v1676
        %v1701 = vadd.f32 %v1553, %v1677
        %v1702 = vadd.f32 %v1554, %v1678
        %v1703 = vadd.f32 %v1555, %v1679
        %v1704 = vadd.f32 %v1556, %v1680
        %v1705 = vadd.f32 %v1557, %v1681
        %v1707 = vlaneseq
        %v1708 = vshrl.u32 %v1707, 7
        %v1709 = vsub.s32 0, %v1708
        %v1710 = vrot.slane %v711, %v1709
        %v1712 = vadd.f32 %v1682, %v1710
        %v1713 = vadd.f32 %v1683, %v1710
        %v1714 = vadd.f32 %v1684, %v1710
        %v1715 = vadd.f32 %v1685, %v1710
        %v1716 = vadd.f32 %v1686, %v1710
        %v1717 = vadd.f32 %v1687, %v1710
        %v1718 = vadd.f32 %v1688, %v1710
        %v1719 = vadd.f32 %v1689, %v1710
        %v1720 = vadd.f32 %v1690, %v1710
        %v1721 = vadd.f32 %v1691, %v1710
        %v1722 = vadd.f32 %v1692, %v1710
        %v1723 = vadd.f32 %v1693, %v1710
        %v1724 = vadd.f32 %v1694, %v1710
        %v1725 = vadd.f32 %v1695, %v1710
        %v1726 = vadd.f32 %v1696, %v1710
        %v1727 = vadd.f32 %v1697, %v1710
        %v1728 = vadd.f32 %v1698, %v1710
        %v1729 = vadd.f32 %v1699, %v1710
        %v1730 = vadd.f32 %v1700, %v1710
        %v1731 = vadd.f32 %v1701, %v1710
        %v1732 = vadd.f32 %v1702, %v1710
        %v1733 = vadd.f32 %v1703, %v1710
        %v1734 = vadd.f32 %v1704, %v1710
        %v1735 = vadd.f32 %v1705, %v1710
        %v1736 = vmax.f32 %v1712, 0.0
        %v1737 = vmax.f32 %v1713, 0.0
        %v1738 = vmax.f32 %v1714, 0.0
        %v1739 = vmax.f32 %v1715, 0.0
        %v1740 = vmax.f32 %v1716, 0.0
        %v1741 = vmax.f32 %v1717, 0.0
        %v1742 = vmax.f32 %v1718, 0.0
        %v1743 = vmax.f32 %v1719, 0.0
        %v1744 = vmax.f32 %v1720, 0.0
        %v1745 = vmax.f32 %v1721, 0.0
        %v1746 = vmax.f32 %v1722, 0.0
        %v1747 = vmax.f32 %v1723, 0.0
        %v1748 = vmax.f32 %v1724, 0.0
        %v1749 = vmax.f32 %v1725, 0.0
        %v1750 = vmax.f32 %v1726, 0.0
        %v1751 = vmax.f32 %v1727, 0.0
        %v1752 = vmax.f32 %v1728, 0.0
        %v1753 = vmax.f32 %v1729, 0.0
        %v1754 = vmax.f32 %v1730, 0.0
        %v1755 = vmax.f32 %v1731, 0.0
        %v1756 = vmax.f32 %v1732, 0.0
        %v1757 = vmax.f32 %v1733, 0.0
        %v1758 = vmax.f32 %v1734, 0.0
        %v1759 = vmax.f32 %v1735, 0.0
        %v1760 = vmul.f32 %v1736, %v1408
        %v1761 = vmul.f32 %v1737, %v1409
        %v1762 = vmul.f32 %v1738, %v1408
        %v1763 = vmul.f32 %v1739, %v1409
        %v1764 = vmul.f32 %v1740, %v1408
        %v1765 = vmul.f32 %v1741, %v1409
        %v1766 = vmul.f32 %v1742, %v1408
        %v1767 = vmul.f32 %v1743, %v1409
        %v1768 = vmul.f32 %v1744, %v1408
        %v1769 = vmul.f32 %v1745, %v1409
        %v1770 = vmul.f32 %v1746, %v1408
        %v1771 = vmul.f32 %v1747, %v1409
        %v1772 = vmul.f32 %v1748, %v1408
        %v1773 = vmul.f32 %v1749, %v1409
        %v1774 = vmul.f32 %v1750, %v1408
        %v1775 = vmul.f32 %v1751, %v1409
        %v1776 = vmul.f32 %v1752, %v1408
        %v1777 = vmul.f32 %v1753, %v1409
        %v1778 = vmul.f32 %v1754, %v1408
        %v1779 = vmul.f32 %v1755, %v1409
        %v1780 = vmul.f32 %v1756, %v1408
        %v1781 = vmul.f32 %v1757, %v1409
        %v1782 = vmul.f32 %v1758, %v1408
        %v1783 = vmul.f32 %v1759, %v1409
        %vm1784 = vcmask 523264
        %v1785 = vsel %vm1784, %v1760, 0.0
        %vm1786 = vcmask 519168
        %v1787 = vsel %vm1786, %v1761, 0.0
        %v1788 = vadd.f32 %v1785, %v1787
        %v1789 = vrot.slane %v1788, 4
        %v1790 = vadd.f32 %v1788, %v1789
        %v1791 = vrot.slane %v1790, 2
        %v1792 = vadd.f32 %v1790, %v1791
        %v1793 = vrot.slane %v1792, 1
        %v1794 = vadd.f32 %v1792, %v1793
        %v1795 = vsel %vm1784, %v1762, 0.0
        %v1796 = vsel %vm1786, %v1763, 0.0
        %v1797 = vadd.f32 %v1795, %v1796
        %v1798 = vrot.slane %v1797, 4
        %v1799 = vadd.f32 %v1797, %v1798
        %v1800 = vrot.slane %v1799, 2
        %v1801 = vadd.f32 %v1799, %v1800
        %v1802 = vrot.slane %v1801, 1
        %v1803 = vadd.f32 %v1801, %v1802
        %v1804 = vsel %vm1784, %v1764, 0.0
        %v1805 = vsel %vm1786, %v1765, 0.0
        %v1806 = vadd.f32 %v1804, %v1805
        %v1807 = vrot.slane %v1806, 4
        %v1808 = vadd.f32 %v1806, %v1807
        %v1809 = vrot.slane %v1808, 2
        %v1810 = vadd.f32 %v1808, %v1809
        %v1811 = vrot.slane %v1810, 1
        %v1812 = vadd.f32 %v1810, %v1811
        %v1813 = vsel %vm1784, %v1766, 0.0
        %v1814 = vsel %vm1786, %v1767, 0.0
        %v1815 = vadd.f32 %v1813, %v1814
        %v1816 = vrot.slane %v1815, 4
        %v1817 = vadd.f32 %v1815, %v1816
        %v1818 = vrot.slane %v1817, 2
        %v1819 = vadd.f32 %v1817, %v1818
        %v1820 = vrot.slane %v1819, 1
        %v1821 = vadd.f32 %v1819, %v1820
        %v1822 = vsel %vm1784, %v1768, 0.0
        %v1823 = vsel %vm1786, %v1769, 0.0
        %v1824 = vadd.f32 %v1822, %v1823
        %v1825 = vrot.slane %v1824, 4
        %v1826 = vadd.f32 %v1824, %v1825
        %v1827 = vrot.slane %v1826, 2
        %v1828 = vadd.f32 %v1826, %v1827
        %v1829 = vrot.slane %v1828, 1
        %v1830 = vadd.f32 %v1828, %v1829
        %v1831 = vsel %vm1784, %v1770, 0.0
        %v1832 = vsel %vm1786, %v1771, 0.0
        %v1833 = vadd.f32 %v1831, %v1832
        %v1834 = vrot.slane %v1833, 4
        %v1835 = vadd.f32 %v1833, %v1834
        %v1836 = vrot.slane %v1835, 2
        %v1837 = vadd.f32 %v1835, %v1836
        %v1838 = vrot.slane %v1837, 1
        %v1839 = vadd.f32 %v1837, %v1838
        %v1840 = vsel %vm1784, %v1772, 0.0
        %v1841 = vsel %vm1786, %v1773, 0.0
        %v1842 = vadd.f32 %v1840, %v1841
        %v1843 = vrot.slane %v1842, 4
        %v1844 = vadd.f32 %v1842, %v1843
        %v1845 = vrot.slane %v1844, 2
        %v1846 = vadd.f32 %v1844, %v1845
        %v1847 = vrot.slane %v1846, 1
        %v1848 = vadd.f32 %v1846, %v1847
        %v1849 = vsel %vm1784, %v1774, 0.0
        %v1850 = vsel %vm1786, %v1775, 0.0
        %v1851 = vadd.f32 %v1849, %v1850
        %v1852 = vrot.slane %v1851, 4
        %v1853 = vadd.f32 %v1851, %v1852
        %v1854 = vrot.slane %v1853, 2
        %v1855 = vadd.f32 %v1853, %v1854
        %v1856 = vrot.slane %v1855, 1
        %v1857 = vadd.f32 %v1855, %v1856
        %v1858 = vsel %vm1784, %v1776, 0.0
        %v1859 = vsel %vm1786, %v1777, 0.0
        %v1860 = vadd.f32 %v1858, %v1859
        %v1861 = vrot.slane %v1860, 4
        %v1862 = vadd.f32 %v1860, %v1861
        %v1863 = vrot.slane %v1862, 2
        %v1864 = vadd.f32 %v1862, %v1863
        %v1865 = vrot.slane %v1864, 1
        %v1866 = vadd.f32 %v1864, %v1865
        %v1867 = vsel %vm1784, %v1778, 0.0
        %v1868 = vsel %vm1786, %v1779, 0.0
        %v1869 = vadd.f32 %v1867, %v1868
        %v1870 = vrot.slane %v1869, 4
        %v1871 = vadd.f32 %v1869, %v1870
        %v1872 = vrot.slane %v1871, 2
        %v1873 = vadd.f32 %v1871, %v1872
        %v1874 = vrot.slane %v1873, 1
        %v1875 = vadd.f32 %v1873, %v1874
        %v1876 = vsel %vm1784, %v1780, 0.0
        %v1877 = vsel %vm1786, %v1781, 0.0
        %v1878 = vadd.f32 %v1876, %v1877
        %v1879 = vrot.slane %v1878, 4
        %v1880 = vadd.f32 %v1878, %v1879
        %v1881 = vrot.slane %v1880, 2
        %v1882 = vadd.f32 %v1880, %v1881
        %v1883 = vrot.slane %v1882, 1
        %v1884 = vadd.f32 %v1882, %v1883
        %v1885 = vsel %vm1784, %v1782, 0.0
        %v1886 = vsel %vm1786, %v1783, 0.0
        %v1887 = vadd.f32 %v1885, %v1886
        %v1888 = vrot.slane %v1887, 4
        %v1889 = vadd.f32 %v1887, %v1888
        %v1890 = vrot.slane %v1889, 2
        %v1891 = vadd.f32 %v1889, %v1890
        %v1892 = vrot.slane %v1891, 1
        %v1893 = vadd.f32 %v1891, %v1892
        %vm1906 = vcmask 1041409
        %v1907 = vsel %vm1906, %v1803, %v1794
        %vm1908 = vcmask 1042434
        %v1909 = vsel %vm1908, %v1812, %v1907
        %vm1910 = vcmask 1043459
        %v1911 = vsel %vm1910, %v1821, %v1909
        %vm1912 = vcmask 1044484
        %v1913 = vsel %vm1912, %v1830, %v1911
        %vm1914 = vcmask 1045509
        %v1915 = vsel %vm1914, %v1839, %v1913
        %vm1916 = vcmask 1046534
        %v1917 = vsel %vm1916, %v1848, %v1915
        %vm1918 = vcmask 1047559
        %v1919 = vsel %vm1918, %v1857, %v1917
        %v1920 = vsel %vm1906, %v1875, %v1866
        %v1921 = vsel %vm1908, %v1884, %v1920
        %v1922 = vsel %vm1910, %v1893, %v1921
        %1925 = vst.msk [vmem:[#allocation2] sm:$0xff] %vm1784, %v1919
        %1926 = vst.msk [vmem:[#allocation2 + $0x8] sm:$0xf] %vm1786, %v1922
        %1927 = vset.pattern.permute.xlu0 0
        %1928 = vperm.xlu0 %1927, %v739
        %v1929 = vpop.permute.xlu0 %1928
        %v1931 = vlaneseq
        %v1932 = vshrl.u32 %v1931, 7
        %v1933 = vsub.s32 0, %v1932
        %v1934 = vrot.slane %v708, %v1933
        %v1935 = vmul.f32 %v1929, %v1934
        %1936 = vset.pattern.permute.xlu0 1
        %1937 = vperm.xlu0 %1936, %v739
        %v1938 = vpop.permute.xlu0 %1937
        %v1940 = vlaneseq
        %v1941 = vshrl.u32 %v1940, 7
        %v1942 = vsub.s32 1, %v1941
        %v1943 = vrot.slane %v708, %v1942
        %v1944 = vmul.f32 %v1938, %v1943
        %v1945 = vadd.f32 %v1935, %v1944
        %v1947 = vlaneseq
        %v1948 = vshrl.u32 %v1947, 7
        %v1949 = vsub.s32 0, %v1948
        %v1950 = vrot.slane %v709, %v1949
        %v1952 = vadd.f32 %v1945, %v1950
        %v1953 = vmul.f32 %v1197, %v1360
        %v1954 = vadd.f32 %v1953, %v1952
        %vm1955 = vcmask 523267
        %1956 = vst.msk [vmem:[#allocation4 - $0x3] sm:$0xf8] %vm1955, %v1954
        %1957 = vrot.lane.b32.xlu0 %v739, 126
        %v1958 = vpop.permute.xlu0 %1957
        %vm1960 = vcmask 7171
        %1961 = vst.msk [vmem:[#allocation5 - $0x3] sm:$0xf8] %vm1960, %v1958
        %s1962 = scalar_lea.vmem %s697, 16
        %v1963 = vld [vmem:[%s1962] sm:$0xff]
        %v1964 = vld [vmem:[%s1962 + $0x8] sm:$0xf]
        %v1965 = vmul.f32 %v1963, 3.1415927
        %v1966 = vmul.f32 %v1964, 3.1415927
        %v1967 = vand.u32 2147483647, %v1965
        %vm1968 = vcmp.le.f32.partialorder %v1967, 0.7853982
        %vm1969 = vcmp.lt.s32.totalorder %v1965, 0
        %v1970 = vand.u32 %v1965, 2139095040
        %v1971 = vshrl.u32 %v1970, 23
        %v1972 = vsub.s32 %v1971, 127
        %v1973 = vand.u32 2147483647, %v1965
        %v1974 = vand.u32 %v1973, 8388607
        %v1975 = vor.u32 %v1974, 8388608
        %v1976 = vsub.s32 0, %v1975
        %v1977 = vadd.s32 %v1972, 1
        %vm1978 = vcmp.gt.s32.totalorder %v1977, 0
        %v1979 = vsel %vm1978, %v1977, 0
        %v1980 = vshrl.u32 %v1979, 5
        %v1981 = vand.u32 %v1979, 31
        %v1982 = vsub.s32 32, %v1981
        %v1983 = vshrl.u32 683565275, %v1982
        %v1984 = vshll.u32 683565275, %v1981
        %v1985 = vshrl.u32 2475754826, %v1982
        %v1986 = vor.u32 %v1984, %v1985
        %v1987 = vshll.u32 2475754826, %v1981
        %v1988 = vshrl.u32 2131351028, %v1982
        %v1989 = vor.u32 %v1987, %v1988
        %v1990 = vshll.u32 2131351028, %v1981
        %v1991 = vshrl.u32 2102212464, %v1982
        %v1992 = vor.u32 %v1990, %v1991
        %v1993 = vshll.u32 2102212464, %v1981
        %v1994 = vshrl.u32 920167782, %v1982
        %v1995 = vor.u32 %v1993, %v1994
        %v1996 = vshll.u32 920167782, %v1981
        %v1997 = vshrl.u32 1326507024, %v1982
        %v1998 = vor.u32 %v1996, %v1997
        %vm1999 = vcmp.lt.s32.totalorder %v1980, 1
        %vm2000 = vcmp.lt.s32.totalorder %v1980, 2
        %vm2001 = vcmp.lt.s32.totalorder %v1980, 3
        %vm2002 = vcmp.lt.s32.totalorder %v1980, 4
        %v2003 = vsel %vm1999, %v1983, %v1986
        %v2004 = vsel %vm2002, %v1992, 2102212464
        %v2005 = vsel %vm2001, %v1989, %v2004
        %v2006 = vsel %vm2000, %v2003, %v2005
        %v2007 = vsel %vm1999, %v1986, %v1989
        %v2008 = vsel %vm2002, %v1995, 920167782
        %v2009 = vsel %vm2001, %v1992, %v2008
        %v2010 = vsel %vm2000, %v2007, %v2009
        %v2011 = vsel %vm1999, %v1989, %v1992
        %v2012 = vsel %vm2002, %v1998, 1326507024
        %v2013 = vsel %vm2001, %v1995, %v2012
        %v2014 = vsel %vm2000, %v2011, %v2013
        %v2015 = vshll.u32 %v1975, 8
        %v2016 = vmul.u32.u64.compose %v2015, %v2014
        %v2017 = vextract.low.u32 %v2016
        %v2018 = vextract.high.u32 %v2016
        %v2019 = vmul.u32.u64.compose %v2015, %v2010
        %v2020 = vextract.low.u32 %v2019
        %v2021 = vextract.high.u32 %v2019
        %v2022 = vmul.u32 %v2015, %v2006
        %v2023 = vadd.s32 %v2018, %v2020
        %vm2024 = vc.u32 %v2018, %v2020
        %v2025 = vadd.s32 %v2021, 1
        %v2026 = vsel %vm2024, %v2025, %v2021
        %v2027 = vadd.s32 %v2022, %v2026
        %v2028 = vadd.s32 %v2027, 536870912
        %v2029 = vshrl.u32 %v2028, 30
        %v2030 = vshll.u32 %v2029, 30
        %v2031 = vsub.s32 %v2027, %v2030
        %vm2032 = vcmp.lt.s32.totalorder %v2031, 0
        %v2033 = vsub.s32 0, %v2031
        %v2034 = vsel %vm2032, %v2033, %v2031
        %v2035 = vclz %v2034
        %v2036 = vsub.s32 %v2035, 2
        %vm2037 = vcmp.gt.s32.totalorder 0, %v2036
        %v2038 = vsel %vm2037, 0, %v2036
        %v2039 = vsub.s32 32, %v2038
        %v2040 = vshll.u32 %v2031, %v2038
        %v2041 = vshrl.u32 %v2023, %v2039
        %v2042 = vor.u32 %v2040, %v2041
        %v2043 = vsub.s32 4294967266, %v2038
        %v2044 = vadd.s32 %v2043, 127
        %v2045 = vshll.u32 %v2044, 23
        %v2046 = vor.u32 4788187, %v2045
        %v2047 = vand.u32 2147483647, %v2046
        %v2049 = vcvt.s32.f32 %v2042
        %v2050 = vmul.f32 %v2049, %v2047
        %v2051 = vxor.u32 %v2050, 2147483648
        %v2052 = vsel %vm1969, %v2051, %v2050
        %v2053 = vsub.s32 4, %v2029
        %v2054 = vsel %vm1969, %v2053, %v2029
        %v2055 = vsel %vm1968, %v1965, %v2052
        %v2056 = vsel %vm1968, 0, %v2054
        %v2057 = vcosq.f32.pop %v2055
        %v2058 = vsinq.f32.pop %v2055
        %vm2059 = vweird.f32 %v1965
        %v2060 = vadd.s32 %v2056, 3
        %v2061 = vand.u32 %v2060, 3
        %vm2062 = vcmp.lt.s32.totalorder %v2061, 2
        %vm2063 = vcmp.eq.s32.totalorder %v2061, 0
        %v2064 = vxor.u32 %v2058, 2147483648
        %v2065 = vsel %vm2063, %v2057, %v2064
        %vm2066 = vcmp.eq.s32.totalorder %v2061, 2
        %v2067 = vxor.u32 %v2057, 2147483648
        %v2068 = vsel %vm2066, %v2067, %v2058
        %v2069 = vsel %vm2062, %v2065, %v2068
        %v2070 = vsel %vm2059, nan, %v2069
        %v2071 = vand.u32 2147483647, %v1966
        %vm2072 = vcmp.le.f32.partialorder %v2071, 0.7853982
        %vm2073 = vcmp.lt.s32.totalorder %v1966, 0
        %v2074 = vand.u32 %v1966, 2139095040
        %v2075 = vshrl.u32 %v2074, 23
        %v2076 = vsub.s32 %v2075, 127
        %v2077 = vand.u32 2147483647, %v1966
        %v2078 = vand.u32 %v2077, 8388607
        %v2079 = vor.u32 %v2078, 8388608
        %v2080 = vsub.s32 0, %v2079
        %v2081 = vadd.s32 %v2076, 1
        %vm2082 = vcmp.gt.s32.totalorder %v2081, 0
        %v2083 = vsel %vm2082, %v2081, 0
        %v2084 = vshrl.u32 %v2083, 5
        %v2085 = vand.u32 %v2083, 31
        %v2086 = vsub.s32 32, %v2085
        %v2087 = vshrl.u32 683565275, %v2086
        %v2088 = vshll.u32 683565275, %v2085
        %v2089 = vshrl.u32 2475754826, %v2086
        %v2090 = vor.u32 %v2088, %v2089
        %v2091 = vshll.u32 2475754826, %v2085
        %v2092 = vshrl.u32 2131351028, %v2086
        %v2093 = vor.u32 %v2091, %v2092
        %v2094 = vshll.u32 2131351028, %v2085
        %v2095 = vshrl.u32 2102212464, %v2086
        %v2096 = vor.u32 %v2094, %v2095
        %v2097 = vshll.u32 2102212464, %v2085
        %v2098 = vshrl.u32 920167782, %v2086
        %v2099 = vor.u32 %v2097, %v2098
        %v2100 = vshll.u32 920167782, %v2085
        %v2101 = vshrl.u32 1326507024, %v2086
        %v2102 = vor.u32 %v2100, %v2101
        %vm2103 = vcmp.lt.s32.totalorder %v2084, 1
        %vm2104 = vcmp.lt.s32.totalorder %v2084, 2
        %vm2105 = vcmp.lt.s32.totalorder %v2084, 3
        %vm2106 = vcmp.lt.s32.totalorder %v2084, 4
        %v2107 = vsel %vm2103, %v2087, %v2090
        %v2108 = vsel %vm2106, %v2096, 2102212464
        %v2109 = vsel %vm2105, %v2093, %v2108
        %v2110 = vsel %vm2104, %v2107, %v2109
        %v2111 = vsel %vm2103, %v2090, %v2093
        %v2112 = vsel %vm2106, %v2099, 920167782
        %v2113 = vsel %vm2105, %v2096, %v2112
        %v2114 = vsel %vm2104, %v2111, %v2113
        %v2115 = vsel %vm2103, %v2093, %v2096
        %v2116 = vsel %vm2106, %v2102, 1326507024
        %v2117 = vsel %vm2105, %v2099, %v2116
        %v2118 = vsel %vm2104, %v2115, %v2117
        %v2119 = vshll.u32 %v2079, 8
        %v2120 = vmul.u32.u64.compose %v2119, %v2118
        %v2121 = vextract.low.u32 %v2120
        %v2122 = vextract.high.u32 %v2120
        %v2123 = vmul.u32.u64.compose %v2119, %v2114
        %v2124 = vextract.low.u32 %v2123
        %v2125 = vextract.high.u32 %v2123
        %v2126 = vmul.u32 %v2119, %v2110
        %v2127 = vadd.s32 %v2122, %v2124
        %vm2128 = vc.u32 %v2122, %v2124
        %v2129 = vadd.s32 %v2125, 1
        %v2130 = vsel %vm2128, %v2129, %v2125
        %v2131 = vadd.s32 %v2126, %v2130
        %v2132 = vadd.s32 %v2131, 536870912
        %v2133 = vshrl.u32 %v2132, 30
        %v2134 = vshll.u32 %v2133, 30
        %v2135 = vsub.s32 %v2131, %v2134
        %vm2136 = vcmp.lt.s32.totalorder %v2135, 0
        %v2137 = vsub.s32 0, %v2135
        %v2138 = vsel %vm2136, %v2137, %v2135
        %v2139 = vclz %v2138
        %v2140 = vsub.s32 %v2139, 2
        %vm2141 = vcmp.gt.s32.totalorder 0, %v2140
        %v2142 = vsel %vm2141, 0, %v2140
        %v2143 = vsub.s32 32, %v2142
        %v2144 = vshll.u32 %v2135, %v2142
        %v2145 = vshrl.u32 %v2127, %v2143
        %v2146 = vor.u32 %v2144, %v2145
        %v2147 = vsub.s32 4294967266, %v2142
        %v2148 = vadd.s32 %v2147, 127
        %v2149 = vshll.u32 %v2148, 23
        %v2150 = vor.u32 4788187, %v2149
        %v2151 = vand.u32 2147483647, %v2150
        %v2153 = vcvt.s32.f32 %v2146
        %v2154 = vmul.f32 %v2153, %v2151
        %v2155 = vxor.u32 %v2154, 2147483648
        %v2156 = vsel %vm2073, %v2155, %v2154
        %v2157 = vsub.s32 4, %v2133
        %v2158 = vsel %vm2073, %v2157, %v2133
        %v2159 = vsel %vm2072, %v1966, %v2156
        %v2160 = vsel %vm2072, 0, %v2158
        %v2161 = vcosq.f32.pop %v2159
        %v2162 = vsinq.f32.pop %v2159
        %vm2163 = vweird.f32 %v1966
        %v2164 = vadd.s32 %v2160, 3
        %v2165 = vand.u32 %v2164, 3
        %vm2166 = vcmp.lt.s32.totalorder %v2165, 2
        %vm2167 = vcmp.eq.s32.totalorder %v2165, 0
        %v2168 = vxor.u32 %v2162, 2147483648
        %v2169 = vsel %vm2167, %v2161, %v2168
        %vm2170 = vcmp.eq.s32.totalorder %v2165, 2
        %v2171 = vxor.u32 %v2161, 2147483648
        %v2172 = vsel %vm2170, %v2171, %v2162
        %v2173 = vsel %vm2166, %v2169, %v2172
        %v2174 = vsel %vm2163, nan, %v2173
        %2176 = vset.pattern.permute.xlu0 3
        %2177 = vperm.xlu0 %2176, %v2070
        %v2178 = vpop.permute.xlu0 %2177
        %2181 = vset.pattern.permute.xlu0 3
        %2182 = vperm.xlu0 %2181, %v2174
        %v2183 = vpop.permute.xlu0 %2182
        %v2185 = vmul.f32 %v2178, %v964
        %v2186 = vmul.f32 %v2183, %v964
        %v2187 = vand.u32 2147483647, %v1965
        %vm2188 = vcmp.le.f32.partialorder %v2187, 0.7853982
        %vm2189 = vcmp.lt.s32.totalorder %v1965, 0
        %v2190 = vand.u32 %v1965, 2139095040
        %v2191 = vshrl.u32 %v2190, 23
        %v2192 = vsub.s32 %v2191, 127
        %v2193 = vand.u32 2147483647, %v1965
        %v2194 = vand.u32 %v2193, 8388607
        %v2195 = vor.u32 %v2194, 8388608
        %v2196 = vsub.s32 0, %v2195
        %v2197 = vadd.s32 %v2192, 1
        %vm2198 = vcmp.gt.s32.totalorder %v2197, 0
        %v2199 = vsel %vm2198, %v2197, 0
        %v2200 = vshrl.u32 %v2199, 5
        %v2201 = vand.u32 %v2199, 31
        %v2202 = vsub.s32 32, %v2201
        %v2203 = vshrl.u32 683565275, %v2202
        %v2204 = vshll.u32 683565275, %v2201
        %v2205 = vshrl.u32 2475754826, %v2202
        %v2206 = vor.u32 %v2204, %v2205
        %v2207 = vshll.u32 2475754826, %v2201
        %v2208 = vshrl.u32 2131351028, %v2202
        %v2209 = vor.u32 %v2207, %v2208
        %v2210 = vshll.u32 2131351028, %v2201
        %v2211 = vshrl.u32 2102212464, %v2202
        %v2212 = vor.u32 %v2210, %v2211
        %v2213 = vshll.u32 2102212464, %v2201
        %v2214 = vshrl.u32 920167782, %v2202
        %v2215 = vor.u32 %v2213, %v2214
        %v2216 = vshll.u32 920167782, %v2201
        %v2217 = vshrl.u32 1326507024, %v2202
        %v2218 = vor.u32 %v2216, %v2217
        %vm2219 = vcmp.lt.s32.totalorder %v2200, 1
        %vm2220 = vcmp.lt.s32.totalorder %v2200, 2
        %vm2221 = vcmp.lt.s32.totalorder %v2200, 3
        %vm2222 = vcmp.lt.s32.totalorder %v2200, 4
        %v2223 = vsel %vm2219, %v2203, %v2206
        %v2224 = vsel %vm2222, %v2212, 2102212464
        %v2225 = vsel %vm2221, %v2209, %v2224
        %v2226 = vsel %vm2220, %v2223, %v2225
        %v2227 = vsel %vm2219, %v2206, %v2209
        %v2228 = vsel %vm2222, %v2215, 920167782
        %v2229 = vsel %vm2221, %v2212, %v2228
        %v2230 = vsel %vm2220, %v2227, %v2229
        %v2231 = vsel %vm2219, %v2209, %v2212
        %v2232 = vsel %vm2222, %v2218, 1326507024
        %v2233 = vsel %vm2221, %v2215, %v2232
        %v2234 = vsel %vm2220, %v2231, %v2233
        %v2235 = vshll.u32 %v2195, 8
        %v2236 = vmul.u32.u64.compose %v2235, %v2234
        %v2237 = vextract.low.u32 %v2236
        %v2238 = vextract.high.u32 %v2236
        %v2239 = vmul.u32.u64.compose %v2235, %v2230
        %v2240 = vextract.low.u32 %v2239
        %v2241 = vextract.high.u32 %v2239
        %v2242 = vmul.u32 %v2235, %v2226
        %v2243 = vadd.s32 %v2238, %v2240
        %vm2244 = vc.u32 %v2238, %v2240
        %v2245 = vadd.s32 %v2241, 1
        %v2246 = vsel %vm2244, %v2245, %v2241
        %v2247 = vadd.s32 %v2242, %v2246
        %v2248 = vadd.s32 %v2247, 536870912
        %v2249 = vshrl.u32 %v2248, 30
        %v2250 = vshll.u32 %v2249, 30
        %v2251 = vsub.s32 %v2247, %v2250
        %vm2252 = vcmp.lt.s32.totalorder %v2251, 0
        %v2253 = vsub.s32 0, %v2251
        %v2254 = vsel %vm2252, %v2253, %v2251
        %v2255 = vclz %v2254
        %v2256 = vsub.s32 %v2255, 2
        %vm2257 = vcmp.gt.s32.totalorder 0, %v2256
        %v2258 = vsel %vm2257, 0, %v2256
        %v2259 = vsub.s32 32, %v2258
        %v2260 = vshll.u32 %v2251, %v2258
        %v2261 = vshrl.u32 %v2243, %v2259
        %v2262 = vor.u32 %v2260, %v2261
        %v2263 = vsub.s32 4294967266, %v2258
        %v2264 = vadd.s32 %v2263, 127
        %v2265 = vshll.u32 %v2264, 23
        %v2266 = vor.u32 4788187, %v2265
        %v2267 = vand.u32 2147483647, %v2266
        %v2269 = vcvt.s32.f32 %v2262
        %v2270 = vmul.f32 %v2269, %v2267
        %v2271 = vxor.u32 %v2270, 2147483648
        %v2272 = vsel %vm2189, %v2271, %v2270
        %v2273 = vsub.s32 4, %v2249
        %v2274 = vsel %vm2189, %v2273, %v2249
        %v2275 = vsel %vm2188, %v1965, %v2272
        %v2276 = vsel %vm2188, 0, %v2274
        %v2277 = vcosq.f32.pop %v2275
        %v2278 = vsinq.f32.pop %v2275
        %vm2279 = vweird.f32 %v1965
        %v2280 = vand.u32 %v2276, 3
        %vm2281 = vcmp.lt.s32.totalorder %v2280, 2
        %vm2282 = vcmp.eq.s32.totalorder %v2280, 0
        %v2283 = vxor.u32 %v2278, 2147483648
        %v2284 = vsel %vm2282, %v2277, %v2283
        %vm2285 = vcmp.eq.s32.totalorder %v2280, 2
        %v2286 = vxor.u32 %v2277, 2147483648
        %v2287 = vsel %vm2285, %v2286, %v2278
        %v2288 = vsel %vm2281, %v2284, %v2287
        %v2289 = vsel %vm2279, nan, %v2288
        %v2290 = vand.u32 2147483647, %v1966
        %vm2291 = vcmp.le.f32.partialorder %v2290, 0.7853982
        %vm2292 = vcmp.lt.s32.totalorder %v1966, 0
        %v2293 = vand.u32 %v1966, 2139095040
        %v2294 = vshrl.u32 %v2293, 23
        %v2295 = vsub.s32 %v2294, 127
        %v2296 = vand.u32 2147483647, %v1966
        %v2297 = vand.u32 %v2296, 8388607
        %v2298 = vor.u32 %v2297, 8388608
        %v2299 = vsub.s32 0, %v2298
        %v2300 = vadd.s32 %v2295, 1
        %vm2301 = vcmp.gt.s32.totalorder %v2300, 0
        %v2302 = vsel %vm2301, %v2300, 0
        %v2303 = vshrl.u32 %v2302, 5
        %v2304 = vand.u32 %v2302, 31
        %v2305 = vsub.s32 32, %v2304
        %v2306 = vshrl.u32 683565275, %v2305
        %v2307 = vshll.u32 683565275, %v2304
        %v2308 = vshrl.u32 2475754826, %v2305
        %v2309 = vor.u32 %v2307, %v2308
        %v2310 = vshll.u32 2475754826, %v2304
        %v2311 = vshrl.u32 2131351028, %v2305
        %v2312 = vor.u32 %v2310, %v2311
        %v2313 = vshll.u32 2131351028, %v2304
        %v2314 = vshrl.u32 2102212464, %v2305
        %v2315 = vor.u32 %v2313, %v2314
        %v2316 = vshll.u32 2102212464, %v2304
        %v2317 = vshrl.u32 920167782, %v2305
        %v2318 = vor.u32 %v2316, %v2317
        %v2319 = vshll.u32 920167782, %v2304
        %v2320 = vshrl.u32 1326507024, %v2305
        %v2321 = vor.u32 %v2319, %v2320
        %vm2322 = vcmp.lt.s32.totalorder %v2303, 1
        %vm2323 = vcmp.lt.s32.totalorder %v2303, 2
        %vm2324 = vcmp.lt.s32.totalorder %v2303, 3
        %vm2325 = vcmp.lt.s32.totalorder %v2303, 4
        %v2326 = vsel %vm2322, %v2306, %v2309
        %v2327 = vsel %vm2325, %v2315, 2102212464
        %v2328 = vsel %vm2324, %v2312, %v2327
        %v2329 = vsel %vm2323, %v2326, %v2328
        %v2330 = vsel %vm2322, %v2309, %v2312
        %v2331 = vsel %vm2325, %v2318, 920167782
        %v2332 = vsel %vm2324, %v2315, %v2331
        %v2333 = vsel %vm2323, %v2330, %v2332
        %v2334 = vsel %vm2322, %v2312, %v2315
        %v2335 = vsel %vm2325, %v2321, 1326507024
        %v2336 = vsel %vm2324, %v2318, %v2335
        %v2337 = vsel %vm2323, %v2334, %v2336
        %v2338 = vshll.u32 %v2298, 8
        %v2339 = vmul.u32.u64.compose %v2338, %v2337
        %v2340 = vextract.low.u32 %v2339
        %v2341 = vextract.high.u32 %v2339
        %v2342 = vmul.u32.u64.compose %v2338, %v2333
        %v2343 = vextract.low.u32 %v2342
        %v2344 = vextract.high.u32 %v2342
        %v2345 = vmul.u32 %v2338, %v2329
        %v2346 = vadd.s32 %v2341, %v2343
        %vm2347 = vc.u32 %v2341, %v2343
        %v2348 = vadd.s32 %v2344, 1
        %v2349 = vsel %vm2347, %v2348, %v2344
        %v2350 = vadd.s32 %v2345, %v2349
        %v2351 = vadd.s32 %v2350, 536870912
        %v2352 = vshrl.u32 %v2351, 30
        %v2353 = vshll.u32 %v2352, 30
        %v2354 = vsub.s32 %v2350, %v2353
        %vm2355 = vcmp.lt.s32.totalorder %v2354, 0
        %v2356 = vsub.s32 0, %v2354
        %v2357 = vsel %vm2355, %v2356, %v2354
        %v2358 = vclz %v2357
        %v2359 = vsub.s32 %v2358, 2
        %vm2360 = vcmp.gt.s32.totalorder 0, %v2359
        %v2361 = vsel %vm2360, 0, %v2359
        %v2362 = vsub.s32 32, %v2361
        %v2363 = vshll.u32 %v2354, %v2361
        %v2364 = vshrl.u32 %v2346, %v2362
        %v2365 = vor.u32 %v2363, %v2364
        %v2366 = vsub.s32 4294967266, %v2361
        %v2367 = vadd.s32 %v2366, 127
        %v2368 = vshll.u32 %v2367, 23
        %v2369 = vor.u32 4788187, %v2368
        %v2370 = vand.u32 2147483647, %v2369
        %v2372 = vcvt.s32.f32 %v2365
        %v2373 = vmul.f32 %v2372, %v2370
        %v2374 = vxor.u32 %v2373, 2147483648
        %v2375 = vsel %vm2292, %v2374, %v2373
        %v2376 = vsub.s32 4, %v2352
        %v2377 = vsel %vm2292, %v2376, %v2352
        %v2378 = vsel %vm2291, %v1966, %v2375
        %v2379 = vsel %vm2291, 0, %v2377
        %v2380 = vcosq.f32.pop %v2378
        %v2381 = vsinq.f32.pop %v2378
        %vm2382 = vweird.f32 %v1966
        %v2383 = vand.u32 %v2379, 3
        %vm2384 = vcmp.lt.s32.totalorder %v2383, 2
        %vm2385 = vcmp.eq.s32.totalorder %v2383, 0
        %v2386 = vxor.u32 %v2381, 2147483648
        %v2387 = vsel %vm2385, %v2380, %v2386
        %vm2388 = vcmp.eq.s32.totalorder %v2383, 2
        %v2389 = vxor.u32 %v2380, 2147483648
        %v2390 = vsel %vm2388, %v2389, %v2381
        %v2391 = vsel %vm2384, %v2387, %v2390
        %v2392 = vsel %vm2382, nan, %v2391
        %2394 = vset.pattern.permute.xlu0 3
        %2395 = vperm.xlu0 %2394, %v2289
        %v2396 = vpop.permute.xlu0 %2395
        %2399 = vset.pattern.permute.xlu0 3
        %2400 = vperm.xlu0 %2399, %v2392
        %v2401 = vpop.permute.xlu0 %2400
        %v2403 = vmul.f32 %v2396, %v1186
        %v2404 = vmul.f32 %v2401, %v1186
        %v2405 = vadd.f32 %v2185, %v2403
        %v2406 = vadd.f32 %v2186, %v2404
        %v2407 = vadd.f32 %v2405, %v1195
        %v2408 = vadd.f32 %v2406, %v1195
        %v2411 = vcombine.high %v1963, %v1963
        %v2413 = vunpack.c.l.s4 1966171168
        %v2414 = vunpack.c.0.s8 %v2413
        %v2415 = vlaneseq
        %v2416 = vshrl.u32 %v2415, 7
        %v2417 = vsub.s32 %v2414, %v2416
        %v2418 = vrot.slane %v1963, %v2417
        %v2420 = vunpack.c.l.s4 1966171168
        %v2421 = vunpack.c.0.s8 %v2420
        %v2422 = vlaneseq
        %v2423 = vshrl.u32 %v2422, 7
        %v2424 = vsub.s32 %v2421, %v2423
        %v2425 = vrot.slane %v2411, %v2424
        %v2426 = vcombine.high %v2418, %v2418
        %v2427 = vcombine.high %v2425, %v2425
        %v2429 = vunpack.c.l.s4 1966171168
        %v2430 = vunpack.c.0.s8 %v2429
        %v2431 = vlaneseq
        %v2432 = vshrl.u32 %v2431, 7
        %v2433 = vsub.s32 %v2430, %v2432
        %v2434 = vrot.slane %v2418, %v2433
        %v2436 = vunpack.c.l.s4 1966171168
        %v2437 = vunpack.c.0.s8 %v2436
        %v2438 = vlaneseq
        %v2439 = vshrl.u32 %v2438, 7
        %v2440 = vsub.s32 %v2437, %v2439
        %v2441 = vrot.slane %v2425, %v2440
        %v2443 = vunpack.c.l.s4 1966171168
        %v2444 = vunpack.c.0.s8 %v2443
        %v2445 = vlaneseq
        %v2446 = vshrl.u32 %v2445, 7
        %v2447 = vsub.s32 %v2444, %v2446
        %v2448 = vrot.slane %v2426, %v2447
        %v2450 = vunpack.c.l.s4 1966171168
        %v2451 = vunpack.c.0.s8 %v2450
        %v2452 = vlaneseq
        %v2453 = vshrl.u32 %v2452, 7
        %v2454 = vsub.s32 %v2451, %v2453
        %v2455 = vrot.slane %v2427, %v2454
        %v2456 = vcombine.high %v2434, %v2434
        %v2457 = vcombine.high %v2441, %v2441
        %v2458 = vcombine.high %v2448, %v2448
        %v2459 = vcombine.high %v2455, %v2455
        %v2461 = vunpack.c.l.s4 1966171168
        %v2462 = vunpack.c.0.s8 %v2461
        %v2463 = vlaneseq
        %v2464 = vshrl.u32 %v2463, 7
        %v2465 = vsub.s32 %v2462, %v2464
        %v2466 = vrot.slane %v1964, %v2465
        %v2467 = vcombine.high %v2466, %v2466
        %v2469 = vunpack.c.l.s4 1966171168
        %v2470 = vunpack.c.0.s8 %v2469
        %v2471 = vlaneseq
        %v2472 = vshrl.u32 %v2471, 7
        %v2473 = vsub.s32 %v2470, %v2472
        %v2474 = vrot.slane %v2466, %v2473
        %v2476 = vunpack.c.l.s4 1966171168
        %v2477 = vunpack.c.0.s8 %v2476
        %v2478 = vlaneseq
        %v2479 = vshrl.u32 %v2478, 7
        %v2480 = vsub.s32 %v2477, %v2479
        %v2481 = vrot.slane %v2467, %v2480
        %v2482 = vcombine.high %v2474, %v2474
        %v2483 = vcombine.high %v2481, %v2481
        %v2484 = vlaneseq
        %v2485 = vshrl.u32 %v2484, 7
        %v2486 = vsub.s32 0, %v2485
        %v2487 = vrot.slane %v2434, %v2486
        %v2488 = vlaneseq
        %v2489 = vshrl.u32 %v2488, 7
        %v2490 = vsub.s32 0, %v2489
        %v2491 = vrot.slane %v2448, %v2490
        %v2492 = vlaneseq
        %v2493 = vshrl.u32 %v2492, 7
        %v2494 = vsub.s32 0, %v2493
        %v2495 = vrot.slane %v2456, %v2494
        %v2496 = vlaneseq
        %v2497 = vshrl.u32 %v2496, 7
        %v2498 = vsub.s32 0, %v2497
        %v2499 = vrot.slane %v2458, %v2498
        %v2500 = vlaneseq
        %v2501 = vshrl.u32 %v2500, 7
        %v2502 = vsub.s32 0, %v2501
        %v2503 = vrot.slane %v2441, %v2502
        %v2504 = vlaneseq
        %v2505 = vshrl.u32 %v2504, 7
        %v2506 = vsub.s32 0, %v2505
        %v2507 = vrot.slane %v2455, %v2506
        %v2508 = vlaneseq
        %v2509 = vshrl.u32 %v2508, 7
        %v2510 = vsub.s32 0, %v2509
        %v2511 = vrot.slane %v2457, %v2510
        %v2512 = vlaneseq
        %v2513 = vshrl.u32 %v2512, 7
        %v2514 = vsub.s32 0, %v2513
        %v2515 = vrot.slane %v2459, %v2514
        %v2516 = vlaneseq
        %v2517 = vshrl.u32 %v2516, 7
        %v2518 = vsub.s32 0, %v2517
        %v2519 = vrot.slane %v2474, %v2518
        %v2520 = vlaneseq
        %v2521 = vshrl.u32 %v2520, 7
        %v2522 = vsub.s32 0, %v2521
        %v2523 = vrot.slane %v2481, %v2522
        %v2524 = vlaneseq
        %v2525 = vshrl.u32 %v2524, 7
        %v2526 = vsub.s32 0, %v2525
        %v2527 = vrot.slane %v2482, %v2526
        %v2528 = vlaneseq
        %v2529 = vshrl.u32 %v2528, 7
        %v2530 = vsub.s32 0, %v2529
        %v2531 = vrot.slane %v2483, %v2530
        %v2544 = vsub.f32 %v1963, %v2487
        %v2545 = vsub.f32 %v1964, %v2487
        %v2546 = vsub.f32 %v1963, %v2491
        %v2547 = vsub.f32 %v1964, %v2491
        %v2548 = vsub.f32 %v1963, %v2495
        %v2549 = vsub.f32 %v1964, %v2495
        %v2550 = vsub.f32 %v1963, %v2499
        %v2551 = vsub.f32 %v1964, %v2499
        %v2552 = vsub.f32 %v1963, %v2503
        %v2553 = vsub.f32 %v1964, %v2503
        %v2554 = vsub.f32 %v1963, %v2507
        %v2555 = vsub.f32 %v1964, %v2507
        %v2556 = vsub.f32 %v1963, %v2511
        %v2557 = vsub.f32 %v1964, %v2511
        %v2558 = vsub.f32 %v1963, %v2515
        %v2559 = vsub.f32 %v1964, %v2515
        %v2560 = vsub.f32 %v1963, %v2519
        %v2561 = vsub.f32 %v1964, %v2519
        %v2562 = vsub.f32 %v1963, %v2523
        %v2563 = vsub.f32 %v1964, %v2523
        %v2564 = vsub.f32 %v1963, %v2527
        %v2565 = vsub.f32 %v1964, %v2527
        %v2566 = vsub.f32 %v1963, %v2531
        %v2567 = vsub.f32 %v1964, %v2531
        %2568 = vset.pattern.permute.xlu0 2
        %2569 = vperm.xlu0 %2568, %v1963
        %v2570 = vpop.permute.xlu0 %2569
        %2572 = vset.pattern.permute.xlu0 2
        %2573 = vperm.xlu0 %2572, %v1964
        %v2574 = vpop.permute.xlu0 %2573
        %v2576 = vmul.f32 %v2570, %v1370
        %v2577 = vmul.f32 %v2574, %v1370
        %v2578 = vadd.f32 %v2576, %v1378
        %v2579 = vadd.f32 %v2577, %v1378
        %v2580 = vadd.f32 %v1391, %v2407
        %v2581 = vadd.f32 %v1391, %v2408
        %v2582 = vmul.f32 %v731, %v2580
        %v2583 = vmul.f32 %v732, %v2581
        %v2584 = vmul.f32 %v2582, %v2570
        %v2585 = vmul.f32 %v2583, %v2574
        %v2586 = vadd.f32 %v1386, %v2584
        %v2587 = vadd.f32 %v1387, %v2585
        %v2588 = vadd.f32 %v1403, %v2578
        %v2589 = vadd.f32 %v1403, %v2579
        %v2590 = vmul.f32 %v737, %v2588
        %v2591 = vmul.f32 %v738, %v2589
        %v2592 = vadd.f32 %v2586, %v2590
        %v2593 = vadd.f32 %v2587, %v2591
        %2595 = vset.pattern.permute.xlu0 0
        %2596 = vperm.xlu0 %2595, %v2544
        %v2597 = vpop.permute.xlu0 %2596
        %2600 = vset.pattern.permute.xlu0 0
        %2601 = vperm.xlu0 %2600, %v2545
        %v2602 = vpop.permute.xlu0 %2601
        %2605 = vset.pattern.permute.xlu0 0
        %2606 = vperm.xlu0 %2605, %v2546
        %v2607 = vpop.permute.xlu0 %2606
        %2610 = vset.pattern.permute.xlu0 0
        %2611 = vperm.xlu0 %2610, %v2547
        %v2612 = vpop.permute.xlu0 %2611
        %2615 = vset.pattern.permute.xlu0 0
        %2616 = vperm.xlu0 %2615, %v2548
        %v2617 = vpop.permute.xlu0 %2616
        %2620 = vset.pattern.permute.xlu0 0
        %2621 = vperm.xlu0 %2620, %v2549
        %v2622 = vpop.permute.xlu0 %2621
        %2625 = vset.pattern.permute.xlu0 0
        %2626 = vperm.xlu0 %2625, %v2550
        %v2627 = vpop.permute.xlu0 %2626
        %2630 = vset.pattern.permute.xlu0 0
        %2631 = vperm.xlu0 %2630, %v2551
        %v2632 = vpop.permute.xlu0 %2631
        %2635 = vset.pattern.permute.xlu0 0
        %2636 = vperm.xlu0 %2635, %v2552
        %v2637 = vpop.permute.xlu0 %2636
        %2640 = vset.pattern.permute.xlu0 0
        %2641 = vperm.xlu0 %2640, %v2553
        %v2642 = vpop.permute.xlu0 %2641
        %2645 = vset.pattern.permute.xlu0 0
        %2646 = vperm.xlu0 %2645, %v2554
        %v2647 = vpop.permute.xlu0 %2646
        %2650 = vset.pattern.permute.xlu0 0
        %2651 = vperm.xlu0 %2650, %v2555
        %v2652 = vpop.permute.xlu0 %2651
        %2655 = vset.pattern.permute.xlu0 0
        %2656 = vperm.xlu0 %2655, %v2556
        %v2657 = vpop.permute.xlu0 %2656
        %2660 = vset.pattern.permute.xlu0 0
        %2661 = vperm.xlu0 %2660, %v2557
        %v2662 = vpop.permute.xlu0 %2661
        %2665 = vset.pattern.permute.xlu0 0
        %2666 = vperm.xlu0 %2665, %v2558
        %v2667 = vpop.permute.xlu0 %2666
        %2670 = vset.pattern.permute.xlu0 0
        %2671 = vperm.xlu0 %2670, %v2559
        %v2672 = vpop.permute.xlu0 %2671
        %2675 = vset.pattern.permute.xlu0 0
        %2676 = vperm.xlu0 %2675, %v2560
        %v2677 = vpop.permute.xlu0 %2676
        %2680 = vset.pattern.permute.xlu0 0
        %2681 = vperm.xlu0 %2680, %v2561
        %v2682 = vpop.permute.xlu0 %2681
        %2685 = vset.pattern.permute.xlu0 0
        %2686 = vperm.xlu0 %2685, %v2562
        %v2687 = vpop.permute.xlu0 %2686
        %2690 = vset.pattern.permute.xlu0 0
        %2691 = vperm.xlu0 %2690, %v2563
        %v2692 = vpop.permute.xlu0 %2691
        %2695 = vset.pattern.permute.xlu0 0
        %2696 = vperm.xlu0 %2695, %v2564
        %v2697 = vpop.permute.xlu0 %2696
        %2700 = vset.pattern.permute.xlu0 0
        %2701 = vperm.xlu0 %2700, %v2565
        %v2702 = vpop.permute.xlu0 %2701
        %2705 = vset.pattern.permute.xlu0 0
        %2706 = vperm.xlu0 %2705, %v2566
        %v2707 = vpop.permute.xlu0 %2706
        %2710 = vset.pattern.permute.xlu0 0
        %2711 = vperm.xlu0 %2710, %v2567
        %v2712 = vpop.permute.xlu0 %2711
        %v2714 = vmul.f32 %v2597, %v1533
        %v2715 = vmul.f32 %v2602, %v1533
        %v2716 = vmul.f32 %v2607, %v1533
        %v2717 = vmul.f32 %v2612, %v1533
        %v2718 = vmul.f32 %v2617, %v1533
        %v2719 = vmul.f32 %v2622, %v1533
        %v2720 = vmul.f32 %v2627, %v1533
        %v2721 = vmul.f32 %v2632, %v1533
        %v2722 = vmul.f32 %v2637, %v1533
        %v2723 = vmul.f32 %v2642, %v1533
        %v2724 = vmul.f32 %v2647, %v1533
        %v2725 = vmul.f32 %v2652, %v1533
        %v2726 = vmul.f32 %v2657, %v1533
        %v2727 = vmul.f32 %v2662, %v1533
        %v2728 = vmul.f32 %v2667, %v1533
        %v2729 = vmul.f32 %v2672, %v1533
        %v2730 = vmul.f32 %v2677, %v1533
        %v2731 = vmul.f32 %v2682, %v1533
        %v2732 = vmul.f32 %v2687, %v1533
        %v2733 = vmul.f32 %v2692, %v1533
        %v2734 = vmul.f32 %v2697, %v1533
        %v2735 = vmul.f32 %v2702, %v1533
        %v2736 = vmul.f32 %v2707, %v1533
        %v2737 = vmul.f32 %v2712, %v1533
        %2738 = vset.pattern.permute.xlu0 1
        %2739 = vperm.xlu0 %2738, %v2544
        %v2740 = vpop.permute.xlu0 %2739
        %2742 = vset.pattern.permute.xlu0 1
        %2743 = vperm.xlu0 %2742, %v2545
        %v2744 = vpop.permute.xlu0 %2743
        %2746 = vset.pattern.permute.xlu0 1
        %2747 = vperm.xlu0 %2746, %v2546
        %v2748 = vpop.permute.xlu0 %2747
        %2750 = vset.pattern.permute.xlu0 1
        %2751 = vperm.xlu0 %2750, %v2547
        %v2752 = vpop.permute.xlu0 %2751
        %2754 = vset.pattern.permute.xlu0 1
        %2755 = vperm.xlu0 %2754, %v2548
        %v2756 = vpop.permute.xlu0 %2755
        %2758 = vset.pattern.permute.xlu0 1
        %2759 = vperm.xlu0 %2758, %v2549
        %v2760 = vpop.permute.xlu0 %2759
        %2762 = vset.pattern.permute.xlu0 1
        %2763 = vperm.xlu0 %2762, %v2550
        %v2764 = vpop.permute.xlu0 %2763
        %2766 = vset.pattern.permute.xlu0 1
        %2767 = vperm.xlu0 %2766, %v2551
        %v2768 = vpop.permute.xlu0 %2767
        %2770 = vset.pattern.permute.xlu0 1
        %2771 = vperm.xlu0 %2770, %v2552
        %v2772 = vpop.permute.xlu0 %2771
        %2774 = vset.pattern.permute.xlu0 1
        %2775 = vperm.xlu0 %2774, %v2553
        %v2776 = vpop.permute.xlu0 %2775
        %2778 = vset.pattern.permute.xlu0 1
        %2779 = vperm.xlu0 %2778, %v2554
        %v2780 = vpop.permute.xlu0 %2779
        %2782 = vset.pattern.permute.xlu0 1
        %2783 = vperm.xlu0 %2782, %v2555
        %v2784 = vpop.permute.xlu0 %2783
        %2786 = vset.pattern.permute.xlu0 1
        %2787 = vperm.xlu0 %2786, %v2556
        %v2788 = vpop.permute.xlu0 %2787
        %2790 = vset.pattern.permute.xlu0 1
        %2791 = vperm.xlu0 %2790, %v2557
        %v2792 = vpop.permute.xlu0 %2791
        %2794 = vset.pattern.permute.xlu0 1
        %2795 = vperm.xlu0 %2794, %v2558
        %v2796 = vpop.permute.xlu0 %2795
        %2798 = vset.pattern.permute.xlu0 1
        %2799 = vperm.xlu0 %2798, %v2559
        %v2800 = vpop.permute.xlu0 %2799
        %2802 = vset.pattern.permute.xlu0 1
        %2803 = vperm.xlu0 %2802, %v2560
        %v2804 = vpop.permute.xlu0 %2803
        %2806 = vset.pattern.permute.xlu0 1
        %2807 = vperm.xlu0 %2806, %v2561
        %v2808 = vpop.permute.xlu0 %2807
        %2810 = vset.pattern.permute.xlu0 1
        %2811 = vperm.xlu0 %2810, %v2562
        %v2812 = vpop.permute.xlu0 %2811
        %2814 = vset.pattern.permute.xlu0 1
        %2815 = vperm.xlu0 %2814, %v2563
        %v2816 = vpop.permute.xlu0 %2815
        %2818 = vset.pattern.permute.xlu0 1
        %2819 = vperm.xlu0 %2818, %v2564
        %v2820 = vpop.permute.xlu0 %2819
        %2822 = vset.pattern.permute.xlu0 1
        %2823 = vperm.xlu0 %2822, %v2565
        %v2824 = vpop.permute.xlu0 %2823
        %2826 = vset.pattern.permute.xlu0 1
        %2827 = vperm.xlu0 %2826, %v2566
        %v2828 = vpop.permute.xlu0 %2827
        %2830 = vset.pattern.permute.xlu0 1
        %2831 = vperm.xlu0 %2830, %v2567
        %v2832 = vpop.permute.xlu0 %2831
        %v2834 = vmul.f32 %v2740, %v1657
        %v2835 = vmul.f32 %v2744, %v1657
        %v2836 = vmul.f32 %v2748, %v1657
        %v2837 = vmul.f32 %v2752, %v1657
        %v2838 = vmul.f32 %v2756, %v1657
        %v2839 = vmul.f32 %v2760, %v1657
        %v2840 = vmul.f32 %v2764, %v1657
        %v2841 = vmul.f32 %v2768, %v1657
        %v2842 = vmul.f32 %v2772, %v1657
        %v2843 = vmul.f32 %v2776, %v1657
        %v2844 = vmul.f32 %v2780, %v1657
        %v2845 = vmul.f32 %v2784, %v1657
        %v2846 = vmul.f32 %v2788, %v1657
        %v2847 = vmul.f32 %v2792, %v1657
        %v2848 = vmul.f32 %v2796, %v1657
        %v2849 = vmul.f32 %v2800, %v1657
        %v2850 = vmul.f32 %v2804, %v1657
        %v2851 = vmul.f32 %v2808, %v1657
        %v2852 = vmul.f32 %v2812, %v1657
        %v2853 = vmul.f32 %v2816, %v1657
        %v2854 = vmul.f32 %v2820, %v1657
        %v2855 = vmul.f32 %v2824, %v1657
        %v2856 = vmul.f32 %v2828, %v1657
        %v2857 = vmul.f32 %v2832, %v1657
        %v2858 = vadd.f32 %v2714, %v2834
        %v2859 = vadd.f32 %v2715, %v2835
        %v2860 = vadd.f32 %v2716, %v2836
        %v2861 = vadd.f32 %v2717, %v2837
        %v2862 = vadd.f32 %v2718, %v2838
        %v2863 = vadd.f32 %v2719, %v2839
        %v2864 = vadd.f32 %v2720, %v2840
        %v2865 = vadd.f32 %v2721, %v2841
        %v2866 = vadd.f32 %v2722, %v2842
        %v2867 = vadd.f32 %v2723, %v2843
        %v2868 = vadd.f32 %v2724, %v2844
        %v2869 = vadd.f32 %v2725, %v2845
        %v2870 = vadd.f32 %v2726, %v2846
        %v2871 = vadd.f32 %v2727, %v2847
        %v2872 = vadd.f32 %v2728, %v2848
        %v2873 = vadd.f32 %v2729, %v2849
        %v2874 = vadd.f32 %v2730, %v2850
        %v2875 = vadd.f32 %v2731, %v2851
        %v2876 = vadd.f32 %v2732, %v2852
        %v2877 = vadd.f32 %v2733, %v2853
        %v2878 = vadd.f32 %v2734, %v2854
        %v2879 = vadd.f32 %v2735, %v2855
        %v2880 = vadd.f32 %v2736, %v2856
        %v2881 = vadd.f32 %v2737, %v2857
        %v2882 = vadd.f32 %v2858, %v1710
        %v2883 = vadd.f32 %v2859, %v1710
        %v2884 = vadd.f32 %v2860, %v1710
        %v2885 = vadd.f32 %v2861, %v1710
        %v2886 = vadd.f32 %v2862, %v1710
        %v2887 = vadd.f32 %v2863, %v1710
        %v2888 = vadd.f32 %v2864, %v1710
        %v2889 = vadd.f32 %v2865, %v1710
        %v2890 = vadd.f32 %v2866, %v1710
        %v2891 = vadd.f32 %v2867, %v1710
        %v2892 = vadd.f32 %v2868, %v1710
        %v2893 = vadd.f32 %v2869, %v1710
        %v2894 = vadd.f32 %v2870, %v1710
        %v2895 = vadd.f32 %v2871, %v1710
        %v2896 = vadd.f32 %v2872, %v1710
        %v2897 = vadd.f32 %v2873, %v1710
        %v2898 = vadd.f32 %v2874, %v1710
        %v2899 = vadd.f32 %v2875, %v1710
        %v2900 = vadd.f32 %v2876, %v1710
        %v2901 = vadd.f32 %v2877, %v1710
        %v2902 = vadd.f32 %v2878, %v1710
        %v2903 = vadd.f32 %v2879, %v1710
        %v2904 = vadd.f32 %v2880, %v1710
        %v2905 = vadd.f32 %v2881, %v1710
        %v2906 = vmax.f32 %v2882, 0.0
        %v2907 = vmax.f32 %v2883, 0.0
        %v2908 = vmax.f32 %v2884, 0.0
        %v2909 = vmax.f32 %v2885, 0.0
        %v2910 = vmax.f32 %v2886, 0.0
        %v2911 = vmax.f32 %v2887, 0.0
        %v2912 = vmax.f32 %v2888, 0.0
        %v2913 = vmax.f32 %v2889, 0.0
        %v2914 = vmax.f32 %v2890, 0.0
        %v2915 = vmax.f32 %v2891, 0.0
        %v2916 = vmax.f32 %v2892, 0.0
        %v2917 = vmax.f32 %v2893, 0.0
        %v2918 = vmax.f32 %v2894, 0.0
        %v2919 = vmax.f32 %v2895, 0.0
        %v2920 = vmax.f32 %v2896, 0.0
        %v2921 = vmax.f32 %v2897, 0.0
        %v2922 = vmax.f32 %v2898, 0.0
        %v2923 = vmax.f32 %v2899, 0.0
        %v2924 = vmax.f32 %v2900, 0.0
        %v2925 = vmax.f32 %v2901, 0.0
        %v2926 = vmax.f32 %v2902, 0.0
        %v2927 = vmax.f32 %v2903, 0.0
        %v2928 = vmax.f32 %v2904, 0.0
        %v2929 = vmax.f32 %v2905, 0.0
        %v2930 = vmul.f32 %v2906, %v2592
        %v2931 = vmul.f32 %v2907, %v2593
        %v2932 = vmul.f32 %v2908, %v2592
        %v2933 = vmul.f32 %v2909, %v2593
        %v2934 = vmul.f32 %v2910, %v2592
        %v2935 = vmul.f32 %v2911, %v2593
        %v2936 = vmul.f32 %v2912, %v2592
        %v2937 = vmul.f32 %v2913, %v2593
        %v2938 = vmul.f32 %v2914, %v2592
        %v2939 = vmul.f32 %v2915, %v2593
        %v2940 = vmul.f32 %v2916, %v2592
        %v2941 = vmul.f32 %v2917, %v2593
        %v2942 = vmul.f32 %v2918, %v2592
        %v2943 = vmul.f32 %v2919, %v2593
        %v2944 = vmul.f32 %v2920, %v2592
        %v2945 = vmul.f32 %v2921, %v2593
        %v2946 = vmul.f32 %v2922, %v2592
        %v2947 = vmul.f32 %v2923, %v2593
        %v2948 = vmul.f32 %v2924, %v2592
        %v2949 = vmul.f32 %v2925, %v2593
        %v2950 = vmul.f32 %v2926, %v2592
        %v2951 = vmul.f32 %v2927, %v2593
        %v2952 = vmul.f32 %v2928, %v2592
        %v2953 = vmul.f32 %v2929, %v2593
        %v2954 = vsel %vm1784, %v2930, 0.0
        %v2955 = vsel %vm1786, %v2931, 0.0
        %v2956 = vadd.f32 %v2954, %v2955
        %v2957 = vrot.slane %v2956, 4
        %v2958 = vadd.f32 %v2956, %v2957
        %v2959 = vrot.slane %v2958, 2
        %v2960 = vadd.f32 %v2958, %v2959
        %v2961 = vrot.slane %v2960, 1
        %v2962 = vadd.f32 %v2960, %v2961
        %v2963 = vsel %vm1784, %v2932, 0.0
        %v2964 = vsel %vm1786, %v2933, 0.0
        %v2965 = vadd.f32 %v2963, %v2964
        %v2966 = vrot.slane %v2965, 4
        %v2967 = vadd.f32 %v2965, %v2966
        %v2968 = vrot.slane %v2967, 2
        %v2969 = vadd.f32 %v2967, %v2968
        %v2970 = vrot.slane %v2969, 1
        %v2971 = vadd.f32 %v2969, %v2970
        %v2972 = vsel %vm1784, %v2934, 0.0
        %v2973 = vsel %vm1786, %v2935, 0.0
        %v2974 = vadd.f32 %v2972, %v2973
        %v2975 = vrot.slane %v2974, 4
        %v2976 = vadd.f32 %v2974, %v2975
        %v2977 = vrot.slane %v2976, 2
        %v2978 = vadd.f32 %v2976, %v2977
        %v2979 = vrot.slane %v2978, 1
        %v2980 = vadd.f32 %v2978, %v2979
        %v2981 = vsel %vm1784, %v2936, 0.0
        %v2982 = vsel %vm1786, %v2937, 0.0
        %v2983 = vadd.f32 %v2981, %v2982
        %v2984 = vrot.slane %v2983, 4
        %v2985 = vadd.f32 %v2983, %v2984
        %v2986 = vrot.slane %v2985, 2
        %v2987 = vadd.f32 %v2985, %v2986
        %v2988 = vrot.slane %v2987, 1
        %v2989 = vadd.f32 %v2987, %v2988
        %v2990 = vsel %vm1784, %v2938, 0.0
        %v2991 = vsel %vm1786, %v2939, 0.0
        %v2992 = vadd.f32 %v2990, %v2991
        %v2993 = vrot.slane %v2992, 4
        %v2994 = vadd.f32 %v2992, %v2993
        %v2995 = vrot.slane %v2994, 2
        %v2996 = vadd.f32 %v2994, %v2995
        %v2997 = vrot.slane %v2996, 1
        %v2998 = vadd.f32 %v2996, %v2997
        %v2999 = vsel %vm1784, %v2940, 0.0
        %v3000 = vsel %vm1786, %v2941, 0.0
        %v3001 = vadd.f32 %v2999, %v3000
        %v3002 = vrot.slane %v3001, 4
        %v3003 = vadd.f32 %v3001, %v3002
        %v3004 = vrot.slane %v3003, 2
        %v3005 = vadd.f32 %v3003, %v3004
        %v3006 = vrot.slane %v3005, 1
        %v3007 = vadd.f32 %v3005, %v3006
        %v3008 = vsel %vm1784, %v2942, 0.0
        %v3009 = vsel %vm1786, %v2943, 0.0
        %v3010 = vadd.f32 %v3008, %v3009
        %v3011 = vrot.slane %v3010, 4
        %v3012 = vadd.f32 %v3010, %v3011
        %v3013 = vrot.slane %v3012, 2
        %v3014 = vadd.f32 %v3012, %v3013
        %v3015 = vrot.slane %v3014, 1
        %v3016 = vadd.f32 %v3014, %v3015
        %v3017 = vsel %vm1784, %v2944, 0.0
        %v3018 = vsel %vm1786, %v2945, 0.0
        %v3019 = vadd.f32 %v3017, %v3018
        %v3020 = vrot.slane %v3019, 4
        %v3021 = vadd.f32 %v3019, %v3020
        %v3022 = vrot.slane %v3021, 2
        %v3023 = vadd.f32 %v3021, %v3022
        %v3024 = vrot.slane %v3023, 1
        %v3025 = vadd.f32 %v3023, %v3024
        %v3026 = vsel %vm1784, %v2946, 0.0
        %v3027 = vsel %vm1786, %v2947, 0.0
        %v3028 = vadd.f32 %v3026, %v3027
        %v3029 = vrot.slane %v3028, 4
        %v3030 = vadd.f32 %v3028, %v3029
        %v3031 = vrot.slane %v3030, 2
        %v3032 = vadd.f32 %v3030, %v3031
        %v3033 = vrot.slane %v3032, 1
        %v3034 = vadd.f32 %v3032, %v3033
        %v3035 = vsel %vm1784, %v2948, 0.0
        %v3036 = vsel %vm1786, %v2949, 0.0
        %v3037 = vadd.f32 %v3035, %v3036
        %v3038 = vrot.slane %v3037, 4
        %v3039 = vadd.f32 %v3037, %v3038
        %v3040 = vrot.slane %v3039, 2
        %v3041 = vadd.f32 %v3039, %v3040
        %v3042 = vrot.slane %v3041, 1
        %v3043 = vadd.f32 %v3041, %v3042
        %v3044 = vsel %vm1784, %v2950, 0.0
        %v3045 = vsel %vm1786, %v2951, 0.0
        %v3046 = vadd.f32 %v3044, %v3045
        %v3047 = vrot.slane %v3046, 4
        %v3048 = vadd.f32 %v3046, %v3047
        %v3049 = vrot.slane %v3048, 2
        %v3050 = vadd.f32 %v3048, %v3049
        %v3051 = vrot.slane %v3050, 1
        %v3052 = vadd.f32 %v3050, %v3051
        %v3053 = vsel %vm1784, %v2952, 0.0
        %v3054 = vsel %vm1786, %v2953, 0.0
        %v3055 = vadd.f32 %v3053, %v3054
        %v3056 = vrot.slane %v3055, 4
        %v3057 = vadd.f32 %v3055, %v3056
        %v3058 = vrot.slane %v3057, 2
        %v3059 = vadd.f32 %v3057, %v3058
        %v3060 = vrot.slane %v3059, 1
        %v3061 = vadd.f32 %v3059, %v3060
        %v3074 = vsel %vm1906, %v2971, %v2962
        %v3075 = vsel %vm1908, %v2980, %v3074
        %v3076 = vsel %vm1910, %v2989, %v3075
        %v3077 = vsel %vm1912, %v2998, %v3076
        %v3078 = vsel %vm1914, %v3007, %v3077
        %v3079 = vsel %vm1916, %v3016, %v3078
        %v3080 = vsel %vm1918, %v3025, %v3079
        %v3081 = vsel %vm1906, %v3043, %v3034
        %v3082 = vsel %vm1908, %v3052, %v3081
        %v3083 = vsel %vm1910, %v3061, %v3082
        %3086 = vst.msk [vmem:[#allocation2 + $0xc] sm:$0xff] %vm1784, %v3080
        %3087 = vst.msk [vmem:[#allocation2 + $0x14] sm:$0xf] %vm1786, %v3083
        %3088 = vset.pattern.permute.xlu0 0
        %3089 = vperm.xlu0 %3088, %v1963
        %v3090 = vpop.permute.xlu0 %3089
        %v3092 = vmul.f32 %v3090, %v1934
        %3093 = vset.pattern.permute.xlu0 1
        %3094 = vperm.xlu0 %3093, %v1963
        %v3095 = vpop.permute.xlu0 %3094
        %v3097 = vmul.f32 %v3095, %v1943
        %v3098 = vadd.f32 %v3092, %v3097
        %v3099 = vadd.f32 %v3098, %v1950
        %v3100 = vmul.f32 %v2407, %v2570
        %v3101 = vadd.f32 %v3100, %v3099
        %3102 = vst.msk [vmem:[#allocation4 + $0x2] sm:$0xf8] %vm1955, %v3101
        %3103 = vrot.lane.b32.xlu0 %v1963, 126
        %v3104 = vpop.permute.xlu0 %3103
        %3106 = vst.msk [vmem:[#allocation5 + $0x2] sm:$0xf8] %vm1960, %v3104
        %s3107 = scalar_lea.vmem %s697, 32
        %v3108 = vld [vmem:[%s3107] sm:$0xff]
        %v3109 = vld [vmem:[%s3107 + $0x8] sm:$0xf]
        %v3110 = vmul.f32 %v3108, 3.1415927
        %v3111 = vmul.f32 %v3109, 3.1415927
        %v3112 = vand.u32 2147483647, %v3110
        %vm3113 = vcmp.le.f32.partialorder %v3112, 0.7853982
        %vm3114 = vcmp.lt.s32.totalorder %v3110, 0
        %v3115 = vand.u32 %v3110, 2139095040
        %v3116 = vshrl.u32 %v3115, 23
        %v3117 = vsub.s32 %v3116, 127
        %v3118 = vand.u32 2147483647, %v3110
        %v3119 = vand.u32 %v3118, 8388607
        %v3120 = vor.u32 %v3119, 8388608
        %v3121 = vsub.s32 0, %v3120
        %v3122 = vadd.s32 %v3117, 1
        %vm3123 = vcmp.gt.s32.totalorder %v3122, 0
        %v3124 = vsel %vm3123, %v3122, 0
        %v3125 = vshrl.u32 %v3124, 5
        %v3126 = vand.u32 %v3124, 31
        %v3127 = vsub.s32 32, %v3126
        %v3128 = vshrl.u32 683565275, %v3127
        %v3129 = vshll.u32 683565275, %v3126
        %v3130 = vshrl.u32 2475754826, %v3127
        %v3131 = vor.u32 %v3129, %v3130
        %v3132 = vshll.u32 2475754826, %v3126
        %v3133 = vshrl.u32 2131351028, %v3127
        %v3134 = vor.u32 %v3132, %v3133
        %v3135 = vshll.u32 2131351028, %v3126
        %v3136 = vshrl.u32 2102212464, %v3127
        %v3137 = vor.u32 %v3135, %v3136
        %v3138 = vshll.u32 2102212464, %v3126
        %v3139 = vshrl.u32 920167782, %v3127
        %v3140 = vor.u32 %v3138, %v3139
        %v3141 = vshll.u32 920167782, %v3126
        %v3142 = vshrl.u32 1326507024, %v3127
        %v3143 = vor.u32 %v3141, %v3142
        %vm3144 = vcmp.lt.s32.totalorder %v3125, 1
        %vm3145 = vcmp.lt.s32.totalorder %v3125, 2
        %vm3146 = vcmp.lt.s32.totalorder %v3125, 3
        %vm3147 = vcmp.lt.s32.totalorder %v3125, 4
        %v3148 = vsel %vm3144, %v3128, %v3131
        %v3149 = vsel %vm3147, %v3137, 2102212464
        %v3150 = vsel %vm3146, %v3134, %v3149
        %v3151 = vsel %vm3145, %v3148, %v3150
        %v3152 = vsel %vm3144, %v3131, %v3134
        %v3153 = vsel %vm3147, %v3140, 920167782
        %v3154 = vsel %vm3146, %v3137, %v3153
        %v3155 = vsel %vm3145, %v3152, %v3154
        %v3156 = vsel %vm3144, %v3134, %v3137
        %v3157 = vsel %vm3147, %v3143, 1326507024
        %v3158 = vsel %vm3146, %v3140, %v3157
        %v3159 = vsel %vm3145, %v3156, %v3158
        %v3160 = vshll.u32 %v3120, 8
        %v3161 = vmul.u32.u64.compose %v3160, %v3159
        %v3162 = vextract.low.u32 %v3161
        %v3163 = vextract.high.u32 %v3161
        %v3164 = vmul.u32.u64.compose %v3160, %v3155
        %v3165 = vextract.low.u32 %v3164
        %v3166 = vextract.high.u32 %v3164
        %v3167 = vmul.u32 %v3160, %v3151
        %v3168 = vadd.s32 %v3163, %v3165
        %vm3169 = vc.u32 %v3163, %v3165
        %v3170 = vadd.s32 %v3166, 1
        %v3171 = vsel %vm3169, %v3170, %v3166
        %v3172 = vadd.s32 %v3167, %v3171
        %v3173 = vadd.s32 %v3172, 536870912
        %v3174 = vshrl.u32 %v3173, 30
        %v3175 = vshll.u32 %v3174, 30
        %v3176 = vsub.s32 %v3172, %v3175
        %vm3177 = vcmp.lt.s32.totalorder %v3176, 0
        %v3178 = vsub.s32 0, %v3176
        %v3179 = vsel %vm3177, %v3178, %v3176
        %v3180 = vclz %v3179
        %v3181 = vsub.s32 %v3180, 2
        %vm3182 = vcmp.gt.s32.totalorder 0, %v3181
        %v3183 = vsel %vm3182, 0, %v3181
        %v3184 = vsub.s32 32, %v3183
        %v3185 = vshll.u32 %v3176, %v3183
        %v3186 = vshrl.u32 %v3168, %v3184
        %v3187 = vor.u32 %v3185, %v3186
        %v3188 = vsub.s32 4294967266, %v3183
        %v3189 = vadd.s32 %v3188, 127
        %v3190 = vshll.u32 %v3189, 23
        %v3191 = vor.u32 4788187, %v3190
        %v3192 = vand.u32 2147483647, %v3191
        %v3194 = vcvt.s32.f32 %v3187
        %v3195 = vmul.f32 %v3194, %v3192
        %v3196 = vxor.u32 %v3195, 2147483648
        %v3197 = vsel %vm3114, %v3196, %v3195
        %v3198 = vsub.s32 4, %v3174
        %v3199 = vsel %vm3114, %v3198, %v3174
        %v3200 = vsel %vm3113, %v3110, %v3197
        %v3201 = vsel %vm3113, 0, %v3199
        %v3202 = vcosq.f32.pop %v3200
        %v3203 = vsinq.f32.pop %v3200
        %vm3204 = vweird.f32 %v3110
        %v3205 = vadd.s32 %v3201, 3
        %v3206 = vand.u32 %v3205, 3
        %vm3207 = vcmp.lt.s32.totalorder %v3206, 2
        %vm3208 = vcmp.eq.s32.totalorder %v3206, 0
        %v3209 = vxor.u32 %v3203, 2147483648
        %v3210 = vsel %vm3208, %v3202, %v3209
        %vm3211 = vcmp.eq.s32.totalorder %v3206, 2
        %v3212 = vxor.u32 %v3202, 2147483648
        %v3213 = vsel %vm3211, %v3212, %v3203
        %v3214 = vsel %vm3207, %v3210, %v3213
        %v3215 = vsel %vm3204, nan, %v3214
        %v3216 = vand.u32 2147483647, %v3111
        %vm3217 = vcmp.le.f32.partialorder %v3216, 0.7853982
        %vm3218 = vcmp.lt.s32.totalorder %v3111, 0
        %v3219 = vand.u32 %v3111, 2139095040
        %v3220 = vshrl.u32 %v3219, 23
        %v3221 = vsub.s32 %v3220, 127
        %v3222 = vand.u32 2147483647, %v3111
        %v3223 = vand.u32 %v3222, 8388607
        %v3224 = vor.u32 %v3223, 8388608
        %v3225 = vsub.s32 0, %v3224
        %v3226 = vadd.s32 %v3221, 1
        %vm3227 = vcmp.gt.s32.totalorder %v3226, 0
        %v3228 = vsel %vm3227, %v3226, 0
        %v3229 = vshrl.u32 %v3228, 5
        %v3230 = vand.u32 %v3228, 31
        %v3231 = vsub.s32 32, %v3230
        %v3232 = vshrl.u32 683565275, %v3231
        %v3233 = vshll.u32 683565275, %v3230
        %v3234 = vshrl.u32 2475754826, %v3231
        %v3235 = vor.u32 %v3233, %v3234
        %v3236 = vshll.u32 2475754826, %v3230
        %v3237 = vshrl.u32 2131351028, %v3231
        %v3238 = vor.u32 %v3236, %v3237
        %v3239 = vshll.u32 2131351028, %v3230
        %v3240 = vshrl.u32 2102212464, %v3231
        %v3241 = vor.u32 %v3239, %v3240
        %v3242 = vshll.u32 2102212464, %v3230
        %v3243 = vshrl.u32 920167782, %v3231
        %v3244 = vor.u32 %v3242, %v3243
        %v3245 = vshll.u32 920167782, %v3230
        %v3246 = vshrl.u32 1326507024, %v3231
        %v3247 = vor.u32 %v3245, %v3246
        %vm3248 = vcmp.lt.s32.totalorder %v3229, 1
        %vm3249 = vcmp.lt.s32.totalorder %v3229, 2
        %vm3250 = vcmp.lt.s32.totalorder %v3229, 3
        %vm3251 = vcmp.lt.s32.totalorder %v3229, 4
        %v3252 = vsel %vm3248, %v3232, %v3235
        %v3253 = vsel %vm3251, %v3241, 2102212464
        %v3254 = vsel %vm3250, %v3238, %v3253
        %v3255 = vsel %vm3249, %v3252, %v3254
        %v3256 = vsel %vm3248, %v3235, %v3238
        %v3257 = vsel %vm3251, %v3244, 920167782
        %v3258 = vsel %vm3250, %v3241, %v3257
        %v3259 = vsel %vm3249, %v3256, %v3258
        %v3260 = vsel %vm3248, %v3238, %v3241
        %v3261 = vsel %vm3251, %v3247, 1326507024
        %v3262 = vsel %vm3250, %v3244, %v3261
        %v3263 = vsel %vm3249, %v3260, %v3262
        %v3264 = vshll.u32 %v3224, 8
        %v3265 = vmul.u32.u64.compose %v3264, %v3263
        %v3266 = vextract.low.u32 %v3265
        %v3267 = vextract.high.u32 %v3265
        %v3268 = vmul.u32.u64.compose %v3264, %v3259
        %v3269 = vextract.low.u32 %v3268
        %v3270 = vextract.high.u32 %v3268
        %v3271 = vmul.u32 %v3264, %v3255
        %v3272 = vadd.s32 %v3267, %v3269
        %vm3273 = vc.u32 %v3267, %v3269
        %v3274 = vadd.s32 %v3270, 1
        %v3275 = vsel %vm3273, %v3274, %v3270
        %v3276 = vadd.s32 %v3271, %v3275
        %v3277 = vadd.s32 %v3276, 536870912
        %v3278 = vshrl.u32 %v3277, 30
        %v3279 = vshll.u32 %v3278, 30
        %v3280 = vsub.s32 %v3276, %v3279
        %vm3281 = vcmp.lt.s32.totalorder %v3280, 0
        %v3282 = vsub.s32 0, %v3280
        %v3283 = vsel %vm3281, %v3282, %v3280
        %v3284 = vclz %v3283
        %v3285 = vsub.s32 %v3284, 2
        %vm3286 = vcmp.gt.s32.totalorder 0, %v3285
        %v3287 = vsel %vm3286, 0, %v3285
        %v3288 = vsub.s32 32, %v3287
        %v3289 = vshll.u32 %v3280, %v3287
        %v3290 = vshrl.u32 %v3272, %v3288
        %v3291 = vor.u32 %v3289, %v3290
        %v3292 = vsub.s32 4294967266, %v3287
        %v3293 = vadd.s32 %v3292, 127
        %v3294 = vshll.u32 %v3293, 23
        %v3295 = vor.u32 4788187, %v3294
        %v3296 = vand.u32 2147483647, %v3295
        %v3298 = vcvt.s32.f32 %v3291
        %v3299 = vmul.f32 %v3298, %v3296
        %v3300 = vxor.u32 %v3299, 2147483648
        %v3301 = vsel %vm3218, %v3300, %v3299
        %v3302 = vsub.s32 4, %v3278
        %v3303 = vsel %vm3218, %v3302, %v3278
        %v3304 = vsel %vm3217, %v3111, %v3301
        %v3305 = vsel %vm3217, 0, %v3303
        %v3306 = vcosq.f32.pop %v3304
        %v3307 = vsinq.f32.pop %v3304
        %vm3308 = vweird.f32 %v3111
        %v3309 = vadd.s32 %v3305, 3
        %v3310 = vand.u32 %v3309, 3
        %vm3311 = vcmp.lt.s32.totalorder %v3310, 2
        %vm3312 = vcmp.eq.s32.totalorder %v3310, 0
        %v3313 = vxor.u32 %v3307, 2147483648
        %v3314 = vsel %vm3312, %v3306, %v3313
        %vm3315 = vcmp.eq.s32.totalorder %v3310, 2
        %v3316 = vxor.u32 %v3306, 2147483648
        %v3317 = vsel %vm3315, %v3316, %v3307
        %v3318 = vsel %vm3311, %v3314, %v3317
        %v3319 = vsel %vm3308, nan, %v3318
        %3321 = vset.pattern.permute.xlu0 3
        %3322 = vperm.xlu0 %3321, %v3215
        %v3323 = vpop.permute.xlu0 %3322
        %3326 = vset.pattern.permute.xlu0 3
        %3327 = vperm.xlu0 %3326, %v3319
        %v3328 = vpop.permute.xlu0 %3327
        %v3330 = vmul.f32 %v3323, %v964
        %v3331 = vmul.f32 %v3328, %v964
        %v3332 = vand.u32 2147483647, %v3110
        %vm3333 = vcmp.le.f32.partialorder %v3332, 0.7853982
        %vm3334 = vcmp.lt.s32.totalorder %v3110, 0
        %v3335 = vand.u32 %v3110, 2139095040
        %v3336 = vshrl.u32 %v3335, 23
        %v3337 = vsub.s32 %v3336, 127
        %v3338 = vand.u32 2147483647, %v3110
        %v3339 = vand.u32 %v3338, 8388607
        %v3340 = vor.u32 %v3339, 8388608
        %v3341 = vsub.s32 0, %v3340
        %v3342 = vadd.s32 %v3337, 1
        %vm3343 = vcmp.gt.s32.totalorder %v3342, 0
        %v3344 = vsel %vm3343, %v3342, 0
        %v3345 = vshrl.u32 %v3344, 5
        %v3346 = vand.u32 %v3344, 31
        %v3347 = vsub.s32 32, %v3346
        %v3348 = vshrl.u32 683565275, %v3347
        %v3349 = vshll.u32 683565275, %v3346
        %v3350 = vshrl.u32 2475754826, %v3347
        %v3351 = vor.u32 %v3349, %v3350
        %v3352 = vshll.u32 2475754826, %v3346
        %v3353 = vshrl.u32 2131351028, %v3347
        %v3354 = vor.u32 %v3352, %v3353
        %v3355 = vshll.u32 2131351028, %v3346
        %v3356 = vshrl.u32 2102212464, %v3347
        %v3357 = vor.u32 %v3355, %v3356
        %v3358 = vshll.u32 2102212464, %v3346
        %v3359 = vshrl.u32 920167782, %v3347
        %v3360 = vor.u32 %v3358, %v3359
        %v3361 = vshll.u32 920167782, %v3346
        %v3362 = vshrl.u32 1326507024, %v3347
        %v3363 = vor.u32 %v3361, %v3362
        %vm3364 = vcmp.lt.s32.totalorder %v3345, 1
        %vm3365 = vcmp.lt.s32.totalorder %v3345, 2
        %vm3366 = vcmp.lt.s32.totalorder %v3345, 3
        %vm3367 = vcmp.lt.s32.totalorder %v3345, 4
        %v3368 = vsel %vm3364, %v3348, %v3351
        %v3369 = vsel %vm3367, %v3357, 2102212464
        %v3370 = vsel %vm3366, %v3354, %v3369
        %v3371 = vsel %vm3365, %v3368, %v3370
        %v3372 = vsel %vm3364, %v3351, %v3354
        %v3373 = vsel %vm3367, %v3360, 920167782
        %v3374 = vsel %vm3366, %v3357, %v3373
        %v3375 = vsel %vm3365, %v3372, %v3374
        %v3376 = vsel %vm3364, %v3354, %v3357
        %v3377 = vsel %vm3367, %v3363, 1326507024
        %v3378 = vsel %vm3366, %v3360, %v3377
        %v3379 = vsel %vm3365, %v3376, %v3378
        %v3380 = vshll.u32 %v3340, 8
        %v3381 = vmul.u32.u64.compose %v3380, %v3379
        %v3382 = vextract.low.u32 %v3381
        %v3383 = vextract.high.u32 %v3381
        %v3384 = vmul.u32.u64.compose %v3380, %v3375
        %v3385 = vextract.low.u32 %v3384
        %v3386 = vextract.high.u32 %v3384
        %v3387 = vmul.u32 %v3380, %v3371
        %v3388 = vadd.s32 %v3383, %v3385
        %vm3389 = vc.u32 %v3383, %v3385
        %v3390 = vadd.s32 %v3386, 1
        %v3391 = vsel %vm3389, %v3390, %v3386
        %v3392 = vadd.s32 %v3387, %v3391
        %v3393 = vadd.s32 %v3392, 536870912
        %v3394 = vshrl.u32 %v3393, 30
        %v3395 = vshll.u32 %v3394, 30
        %v3396 = vsub.s32 %v3392, %v3395
        %vm3397 = vcmp.lt.s32.totalorder %v3396, 0
        %v3398 = vsub.s32 0, %v3396
        %v3399 = vsel %vm3397, %v3398, %v3396
        %v3400 = vclz %v3399
        %v3401 = vsub.s32 %v3400, 2
        %vm3402 = vcmp.gt.s32.totalorder 0, %v3401
        %v3403 = vsel %vm3402, 0, %v3401
        %v3404 = vsub.s32 32, %v3403
        %v3405 = vshll.u32 %v3396, %v3403
        %v3406 = vshrl.u32 %v3388, %v3404
        %v3407 = vor.u32 %v3405, %v3406
        %v3408 = vsub.s32 4294967266, %v3403
        %v3409 = vadd.s32 %v3408, 127
        %v3410 = vshll.u32 %v3409, 23
        %v3411 = vor.u32 4788187, %v3410
        %v3412 = vand.u32 2147483647, %v3411
        %v3414 = vcvt.s32.f32 %v3407
        %v3415 = vmul.f32 %v3414, %v3412
        %v3416 = vxor.u32 %v3415, 2147483648
        %v3417 = vsel %vm3334, %v3416, %v3415
        %v3418 = vsub.s32 4, %v3394
        %v3419 = vsel %vm3334, %v3418, %v3394
        %v3420 = vsel %vm3333, %v3110, %v3417
        %v3421 = vsel %vm3333, 0, %v3419
        %v3422 = vcosq.f32.pop %v3420
        %v3423 = vsinq.f32.pop %v3420
        %vm3424 = vweird.f32 %v3110
        %v3425 = vand.u32 %v3421, 3
        %vm3426 = vcmp.lt.s32.totalorder %v3425, 2
        %vm3427 = vcmp.eq.s32.totalorder %v3425, 0
        %v3428 = vxor.u32 %v3423, 2147483648
        %v3429 = vsel %vm3427, %v3422, %v3428
        %vm3430 = vcmp.eq.s32.totalorder %v3425, 2
        %v3431 = vxor.u32 %v3422, 2147483648
        %v3432 = vsel %vm3430, %v3431, %v3423
        %v3433 = vsel %vm3426, %v3429, %v3432
        %v3434 = vsel %vm3424, nan, %v3433
        %v3435 = vand.u32 2147483647, %v3111
        %vm3436 = vcmp.le.f32.partialorder %v3435, 0.7853982
        %vm3437 = vcmp.lt.s32.totalorder %v3111, 0
        %v3438 = vand.u32 %v3111, 2139095040
        %v3439 = vshrl.u32 %v3438, 23
        %v3440 = vsub.s32 %v3439, 127
        %v3441 = vand.u32 2147483647, %v3111
        %v3442 = vand.u32 %v3441, 8388607
        %v3443 = vor.u32 %v3442, 8388608
        %v3444 = vsub.s32 0, %v3443
        %v3445 = vadd.s32 %v3440, 1
        %vm3446 = vcmp.gt.s32.totalorder %v3445, 0
        %v3447 = vsel %vm3446, %v3445, 0
        %v3448 = vshrl.u32 %v3447, 5
        %v3449 = vand.u32 %v3447, 31
        %v3450 = vsub.s32 32, %v3449
        %v3451 = vshrl.u32 683565275, %v3450
        %v3452 = vshll.u32 683565275, %v3449
        %v3453 = vshrl.u32 2475754826, %v3450
        %v3454 = vor.u32 %v3452, %v3453
        %v3455 = vshll.u32 2475754826, %v3449
        %v3456 = vshrl.u32 2131351028, %v3450
        %v3457 = vor.u32 %v3455, %v3456
        %v3458 = vshll.u32 2131351028, %v3449
        %v3459 = vshrl.u32 2102212464, %v3450
        %v3460 = vor.u32 %v3458, %v3459
        %v3461 = vshll.u32 2102212464, %v3449
        %v3462 = vshrl.u32 920167782, %v3450
        %v3463 = vor.u32 %v3461, %v3462
        %v3464 = vshll.u32 920167782, %v3449
        %v3465 = vshrl.u32 1326507024, %v3450
        %v3466 = vor.u32 %v3464, %v3465
        %vm3467 = vcmp.lt.s32.totalorder %v3448, 1
        %vm3468 = vcmp.lt.s32.totalorder %v3448, 2
        %vm3469 = vcmp.lt.s32.totalorder %v3448, 3
        %vm3470 = vcmp.lt.s32.totalorder %v3448, 4
        %v3471 = vsel %vm3467, %v3451, %v3454
        %v3472 = vsel %vm3470, %v3460, 2102212464
        %v3473 = vsel %vm3469, %v3457, %v3472
        %v3474 = vsel %vm3468, %v3471, %v3473
        %v3475 = vsel %vm3467, %v3454, %v3457
        %v3476 = vsel %vm3470, %v3463, 920167782
        %v3477 = vsel %vm3469, %v3460, %v3476
        %v3478 = vsel %vm3468, %v3475, %v3477
        %v3479 = vsel %vm3467, %v3457, %v3460
        %v3480 = vsel %vm3470, %v3466, 1326507024
        %v3481 = vsel %vm3469, %v3463, %v3480
        %v3482 = vsel %vm3468, %v3479, %v3481
        %v3483 = vshll.u32 %v3443, 8
        %v3484 = vmul.u32.u64.compose %v3483, %v3482
        %v3485 = vextract.low.u32 %v3484
        %v3486 = vextract.high.u32 %v3484
        %v3487 = vmul.u32.u64.compose %v3483, %v3478
        %v3488 = vextract.low.u32 %v3487
        %v3489 = vextract.high.u32 %v3487
        %v3490 = vmul.u32 %v3483, %v3474
        %v3491 = vadd.s32 %v3486, %v3488
        %vm3492 = vc.u32 %v3486, %v3488
        %v3493 = vadd.s32 %v3489, 1
        %v3494 = vsel %vm3492, %v3493, %v3489
        %v3495 = vadd.s32 %v3490, %v3494
        %v3496 = vadd.s32 %v3495, 536870912
        %v3497 = vshrl.u32 %v3496, 30
        %v3498 = vshll.u32 %v3497, 30
        %v3499 = vsub.s32 %v3495, %v3498
        %vm3500 = vcmp.lt.s32.totalorder %v3499, 0
        %v3501 = vsub.s32 0, %v3499
        %v3502 = vsel %vm3500, %v3501, %v3499
        %v3503 = vclz %v3502
        %v3504 = vsub.s32 %v3503, 2
        %vm3505 = vcmp.gt.s32.totalorder 0, %v3504
        %v3506 = vsel %vm3505, 0, %v3504
        %v3507 = vsub.s32 32, %v3506
        %v3508 = vshll.u32 %v3499, %v3506
        %v3509 = vshrl.u32 %v3491, %v3507
        %v3510 = vor.u32 %v3508, %v3509
        %v3511 = vsub.s32 4294967266, %v3506
        %v3512 = vadd.s32 %v3511, 127
        %v3513 = vshll.u32 %v3512, 23
        %v3514 = vor.u32 4788187, %v3513
        %v3515 = vand.u32 2147483647, %v3514
        %v3517 = vcvt.s32.f32 %v3510
        %v3518 = vmul.f32 %v3517, %v3515
        %v3519 = vxor.u32 %v3518, 2147483648
        %v3520 = vsel %vm3437, %v3519, %v3518
        %v3521 = vsub.s32 4, %v3497
        %v3522 = vsel %vm3437, %v3521, %v3497
        %v3523 = vsel %vm3436, %v3111, %v3520
        %v3524 = vsel %vm3436, 0, %v3522
        %v3525 = vcosq.f32.pop %v3523
        %v3526 = vsinq.f32.pop %v3523
        %vm3527 = vweird.f32 %v3111
        %v3528 = vand.u32 %v3524, 3
        %vm3529 = vcmp.lt.s32.totalorder %v3528, 2
        %vm3530 = vcmp.eq.s32.totalorder %v3528, 0
        %v3531 = vxor.u32 %v3526, 2147483648
        %v3532 = vsel %vm3530, %v3525, %v3531
        %vm3533 = vcmp.eq.s32.totalorder %v3528, 2
        %v3534 = vxor.u32 %v3525, 2147483648
        %v3535 = vsel %vm3533, %v3534, %v3526
        %v3536 = vsel %vm3529, %v3532, %v3535
        %v3537 = vsel %vm3527, nan, %v3536
        %3539 = vset.pattern.permute.xlu0 3
        %3540 = vperm.xlu0 %3539, %v3434
        %v3541 = vpop.permute.xlu0 %3540
        %3544 = vset.pattern.permute.xlu0 3
        %3545 = vperm.xlu0 %3544, %v3537
        %v3546 = vpop.permute.xlu0 %3545
        %v3548 = vmul.f32 %v3541, %v1186
        %v3549 = vmul.f32 %v3546, %v1186
        %v3550 = vadd.f32 %v3330, %v3548
        %v3551 = vadd.f32 %v3331, %v3549
        %v3552 = vadd.f32 %v3550, %v1195
        %v3553 = vadd.f32 %v3551, %v1195
        %v3556 = vcombine.high %v3108, %v3108
        %v3558 = vunpack.c.l.s4 1966171168
        %v3559 = vunpack.c.0.s8 %v3558
        %v3560 = vlaneseq
        %v3561 = vshrl.u32 %v3560, 7
        %v3562 = vsub.s32 %v3559, %v3561
        %v3563 = vrot.slane %v3108, %v3562
        %v3565 = vunpack.c.l.s4 1966171168
        %v3566 = vunpack.c.0.s8 %v3565
        %v3567 = vlaneseq
        %v3568 = vshrl.u32 %v3567, 7
        %v3569 = vsub.s32 %v3566, %v3568
        %v3570 = vrot.slane %v3556, %v3569
        %v3571 = vcombine.high %v3563, %v3563
        %v3572 = vcombine.high %v3570, %v3570
        %v3574 = vunpack.c.l.s4 1966171168
        %v3575 = vunpack.c.0.s8 %v3574
        %v3576 = vlaneseq
        %v3577 = vshrl.u32 %v3576, 7
        %v3578 = vsub.s32 %v3575, %v3577
        %v3579 = vrot.slane %v3563, %v3578
        %v3581 = vunpack.c.l.s4 1966171168
        %v3582 = vunpack.c.0.s8 %v3581
        %v3583 = vlaneseq
        %v3584 = vshrl.u32 %v3583, 7
        %v3585 = vsub.s32 %v3582, %v3584
        %v3586 = vrot.slane %v3570, %v3585
        %v3588 = vunpack.c.l.s4 1966171168
        %v3589 = vunpack.c.0.s8 %v3588
        %v3590 = vlaneseq
        %v3591 = vshrl.u32 %v3590, 7
        %v3592 = vsub.s32 %v3589, %v3591
        %v3593 = vrot.slane %v3571, %v3592
        %v3595 = vunpack.c.l.s4 1966171168
        %v3596 = vunpack.c.0.s8 %v3595
        %v3597 = vlaneseq
        %v3598 = vshrl.u32 %v3597, 7
        %v3599 = vsub.s32 %v3596, %v3598
        %v3600 = vrot.slane %v3572, %v3599
        %v3601 = vcombine.high %v3579, %v3579
        %v3602 = vcombine.high %v3586, %v3586
        %v3603 = vcombine.high %v3593, %v3593
        %v3604 = vcombine.high %v3600, %v3600
        %v3606 = vunpack.c.l.s4 1966171168
        %v3607 = vunpack.c.0.s8 %v3606
        %v3608 = vlaneseq
        %v3609 = vshrl.u32 %v3608, 7
        %v3610 = vsub.s32 %v3607, %v3609
        %v3611 = vrot.slane %v3109, %v3610
        %v3612 = vcombine.high %v3611, %v3611
        %v3614 = vunpack.c.l.s4 1966171168
        %v3615 = vunpack.c.0.s8 %v3614
        %v3616 = vlaneseq
        %v3617 = vshrl.u32 %v3616, 7
        %v3618 = vsub.s32 %v3615, %v3617
        %v3619 = vrot.slane %v3611, %v3618
        %v3621 = vunpack.c.l.s4 1966171168
        %v3622 = vunpack.c.0.s8 %v3621
        %v3623 = vlaneseq
        %v3624 = vshrl.u32 %v3623, 7
        %v3625 = vsub.s32 %v3622, %v3624
        %v3626 = vrot.slane %v3612, %v3625
        %v3627 = vcombine.high %v3619, %v3619
        %v3628 = vcombine.high %v3626, %v3626
        %v3629 = vlaneseq
        %v3630 = vshrl.u32 %v3629, 7
        %v3631 = vsub.s32 0, %v3630
        %v3632 = vrot.slane %v3579, %v3631
        %v3633 = vlaneseq
        %v3634 = vshrl.u32 %v3633, 7
        %v3635 = vsub.s32 0, %v3634
        %v3636 = vrot.slane %v3593, %v3635
        %v3637 = vlaneseq
        %v3638 = vshrl.u32 %v3637, 7
        %v3639 = vsub.s32 0, %v3638
        %v3640 = vrot.slane %v3601, %v3639
        %v3641 = vlaneseq
        %v3642 = vshrl.u32 %v3641, 7
        %v3643 = vsub.s32 0, %v3642
        %v3644 = vrot.slane %v3603, %v3643
        %v3645 = vlaneseq
        %v3646 = vshrl.u32 %v3645, 7
        %v3647 = vsub.s32 0, %v3646
        %v3648 = vrot.slane %v3586, %v3647
        %v3649 = vlaneseq
        %v3650 = vshrl.u32 %v3649, 7
        %v3651 = vsub.s32 0, %v3650
        %v3652 = vrot.slane %v3600, %v3651
        %v3653 = vlaneseq
        %v3654 = vshrl.u32 %v3653, 7
        %v3655 = vsub.s32 0, %v3654
        %v3656 = vrot.slane %v3602, %v3655
        %v3657 = vlaneseq
        %v3658 = vshrl.u32 %v3657, 7
        %v3659 = vsub.s32 0, %v3658
        %v3660 = vrot.slane %v3604, %v3659
        %v3661 = vlaneseq
        %v3662 = vshrl.u32 %v3661, 7
        %v3663 = vsub.s32 0, %v3662
        %v3664 = vrot.slane %v3619, %v3663
        %v3665 = vlaneseq
        %v3666 = vshrl.u32 %v3665, 7
        %v3667 = vsub.s32 0, %v3666
        %v3668 = vrot.slane %v3626, %v3667
        %v3669 = vlaneseq
        %v3670 = vshrl.u32 %v3669, 7
        %v3671 = vsub.s32 0, %v3670
        %v3672 = vrot.slane %v3627, %v3671
        %v3673 = vlaneseq
        %v3674 = vshrl.u32 %v3673, 7
        %v3675 = vsub.s32 0, %v3674
        %v3676 = vrot.slane %v3628, %v3675
        %v3689 = vsub.f32 %v3108, %v3632
        %v3690 = vsub.f32 %v3109, %v3632
        %v3691 = vsub.f32 %v3108, %v3636
        %v3692 = vsub.f32 %v3109, %v3636
        %v3693 = vsub.f32 %v3108, %v3640
        %v3694 = vsub.f32 %v3109, %v3640
        %v3695 = vsub.f32 %v3108, %v3644
        %v3696 = vsub.f32 %v3109, %v3644
        %v3697 = vsub.f32 %v3108, %v3648
        %v3698 = vsub.f32 %v3109, %v3648
        %v3699 = vsub.f32 %v3108, %v3652
        %v3700 = vsub.f32 %v3109, %v3652
        %v3701 = vsub.f32 %v3108, %v3656
        %v3702 = vsub.f32 %v3109, %v3656
        %v3703 = vsub.f32 %v3108, %v3660
        %v3704 = vsub.f32 %v3109, %v3660
        %v3705 = vsub.f32 %v3108, %v3664
        %v3706 = vsub.f32 %v3109, %v3664
        %v3707 = vsub.f32 %v3108, %v3668
        %v3708 = vsub.f32 %v3109, %v3668
        %v3709 = vsub.f32 %v3108, %v3672
        %v3710 = vsub.f32 %v3109, %v3672
        %v3711 = vsub.f32 %v3108, %v3676
        %v3712 = vsub.f32 %v3109, %v3676
        %3713 = vset.pattern.permute.xlu0 2
        %3714 = vperm.xlu0 %3713, %v3108
        %v3715 = vpop.permute.xlu0 %3714
        %3717 = vset.pattern.permute.xlu0 2
        %3718 = vperm.xlu0 %3717, %v3109
        %v3719 = vpop.permute.xlu0 %3718
        %v3721 = vmul.f32 %v3715, %v1370
        %v3722 = vmul.f32 %v3719, %v1370
        %v3723 = vadd.f32 %v3721, %v1378
        %v3724 = vadd.f32 %v3722, %v1378
        %v3725 = vadd.f32 %v1391, %v3552
        %v3726 = vadd.f32 %v1391, %v3553
        %v3727 = vmul.f32 %v731, %v3725
        %v3728 = vmul.f32 %v732, %v3726
        %v3729 = vmul.f32 %v3727, %v3715
        %v3730 = vmul.f32 %v3728, %v3719
        %v3731 = vadd.f32 %v1386, %v3729
        %v3732 = vadd.f32 %v1387, %v3730
        %v3733 = vadd.f32 %v1403, %v3723
        %v3734 = vadd.f32 %v1403, %v3724
        %v3735 = vmul.f32 %v737, %v3733
        %v3736 = vmul.f32 %v738, %v3734
        %v3737 = vadd.f32 %v3731, %v3735
        %v3738 = vadd.f32 %v3732, %v3736
        %3740 = vset.pattern.permute.xlu0 0
        %3741 = vperm.xlu0 %3740, %v3689
        %v3742 = vpop.permute.xlu0 %3741
        %3745 = vset.pattern.permute.xlu0 0
        %3746 = vperm.xlu0 %3745, %v3690
        %v3747 = vpop.permute.xlu0 %3746
        %3750 = vset.pattern.permute.xlu0 0
        %3751 = vperm.xlu0 %3750, %v3691
        %v3752 = vpop.permute.xlu0 %3751
        %3755 = vset.pattern.permute.xlu0 0
        %3756 = vperm.xlu0 %3755, %v3692
        %v3757 = vpop.permute.xlu0 %3756
        %3760 = vset.pattern.permute.xlu0 0
        %3761 = vperm.xlu0 %3760, %v3693
        %v3762 = vpop.permute.xlu0 %3761
        %3765 = vset.pattern.permute.xlu0 0
        %3766 = vperm.xlu0 %3765, %v3694
        %v3767 = vpop.permute.xlu0 %3766
        %3770 = vset.pattern.permute.xlu0 0
        %3771 = vperm.xlu0 %3770, %v3695
        %v3772 = vpop.permute.xlu0 %3771
        %3775 = vset.pattern.permute.xlu0 0
        %3776 = vperm.xlu0 %3775, %v3696
        %v3777 = vpop.permute.xlu0 %3776
        %3780 = vset.pattern.permute.xlu0 0
        %3781 = vperm.xlu0 %3780, %v3697
        %v3782 = vpop.permute.xlu0 %3781
        %3785 = vset.pattern.permute.xlu0 0
        %3786 = vperm.xlu0 %3785, %v3698
        %v3787 = vpop.permute.xlu0 %3786
        %3790 = vset.pattern.permute.xlu0 0
        %3791 = vperm.xlu0 %3790, %v3699
        %v3792 = vpop.permute.xlu0 %3791
        %3795 = vset.pattern.permute.xlu0 0
        %3796 = vperm.xlu0 %3795, %v3700
        %v3797 = vpop.permute.xlu0 %3796
        %3800 = vset.pattern.permute.xlu0 0
        %3801 = vperm.xlu0 %3800, %v3701
        %v3802 = vpop.permute.xlu0 %3801
        %3805 = vset.pattern.permute.xlu0 0
        %3806 = vperm.xlu0 %3805, %v3702
        %v3807 = vpop.permute.xlu0 %3806
        %3810 = vset.pattern.permute.xlu0 0
        %3811 = vperm.xlu0 %3810, %v3703
        %v3812 = vpop.permute.xlu0 %3811
        %3815 = vset.pattern.permute.xlu0 0
        %3816 = vperm.xlu0 %3815, %v3704
        %v3817 = vpop.permute.xlu0 %3816
        %3820 = vset.pattern.permute.xlu0 0
        %3821 = vperm.xlu0 %3820, %v3705
        %v3822 = vpop.permute.xlu0 %3821
        %3825 = vset.pattern.permute.xlu0 0
        %3826 = vperm.xlu0 %3825, %v3706
        %v3827 = vpop.permute.xlu0 %3826
        %3830 = vset.pattern.permute.xlu0 0
        %3831 = vperm.xlu0 %3830, %v3707
        %v3832 = vpop.permute.xlu0 %3831
        %3835 = vset.pattern.permute.xlu0 0
        %3836 = vperm.xlu0 %3835, %v3708
        %v3837 = vpop.permute.xlu0 %3836
        %3840 = vset.pattern.permute.xlu0 0
        %3841 = vperm.xlu0 %3840, %v3709
        %v3842 = vpop.permute.xlu0 %3841
        %3845 = vset.pattern.permute.xlu0 0
        %3846 = vperm.xlu0 %3845, %v3710
        %v3847 = vpop.permute.xlu0 %3846
        %3850 = vset.pattern.permute.xlu0 0
        %3851 = vperm.xlu0 %3850, %v3711
        %v3852 = vpop.permute.xlu0 %3851
        %3855 = vset.pattern.permute.xlu0 0
        %3856 = vperm.xlu0 %3855, %v3712
        %v3857 = vpop.permute.xlu0 %3856
        %v3859 = vmul.f32 %v3742, %v1533
        %v3860 = vmul.f32 %v3747, %v1533
        %v3861 = vmul.f32 %v3752, %v1533
        %v3862 = vmul.f32 %v3757, %v1533
        %v3863 = vmul.f32 %v3762, %v1533
        %v3864 = vmul.f32 %v3767, %v1533
        %v3865 = vmul.f32 %v3772, %v1533
        %v3866 = vmul.f32 %v3777, %v1533
        %v3867 = vmul.f32 %v3782, %v1533
        %v3868 = vmul.f32 %v3787, %v1533
        %v3869 = vmul.f32 %v3792, %v1533
        %v3870 = vmul.f32 %v3797, %v1533
        %v3871 = vmul.f32 %v3802, %v1533
        %v3872 = vmul.f32 %v3807, %v1533
        %v3873 = vmul.f32 %v3812, %v1533
        %v3874 = vmul.f32 %v3817, %v1533
        %v3875 = vmul.f32 %v3822, %v1533
        %v3876 = vmul.f32 %v3827, %v1533
        %v3877 = vmul.f32 %v3832, %v1533
        %v3878 = vmul.f32 %v3837, %v1533
        %v3879 = vmul.f32 %v3842, %v1533
        %v3880 = vmul.f32 %v3847, %v1533
        %v3881 = vmul.f32 %v3852, %v1533
        %v3882 = vmul.f32 %v3857, %v1533
        %3883 = vset.pattern.permute.xlu0 1
        %3884 = vperm.xlu0 %3883, %v3689
        %v3885 = vpop.permute.xlu0 %3884
        %3887 = vset.pattern.permute.xlu0 1
        %3888 = vperm.xlu0 %3887, %v3690
        %v3889 = vpop.permute.xlu0 %3888
        %3891 = vset.pattern.permute.xlu0 1
        %3892 = vperm.xlu0 %3891, %v3691
        %v3893 = vpop.permute.xlu0 %3892
        %3895 = vset.pattern.permute.xlu0 1
        %3896 = vperm.xlu0 %3895, %v3692
        %v3897 = vpop.permute.xlu0 %3896
        %3899 = vset.pattern.permute.xlu0 1
        %3900 = vperm.xlu0 %3899, %v3693
        %v3901 = vpop.permute.xlu0 %3900
        %3903 = vset.pattern.permute.xlu0 1
        %3904 = vperm.xlu0 %3903, %v3694
        %v3905 = vpop.permute.xlu0 %3904
        %3907 = vset.pattern.permute.xlu0 1
        %3908 = vperm.xlu0 %3907, %v3695
        %v3909 = vpop.permute.xlu0 %3908
        %3911 = vset.pattern.permute.xlu0 1
        %3912 = vperm.xlu0 %3911, %v3696
        %v3913 = vpop.permute.xlu0 %3912
        %3915 = vset.pattern.permute.xlu0 1
        %3916 = vperm.xlu0 %3915, %v3697
        %v3917 = vpop.permute.xlu0 %3916
        %3919 = vset.pattern.permute.xlu0 1
        %3920 = vperm.xlu0 %3919, %v3698
        %v3921 = vpop.permute.xlu0 %3920
        %3923 = vset.pattern.permute.xlu0 1
        %3924 = vperm.xlu0 %3923, %v3699
        %v3925 = vpop.permute.xlu0 %3924
        %3927 = vset.pattern.permute.xlu0 1
        %3928 = vperm.xlu0 %3927, %v3700
        %v3929 = vpop.permute.xlu0 %3928
        %3931 = vset.pattern.permute.xlu0 1
        %3932 = vperm.xlu0 %3931, %v3701
        %v3933 = vpop.permute.xlu0 %3932
        %3935 = vset.pattern.permute.xlu0 1
        %3936 = vperm.xlu0 %3935, %v3702
        %v3937 = vpop.permute.xlu0 %3936
        %3939 = vset.pattern.permute.xlu0 1
        %3940 = vperm.xlu0 %3939, %v3703
        %v3941 = vpop.permute.xlu0 %3940
        %3943 = vset.pattern.permute.xlu0 1
        %3944 = vperm.xlu0 %3943, %v3704
        %v3945 = vpop.permute.xlu0 %3944
        %3947 = vset.pattern.permute.xlu0 1
        %3948 = vperm.xlu0 %3947, %v3705
        %v3949 = vpop.permute.xlu0 %3948
        %3951 = vset.pattern.permute.xlu0 1
        %3952 = vperm.xlu0 %3951, %v3706
        %v3953 = vpop.permute.xlu0 %3952
        %3955 = vset.pattern.permute.xlu0 1
        %3956 = vperm.xlu0 %3955, %v3707
        %v3957 = vpop.permute.xlu0 %3956
        %3959 = vset.pattern.permute.xlu0 1
        %3960 = vperm.xlu0 %3959, %v3708
        %v3961 = vpop.permute.xlu0 %3960
        %3963 = vset.pattern.permute.xlu0 1
        %3964 = vperm.xlu0 %3963, %v3709
        %v3965 = vpop.permute.xlu0 %3964
        %3967 = vset.pattern.permute.xlu0 1
        %3968 = vperm.xlu0 %3967, %v3710
        %v3969 = vpop.permute.xlu0 %3968
        %3971 = vset.pattern.permute.xlu0 1
        %3972 = vperm.xlu0 %3971, %v3711
        %v3973 = vpop.permute.xlu0 %3972
        %3975 = vset.pattern.permute.xlu0 1
        %3976 = vperm.xlu0 %3975, %v3712
        %v3977 = vpop.permute.xlu0 %3976
        %v3979 = vmul.f32 %v3885, %v1657
        %v3980 = vmul.f32 %v3889, %v1657
        %v3981 = vmul.f32 %v3893, %v1657
        %v3982 = vmul.f32 %v3897, %v1657
        %v3983 = vmul.f32 %v3901, %v1657
        %v3984 = vmul.f32 %v3905, %v1657
        %v3985 = vmul.f32 %v3909, %v1657
        %v3986 = vmul.f32 %v3913, %v1657
        %v3987 = vmul.f32 %v3917, %v1657
        %v3988 = vmul.f32 %v3921, %v1657
        %v3989 = vmul.f32 %v3925, %v1657
        %v3990 = vmul.f32 %v3929, %v1657
        %v3991 = vmul.f32 %v3933, %v1657
        %v3992 = vmul.f32 %v3937, %v1657
        %v3993 = vmul.f32 %v3941, %v1657
        %v3994 = vmul.f32 %v3945, %v1657
        %v3995 = vmul.f32 %v3949, %v1657
        %v3996 = vmul.f32 %v3953, %v1657
        %v3997 = vmul.f32 %v3957, %v1657
        %v3998 = vmul.f32 %v3961, %v1657
        %v3999 = vmul.f32 %v3965, %v1657
        %v4000 = vmul.f32 %v3969, %v1657
        %v4001 = vmul.f32 %v3973, %v1657
        %v4002 = vmul.f32 %v3977, %v1657
        %v4003 = vadd.f32 %v3859, %v3979
        %v4004 = vadd.f32 %v3860, %v3980
        %v4005 = vadd.f32 %v3861, %v3981
        %v4006 = vadd.f32 %v3862, %v3982
        %v4007 = vadd.f32 %v3863, %v3983
        %v4008 = vadd.f32 %v3864, %v3984
        %v4009 = vadd.f32 %v3865, %v3985
        %v4010 = vadd.f32 %v3866, %v3986
        %v4011 = vadd.f32 %v3867, %v3987
        %v4012 = vadd.f32 %v3868, %v3988
        %v4013 = vadd.f32 %v3869, %v3989
        %v4014 = vadd.f32 %v3870, %v3990
        %v4015 = vadd.f32 %v3871, %v3991
        %v4016 = vadd.f32 %v3872, %v3992
        %v4017 = vadd.f32 %v3873, %v3993
        %v4018 = vadd.f32 %v3874, %v3994
        %v4019 = vadd.f32 %v3875, %v3995
        %v4020 = vadd.f32 %v3876, %v3996
        %v4021 = vadd.f32 %v3877, %v3997
        %v4022 = vadd.f32 %v3878, %v3998
        %v4023 = vadd.f32 %v3879, %v3999
        %v4024 = vadd.f32 %v3880, %v4000
        %v4025 = vadd.f32 %v3881, %v4001
        %v4026 = vadd.f32 %v3882, %v4002
        %v4027 = vadd.f32 %v4003, %v1710
        %v4028 = vadd.f32 %v4004, %v1710
        %v4029 = vadd.f32 %v4005, %v1710
        %v4030 = vadd.f32 %v4006, %v1710
        %v4031 = vadd.f32 %v4007, %v1710
        %v4032 = vadd.f32 %v4008, %v1710
        %v4033 = vadd.f32 %v4009, %v1710
        %v4034 = vadd.f32 %v4010, %v1710
        %v4035 = vadd.f32 %v4011, %v1710
        %v4036 = vadd.f32 %v4012, %v1710
        %v4037 = vadd.f32 %v4013, %v1710
        %v4038 = vadd.f32 %v4014, %v1710
        %v4039 = vadd.f32 %v4015, %v1710
        %v4040 = vadd.f32 %v4016, %v1710
        %v4041 = vadd.f32 %v4017, %v1710
        %v4042 = vadd.f32 %v4018, %v1710
        %v4043 = vadd.f32 %v4019, %v1710
        %v4044 = vadd.f32 %v4020, %v1710
        %v4045 = vadd.f32 %v4021, %v1710
        %v4046 = vadd.f32 %v4022, %v1710
        %v4047 = vadd.f32 %v4023, %v1710
        %v4048 = vadd.f32 %v4024, %v1710
        %v4049 = vadd.f32 %v4025, %v1710
        %v4050 = vadd.f32 %v4026, %v1710
        %v4051 = vmax.f32 %v4027, 0.0
        %v4052 = vmax.f32 %v4028, 0.0
        %v4053 = vmax.f32 %v4029, 0.0
        %v4054 = vmax.f32 %v4030, 0.0
        %v4055 = vmax.f32 %v4031, 0.0
        %v4056 = vmax.f32 %v4032, 0.0
        %v4057 = vmax.f32 %v4033, 0.0
        %v4058 = vmax.f32 %v4034, 0.0
        %v4059 = vmax.f32 %v4035, 0.0
        %v4060 = vmax.f32 %v4036, 0.0
        %v4061 = vmax.f32 %v4037, 0.0
        %v4062 = vmax.f32 %v4038, 0.0
        %v4063 = vmax.f32 %v4039, 0.0
        %v4064 = vmax.f32 %v4040, 0.0
        %v4065 = vmax.f32 %v4041, 0.0
        %v4066 = vmax.f32 %v4042, 0.0
        %v4067 = vmax.f32 %v4043, 0.0
        %v4068 = vmax.f32 %v4044, 0.0
        %v4069 = vmax.f32 %v4045, 0.0
        %v4070 = vmax.f32 %v4046, 0.0
        %v4071 = vmax.f32 %v4047, 0.0
        %v4072 = vmax.f32 %v4048, 0.0
        %v4073 = vmax.f32 %v4049, 0.0
        %v4074 = vmax.f32 %v4050, 0.0
        %v4075 = vmul.f32 %v4051, %v3737
        %v4076 = vmul.f32 %v4052, %v3738
        %v4077 = vmul.f32 %v4053, %v3737
        %v4078 = vmul.f32 %v4054, %v3738
        %v4079 = vmul.f32 %v4055, %v3737
        %v4080 = vmul.f32 %v4056, %v3738
        %v4081 = vmul.f32 %v4057, %v3737
        %v4082 = vmul.f32 %v4058, %v3738
        %v4083 = vmul.f32 %v4059, %v3737
        %v4084 = vmul.f32 %v4060, %v3738
        %v4085 = vmul.f32 %v4061, %v3737
        %v4086 = vmul.f32 %v4062, %v3738
        %v4087 = vmul.f32 %v4063, %v3737
        %v4088 = vmul.f32 %v4064, %v3738
        %v4089 = vmul.f32 %v4065, %v3737
        %v4090 = vmul.f32 %v4066, %v3738
        %v4091 = vmul.f32 %v4067, %v3737
        %v4092 = vmul.f32 %v4068, %v3738
        %v4093 = vmul.f32 %v4069, %v3737
        %v4094 = vmul.f32 %v4070, %v3738
        %v4095 = vmul.f32 %v4071, %v3737
        %v4096 = vmul.f32 %v4072, %v3738
        %v4097 = vmul.f32 %v4073, %v3737
        %v4098 = vmul.f32 %v4074, %v3738
        %v4099 = vsel %vm1784, %v4075, 0.0
        %v4100 = vsel %vm1786, %v4076, 0.0
        %v4101 = vadd.f32 %v4099, %v4100
        %v4102 = vrot.slane %v4101, 4
        %v4103 = vadd.f32 %v4101, %v4102
        %v4104 = vrot.slane %v4103, 2
        %v4105 = vadd.f32 %v4103, %v4104
        %v4106 = vrot.slane %v4105, 1
        %v4107 = vadd.f32 %v4105, %v4106
        %v4108 = vsel %vm1784, %v4077, 0.0
        %v4109 = vsel %vm1786, %v4078, 0.0
        %v4110 = vadd.f32 %v4108, %v4109
        %v4111 = vrot.slane %v4110, 4
        %v4112 = vadd.f32 %v4110, %v4111
        %v4113 = vrot.slane %v4112, 2
        %v4114 = vadd.f32 %v4112, %v4113
        %v4115 = vrot.slane %v4114, 1
        %v4116 = vadd.f32 %v4114, %v4115
        %v4117 = vsel %vm1784, %v4079, 0.0
        %v4118 = vsel %vm1786, %v4080, 0.0
        %v4119 = vadd.f32 %v4117, %v4118
        %v4120 = vrot.slane %v4119, 4
        %v4121 = vadd.f32 %v4119, %v4120
        %v4122 = vrot.slane %v4121, 2
        %v4123 = vadd.f32 %v4121, %v4122
        %v4124 = vrot.slane %v4123, 1
        %v4125 = vadd.f32 %v4123, %v4124
        %v4126 = vsel %vm1784, %v4081, 0.0
        %v4127 = vsel %vm1786, %v4082, 0.0
        %v4128 = vadd.f32 %v4126, %v4127
        %v4129 = vrot.slane %v4128, 4
        %v4130 = vadd.f32 %v4128, %v4129
        %v4131 = vrot.slane %v4130, 2
        %v4132 = vadd.f32 %v4130, %v4131
        %v4133 = vrot.slane %v4132, 1
        %v4134 = vadd.f32 %v4132, %v4133
        %v4135 = vsel %vm1784, %v4083, 0.0
        %v4136 = vsel %vm1786, %v4084, 0.0
        %v4137 = vadd.f32 %v4135, %v4136
        %v4138 = vrot.slane %v4137, 4
        %v4139 = vadd.f32 %v4137, %v4138
        %v4140 = vrot.slane %v4139, 2
        %v4141 = vadd.f32 %v4139, %v4140
        %v4142 = vrot.slane %v4141, 1
        %v4143 = vadd.f32 %v4141, %v4142
        %v4144 = vsel %vm1784, %v4085, 0.0
        %v4145 = vsel %vm1786, %v4086, 0.0
        %v4146 = vadd.f32 %v4144, %v4145
        %v4147 = vrot.slane %v4146, 4
        %v4148 = vadd.f32 %v4146, %v4147
        %v4149 = vrot.slane %v4148, 2
        %v4150 = vadd.f32 %v4148, %v4149
        %v4151 = vrot.slane %v4150, 1
        %v4152 = vadd.f32 %v4150, %v4151
        %v4153 = vsel %vm1784, %v4087, 0.0
        %v4154 = vsel %vm1786, %v4088, 0.0
        %v4155 = vadd.f32 %v4153, %v4154
        %v4156 = vrot.slane %v4155, 4
        %v4157 = vadd.f32 %v4155, %v4156
        %v4158 = vrot.slane %v4157, 2
        %v4159 = vadd.f32 %v4157, %v4158
        %v4160 = vrot.slane %v4159, 1
        %v4161 = vadd.f32 %v4159, %v4160
        %v4162 = vsel %vm1784, %v4089, 0.0
        %v4163 = vsel %vm1786, %v4090, 0.0
        %v4164 = vadd.f32 %v4162, %v4163
        %v4165 = vrot.slane %v4164, 4
        %v4166 = vadd.f32 %v4164, %v4165
        %v4167 = vrot.slane %v4166, 2
        %v4168 = vadd.f32 %v4166, %v4167
        %v4169 = vrot.slane %v4168, 1
        %v4170 = vadd.f32 %v4168, %v4169
        %v4171 = vsel %vm1784, %v4091, 0.0
        %v4172 = vsel %vm1786, %v4092, 0.0
        %v4173 = vadd.f32 %v4171, %v4172
        %v4174 = vrot.slane %v4173, 4
        %v4175 = vadd.f32 %v4173, %v4174
        %v4176 = vrot.slane %v4175, 2
        %v4177 = vadd.f32 %v4175, %v4176
        %v4178 = vrot.slane %v4177, 1
        %v4179 = vadd.f32 %v4177, %v4178
        %v4180 = vsel %vm1784, %v4093, 0.0
        %v4181 = vsel %vm1786, %v4094, 0.0
        %v4182 = vadd.f32 %v4180, %v4181
        %v4183 = vrot.slane %v4182, 4
        %v4184 = vadd.f32 %v4182, %v4183
        %v4185 = vrot.slane %v4184, 2
        %v4186 = vadd.f32 %v4184, %v4185
        %v4187 = vrot.slane %v4186, 1
        %v4188 = vadd.f32 %v4186, %v4187
        %v4189 = vsel %vm1784, %v4095, 0.0
        %v4190 = vsel %vm1786, %v4096, 0.0
        %v4191 = vadd.f32 %v4189, %v4190
        %v4192 = vrot.slane %v4191, 4
        %v4193 = vadd.f32 %v4191, %v4192
        %v4194 = vrot.slane %v4193, 2
        %v4195 = vadd.f32 %v4193, %v4194
        %v4196 = vrot.slane %v4195, 1
        %v4197 = vadd.f32 %v4195, %v4196
        %v4198 = vsel %vm1784, %v4097, 0.0
        %v4199 = vsel %vm1786, %v4098, 0.0
        %v4200 = vadd.f32 %v4198, %v4199
        %v4201 = vrot.slane %v4200, 4
        %v4202 = vadd.f32 %v4200, %v4201
        %v4203 = vrot.slane %v4202, 2
        %v4204 = vadd.f32 %v4202, %v4203
        %v4205 = vrot.slane %v4204, 1
        %v4206 = vadd.f32 %v4204, %v4205
        %v4219 = vsel %vm1906, %v4116, %v4107
        %v4220 = vsel %vm1908, %v4125, %v4219
        %v4221 = vsel %vm1910, %v4134, %v4220
        %v4222 = vsel %vm1912, %v4143, %v4221
        %v4223 = vsel %vm1914, %v4152, %v4222
        %v4224 = vsel %vm1916, %v4161, %v4223
        %v4225 = vsel %vm1918, %v4170, %v4224
        %v4226 = vsel %vm1906, %v4188, %v4179
        %v4227 = vsel %vm1908, %v4197, %v4226
        %v4228 = vsel %vm1910, %v4206, %v4227
        %4231 = vst.msk [vmem:[#allocation2 + $0x18] sm:$0xff] %vm1784, %v4225
        %4232 = vst.msk [vmem:[#allocation2 + $0x20] sm:$0xf] %vm1786, %v4228
        %4233 = vset.pattern.permute.xlu0 0
        %4234 = vperm.xlu0 %4233, %v3108
        %v4235 = vpop.permute.xlu0 %4234
        %v4237 = vmul.f32 %v4235, %v1934
        %4238 = vset.pattern.permute.xlu0 1
        %4239 = vperm.xlu0 %4238, %v3108
        %v4240 = vpop.permute.xlu0 %4239
        %v4242 = vmul.f32 %v4240, %v1943
        %v4243 = vadd.f32 %v4237, %v4242
        %v4244 = vadd.f32 %v4243, %v1950
        %v4245 = vmul.f32 %v3552, %v3715
        %v4246 = vadd.f32 %v4245, %v4244
        %4247 = vst.msk [vmem:[#allocation4 + $0x7] sm:$0xf8] %vm1955, %v4246
        %4248 = vrot.lane.b32.xlu0 %v3108, 126
        %v4249 = vpop.permute.xlu0 %4248
        %4251 = vst.msk [vmem:[#allocation5 + $0x7] sm:$0xf8] %vm1960, %v4249
        %s4252 = scalar_lea.vmem %s697, 48
        %v4253 = vld [vmem:[%s4252] sm:$0xff]
        %v4254 = vld [vmem:[%s4252 + $0x8] sm:$0xf]
        %v4255 = vmul.f32 %v4253, 3.1415927
        %v4256 = vmul.f32 %v4254, 3.1415927
        %v4257 = vand.u32 2147483647, %v4255
        %vm4258 = vcmp.le.f32.partialorder %v4257, 0.7853982
        %vm4259 = vcmp.lt.s32.totalorder %v4255, 0
        %v4260 = vand.u32 %v4255, 2139095040
        %v4261 = vshrl.u32 %v4260, 23
        %v4262 = vsub.s32 %v4261, 127
        %v4263 = vand.u32 2147483647, %v4255
        %v4264 = vand.u32 %v4263, 8388607
        %v4265 = vor.u32 %v4264, 8388608
        %v4266 = vsub.s32 0, %v4265
        %v4267 = vadd.s32 %v4262, 1
        %vm4268 = vcmp.gt.s32.totalorder %v4267, 0
        %v4269 = vsel %vm4268, %v4267, 0
        %v4270 = vshrl.u32 %v4269, 5
        %v4271 = vand.u32 %v4269, 31
        %v4272 = vsub.s32 32, %v4271
        %v4273 = vshrl.u32 683565275, %v4272
        %v4274 = vshll.u32 683565275, %v4271
        %v4275 = vshrl.u32 2475754826, %v4272
        %v4276 = vor.u32 %v4274, %v4275
        %v4277 = vshll.u32 2475754826, %v4271
        %v4278 = vshrl.u32 2131351028, %v4272
        %v4279 = vor.u32 %v4277, %v4278
        %v4280 = vshll.u32 2131351028, %v4271
        %v4281 = vshrl.u32 2102212464, %v4272
        %v4282 = vor.u32 %v4280, %v4281
        %v4283 = vshll.u32 2102212464, %v4271
        %v4284 = vshrl.u32 920167782, %v4272
        %v4285 = vor.u32 %v4283, %v4284
        %v4286 = vshll.u32 920167782, %v4271
        %v4287 = vshrl.u32 1326507024, %v4272
        %v4288 = vor.u32 %v4286, %v4287
        %vm4289 = vcmp.lt.s32.totalorder %v4270, 1
        %vm4290 = vcmp.lt.s32.totalorder %v4270, 2
        %vm4291 = vcmp.lt.s32.totalorder %v4270, 3
        %vm4292 = vcmp.lt.s32.totalorder %v4270, 4
        %v4293 = vsel %vm4289, %v4273, %v4276
        %v4294 = vsel %vm4292, %v4282, 2102212464
        %v4295 = vsel %vm4291, %v4279, %v4294
        %v4296 = vsel %vm4290, %v4293, %v4295
        %v4297 = vsel %vm4289, %v4276, %v4279
        %v4298 = vsel %vm4292, %v4285, 920167782
        %v4299 = vsel %vm4291, %v4282, %v4298
        %v4300 = vsel %vm4290, %v4297, %v4299
        %v4301 = vsel %vm4289, %v4279, %v4282
        %v4302 = vsel %vm4292, %v4288, 1326507024
        %v4303 = vsel %vm4291, %v4285, %v4302
        %v4304 = vsel %vm4290, %v4301, %v4303
        %v4305 = vshll.u32 %v4265, 8
        %v4306 = vmul.u32.u64.compose %v4305, %v4304
        %v4307 = vextract.low.u32 %v4306
        %v4308 = vextract.high.u32 %v4306
        %v4309 = vmul.u32.u64.compose %v4305, %v4300
        %v4310 = vextract.low.u32 %v4309
        %v4311 = vextract.high.u32 %v4309
        %v4312 = vmul.u32 %v4305, %v4296
        %v4313 = vadd.s32 %v4308, %v4310
        %vm4314 = vc.u32 %v4308, %v4310
        %v4315 = vadd.s32 %v4311, 1
        %v4316 = vsel %vm4314, %v4315, %v4311
        %v4317 = vadd.s32 %v4312, %v4316
        %v4318 = vadd.s32 %v4317, 536870912
        %v4319 = vshrl.u32 %v4318, 30
        %v4320 = vshll.u32 %v4319, 30
        %v4321 = vsub.s32 %v4317, %v4320
        %vm4322 = vcmp.lt.s32.totalorder %v4321, 0
        %v4323 = vsub.s32 0, %v4321
        %v4324 = vsel %vm4322, %v4323, %v4321
        %v4325 = vclz %v4324
        %v4326 = vsub.s32 %v4325, 2
        %vm4327 = vcmp.gt.s32.totalorder 0, %v4326
        %v4328 = vsel %vm4327, 0, %v4326
        %v4329 = vsub.s32 32, %v4328
        %v4330 = vshll.u32 %v4321, %v4328
        %v4331 = vshrl.u32 %v4313, %v4329
        %v4332 = vor.u32 %v4330, %v4331
        %v4333 = vsub.s32 4294967266, %v4328
        %v4334 = vadd.s32 %v4333, 127
        %v4335 = vshll.u32 %v4334, 23
        %v4336 = vor.u32 4788187, %v4335
        %v4337 = vand.u32 2147483647, %v4336
        %v4339 = vcvt.s32.f32 %v4332
        %v4340 = vmul.f32 %v4339, %v4337
        %v4341 = vxor.u32 %v4340, 2147483648
        %v4342 = vsel %vm4259, %v4341, %v4340
        %v4343 = vsub.s32 4, %v4319
        %v4344 = vsel %vm4259, %v4343, %v4319
        %v4345 = vsel %vm4258, %v4255, %v4342
        %v4346 = vsel %vm4258, 0, %v4344
        %v4347 = vcosq.f32.pop %v4345
        %v4348 = vsinq.f32.pop %v4345
        %vm4349 = vweird.f32 %v4255
        %v4350 = vadd.s32 %v4346, 3
        %v4351 = vand.u32 %v4350, 3
        %vm4352 = vcmp.lt.s32.totalorder %v4351, 2
        %vm4353 = vcmp.eq.s32.totalorder %v4351, 0
        %v4354 = vxor.u32 %v4348, 2147483648
        %v4355 = vsel %vm4353, %v4347, %v4354
        %vm4356 = vcmp.eq.s32.totalorder %v4351, 2
        %v4357 = vxor.u32 %v4347, 2147483648
        %v4358 = vsel %vm4356, %v4357, %v4348
        %v4359 = vsel %vm4352, %v4355, %v4358
        %v4360 = vsel %vm4349, nan, %v4359
        %v4361 = vand.u32 2147483647, %v4256
        %vm4362 = vcmp.le.f32.partialorder %v4361, 0.7853982
        %vm4363 = vcmp.lt.s32.totalorder %v4256, 0
        %v4364 = vand.u32 %v4256, 2139095040
        %v4365 = vshrl.u32 %v4364, 23
        %v4366 = vsub.s32 %v4365, 127
        %v4367 = vand.u32 2147483647, %v4256
        %v4368 = vand.u32 %v4367, 8388607
        %v4369 = vor.u32 %v4368, 8388608
        %v4370 = vsub.s32 0, %v4369
        %v4371 = vadd.s32 %v4366, 1
        %vm4372 = vcmp.gt.s32.totalorder %v4371, 0
        %v4373 = vsel %vm4372, %v4371, 0
        %v4374 = vshrl.u32 %v4373, 5
        %v4375 = vand.u32 %v4373, 31
        %v4376 = vsub.s32 32, %v4375
        %v4377 = vshrl.u32 683565275, %v4376
        %v4378 = vshll.u32 683565275, %v4375
        %v4379 = vshrl.u32 2475754826, %v4376
        %v4380 = vor.u32 %v4378, %v4379
        %v4381 = vshll.u32 2475754826, %v4375
        %v4382 = vshrl.u32 2131351028, %v4376
        %v4383 = vor.u32 %v4381, %v4382
        %v4384 = vshll.u32 2131351028, %v4375
        %v4385 = vshrl.u32 2102212464, %v4376
        %v4386 = vor.u32 %v4384, %v4385
        %v4387 = vshll.u32 2102212464, %v4375
        %v4388 = vshrl.u32 920167782, %v4376
        %v4389 = vor.u32 %v4387, %v4388
        %v4390 = vshll.u32 920167782, %v4375
        %v4391 = vshrl.u32 1326507024, %v4376
        %v4392 = vor.u32 %v4390, %v4391
        %vm4393 = vcmp.lt.s32.totalorder %v4374, 1
        %vm4394 = vcmp.lt.s32.totalorder %v4374, 2
        %vm4395 = vcmp.lt.s32.totalorder %v4374, 3
        %vm4396 = vcmp.lt.s32.totalorder %v4374, 4
        %v4397 = vsel %vm4393, %v4377, %v4380
        %v4398 = vsel %vm4396, %v4386, 2102212464
        %v4399 = vsel %vm4395, %v4383, %v4398
        %v4400 = vsel %vm4394, %v4397, %v4399
        %v4401 = vsel %vm4393, %v4380, %v4383
        %v4402 = vsel %vm4396, %v4389, 920167782
        %v4403 = vsel %vm4395, %v4386, %v4402
        %v4404 = vsel %vm4394, %v4401, %v4403
        %v4405 = vsel %vm4393, %v4383, %v4386
        %v4406 = vsel %vm4396, %v4392, 1326507024
        %v4407 = vsel %vm4395, %v4389, %v4406
        %v4408 = vsel %vm4394, %v4405, %v4407
        %v4409 = vshll.u32 %v4369, 8
        %v4410 = vmul.u32.u64.compose %v4409, %v4408
        %v4411 = vextract.low.u32 %v4410
        %v4412 = vextract.high.u32 %v4410
        %v4413 = vmul.u32.u64.compose %v4409, %v4404
        %v4414 = vextract.low.u32 %v4413
        %v4415 = vextract.high.u32 %v4413
        %v4416 = vmul.u32 %v4409, %v4400
        %v4417 = vadd.s32 %v4412, %v4414
        %vm4418 = vc.u32 %v4412, %v4414
        %v4419 = vadd.s32 %v4415, 1
        %v4420 = vsel %vm4418, %v4419, %v4415
        %v4421 = vadd.s32 %v4416, %v4420
        %v4422 = vadd.s32 %v4421, 536870912
        %v4423 = vshrl.u32 %v4422, 30
        %v4424 = vshll.u32 %v4423, 30
        %v4425 = vsub.s32 %v4421, %v4424
        %vm4426 = vcmp.lt.s32.totalorder %v4425, 0
        %v4427 = vsub.s32 0, %v4425
        %v4428 = vsel %vm4426, %v4427, %v4425
        %v4429 = vclz %v4428
        %v4430 = vsub.s32 %v4429, 2
        %vm4431 = vcmp.gt.s32.totalorder 0, %v4430
        %v4432 = vsel %vm4431, 0, %v4430
        %v4433 = vsub.s32 32, %v4432
        %v4434 = vshll.u32 %v4425, %v4432
        %v4435 = vshrl.u32 %v4417, %v4433
        %v4436 = vor.u32 %v4434, %v4435
        %v4437 = vsub.s32 4294967266, %v4432
        %v4438 = vadd.s32 %v4437, 127
        %v4439 = vshll.u32 %v4438, 23
        %v4440 = vor.u32 4788187, %v4439
        %v4441 = vand.u32 2147483647, %v4440
        %v4443 = vcvt.s32.f32 %v4436
        %v4444 = vmul.f32 %v4443, %v4441
        %v4445 = vxor.u32 %v4444, 2147483648
        %v4446 = vsel %vm4363, %v4445, %v4444
        %v4447 = vsub.s32 4, %v4423
        %v4448 = vsel %vm4363, %v4447, %v4423
        %v4449 = vsel %vm4362, %v4256, %v4446
        %v4450 = vsel %vm4362, 0, %v4448
        %v4451 = vcosq.f32.pop %v4449
        %v4452 = vsinq.f32.pop %v4449
        %vm4453 = vweird.f32 %v4256
        %v4454 = vadd.s32 %v4450, 3
        %v4455 = vand.u32 %v4454, 3
        %vm4456 = vcmp.lt.s32.totalorder %v4455, 2
        %vm4457 = vcmp.eq.s32.totalorder %v4455, 0
        %v4458 = vxor.u32 %v4452, 2147483648
        %v4459 = vsel %vm4457, %v4451, %v4458
        %vm4460 = vcmp.eq.s32.totalorder %v4455, 2
        %v4461 = vxor.u32 %v4451, 2147483648
        %v4462 = vsel %vm4460, %v4461, %v4452
        %v4463 = vsel %vm4456, %v4459, %v4462
        %v4464 = vsel %vm4453, nan, %v4463
        %4466 = vset.pattern.permute.xlu0 3
        %4467 = vperm.xlu0 %4466, %v4360
        %v4468 = vpop.permute.xlu0 %4467
        %4471 = vset.pattern.permute.xlu0 3
        %4472 = vperm.xlu0 %4471, %v4464
        %v4473 = vpop.permute.xlu0 %4472
        %v4475 = vmul.f32 %v4468, %v964
        %v4476 = vmul.f32 %v4473, %v964
        %v4477 = vand.u32 2147483647, %v4255
        %vm4478 = vcmp.le.f32.partialorder %v4477, 0.7853982
        %vm4479 = vcmp.lt.s32.totalorder %v4255, 0
        %v4480 = vand.u32 %v4255, 2139095040
        %v4481 = vshrl.u32 %v4480, 23
        %v4482 = vsub.s32 %v4481, 127
        %v4483 = vand.u32 2147483647, %v4255
        %v4484 = vand.u32 %v4483, 8388607
        %v4485 = vor.u32 %v4484, 8388608
        %v4486 = vsub.s32 0, %v4485
        %v4487 = vadd.s32 %v4482, 1
        %vm4488 = vcmp.gt.s32.totalorder %v4487, 0
        %v4489 = vsel %vm4488, %v4487, 0
        %v4490 = vshrl.u32 %v4489, 5
        %v4491 = vand.u32 %v4489, 31
        %v4492 = vsub.s32 32, %v4491
        %v4493 = vshrl.u32 683565275, %v4492
        %v4494 = vshll.u32 683565275, %v4491
        %v4495 = vshrl.u32 2475754826, %v4492
        %v4496 = vor.u32 %v4494, %v4495
        %v4497 = vshll.u32 2475754826, %v4491
        %v4498 = vshrl.u32 2131351028, %v4492
        %v4499 = vor.u32 %v4497, %v4498
        %v4500 = vshll.u32 2131351028, %v4491
        %v4501 = vshrl.u32 2102212464, %v4492
        %v4502 = vor.u32 %v4500, %v4501
        %v4503 = vshll.u32 2102212464, %v4491
        %v4504 = vshrl.u32 920167782, %v4492
        %v4505 = vor.u32 %v4503, %v4504
        %v4506 = vshll.u32 920167782, %v4491
        %v4507 = vshrl.u32 1326507024, %v4492
        %v4508 = vor.u32 %v4506, %v4507
        %vm4509 = vcmp.lt.s32.totalorder %v4490, 1
        %vm4510 = vcmp.lt.s32.totalorder %v4490, 2
        %vm4511 = vcmp.lt.s32.totalorder %v4490, 3
        %vm4512 = vcmp.lt.s32.totalorder %v4490, 4
        %v4513 = vsel %vm4509, %v4493, %v4496
        %v4514 = vsel %vm4512, %v4502, 2102212464
        %v4515 = vsel %vm4511, %v4499, %v4514
        %v4516 = vsel %vm4510, %v4513, %v4515
        %v4517 = vsel %vm4509, %v4496, %v4499
        %v4518 = vsel %vm4512, %v4505, 920167782
        %v4519 = vsel %vm4511, %v4502, %v4518
        %v4520 = vsel %vm4510, %v4517, %v4519
        %v4521 = vsel %vm4509, %v4499, %v4502
        %v4522 = vsel %vm4512, %v4508, 1326507024
        %v4523 = vsel %vm4511, %v4505, %v4522
        %v4524 = vsel %vm4510, %v4521, %v4523
        %v4525 = vshll.u32 %v4485, 8
        %v4526 = vmul.u32.u64.compose %v4525, %v4524
        %v4527 = vextract.low.u32 %v4526
        %v4528 = vextract.high.u32 %v4526
        %v4529 = vmul.u32.u64.compose %v4525, %v4520
        %v4530 = vextract.low.u32 %v4529
        %v4531 = vextract.high.u32 %v4529
        %v4532 = vmul.u32 %v4525, %v4516
        %v4533 = vadd.s32 %v4528, %v4530
        %vm4534 = vc.u32 %v4528, %v4530
        %v4535 = vadd.s32 %v4531, 1
        %v4536 = vsel %vm4534, %v4535, %v4531
        %v4537 = vadd.s32 %v4532, %v4536
        %v4538 = vadd.s32 %v4537, 536870912
        %v4539 = vshrl.u32 %v4538, 30
        %v4540 = vshll.u32 %v4539, 30
        %v4541 = vsub.s32 %v4537, %v4540
        %vm4542 = vcmp.lt.s32.totalorder %v4541, 0
        %v4543 = vsub.s32 0, %v4541
        %v4544 = vsel %vm4542, %v4543, %v4541
        %v4545 = vclz %v4544
        %v4546 = vsub.s32 %v4545, 2
        %vm4547 = vcmp.gt.s32.totalorder 0, %v4546
        %v4548 = vsel %vm4547, 0, %v4546
        %v4549 = vsub.s32 32, %v4548
        %v4550 = vshll.u32 %v4541, %v4548
        %v4551 = vshrl.u32 %v4533, %v4549
        %v4552 = vor.u32 %v4550, %v4551
        %v4553 = vsub.s32 4294967266, %v4548
        %v4554 = vadd.s32 %v4553, 127
        %v4555 = vshll.u32 %v4554, 23
        %v4556 = vor.u32 4788187, %v4555
        %v4557 = vand.u32 2147483647, %v4556
        %v4559 = vcvt.s32.f32 %v4552
        %v4560 = vmul.f32 %v4559, %v4557
        %v4561 = vxor.u32 %v4560, 2147483648
        %v4562 = vsel %vm4479, %v4561, %v4560
        %v4563 = vsub.s32 4, %v4539
        %v4564 = vsel %vm4479, %v4563, %v4539
        %v4565 = vsel %vm4478, %v4255, %v4562
        %v4566 = vsel %vm4478, 0, %v4564
        %v4567 = vcosq.f32.pop %v4565
        %v4568 = vsinq.f32.pop %v4565
        %vm4569 = vweird.f32 %v4255
        %v4570 = vand.u32 %v4566, 3
        %vm4571 = vcmp.lt.s32.totalorder %v4570, 2
        %vm4572 = vcmp.eq.s32.totalorder %v4570, 0
        %v4573 = vxor.u32 %v4568, 2147483648
        %v4574 = vsel %vm4572, %v4567, %v4573
        %vm4575 = vcmp.eq.s32.totalorder %v4570, 2
        %v4576 = vxor.u32 %v4567, 2147483648
        %v4577 = vsel %vm4575, %v4576, %v4568
        %v4578 = vsel %vm4571, %v4574, %v4577
        %v4579 = vsel %vm4569, nan, %v4578
        %v4580 = vand.u32 2147483647, %v4256
        %vm4581 = vcmp.le.f32.partialorder %v4580, 0.7853982
        %vm4582 = vcmp.lt.s32.totalorder %v4256, 0
        %v4583 = vand.u32 %v4256, 2139095040
        %v4584 = vshrl.u32 %v4583, 23
        %v4585 = vsub.s32 %v4584, 127
        %v4586 = vand.u32 2147483647, %v4256
        %v4587 = vand.u32 %v4586, 8388607
        %v4588 = vor.u32 %v4587, 8388608
        %v4589 = vsub.s32 0, %v4588
        %v4590 = vadd.s32 %v4585, 1
        %vm4591 = vcmp.gt.s32.totalorder %v4590, 0
        %v4592 = vsel %vm4591, %v4590, 0
        %v4593 = vshrl.u32 %v4592, 5
        %v4594 = vand.u32 %v4592, 31
        %v4595 = vsub.s32 32, %v4594
        %v4596 = vshrl.u32 683565275, %v4595
        %v4597 = vshll.u32 683565275, %v4594
        %v4598 = vshrl.u32 2475754826, %v4595
        %v4599 = vor.u32 %v4597, %v4598
        %v4600 = vshll.u32 2475754826, %v4594
        %v4601 = vshrl.u32 2131351028, %v4595
        %v4602 = vor.u32 %v4600, %v4601
        %v4603 = vshll.u32 2131351028, %v4594
        %v4604 = vshrl.u32 2102212464, %v4595
        %v4605 = vor.u32 %v4603, %v4604
        %v4606 = vshll.u32 2102212464, %v4594
        %v4607 = vshrl.u32 920167782, %v4595
        %v4608 = vor.u32 %v4606, %v4607
        %v4609 = vshll.u32 920167782, %v4594
        %v4610 = vshrl.u32 1326507024, %v4595
        %v4611 = vor.u32 %v4609, %v4610
        %vm4612 = vcmp.lt.s32.totalorder %v4593, 1
        %vm4613 = vcmp.lt.s32.totalorder %v4593, 2
        %vm4614 = vcmp.lt.s32.totalorder %v4593, 3
        %vm4615 = vcmp.lt.s32.totalorder %v4593, 4
        %v4616 = vsel %vm4612, %v4596, %v4599
        %v4617 = vsel %vm4615, %v4605, 2102212464
        %v4618 = vsel %vm4614, %v4602, %v4617
        %v4619 = vsel %vm4613, %v4616, %v4618
        %v4620 = vsel %vm4612, %v4599, %v4602
        %v4621 = vsel %vm4615, %v4608, 920167782
        %v4622 = vsel %vm4614, %v4605, %v4621
        %v4623 = vsel %vm4613, %v4620, %v4622
        %v4624 = vsel %vm4612, %v4602, %v4605
        %v4625 = vsel %vm4615, %v4611, 1326507024
        %v4626 = vsel %vm4614, %v4608, %v4625
        %v4627 = vsel %vm4613, %v4624, %v4626
        %v4628 = vshll.u32 %v4588, 8
        %v4629 = vmul.u32.u64.compose %v4628, %v4627
        %v4630 = vextract.low.u32 %v4629
        %v4631 = vextract.high.u32 %v4629
        %v4632 = vmul.u32.u64.compose %v4628, %v4623
        %v4633 = vextract.low.u32 %v4632
        %v4634 = vextract.high.u32 %v4632
        %v4635 = vmul.u32 %v4628, %v4619
        %v4636 = vadd.s32 %v4631, %v4633
        %vm4637 = vc.u32 %v4631, %v4633
        %v4638 = vadd.s32 %v4634, 1
        %v4639 = vsel %vm4637, %v4638, %v4634
        %v4640 = vadd.s32 %v4635, %v4639
        %v4641 = vadd.s32 %v4640, 536870912
        %v4642 = vshrl.u32 %v4641, 30
        %v4643 = vshll.u32 %v4642, 30
        %v4644 = vsub.s32 %v4640, %v4643
        %vm4645 = vcmp.lt.s32.totalorder %v4644, 0
        %v4646 = vsub.s32 0, %v4644
        %v4647 = vsel %vm4645, %v4646, %v4644
        %v4648 = vclz %v4647
        %v4649 = vsub.s32 %v4648, 2
        %vm4650 = vcmp.gt.s32.totalorder 0, %v4649
        %v4651 = vsel %vm4650, 0, %v4649
        %v4652 = vsub.s32 32, %v4651
        %v4653 = vshll.u32 %v4644, %v4651
        %v4654 = vshrl.u32 %v4636, %v4652
        %v4655 = vor.u32 %v4653, %v4654
        %v4656 = vsub.s32 4294967266, %v4651
        %v4657 = vadd.s32 %v4656, 127
        %v4658 = vshll.u32 %v4657, 23
        %v4659 = vor.u32 4788187, %v4658
        %v4660 = vand.u32 2147483647, %v4659
        %v4662 = vcvt.s32.f32 %v4655
        %v4663 = vmul.f32 %v4662, %v4660
        %v4664 = vxor.u32 %v4663, 2147483648
        %v4665 = vsel %vm4582, %v4664, %v4663
        %v4666 = vsub.s32 4, %v4642
        %v4667 = vsel %vm4582, %v4666, %v4642
        %v4668 = vsel %vm4581, %v4256, %v4665
        %v4669 = vsel %vm4581, 0, %v4667
        %v4670 = vcosq.f32.pop %v4668
        %v4671 = vsinq.f32.pop %v4668
        %vm4672 = vweird.f32 %v4256
        %v4673 = vand.u32 %v4669, 3
        %vm4674 = vcmp.lt.s32.totalorder %v4673, 2
        %vm4675 = vcmp.eq.s32.totalorder %v4673, 0
        %v4676 = vxor.u32 %v4671, 2147483648
        %v4677 = vsel %vm4675, %v4670, %v4676
        %vm4678 = vcmp.eq.s32.totalorder %v4673, 2
        %v4679 = vxor.u32 %v4670, 2147483648
        %v4680 = vsel %vm4678, %v4679, %v4671
        %v4681 = vsel %vm4674, %v4677, %v4680
        %v4682 = vsel %vm4672, nan, %v4681
        %4684 = vset.pattern.permute.xlu0 3
        %4685 = vperm.xlu0 %4684, %v4579
        %v4686 = vpop.permute.xlu0 %4685
        %4689 = vset.pattern.permute.xlu0 3
        %4690 = vperm.xlu0 %4689, %v4682
        %v4691 = vpop.permute.xlu0 %4690
        %v4693 = vmul.f32 %v4686, %v1186
        %v4694 = vmul.f32 %v4691, %v1186
        %v4695 = vadd.f32 %v4475, %v4693
        %v4696 = vadd.f32 %v4476, %v4694
        %v4697 = vadd.f32 %v4695, %v1195
        %v4698 = vadd.f32 %v4696, %v1195
        %v4701 = vcombine.high %v4253, %v4253
        %v4703 = vunpack.c.l.s4 1966171168
        %v4704 = vunpack.c.0.s8 %v4703
        %v4705 = vlaneseq
        %v4706 = vshrl.u32 %v4705, 7
        %v4707 = vsub.s32 %v4704, %v4706
        %v4708 = vrot.slane %v4253, %v4707
        %v4710 = vunpack.c.l.s4 1966171168
        %v4711 = vunpack.c.0.s8 %v4710
        %v4712 = vlaneseq
        %v4713 = vshrl.u32 %v4712, 7
        %v4714 = vsub.s32 %v4711, %v4713
        %v4715 = vrot.slane %v4701, %v4714
        %v4716 = vcombine.high %v4708, %v4708
        %v4717 = vcombine.high %v4715, %v4715
        %v4719 = vunpack.c.l.s4 1966171168
        %v4720 = vunpack.c.0.s8 %v4719
        %v4721 = vlaneseq
        %v4722 = vshrl.u32 %v4721, 7
        %v4723 = vsub.s32 %v4720, %v4722
        %v4724 = vrot.slane %v4708, %v4723
        %v4726 = vunpack.c.l.s4 1966171168
        %v4727 = vunpack.c.0.s8 %v4726
        %v4728 = vlaneseq
        %v4729 = vshrl.u32 %v4728, 7
        %v4730 = vsub.s32 %v4727, %v4729
        %v4731 = vrot.slane %v4715, %v4730
        %v4733 = vunpack.c.l.s4 1966171168
        %v4734 = vunpack.c.0.s8 %v4733
        %v4735 = vlaneseq
        %v4736 = vshrl.u32 %v4735, 7
        %v4737 = vsub.s32 %v4734, %v4736
        %v4738 = vrot.slane %v4716, %v4737
        %v4740 = vunpack.c.l.s4 1966171168
        %v4741 = vunpack.c.0.s8 %v4740
        %v4742 = vlaneseq
        %v4743 = vshrl.u32 %v4742, 7
        %v4744 = vsub.s32 %v4741, %v4743
        %v4745 = vrot.slane %v4717, %v4744
        %v4746 = vcombine.high %v4724, %v4724
        %v4747 = vcombine.high %v4731, %v4731
        %v4748 = vcombine.high %v4738, %v4738
        %v4749 = vcombine.high %v4745, %v4745
        %v4751 = vunpack.c.l.s4 1966171168
        %v4752 = vunpack.c.0.s8 %v4751
        %v4753 = vlaneseq
        %v4754 = vshrl.u32 %v4753, 7
        %v4755 = vsub.s32 %v4752, %v4754
        %v4756 = vrot.slane %v4254, %v4755
        %v4757 = vcombine.high %v4756, %v4756
        %v4759 = vunpack.c.l.s4 1966171168
        %v4760 = vunpack.c.0.s8 %v4759
        %v4761 = vlaneseq
        %v4762 = vshrl.u32 %v4761, 7
        %v4763 = vsub.s32 %v4760, %v4762
        %v4764 = vrot.slane %v4756, %v4763
        %v4766 = vunpack.c.l.s4 1966171168
        %v4767 = vunpack.c.0.s8 %v4766
        %v4768 = vlaneseq
        %v4769 = vshrl.u32 %v4768, 7
        %v4770 = vsub.s32 %v4767, %v4769
        %v4771 = vrot.slane %v4757, %v4770
        %v4772 = vcombine.high %v4764, %v4764
        %v4773 = vcombine.high %v4771, %v4771
        %v4774 = vlaneseq
        %v4775 = vshrl.u32 %v4774, 7
        %v4776 = vsub.s32 0, %v4775
        %v4777 = vrot.slane %v4724, %v4776
        %v4778 = vlaneseq
        %v4779 = vshrl.u32 %v4778, 7
        %v4780 = vsub.s32 0, %v4779
        %v4781 = vrot.slane %v4738, %v4780
        %v4782 = vlaneseq
        %v4783 = vshrl.u32 %v4782, 7
        %v4784 = vsub.s32 0, %v4783
        %v4785 = vrot.slane %v4746, %v4784
        %v4786 = vlaneseq
        %v4787 = vshrl.u32 %v4786, 7
        %v4788 = vsub.s32 0, %v4787
        %v4789 = vrot.slane %v4748, %v4788
        %v4790 = vlaneseq
        %v4791 = vshrl.u32 %v4790, 7
        %v4792 = vsub.s32 0, %v4791
        %v4793 = vrot.slane %v4731, %v4792
        %v4794 = vlaneseq
        %v4795 = vshrl.u32 %v4794, 7
        %v4796 = vsub.s32 0, %v4795
        %v4797 = vrot.slane %v4745, %v4796
        %v4798 = vlaneseq
        %v4799 = vshrl.u32 %v4798, 7
        %v4800 = vsub.s32 0, %v4799
        %v4801 = vrot.slane %v4747, %v4800
        %v4802 = vlaneseq
        %v4803 = vshrl.u32 %v4802, 7
        %v4804 = vsub.s32 0, %v4803
        %v4805 = vrot.slane %v4749, %v4804
        %v4806 = vlaneseq
        %v4807 = vshrl.u32 %v4806, 7
        %v4808 = vsub.s32 0, %v4807
        %v4809 = vrot.slane %v4764, %v4808
        %v4810 = vlaneseq
        %v4811 = vshrl.u32 %v4810, 7
        %v4812 = vsub.s32 0, %v4811
        %v4813 = vrot.slane %v4771, %v4812
        %v4814 = vlaneseq
        %v4815 = vshrl.u32 %v4814, 7
        %v4816 = vsub.s32 0, %v4815
        %v4817 = vrot.slane %v4772, %v4816
        %v4818 = vlaneseq
        %v4819 = vshrl.u32 %v4818, 7
        %v4820 = vsub.s32 0, %v4819
        %v4821 = vrot.slane %v4773, %v4820
        %v4834 = vsub.f32 %v4253, %v4777
        %v4835 = vsub.f32 %v4254, %v4777
        %v4836 = vsub.f32 %v4253, %v4781
        %v4837 = vsub.f32 %v4254, %v4781
        %v4838 = vsub.f32 %v4253, %v4785
        %v4839 = vsub.f32 %v4254, %v4785
        %v4840 = vsub.f32 %v4253, %v4789
        %v4841 = vsub.f32 %v4254, %v4789
        %v4842 = vsub.f32 %v4253, %v4793
        %v4843 = vsub.f32 %v4254, %v4793
        %v4844 = vsub.f32 %v4253, %v4797
        %v4845 = vsub.f32 %v4254, %v4797
        %v4846 = vsub.f32 %v4253, %v4801
        %v4847 = vsub.f32 %v4254, %v4801
        %v4848 = vsub.f32 %v4253, %v4805
        %v4849 = vsub.f32 %v4254, %v4805
        %v4850 = vsub.f32 %v4253, %v4809
        %v4851 = vsub.f32 %v4254, %v4809
        %v4852 = vsub.f32 %v4253, %v4813
        %v4853 = vsub.f32 %v4254, %v4813
        %v4854 = vsub.f32 %v4253, %v4817
        %v4855 = vsub.f32 %v4254, %v4817
        %v4856 = vsub.f32 %v4253, %v4821
        %v4857 = vsub.f32 %v4254, %v4821
        %4858 = vset.pattern.permute.xlu0 2
        %4859 = vperm.xlu0 %4858, %v4253
        %v4860 = vpop.permute.xlu0 %4859
        %4862 = vset.pattern.permute.xlu0 2
        %4863 = vperm.xlu0 %4862, %v4254
        %v4864 = vpop.permute.xlu0 %4863
        %v4866 = vmul.f32 %v4860, %v1370
        %v4867 = vmul.f32 %v4864, %v1370
        %v4868 = vadd.f32 %v4866, %v1378
        %v4869 = vadd.f32 %v4867, %v1378
        %v4870 = vadd.f32 %v1391, %v4697
        %v4871 = vadd.f32 %v1391, %v4698
        %v4872 = vmul.f32 %v731, %v4870
        %v4873 = vmul.f32 %v732, %v4871
        %v4874 = vmul.f32 %v4872, %v4860
        %v4875 = vmul.f32 %v4873, %v4864
        %v4876 = vadd.f32 %v1386, %v4874
        %v4877 = vadd.f32 %v1387, %v4875
        %v4878 = vadd.f32 %v1403, %v4868
        %v4879 = vadd.f32 %v1403, %v4869
        %v4880 = vmul.f32 %v737, %v4878
        %v4881 = vmul.f32 %v738, %v4879
        %v4882 = vadd.f32 %v4876, %v4880
        %v4883 = vadd.f32 %v4877, %v4881
        %4885 = vset.pattern.permute.xlu0 0
        %4886 = vperm.xlu0 %4885, %v4834
        %v4887 = vpop.permute.xlu0 %4886
        %4890 = vset.pattern.permute.xlu0 0
        %4891 = vperm.xlu0 %4890, %v4835
        %v4892 = vpop.permute.xlu0 %4891
        %4895 = vset.pattern.permute.xlu0 0
        %4896 = vperm.xlu0 %4895, %v4836
        %v4897 = vpop.permute.xlu0 %4896
        %4900 = vset.pattern.permute.xlu0 0
        %4901 = vperm.xlu0 %4900, %v4837
        %v4902 = vpop.permute.xlu0 %4901
        %4905 = vset.pattern.permute.xlu0 0
        %4906 = vperm.xlu0 %4905, %v4838
        %v4907 = vpop.permute.xlu0 %4906
        %4910 = vset.pattern.permute.xlu0 0
        %4911 = vperm.xlu0 %4910, %v4839
        %v4912 = vpop.permute.xlu0 %4911
        %4915 = vset.pattern.permute.xlu0 0
        %4916 = vperm.xlu0 %4915, %v4840
        %v4917 = vpop.permute.xlu0 %4916
        %4920 = vset.pattern.permute.xlu0 0
        %4921 = vperm.xlu0 %4920, %v4841
        %v4922 = vpop.permute.xlu0 %4921
        %4925 = vset.pattern.permute.xlu0 0
        %4926 = vperm.xlu0 %4925, %v4842
        %v4927 = vpop.permute.xlu0 %4926
        %4930 = vset.pattern.permute.xlu0 0
        %4931 = vperm.xlu0 %4930, %v4843
        %v4932 = vpop.permute.xlu0 %4931
        %4935 = vset.pattern.permute.xlu0 0
        %4936 = vperm.xlu0 %4935, %v4844
        %v4937 = vpop.permute.xlu0 %4936
        %4940 = vset.pattern.permute.xlu0 0
        %4941 = vperm.xlu0 %4940, %v4845
        %v4942 = vpop.permute.xlu0 %4941
        %4945 = vset.pattern.permute.xlu0 0
        %4946 = vperm.xlu0 %4945, %v4846
        %v4947 = vpop.permute.xlu0 %4946
        %4950 = vset.pattern.permute.xlu0 0
        %4951 = vperm.xlu0 %4950, %v4847
        %v4952 = vpop.permute.xlu0 %4951
        %4955 = vset.pattern.permute.xlu0 0
        %4956 = vperm.xlu0 %4955, %v4848
        %v4957 = vpop.permute.xlu0 %4956
        %4960 = vset.pattern.permute.xlu0 0
        %4961 = vperm.xlu0 %4960, %v4849
        %v4962 = vpop.permute.xlu0 %4961
        %4965 = vset.pattern.permute.xlu0 0
        %4966 = vperm.xlu0 %4965, %v4850
        %v4967 = vpop.permute.xlu0 %4966
        %4970 = vset.pattern.permute.xlu0 0
        %4971 = vperm.xlu0 %4970, %v4851
        %v4972 = vpop.permute.xlu0 %4971
        %4975 = vset.pattern.permute.xlu0 0
        %4976 = vperm.xlu0 %4975, %v4852
        %v4977 = vpop.permute.xlu0 %4976
        %4980 = vset.pattern.permute.xlu0 0
        %4981 = vperm.xlu0 %4980, %v4853
        %v4982 = vpop.permute.xlu0 %4981
        %4985 = vset.pattern.permute.xlu0 0
        %4986 = vperm.xlu0 %4985, %v4854
        %v4987 = vpop.permute.xlu0 %4986
        %4990 = vset.pattern.permute.xlu0 0
        %4991 = vperm.xlu0 %4990, %v4855
        %v4992 = vpop.permute.xlu0 %4991
        %4995 = vset.pattern.permute.xlu0 0
        %4996 = vperm.xlu0 %4995, %v4856
        %v4997 = vpop.permute.xlu0 %4996
        %5000 = vset.pattern.permute.xlu0 0
        %5001 = vperm.xlu0 %5000, %v4857
        %v5002 = vpop.permute.xlu0 %5001
        %v5004 = vmul.f32 %v4887, %v1533
        %v5005 = vmul.f32 %v4892, %v1533
        %v5006 = vmul.f32 %v4897, %v1533
        %v5007 = vmul.f32 %v4902, %v1533
        %v5008 = vmul.f32 %v4907, %v1533
        %v5009 = vmul.f32 %v4912, %v1533
        %v5010 = vmul.f32 %v4917, %v1533
        %v5011 = vmul.f32 %v4922, %v1533
        %v5012 = vmul.f32 %v4927, %v1533
        %v5013 = vmul.f32 %v4932, %v1533
        %v5014 = vmul.f32 %v4937, %v1533
        %v5015 = vmul.f32 %v4942, %v1533
        %v5016 = vmul.f32 %v4947, %v1533
        %v5017 = vmul.f32 %v4952, %v1533
        %v5018 = vmul.f32 %v4957, %v1533
        %v5019 = vmul.f32 %v4962, %v1533
        %v5020 = vmul.f32 %v4967, %v1533
        %v5021 = vmul.f32 %v4972, %v1533
        %v5022 = vmul.f32 %v4977, %v1533
        %v5023 = vmul.f32 %v4982, %v1533
        %v5024 = vmul.f32 %v4987, %v1533
        %v5025 = vmul.f32 %v4992, %v1533
        %v5026 = vmul.f32 %v4997, %v1533
        %v5027 = vmul.f32 %v5002, %v1533
        %5028 = vset.pattern.permute.xlu0 1
        %5029 = vperm.xlu0 %5028, %v4834
        %v5030 = vpop.permute.xlu0 %5029
        %5032 = vset.pattern.permute.xlu0 1
        %5033 = vperm.xlu0 %5032, %v4835
        %v5034 = vpop.permute.xlu0 %5033
        %5036 = vset.pattern.permute.xlu0 1
        %5037 = vperm.xlu0 %5036, %v4836
        %v5038 = vpop.permute.xlu0 %5037
        %5040 = vset.pattern.permute.xlu0 1
        %5041 = vperm.xlu0 %5040, %v4837
        %v5042 = vpop.permute.xlu0 %5041
        %5044 = vset.pattern.permute.xlu0 1
        %5045 = vperm.xlu0 %5044, %v4838
        %v5046 = vpop.permute.xlu0 %5045
        %5048 = vset.pattern.permute.xlu0 1
        %5049 = vperm.xlu0 %5048, %v4839
        %v5050 = vpop.permute.xlu0 %5049
        %5052 = vset.pattern.permute.xlu0 1
        %5053 = vperm.xlu0 %5052, %v4840
        %v5054 = vpop.permute.xlu0 %5053
        %5056 = vset.pattern.permute.xlu0 1
        %5057 = vperm.xlu0 %5056, %v4841
        %v5058 = vpop.permute.xlu0 %5057
        %5060 = vset.pattern.permute.xlu0 1
        %5061 = vperm.xlu0 %5060, %v4842
        %v5062 = vpop.permute.xlu0 %5061
        %5064 = vset.pattern.permute.xlu0 1
        %5065 = vperm.xlu0 %5064, %v4843
        %v5066 = vpop.permute.xlu0 %5065
        %5068 = vset.pattern.permute.xlu0 1
        %5069 = vperm.xlu0 %5068, %v4844
        %v5070 = vpop.permute.xlu0 %5069
        %5072 = vset.pattern.permute.xlu0 1
        %5073 = vperm.xlu0 %5072, %v4845
        %v5074 = vpop.permute.xlu0 %5073
        %5076 = vset.pattern.permute.xlu0 1
        %5077 = vperm.xlu0 %5076, %v4846
        %v5078 = vpop.permute.xlu0 %5077
        %5080 = vset.pattern.permute.xlu0 1
        %5081 = vperm.xlu0 %5080, %v4847
        %v5082 = vpop.permute.xlu0 %5081
        %5084 = vset.pattern.permute.xlu0 1
        %5085 = vperm.xlu0 %5084, %v4848
        %v5086 = vpop.permute.xlu0 %5085
        %5088 = vset.pattern.permute.xlu0 1
        %5089 = vperm.xlu0 %5088, %v4849
        %v5090 = vpop.permute.xlu0 %5089
        %5092 = vset.pattern.permute.xlu0 1
        %5093 = vperm.xlu0 %5092, %v4850
        %v5094 = vpop.permute.xlu0 %5093
        %5096 = vset.pattern.permute.xlu0 1
        %5097 = vperm.xlu0 %5096, %v4851
        %v5098 = vpop.permute.xlu0 %5097
        %5100 = vset.pattern.permute.xlu0 1
        %5101 = vperm.xlu0 %5100, %v4852
        %v5102 = vpop.permute.xlu0 %5101
        %5104 = vset.pattern.permute.xlu0 1
        %5105 = vperm.xlu0 %5104, %v4853
        %v5106 = vpop.permute.xlu0 %5105
        %5108 = vset.pattern.permute.xlu0 1
        %5109 = vperm.xlu0 %5108, %v4854
        %v5110 = vpop.permute.xlu0 %5109
        %5112 = vset.pattern.permute.xlu0 1
        %5113 = vperm.xlu0 %5112, %v4855
        %v5114 = vpop.permute.xlu0 %5113
        %5116 = vset.pattern.permute.xlu0 1
        %5117 = vperm.xlu0 %5116, %v4856
        %v5118 = vpop.permute.xlu0 %5117
        %5120 = vset.pattern.permute.xlu0 1
        %5121 = vperm.xlu0 %5120, %v4857
        %v5122 = vpop.permute.xlu0 %5121
        %v5124 = vmul.f32 %v5030, %v1657
        %v5125 = vmul.f32 %v5034, %v1657
        %v5126 = vmul.f32 %v5038, %v1657
        %v5127 = vmul.f32 %v5042, %v1657
        %v5128 = vmul.f32 %v5046, %v1657
        %v5129 = vmul.f32 %v5050, %v1657
        %v5130 = vmul.f32 %v5054, %v1657
        %v5131 = vmul.f32 %v5058, %v1657
        %v5132 = vmul.f32 %v5062, %v1657
        %v5133 = vmul.f32 %v5066, %v1657
        %v5134 = vmul.f32 %v5070, %v1657
        %v5135 = vmul.f32 %v5074, %v1657
        %v5136 = vmul.f32 %v5078, %v1657
        %v5137 = vmul.f32 %v5082, %v1657
        %v5138 = vmul.f32 %v5086, %v1657
        %v5139 = vmul.f32 %v5090, %v1657
        %v5140 = vmul.f32 %v5094, %v1657
        %v5141 = vmul.f32 %v5098, %v1657
        %v5142 = vmul.f32 %v5102, %v1657
        %v5143 = vmul.f32 %v5106, %v1657
        %v5144 = vmul.f32 %v5110, %v1657
        %v5145 = vmul.f32 %v5114, %v1657
        %v5146 = vmul.f32 %v5118, %v1657
        %v5147 = vmul.f32 %v5122, %v1657
        %v5148 = vadd.f32 %v5004, %v5124
        %v5149 = vadd.f32 %v5005, %v5125
        %v5150 = vadd.f32 %v5006, %v5126
        %v5151 = vadd.f32 %v5007, %v5127
        %v5152 = vadd.f32 %v5008, %v5128
        %v5153 = vadd.f32 %v5009, %v5129
        %v5154 = vadd.f32 %v5010, %v5130
        %v5155 = vadd.f32 %v5011, %v5131
        %v5156 = vadd.f32 %v5012, %v5132
        %v5157 = vadd.f32 %v5013, %v5133
        %v5158 = vadd.f32 %v5014, %v5134
        %v5159 = vadd.f32 %v5015, %v5135
        %v5160 = vadd.f32 %v5016, %v5136
        %v5161 = vadd.f32 %v5017, %v5137
        %v5162 = vadd.f32 %v5018, %v5138
        %v5163 = vadd.f32 %v5019, %v5139
        %v5164 = vadd.f32 %v5020, %v5140
        %v5165 = vadd.f32 %v5021, %v5141
        %v5166 = vadd.f32 %v5022, %v5142
        %v5167 = vadd.f32 %v5023, %v5143
        %v5168 = vadd.f32 %v5024, %v5144
        %v5169 = vadd.f32 %v5025, %v5145
        %v5170 = vadd.f32 %v5026, %v5146
        %v5171 = vadd.f32 %v5027, %v5147
        %v5172 = vadd.f32 %v5148, %v1710
        %v5173 = vadd.f32 %v5149, %v1710
        %v5174 = vadd.f32 %v5150, %v1710
        %v5175 = vadd.f32 %v5151, %v1710
        %v5176 = vadd.f32 %v5152, %v1710
        %v5177 = vadd.f32 %v5153, %v1710
        %v5178 = vadd.f32 %v5154, %v1710
        %v5179 = vadd.f32 %v5155, %v1710
        %v5180 = vadd.f32 %v5156, %v1710
        %v5181 = vadd.f32 %v5157, %v1710
        %v5182 = vadd.f32 %v5158, %v1710
        %v5183 = vadd.f32 %v5159, %v1710
        %v5184 = vadd.f32 %v5160, %v1710
        %v5185 = vadd.f32 %v5161, %v1710
        %v5186 = vadd.f32 %v5162, %v1710
        %v5187 = vadd.f32 %v5163, %v1710
        %v5188 = vadd.f32 %v5164, %v1710
        %v5189 = vadd.f32 %v5165, %v1710
        %v5190 = vadd.f32 %v5166, %v1710
        %v5191 = vadd.f32 %v5167, %v1710
        %v5192 = vadd.f32 %v5168, %v1710
        %v5193 = vadd.f32 %v5169, %v1710
        %v5194 = vadd.f32 %v5170, %v1710
        %v5195 = vadd.f32 %v5171, %v1710
        %v5196 = vmax.f32 %v5172, 0.0
        %v5197 = vmax.f32 %v5173, 0.0
        %v5198 = vmax.f32 %v5174, 0.0
        %v5199 = vmax.f32 %v5175, 0.0
        %v5200 = vmax.f32 %v5176, 0.0
        %v5201 = vmax.f32 %v5177, 0.0
        %v5202 = vmax.f32 %v5178, 0.0
        %v5203 = vmax.f32 %v5179, 0.0
        %v5204 = vmax.f32 %v5180, 0.0
        %v5205 = vmax.f32 %v5181, 0.0
        %v5206 = vmax.f32 %v5182, 0.0
        %v5207 = vmax.f32 %v5183, 0.0
        %v5208 = vmax.f32 %v5184, 0.0
        %v5209 = vmax.f32 %v5185, 0.0
        %v5210 = vmax.f32 %v5186, 0.0
        %v5211 = vmax.f32 %v5187, 0.0
        %v5212 = vmax.f32 %v5188, 0.0
        %v5213 = vmax.f32 %v5189, 0.0
        %v5214 = vmax.f32 %v5190, 0.0
        %v5215 = vmax.f32 %v5191, 0.0
        %v5216 = vmax.f32 %v5192, 0.0
        %v5217 = vmax.f32 %v5193, 0.0
        %v5218 = vmax.f32 %v5194, 0.0
        %v5219 = vmax.f32 %v5195, 0.0
        %v5220 = vmul.f32 %v5196, %v4882
        %v5221 = vmul.f32 %v5197, %v4883
        %v5222 = vmul.f32 %v5198, %v4882
        %v5223 = vmul.f32 %v5199, %v4883
        %v5224 = vmul.f32 %v5200, %v4882
        %v5225 = vmul.f32 %v5201, %v4883
        %v5226 = vmul.f32 %v5202, %v4882
        %v5227 = vmul.f32 %v5203, %v4883
        %v5228 = vmul.f32 %v5204, %v4882
        %v5229 = vmul.f32 %v5205, %v4883
        %v5230 = vmul.f32 %v5206, %v4882
        %v5231 = vmul.f32 %v5207, %v4883
        %v5232 = vmul.f32 %v5208, %v4882
        %v5233 = vmul.f32 %v5209, %v4883
        %v5234 = vmul.f32 %v5210, %v4882
        %v5235 = vmul.f32 %v5211, %v4883
        %v5236 = vmul.f32 %v5212, %v4882
        %v5237 = vmul.f32 %v5213, %v4883
        %v5238 = vmul.f32 %v5214, %v4882
        %v5239 = vmul.f32 %v5215, %v4883
        %v5240 = vmul.f32 %v5216, %v4882
        %v5241 = vmul.f32 %v5217, %v4883
        %v5242 = vmul.f32 %v5218, %v4882
        %v5243 = vmul.f32 %v5219, %v4883
        %v5244 = vsel %vm1784, %v5220, 0.0
        %v5245 = vsel %vm1786, %v5221, 0.0
        %v5246 = vadd.f32 %v5244, %v5245
        %v5247 = vrot.slane %v5246, 4
        %v5248 = vadd.f32 %v5246, %v5247
        %v5249 = vrot.slane %v5248, 2
        %v5250 = vadd.f32 %v5248, %v5249
        %v5251 = vrot.slane %v5250, 1
        %v5252 = vadd.f32 %v5250, %v5251
        %v5253 = vsel %vm1784, %v5222, 0.0
        %v5254 = vsel %vm1786, %v5223, 0.0
        %v5255 = vadd.f32 %v5253, %v5254
        %v5256 = vrot.slane %v5255, 4
        %v5257 = vadd.f32 %v5255, %v5256
        %v5258 = vrot.slane %v5257, 2
        %v5259 = vadd.f32 %v5257, %v5258
        %v5260 = vrot.slane %v5259, 1
        %v5261 = vadd.f32 %v5259, %v5260
        %v5262 = vsel %vm1784, %v5224, 0.0
        %v5263 = vsel %vm1786, %v5225, 0.0
        %v5264 = vadd.f32 %v5262, %v5263
        %v5265 = vrot.slane %v5264, 4
        %v5266 = vadd.f32 %v5264, %v5265
        %v5267 = vrot.slane %v5266, 2
        %v5268 = vadd.f32 %v5266, %v5267
        %v5269 = vrot.slane %v5268, 1
        %v5270 = vadd.f32 %v5268, %v5269
        %v5271 = vsel %vm1784, %v5226, 0.0
        %v5272 = vsel %vm1786, %v5227, 0.0
        %v5273 = vadd.f32 %v5271, %v5272
        %v5274 = vrot.slane %v5273, 4
        %v5275 = vadd.f32 %v5273, %v5274
        %v5276 = vrot.slane %v5275, 2
        %v5277 = vadd.f32 %v5275, %v5276
        %v5278 = vrot.slane %v5277, 1
        %v5279 = vadd.f32 %v5277, %v5278
        %v5280 = vsel %vm1784, %v5228, 0.0
        %v5281 = vsel %vm1786, %v5229, 0.0
        %v5282 = vadd.f32 %v5280, %v5281
        %v5283 = vrot.slane %v5282, 4
        %v5284 = vadd.f32 %v5282, %v5283
        %v5285 = vrot.slane %v5284, 2
        %v5286 = vadd.f32 %v5284, %v5285
        %v5287 = vrot.slane %v5286, 1
        %v5288 = vadd.f32 %v5286, %v5287
        %v5289 = vsel %vm1784, %v5230, 0.0
        %v5290 = vsel %vm1786, %v5231, 0.0
        %v5291 = vadd.f32 %v5289, %v5290
        %v5292 = vrot.slane %v5291, 4
        %v5293 = vadd.f32 %v5291, %v5292
        %v5294 = vrot.slane %v5293, 2
        %v5295 = vadd.f32 %v5293, %v5294
        %v5296 = vrot.slane %v5295, 1
        %v5297 = vadd.f32 %v5295, %v5296
        %v5298 = vsel %vm1784, %v5232, 0.0
        %v5299 = vsel %vm1786, %v5233, 0.0
        %v5300 = vadd.f32 %v5298, %v5299
        %v5301 = vrot.slane %v5300, 4
        %v5302 = vadd.f32 %v5300, %v5301
        %v5303 = vrot.slane %v5302, 2
        %v5304 = vadd.f32 %v5302, %v5303
        %v5305 = vrot.slane %v5304, 1
        %v5306 = vadd.f32 %v5304, %v5305
        %v5307 = vsel %vm1784, %v5234, 0.0
        %v5308 = vsel %vm1786, %v5235, 0.0
        %v5309 = vadd.f32 %v5307, %v5308
        %v5310 = vrot.slane %v5309, 4
        %v5311 = vadd.f32 %v5309, %v5310
        %v5312 = vrot.slane %v5311, 2
        %v5313 = vadd.f32 %v5311, %v5312
        %v5314 = vrot.slane %v5313, 1
        %v5315 = vadd.f32 %v5313, %v5314
        %v5316 = vsel %vm1784, %v5236, 0.0
        %v5317 = vsel %vm1786, %v5237, 0.0
        %v5318 = vadd.f32 %v5316, %v5317
        %v5319 = vrot.slane %v5318, 4
        %v5320 = vadd.f32 %v5318, %v5319
        %v5321 = vrot.slane %v5320, 2
        %v5322 = vadd.f32 %v5320, %v5321
        %v5323 = vrot.slane %v5322, 1
        %v5324 = vadd.f32 %v5322, %v5323
        %v5325 = vsel %vm1784, %v5238, 0.0
        %v5326 = vsel %vm1786, %v5239, 0.0
        %v5327 = vadd.f32 %v5325, %v5326
        %v5328 = vrot.slane %v5327, 4
        %v5329 = vadd.f32 %v5327, %v5328
        %v5330 = vrot.slane %v5329, 2
        %v5331 = vadd.f32 %v5329, %v5330
        %v5332 = vrot.slane %v5331, 1
        %v5333 = vadd.f32 %v5331, %v5332
        %v5334 = vsel %vm1784, %v5240, 0.0
        %v5335 = vsel %vm1786, %v5241, 0.0
        %v5336 = vadd.f32 %v5334, %v5335
        %v5337 = vrot.slane %v5336, 4
        %v5338 = vadd.f32 %v5336, %v5337
        %v5339 = vrot.slane %v5338, 2
        %v5340 = vadd.f32 %v5338, %v5339
        %v5341 = vrot.slane %v5340, 1
        %v5342 = vadd.f32 %v5340, %v5341
        %v5343 = vsel %vm1784, %v5242, 0.0
        %v5344 = vsel %vm1786, %v5243, 0.0
        %v5345 = vadd.f32 %v5343, %v5344
        %v5346 = vrot.slane %v5345, 4
        %v5347 = vadd.f32 %v5345, %v5346
        %v5348 = vrot.slane %v5347, 2
        %v5349 = vadd.f32 %v5347, %v5348
        %v5350 = vrot.slane %v5349, 1
        %v5351 = vadd.f32 %v5349, %v5350
        %v5364 = vsel %vm1906, %v5261, %v5252
        %v5365 = vsel %vm1908, %v5270, %v5364
        %v5366 = vsel %vm1910, %v5279, %v5365
        %v5367 = vsel %vm1912, %v5288, %v5366
        %v5368 = vsel %vm1914, %v5297, %v5367
        %v5369 = vsel %vm1916, %v5306, %v5368
        %v5370 = vsel %vm1918, %v5315, %v5369
        %v5371 = vsel %vm1906, %v5333, %v5324
        %v5372 = vsel %vm1908, %v5342, %v5371
        %v5373 = vsel %vm1910, %v5351, %v5372
        %5376 = vst.msk [vmem:[#allocation2 + $0x24] sm:$0xff] %vm1784, %v5370
        %5377 = vst.msk [vmem:[#allocation2 + $0x2c] sm:$0xf] %vm1786, %v5373
        %5378 = vset.pattern.permute.xlu0 0
        %5379 = vperm.xlu0 %5378, %v4253
        %v5380 = vpop.permute.xlu0 %5379
        %v5382 = vmul.f32 %v5380, %v1934
        %5383 = vset.pattern.permute.xlu0 1
        %5384 = vperm.xlu0 %5383, %v4253
        %v5385 = vpop.permute.xlu0 %5384
        %v5387 = vmul.f32 %v5385, %v1943
        %v5388 = vadd.f32 %v5382, %v5387
        %v5389 = vadd.f32 %v5388, %v1950
        %v5390 = vmul.f32 %v4697, %v4860
        %v5391 = vadd.f32 %v5390, %v5389
        %5392 = vst.msk [vmem:[#allocation4 + $0xc] sm:$0xf8] %vm1955, %v5391
        %5393 = vrot.lane.b32.xlu0 %v4253, 126
        %v5394 = vpop.permute.xlu0 %5393
        %5396 = vst.msk [vmem:[#allocation5 + $0xc] sm:$0xf8] %vm1960, %v5394
        %v5397 = vld [vmem:[#allocation2] sm:$0xff]
        %v5398 = vld [vmem:[#allocation2 + $0x8] sm:$0xff]
        %v5399 = vld [vmem:[#allocation2 + $0x10] sm:$0xff]
        %v5400 = vld [vmem:[#allocation2 + $0x18] sm:$0xff]
        %v5401 = vld [vmem:[#allocation2 + $0x20] sm:$0xff]
        %v5402 = vld [vmem:[#allocation2 + $0x28] sm:$0xff]
        %v5403 = vpack.c.bf16 %v5398, %v5397
        %v5404 = vpack.c.bf16 %v5400, %v5399
        %v5405 = vpack.c.bf16 %v5402, %v5401
        %v5406 = vld [vmem:[%s10] sm:$0xf]
        %v5407 = vld [vmem:[%s10 + $0x4] sm:$0xf]
        %v5408 = vld [vmem:[%s10 + $0x8] sm:$0xf]
        %v5409 = vld [vmem:[%s10 + $0xc] sm:$0xf]
        %v5410 = vld [vmem:[%s10 + $0x10] sm:$0xf]
        %v5411 = vld [vmem:[%s10 + $0x14] sm:$0xf]
        %v5412 = vld [vmem:[%s10 + $0x18] sm:$0xf]
        %v5413 = vld [vmem:[%s10 + $0x1c] sm:$0xf]
        %v5414 = vld [vmem:[%s11] sm:$0x1]
        %v5416 = vlaneseq
        %v5417 = vshrl.u32 %v5416, 7
        %v5418 = vsub.s32 0, %v5417
        %v5419 = vrot.slane %v5414, %v5418
        %v5429 = vunpack.c.l.b16 %v5406
        %v5430 = vunpack.c.l.b16 %v5407
        %v5431 = vunpack.c.l.b16 %v5408
        %v5432 = vunpack.c.l.b16 %v5409
        %v5433 = vunpack.c.l.b16 %v5410
        %v5434 = vunpack.c.l.b16 %v5411
        %v5435 = vunpack.c.l.b16 %v5412
        %v5436 = vunpack.c.l.b16 %v5413
        %v5437 = vpack.c.b16 %v5430, %v5429
        %v5438 = vpack.c.b16 %v5432, %v5431
        %v5439 = vpack.c.b16 %v5434, %v5433
        %v5440 = vpack.c.b16 %v5436, %v5435
        %v5446 = vsel %vm1784, %v5403, 0
        %v5449 = vsel %vm1784, %v5404, 0
        %v5452 = vsel %vm1784, %v5405, 0
        %5454 = vmatprep.subr.bf16.mxu0 0
        %5455 = vmatpush1.bf16.msra.mxu0 %v5437
        %5456 = vmatprep.subr.bf16.mxu0 0
        %5457 = vmatpush1.bf16.msra.mxu0 %v5438
        %5458 = vmatprep.subr.bf16.mxu0 0
        %5459 = vmatpush1.bf16.msra.mxu0 %v5439
        %5460 = vmatprep.subr.bf16.mxu0 0
        %5461 = vmatpush1.bf16.msra.mxu0 %v5440
        %5462 = vmatprep.subr.bf16.mxu0 0
        %5463 = vmatpush1.bf16.msra.mxu0 0
        %5464 = vmatprep.subr.bf16.mxu0 0
        %5465 = vmatpush1.bf16.msra.mxu0 0
        %5466 = vmatprep.subr.bf16.mxu0 0
        %5467 = vmatpush1.bf16.msra.mxu0 0
        %5468 = vmatprep.subr.bf16.mxu0 0
        %5469 = vmatpush1.bf16.msra.mxu0 0
        %5470 = vmatprep.subr.bf16.mxu0 0
        %5471 = vmatpush1.bf16.msra.mxu0 0
        %5472 = vmatprep.subr.bf16.mxu0 0
        %5473 = vmatpush1.bf16.msra.mxu0 0
        %5474 = vmatprep.subr.bf16.mxu0 0
        %5475 = vmatpush1.bf16.msra.mxu0 0
        %5476 = vmatprep.subr.bf16.mxu0 0
        %5477 = vmatpush1.bf16.msra.mxu0 0
        %5478 = vmatprep.subr.bf16.mxu0 0
        %5479 = vmatpush1.bf16.msra.mxu0 0
        %5480 = vmatprep.subr.bf16.mxu0 0
        %5481 = vmatpush1.bf16.msra.mxu0 0
        %5482 = vmatprep.subr.bf16.mxu0 0
        %5483 = vmatpush1.bf16.msra.mxu0 0
        %5484 = vmatprep.subr.bf16.mxu0 0
        %5485 = vmatpush1.bf16.msra.mxu0 0
        %5486 = vmatprep.mubr.bf16.mxu0 0
        %5487 = vmatmul.mubr.bf16.gmra.mrb[0].mxu0 %v5446
        %v5488 = vpop.f32.mrb[0].mxu0
        %v5489 = vadd.f32 %v5419, %v5488
        %v5490 = vpop.f32.mrb[0].mxu0
        %v5491 = vpop.f32.mrb[0].mxu0
        %v5492 = vadd.f32 %v5419, %v5491
        %v5493 = vpop.f32.mrb[0].mxu0
        %5494 = vmatprep.mubr.bf16.mxu0 0
        %5495 = vmatmul.mubr.bf16.gmra.mrb[0].mxu0 %v5449
        %v5496 = vpop.f32.mrb[0].mxu0
        %v5497 = vadd.f32 %v5419, %v5496
        %v5498 = vpop.f32.mrb[0].mxu0
        %v5499 = vpop.f32.mrb[0].mxu0
        %v5500 = vadd.f32 %v5419, %v5499
        %v5501 = vpop.f32.mrb[0].mxu0
        %5502 = vmatprep.mubr.bf16.mxu0 0
        %5503 = vmatmul.mubr.bf16.gmra.mrb[0].mxu0 %v5452
        %v5504 = vpop.f32.mrb[0].mxu0
        %v5505 = vadd.f32 %v5419, %v5504
        %v5506 = vpop.f32.mrb[0].mxu0
        %v5507 = vpop.f32.mrb[0].mxu0
        %v5508 = vadd.f32 %v5419, %v5507
        %v5509 = vpop.f32.mrb[0].mxu0
        %5510 = vdwg.mxu0
        %v5511 = vmax.f32 %v5489, 0.0
        %v5512 = vmax.f32 %v5492, 0.0
        %v5513 = vmax.f32 %v5497, 0.0
        %v5514 = vmax.f32 %v5500, 0.0
        %v5515 = vmax.f32 %v5505, 0.0
        %v5516 = vmax.f32 %v5508, 0.0
        %5517 = vst.msk [vmem:[#allocation2] sm:$0xff] %vm1784, %v5511
        %5518 = vst.msk [vmem:[#allocation2 + $0x8] sm:$0xff] %vm1784, %v5512
        %5519 = vst.msk [vmem:[#allocation2 + $0x10] sm:$0xff] %vm1784, %v5513
        %5520 = vst.msk [vmem:[#allocation2 + $0x18] sm:$0xff] %vm1784, %v5514
        %5521 = vst.msk [vmem:[#allocation2 + $0x20] sm:$0xff] %vm1784, %v5515
        %5522 = vst.msk [vmem:[#allocation2 + $0x28] sm:$0xff] %vm1784, %v5516
        %v5523 = vld [vmem:[%s697] sm:$0xff]
        %v5524 = vld [vmem:[%s697 + $0x8] sm:$0xf]
        %v5525 = vmul.f32 %v5523, 3.1415927
        %v5526 = vmul.f32 %v5524, 3.1415927
        %v5527 = vand.u32 2147483647, %v5525
        %vm5528 = vcmp.le.f32.partialorder %v5527, 0.7853982
        %vm5529 = vcmp.lt.s32.totalorder %v5525, 0
        %v5530 = vand.u32 %v5525, 2139095040
        %v5531 = vshrl.u32 %v5530, 23
        %v5532 = vsub.s32 %v5531, 127
        %v5533 = vand.u32 2147483647, %v5525
        %v5534 = vand.u32 %v5533, 8388607
        %v5535 = vor.u32 %v5534, 8388608
        %v5536 = vsub.s32 0, %v5535
        %v5537 = vadd.s32 %v5532, 1
        %vm5538 = vcmp.gt.s32.totalorder %v5537, 0
        %v5539 = vsel %vm5538, %v5537, 0
        %v5540 = vshrl.u32 %v5539, 5
        %v5541 = vand.u32 %v5539, 31
        %v5542 = vsub.s32 32, %v5541
        %v5543 = vshrl.u32 683565275, %v5542
        %v5544 = vshll.u32 683565275, %v5541
        %v5545 = vshrl.u32 2475754826, %v5542
        %v5546 = vor.u32 %v5544, %v5545
        %v5547 = vshll.u32 2475754826, %v5541
        %v5548 = vshrl.u32 2131351028, %v5542
        %v5549 = vor.u32 %v5547, %v5548
        %v5550 = vshll.u32 2131351028, %v5541
        %v5551 = vshrl.u32 2102212464, %v5542
        %v5552 = vor.u32 %v5550, %v5551
        %v5553 = vshll.u32 2102212464, %v5541
        %v5554 = vshrl.u32 920167782, %v5542
        %v5555 = vor.u32 %v5553, %v5554
        %v5556 = vshll.u32 920167782, %v5541
        %v5557 = vshrl.u32 1326507024, %v5542
        %v5558 = vor.u32 %v5556, %v5557
        %vm5559 = vcmp.lt.s32.totalorder %v5540, 1
        %vm5560 = vcmp.lt.s32.totalorder %v5540, 2
        %vm5561 = vcmp.lt.s32.totalorder %v5540, 3
        %vm5562 = vcmp.lt.s32.totalorder %v5540, 4
        %v5563 = vsel %vm5559, %v5543, %v5546
        %v5564 = vsel %vm5562, %v5552, 2102212464
        %v5565 = vsel %vm5561, %v5549, %v5564
        %v5566 = vsel %vm5560, %v5563, %v5565
        %v5567 = vsel %vm5559, %v5546, %v5549
        %v5568 = vsel %vm5562, %v5555, 920167782
        %v5569 = vsel %vm5561, %v5552, %v5568
        %v5570 = vsel %vm5560, %v5567, %v5569
        %v5571 = vsel %vm5559, %v5549, %v5552
        %v5572 = vsel %vm5562, %v5558, 1326507024
        %v5573 = vsel %vm5561, %v5555, %v5572
        %v5574 = vsel %vm5560, %v5571, %v5573
        %v5575 = vshll.u32 %v5535, 8
        %v5576 = vmul.u32.u64.compose %v5575, %v5574
        %v5577 = vextract.low.u32 %v5576
        %v5578 = vextract.high.u32 %v5576
        %v5579 = vmul.u32.u64.compose %v5575, %v5570
        %v5580 = vextract.low.u32 %v5579
        %v5581 = vextract.high.u32 %v5579
        %v5582 = vmul.u32 %v5575, %v5566
        %v5583 = vadd.s32 %v5578, %v5580
        %vm5584 = vc.u32 %v5578, %v5580
        %v5585 = vadd.s32 %v5581, 1
        %v5586 = vsel %vm5584, %v5585, %v5581
        %v5587 = vadd.s32 %v5582, %v5586
        %v5588 = vadd.s32 %v5587, 536870912
        %v5589 = vshrl.u32 %v5588, 30
        %v5590 = vshll.u32 %v5589, 30
        %v5591 = vsub.s32 %v5587, %v5590
        %vm5592 = vcmp.lt.s32.totalorder %v5591, 0
        %v5593 = vsub.s32 0, %v5591
        %v5594 = vsel %vm5592, %v5593, %v5591
        %v5595 = vclz %v5594
        %v5596 = vsub.s32 %v5595, 2
        %vm5597 = vcmp.gt.s32.totalorder 0, %v5596
        %v5598 = vsel %vm5597, 0, %v5596
        %v5599 = vsub.s32 32, %v5598
        %v5600 = vshll.u32 %v5591, %v5598
        %v5601 = vshrl.u32 %v5583, %v5599
        %v5602 = vor.u32 %v5600, %v5601
        %v5603 = vsub.s32 4294967266, %v5598
        %v5604 = vadd.s32 %v5603, 127
        %v5605 = vshll.u32 %v5604, 23
        %v5606 = vor.u32 4788187, %v5605
        %v5607 = vand.u32 2147483647, %v5606
        %v5609 = vcvt.s32.f32 %v5602
        %v5610 = vmul.f32 %v5609, %v5607
        %v5611 = vxor.u32 %v5610, 2147483648
        %v5612 = vsel %vm5529, %v5611, %v5610
        %v5613 = vsub.s32 4, %v5589
        %v5614 = vsel %vm5529, %v5613, %v5589
        %v5615 = vsel %vm5528, %v5525, %v5612
        %v5616 = vsel %vm5528, 0, %v5614
        %v5617 = vcosq.f32.pop %v5615
        %v5618 = vsinq.f32.pop %v5615
        %vm5619 = vweird.f32 %v5525
        %v5620 = vadd.s32 %v5616, 3
        %v5621 = vand.u32 %v5620, 3
        %vm5622 = vcmp.lt.s32.totalorder %v5621, 2
        %vm5623 = vcmp.eq.s32.totalorder %v5621, 0
        %v5624 = vxor.u32 %v5618, 2147483648
        %v5625 = vsel %vm5623, %v5617, %v5624
        %vm5626 = vcmp.eq.s32.totalorder %v5621, 2
        %v5627 = vxor.u32 %v5617, 2147483648
        %v5628 = vsel %vm5626, %v5627, %v5618
        %v5629 = vsel %vm5622, %v5625, %v5628
        %v5630 = vsel %vm5619, nan, %v5629
        %v5631 = vand.u32 2147483647, %v5526
        %vm5632 = vcmp.le.f32.partialorder %v5631, 0.7853982
        %vm5633 = vcmp.lt.s32.totalorder %v5526, 0
        %v5634 = vand.u32 %v5526, 2139095040
        %v5635 = vshrl.u32 %v5634, 23
        %v5636 = vsub.s32 %v5635, 127
        %v5637 = vand.u32 2147483647, %v5526
        %v5638 = vand.u32 %v5637, 8388607
        %v5639 = vor.u32 %v5638, 8388608
        %v5640 = vsub.s32 0, %v5639
        %v5641 = vadd.s32 %v5636, 1
        %vm5642 = vcmp.gt.s32.totalorder %v5641, 0
        %v5643 = vsel %vm5642, %v5641, 0
        %v5644 = vshrl.u32 %v5643, 5
        %v5645 = vand.u32 %v5643, 31
        %v5646 = vsub.s32 32, %v5645
        %v5647 = vshrl.u32 683565275, %v5646
        %v5648 = vshll.u32 683565275, %v5645
        %v5649 = vshrl.u32 2475754826, %v5646
        %v5650 = vor.u32 %v5648, %v5649
        %v5651 = vshll.u32 2475754826, %v5645
        %v5652 = vshrl.u32 2131351028, %v5646
        %v5653 = vor.u32 %v5651, %v5652
        %v5654 = vshll.u32 2131351028, %v5645
        %v5655 = vshrl.u32 2102212464, %v5646
        %v5656 = vor.u32 %v5654, %v5655
        %v5657 = vshll.u32 2102212464, %v5645
        %v5658 = vshrl.u32 920167782, %v5646
        %v5659 = vor.u32 %v5657, %v5658
        %v5660 = vshll.u32 920167782, %v5645
        %v5661 = vshrl.u32 1326507024, %v5646
        %v5662 = vor.u32 %v5660, %v5661
        %vm5663 = vcmp.lt.s32.totalorder %v5644, 1
        %vm5664 = vcmp.lt.s32.totalorder %v5644, 2
        %vm5665 = vcmp.lt.s32.totalorder %v5644, 3
        %vm5666 = vcmp.lt.s32.totalorder %v5644, 4
        %v5667 = vsel %vm5663, %v5647, %v5650
        %v5668 = vsel %vm5666, %v5656, 2102212464
        %v5669 = vsel %vm5665, %v5653, %v5668
        %v5670 = vsel %vm5664, %v5667, %v5669
        %v5671 = vsel %vm5663, %v5650, %v5653
        %v5672 = vsel %vm5666, %v5659, 920167782
        %v5673 = vsel %vm5665, %v5656, %v5672
        %v5674 = vsel %vm5664, %v5671, %v5673
        %v5675 = vsel %vm5663, %v5653, %v5656
        %v5676 = vsel %vm5666, %v5662, 1326507024
        %v5677 = vsel %vm5665, %v5659, %v5676
        %v5678 = vsel %vm5664, %v5675, %v5677
        %v5679 = vshll.u32 %v5639, 8
        %v5680 = vmul.u32.u64.compose %v5679, %v5678
        %v5681 = vextract.low.u32 %v5680
        %v5682 = vextract.high.u32 %v5680
        %v5683 = vmul.u32.u64.compose %v5679, %v5674
        %v5684 = vextract.low.u32 %v5683
        %v5685 = vextract.high.u32 %v5683
        %v5686 = vmul.u32 %v5679, %v5670
        %v5687 = vadd.s32 %v5682, %v5684
        %vm5688 = vc.u32 %v5682, %v5684
        %v5689 = vadd.s32 %v5685, 1
        %v5690 = vsel %vm5688, %v5689, %v5685
        %v5691 = vadd.s32 %v5686, %v5690
        %v5692 = vadd.s32 %v5691, 536870912
        %v5693 = vshrl.u32 %v5692, 30
        %v5694 = vshll.u32 %v5693, 30
        %v5695 = vsub.s32 %v5691, %v5694
        %vm5696 = vcmp.lt.s32.totalorder %v5695, 0
        %v5697 = vsub.s32 0, %v5695
        %v5698 = vsel %vm5696, %v5697, %v5695
        %v5699 = vclz %v5698
        %v5700 = vsub.s32 %v5699, 2
        %vm5701 = vcmp.gt.s32.totalorder 0, %v5700
        %v5702 = vsel %vm5701, 0, %v5700
        %v5703 = vsub.s32 32, %v5702
        %v5704 = vshll.u32 %v5695, %v5702
        %v5705 = vshrl.u32 %v5687, %v5703
        %v5706 = vor.u32 %v5704, %v5705
        %v5707 = vsub.s32 4294967266, %v5702
        %v5708 = vadd.s32 %v5707, 127
        %v5709 = vshll.u32 %v5708, 23
        %v5710 = vor.u32 4788187, %v5709
        %v5711 = vand.u32 2147483647, %v5710
        %v5713 = vcvt.s32.f32 %v5706
        %v5714 = vmul.f32 %v5713, %v5711
        %v5715 = vxor.u32 %v5714, 2147483648
        %v5716 = vsel %vm5633, %v5715, %v5714
        %v5717 = vsub.s32 4, %v5693
        %v5718 = vsel %vm5633, %v5717, %v5693
        %v5719 = vsel %vm5632, %v5526, %v5716
        %v5720 = vsel %vm5632, 0, %v5718
        %v5721 = vcosq.f32.pop %v5719
        %v5722 = vsinq.f32.pop %v5719
        %vm5723 = vweird.f32 %v5526
        %v5724 = vadd.s32 %v5720, 3
        %v5725 = vand.u32 %v5724, 3
        %vm5726 = vcmp.lt.s32.totalorder %v5725, 2
        %vm5727 = vcmp.eq.s32.totalorder %v5725, 0
        %v5728 = vxor.u32 %v5722, 2147483648
        %v5729 = vsel %vm5727, %v5721, %v5728
        %vm5730 = vcmp.eq.s32.totalorder %v5725, 2
        %v5731 = vxor.u32 %v5721, 2147483648
        %v5732 = vsel %vm5730, %v5731, %v5722
        %v5733 = vsel %vm5726, %v5729, %v5732
        %v5734 = vsel %vm5723, nan, %v5733
        %5736 = vset.pattern.permute.xlu0 3
        %5737 = vperm.xlu0 %5736, %v5630
        %v5738 = vpop.permute.xlu0 %5737
        %5741 = vset.pattern.permute.xlu0 3
        %5742 = vperm.xlu0 %5741, %v5734
        %v5743 = vpop.permute.xlu0 %5742
        %v5745 = vmul.f32 %v5738, %v964
        %v5746 = vmul.f32 %v5743, %v964
        %v5747 = vand.u32 2147483647, %v5525
        %vm5748 = vcmp.le.f32.partialorder %v5747, 0.7853982
        %vm5749 = vcmp.lt.s32.totalorder %v5525, 0
        %v5750 = vand.u32 %v5525, 2139095040
        %v5751 = vshrl.u32 %v5750, 23
        %v5752 = vsub.s32 %v5751, 127
        %v5753 = vand.u32 2147483647, %v5525
        %v5754 = vand.u32 %v5753, 8388607
        %v5755 = vor.u32 %v5754, 8388608
        %v5756 = vsub.s32 0, %v5755
        %v5757 = vadd.s32 %v5752, 1
        %vm5758 = vcmp.gt.s32.totalorder %v5757, 0
        %v5759 = vsel %vm5758, %v5757, 0
        %v5760 = vshrl.u32 %v5759, 5
        %v5761 = vand.u32 %v5759, 31
        %v5762 = vsub.s32 32, %v5761
        %v5763 = vshrl.u32 683565275, %v5762
        %v5764 = vshll.u32 683565275, %v5761
        %v5765 = vshrl.u32 2475754826, %v5762
        %v5766 = vor.u32 %v5764, %v5765
        %v5767 = vshll.u32 2475754826, %v5761
        %v5768 = vshrl.u32 2131351028, %v5762
        %v5769 = vor.u32 %v5767, %v5768
        %v5770 = vshll.u32 2131351028, %v5761
        %v5771 = vshrl.u32 2102212464, %v5762
        %v5772 = vor.u32 %v5770, %v5771
        %v5773 = vshll.u32 2102212464, %v5761
        %v5774 = vshrl.u32 920167782, %v5762
        %v5775 = vor.u32 %v5773, %v5774
        %v5776 = vshll.u32 920167782, %v5761
        %v5777 = vshrl.u32 1326507024, %v5762
        %v5778 = vor.u32 %v5776, %v5777
        %vm5779 = vcmp.lt.s32.totalorder %v5760, 1
        %vm5780 = vcmp.lt.s32.totalorder %v5760, 2
        %vm5781 = vcmp.lt.s32.totalorder %v5760, 3
        %vm5782 = vcmp.lt.s32.totalorder %v5760, 4
        %v5783 = vsel %vm5779, %v5763, %v5766
        %v5784 = vsel %vm5782, %v5772, 2102212464
        %v5785 = vsel %vm5781, %v5769, %v5784
        %v5786 = vsel %vm5780, %v5783, %v5785
        %v5787 = vsel %vm5779, %v5766, %v5769
        %v5788 = vsel %vm5782, %v5775, 920167782
        %v5789 = vsel %vm5781, %v5772, %v5788
        %v5790 = vsel %vm5780, %v5787, %v5789
        %v5791 = vsel %vm5779, %v5769, %v5772
        %v5792 = vsel %vm5782, %v5778, 1326507024
        %v5793 = vsel %vm5781, %v5775, %v5792
        %v5794 = vsel %vm5780, %v5791, %v5793
        %v5795 = vshll.u32 %v5755, 8
        %v5796 = vmul.u32.u64.compose %v5795, %v5794
        %v5797 = vextract.low.u32 %v5796
        %v5798 = vextract.high.u32 %v5796
        %v5799 = vmul.u32.u64.compose %v5795, %v5790
        %v5800 = vextract.low.u32 %v5799
        %v5801 = vextract.high.u32 %v5799
        %v5802 = vmul.u32 %v5795, %v5786
        %v5803 = vadd.s32 %v5798, %v5800
        %vm5804 = vc.u32 %v5798, %v5800
        %v5805 = vadd.s32 %v5801, 1
        %v5806 = vsel %vm5804, %v5805, %v5801
        %v5807 = vadd.s32 %v5802, %v5806
        %v5808 = vadd.s32 %v5807, 536870912
        %v5809 = vshrl.u32 %v5808, 30
        %v5810 = vshll.u32 %v5809, 30
        %v5811 = vsub.s32 %v5807, %v5810
        %vm5812 = vcmp.lt.s32.totalorder %v5811, 0
        %v5813 = vsub.s32 0, %v5811
        %v5814 = vsel %vm5812, %v5813, %v5811
        %v5815 = vclz %v5814
        %v5816 = vsub.s32 %v5815, 2
        %vm5817 = vcmp.gt.s32.totalorder 0, %v5816
        %v5818 = vsel %vm5817, 0, %v5816
        %v5819 = vsub.s32 32, %v5818
        %v5820 = vshll.u32 %v5811, %v5818
        %v5821 = vshrl.u32 %v5803, %v5819
        %v5822 = vor.u32 %v5820, %v5821
        %v5823 = vsub.s32 4294967266, %v5818
        %v5824 = vadd.s32 %v5823, 127
        %v5825 = vshll.u32 %v5824, 23
        %v5826 = vor.u32 4788187, %v5825
        %v5827 = vand.u32 2147483647, %v5826
        %v5829 = vcvt.s32.f32 %v5822
        %v5830 = vmul.f32 %v5829, %v5827
        %v5831 = vxor.u32 %v5830, 2147483648
        %v5832 = vsel %vm5749, %v5831, %v5830
        %v5833 = vsub.s32 4, %v5809
        %v5834 = vsel %vm5749, %v5833, %v5809
        %v5835 = vsel %vm5748, %v5525, %v5832
        %v5836 = vsel %vm5748, 0, %v5834
        %v5837 = vcosq.f32.pop %v5835
        %v5838 = vsinq.f32.pop %v5835
        %vm5839 = vweird.f32 %v5525
        %v5840 = vand.u32 %v5836, 3
        %vm5841 = vcmp.lt.s32.totalorder %v5840, 2
        %vm5842 = vcmp.eq.s32.totalorder %v5840, 0
        %v5843 = vxor.u32 %v5838, 2147483648
        %v5844 = vsel %vm5842, %v5837, %v5843
        %vm5845 = vcmp.eq.s32.totalorder %v5840, 2
        %v5846 = vxor.u32 %v5837, 2147483648
        %v5847 = vsel %vm5845, %v5846, %v5838
        %v5848 = vsel %vm5841, %v5844, %v5847
        %v5849 = vsel %vm5839, nan, %v5848
        %v5850 = vand.u32 2147483647, %v5526
        %vm5851 = vcmp.le.f32.partialorder %v5850, 0.7853982
        %vm5852 = vcmp.lt.s32.totalorder %v5526, 0
        %v5853 = vand.u32 %v5526, 2139095040
        %v5854 = vshrl.u32 %v5853, 23
        %v5855 = vsub.s32 %v5854, 127
        %v5856 = vand.u32 2147483647, %v5526
        %v5857 = vand.u32 %v5856, 8388607
        %v5858 = vor.u32 %v5857, 8388608
        %v5859 = vsub.s32 0, %v5858
        %v5860 = vadd.s32 %v5855, 1
        %vm5861 = vcmp.gt.s32.totalorder %v5860, 0
        %v5862 = vsel %vm5861, %v5860, 0
        %v5863 = vshrl.u32 %v5862, 5
        %v5864 = vand.u32 %v5862, 31
        %v5865 = vsub.s32 32, %v5864
        %v5866 = vshrl.u32 683565275, %v5865
        %v5867 = vshll.u32 683565275, %v5864
        %v5868 = vshrl.u32 2475754826, %v5865
        %v5869 = vor.u32 %v5867, %v5868
        %v5870 = vshll.u32 2475754826, %v5864
        %v5871 = vshrl.u32 2131351028, %v5865
        %v5872 = vor.u32 %v5870, %v5871
        %v5873 = vshll.u32 2131351028, %v5864
        %v5874 = vshrl.u32 2102212464, %v5865
        %v5875 = vor.u32 %v5873, %v5874
        %v5876 = vshll.u32 2102212464, %v5864
        %v5877 = vshrl.u32 920167782, %v5865
        %v5878 = vor.u32 %v5876, %v5877
        %v5879 = vshll.u32 920167782, %v5864
        %v5880 = vshrl.u32 1326507024, %v5865
        %v5881 = vor.u32 %v5879, %v5880
        %vm5882 = vcmp.lt.s32.totalorder %v5863, 1
        %vm5883 = vcmp.lt.s32.totalorder %v5863, 2
        %vm5884 = vcmp.lt.s32.totalorder %v5863, 3
        %vm5885 = vcmp.lt.s32.totalorder %v5863, 4
        %v5886 = vsel %vm5882, %v5866, %v5869
        %v5887 = vsel %vm5885, %v5875, 2102212464
        %v5888 = vsel %vm5884, %v5872, %v5887
        %v5889 = vsel %vm5883, %v5886, %v5888
        %v5890 = vsel %vm5882, %v5869, %v5872
        %v5891 = vsel %vm5885, %v5878, 920167782
        %v5892 = vsel %vm5884, %v5875, %v5891
        %v5893 = vsel %vm5883, %v5890, %v5892
        %v5894 = vsel %vm5882, %v5872, %v5875
        %v5895 = vsel %vm5885, %v5881, 1326507024
        %v5896 = vsel %vm5884, %v5878, %v5895
        %v5897 = vsel %vm5883, %v5894, %v5896
        %v5898 = vshll.u32 %v5858, 8
        %v5899 = vmul.u32.u64.compose %v5898, %v5897
        %v5900 = vextract.low.u32 %v5899
        %v5901 = vextract.high.u32 %v5899
        %v5902 = vmul.u32.u64.compose %v5898, %v5893
        %v5903 = vextract.low.u32 %v5902
        %v5904 = vextract.high.u32 %v5902
        %v5905 = vmul.u32 %v5898, %v5889
        %v5906 = vadd.s32 %v5901, %v5903
        %vm5907 = vc.u32 %v5901, %v5903
        %v5908 = vadd.s32 %v5904, 1
        %v5909 = vsel %vm5907, %v5908, %v5904
        %v5910 = vadd.s32 %v5905, %v5909
        %v5911 = vadd.s32 %v5910, 536870912
        %v5912 = vshrl.u32 %v5911, 30
        %v5913 = vshll.u32 %v5912, 30
        %v5914 = vsub.s32 %v5910, %v5913
        %vm5915 = vcmp.lt.s32.totalorder %v5914, 0
        %v5916 = vsub.s32 0, %v5914
        %v5917 = vsel %vm5915, %v5916, %v5914
        %v5918 = vclz %v5917
        %v5919 = vsub.s32 %v5918, 2
        %vm5920 = vcmp.gt.s32.totalorder 0, %v5919
        %v5921 = vsel %vm5920, 0, %v5919
        %v5922 = vsub.s32 32, %v5921
        %v5923 = vshll.u32 %v5914, %v5921
        %v5924 = vshrl.u32 %v5906, %v5922
        %v5925 = vor.u32 %v5923, %v5924
        %v5926 = vsub.s32 4294967266, %v5921
        %v5927 = vadd.s32 %v5926, 127
        %v5928 = vshll.u32 %v5927, 23
        %v5929 = vor.u32 4788187, %v5928
        %v5930 = vand.u32 2147483647, %v5929
        %v5932 = vcvt.s32.f32 %v5925
        %v5933 = vmul.f32 %v5932, %v5930
        %v5934 = vxor.u32 %v5933, 2147483648
        %v5935 = vsel %vm5852, %v5934, %v5933
        %v5936 = vsub.s32 4, %v5912
        %v5937 = vsel %vm5852, %v5936, %v5912
        %v5938 = vsel %vm5851, %v5526, %v5935
        %v5939 = vsel %vm5851, 0, %v5937
        %v5940 = vcosq.f32.pop %v5938
        %v5941 = vsinq.f32.pop %v5938
        %vm5942 = vweird.f32 %v5526
        %v5943 = vand.u32 %v5939, 3
        %vm5944 = vcmp.lt.s32.totalorder %v5943, 2
        %vm5945 = vcmp.eq.s32.totalorder %v5943, 0
        %v5946 = vxor.u32 %v5941, 2147483648
        %v5947 = vsel %vm5945, %v5940, %v5946
        %vm5948 = vcmp.eq.s32.totalorder %v5943, 2
        %v5949 = vxor.u32 %v5940, 2147483648
        %v5950 = vsel %vm5948, %v5949, %v5941
        %v5951 = vsel %vm5944, %v5947, %v5950
        %v5952 = vsel %vm5942, nan, %v5951
        %5954 = vset.pattern.permute.xlu0 3
        %5955 = vperm.xlu0 %5954, %v5849
        %v5956 = vpop.permute.xlu0 %5955
        %5959 = vset.pattern.permute.xlu0 3
        %5960 = vperm.xlu0 %5959, %v5952
        %v5961 = vpop.permute.xlu0 %5960
        %v5963 = vmul.f32 %v5956, %v1186
        %v5964 = vmul.f32 %v5961, %v1186
        %v5965 = vadd.f32 %v5745, %v5963
        %v5966 = vadd.f32 %v5746, %v5964
        %v5967 = vadd.f32 %v5965, %v1195
        %v5968 = vadd.f32 %v5966, %v1195
        %v5969 = vmul.f32 %v731, %v5523
        %v5970 = vmul.f32 %v732, %v5524
        %v5971 = vsub.f32 1.0, %v731
        %v5972 = vsub.f32 1.0, %v732
        %v5973 = vadd.f32 %v5969, %v5971
        %v5974 = vadd.f32 %v5970, %v5972
        %v5976 = vcombine.high %v5523, %v5523
        %v5978 = vunpack.c.l.s4 1966171168
        %v5979 = vunpack.c.0.s8 %v5978
        %v5980 = vlaneseq
        %v5981 = vshrl.u32 %v5980, 7
        %v5982 = vsub.s32 %v5979, %v5981
        %v5983 = vrot.slane %v5523, %v5982
        %v5985 = vunpack.c.l.s4 1966171168
        %v5986 = vunpack.c.0.s8 %v5985
        %v5987 = vlaneseq
        %v5988 = vshrl.u32 %v5987, 7
        %v5989 = vsub.s32 %v5986, %v5988
        %v5990 = vrot.slane %v5976, %v5989
        %v5991 = vcombine.high %v5983, %v5983
        %v5992 = vcombine.high %v5990, %v5990
        %v5994 = vunpack.c.l.s4 1966171168
        %v5995 = vunpack.c.0.s8 %v5994
        %v5996 = vlaneseq
        %v5997 = vshrl.u32 %v5996, 7
        %v5998 = vsub.s32 %v5995, %v5997
        %v5999 = vrot.slane %v5990, %v5998
        %v6001 = vunpack.c.l.s4 1966171168
        %v6002 = vunpack.c.0.s8 %v6001
        %v6003 = vlaneseq
        %v6004 = vshrl.u32 %v6003, 7
        %v6005 = vsub.s32 %v6002, %v6004
        %v6006 = vrot.slane %v5991, %v6005
        %v6008 = vunpack.c.l.s4 1966171168
        %v6009 = vunpack.c.0.s8 %v6008
        %v6010 = vlaneseq
        %v6011 = vshrl.u32 %v6010, 7
        %v6012 = vsub.s32 %v6009, %v6011
        %v6013 = vrot.slane %v5992, %v6012
        %v6014 = vcombine.high %v5999, %v5999
        %v6015 = vcombine.high %v6006, %v6006
        %v6016 = vcombine.high %v6013, %v6013
        %v6017 = vlaneseq
        %v6018 = vshrl.u32 %v6017, 7
        %v6019 = vsub.s32 0, %v6018
        %v6020 = vrot.slane %v6015, %v6019
        %v6021 = vlaneseq
        %v6022 = vshrl.u32 %v6021, 7
        %v6023 = vsub.s32 0, %v6022
        %v6024 = vrot.slane %v5999, %v6023
        %v6025 = vlaneseq
        %v6026 = vshrl.u32 %v6025, 7
        %v6027 = vsub.s32 0, %v6026
        %v6028 = vrot.slane %v6013, %v6027
        %v6029 = vlaneseq
        %v6030 = vshrl.u32 %v6029, 7
        %v6031 = vsub.s32 0, %v6030
        %v6032 = vrot.slane %v6014, %v6031
        %v6033 = vlaneseq
        %v6034 = vshrl.u32 %v6033, 7
        %v6035 = vsub.s32 0, %v6034
        %v6036 = vrot.slane %v6016, %v6035
        %v6042 = vsub.f32 %v5523, %v6020
        %v6043 = vsub.f32 %v5524, %v6020
        %v6044 = vsub.f32 %v5523, %v6024
        %v6045 = vsub.f32 %v5524, %v6024
        %v6046 = vsub.f32 %v5523, %v6028
        %v6047 = vsub.f32 %v5524, %v6028
        %v6048 = vsub.f32 %v5523, %v6032
        %v6049 = vsub.f32 %v5524, %v6032
        %v6050 = vsub.f32 %v5523, %v6036
        %v6051 = vsub.f32 %v5524, %v6036
        %v6052 = vld [vmem:[#allocation2] sm:$0xff]
        %v6053 = vld [vmem:[#allocation2 + $0x8] sm:$0xf]
        %v6054 = vmul.f32 %v731, %v5967
        %v6055 = vmul.f32 %v732, %v5968
        %v6056 = vadd.f32 %v6052, %v6054
        %v6057 = vadd.f32 %v6053, %v6055
        %6059 = vset.pattern.permute.xlu0 2
        %6060 = vperm.xlu0 %6059, %v5973
        %v6061 = vpop.permute.xlu0 %6060
        %6064 = vset.pattern.permute.xlu0 2
        %6065 = vperm.xlu0 %6064, %v5974
        %v6066 = vpop.permute.xlu0 %6065
        %v6068 = vmul.f32 %v6056, %v6061
        %v6069 = vmul.f32 %v6057, %v6066
        %6071 = vset.pattern.permute.xlu0 0
        %6072 = vperm.xlu0 %6071, %v6042
        %v6073 = vpop.permute.xlu0 %6072
        %6076 = vset.pattern.permute.xlu0 0
        %6077 = vperm.xlu0 %6076, %v6043
        %v6078 = vpop.permute.xlu0 %6077
        %6081 = vset.pattern.permute.xlu0 0
        %6082 = vperm.xlu0 %6081, %v6044
        %v6083 = vpop.permute.xlu0 %6082
        %6086 = vset.pattern.permute.xlu0 0
        %6087 = vperm.xlu0 %6086, %v6045
        %v6088 = vpop.permute.xlu0 %6087
        %6091 = vset.pattern.permute.xlu0 0
        %6092 = vperm.xlu0 %6091, %v6046
        %v6093 = vpop.permute.xlu0 %6092
        %6096 = vset.pattern.permute.xlu0 0
        %6097 = vperm.xlu0 %6096, %v6047
        %v6098 = vpop.permute.xlu0 %6097
        %6101 = vset.pattern.permute.xlu0 0
        %6102 = vperm.xlu0 %6101, %v6048
        %v6103 = vpop.permute.xlu0 %6102
        %6106 = vset.pattern.permute.xlu0 0
        %6107 = vperm.xlu0 %6106, %v6049
        %v6108 = vpop.permute.xlu0 %6107
        %6111 = vset.pattern.permute.xlu0 0
        %6112 = vperm.xlu0 %6111, %v6050
        %v6113 = vpop.permute.xlu0 %6112
        %6116 = vset.pattern.permute.xlu0 0
        %6117 = vperm.xlu0 %6116, %v6051
        %v6118 = vpop.permute.xlu0 %6117
        %v6120 = vlaneseq
        %v6121 = vshrl.u32 %v6120, 7
        %v6122 = vsub.s32 0, %v6121
        %v6123 = vrot.slane %v712, %v6122
        %v6124 = vmul.f32 %v6073, %v6123
        %v6125 = vmul.f32 %v6078, %v6123
        %v6126 = vmul.f32 %v6083, %v6123
        %v6127 = vmul.f32 %v6088, %v6123
        %v6128 = vmul.f32 %v6093, %v6123
        %v6129 = vmul.f32 %v6098, %v6123
        %v6130 = vmul.f32 %v6103, %v6123
        %v6131 = vmul.f32 %v6108, %v6123
        %v6132 = vmul.f32 %v6113, %v6123
        %v6133 = vmul.f32 %v6118, %v6123
        %6134 = vset.pattern.permute.xlu0 1
        %6135 = vperm.xlu0 %6134, %v6042
        %v6136 = vpop.permute.xlu0 %6135
        %6138 = vset.pattern.permute.xlu0 1
        %6139 = vperm.xlu0 %6138, %v6043
        %v6140 = vpop.permute.xlu0 %6139
        %6142 = vset.pattern.permute.xlu0 1
        %6143 = vperm.xlu0 %6142, %v6044
        %v6144 = vpop.permute.xlu0 %6143
        %6146 = vset.pattern.permute.xlu0 1
        %6147 = vperm.xlu0 %6146, %v6045
        %v6148 = vpop.permute.xlu0 %6147
        %6150 = vset.pattern.permute.xlu0 1
        %6151 = vperm.xlu0 %6150, %v6046
        %v6152 = vpop.permute.xlu0 %6151
        %6154 = vset.pattern.permute.xlu0 1
        %6155 = vperm.xlu0 %6154, %v6047
        %v6156 = vpop.permute.xlu0 %6155
        %6158 = vset.pattern.permute.xlu0 1
        %6159 = vperm.xlu0 %6158, %v6048
        %v6160 = vpop.permute.xlu0 %6159
        %6162 = vset.pattern.permute.xlu0 1
        %6163 = vperm.xlu0 %6162, %v6049
        %v6164 = vpop.permute.xlu0 %6163
        %6166 = vset.pattern.permute.xlu0 1
        %6167 = vperm.xlu0 %6166, %v6050
        %v6168 = vpop.permute.xlu0 %6167
        %6170 = vset.pattern.permute.xlu0 1
        %6171 = vperm.xlu0 %6170, %v6051
        %v6172 = vpop.permute.xlu0 %6171
        %v6174 = vlaneseq
        %v6175 = vshrl.u32 %v6174, 7
        %v6176 = vsub.s32 1, %v6175
        %v6177 = vrot.slane %v712, %v6176
        %v6178 = vmul.f32 %v6136, %v6177
        %v6179 = vmul.f32 %v6140, %v6177
        %v6180 = vmul.f32 %v6144, %v6177
        %v6181 = vmul.f32 %v6148, %v6177
        %v6182 = vmul.f32 %v6152, %v6177
        %v6183 = vmul.f32 %v6156, %v6177
        %v6184 = vmul.f32 %v6160, %v6177
        %v6185 = vmul.f32 %v6164, %v6177
        %v6186 = vmul.f32 %v6168, %v6177
        %v6187 = vmul.f32 %v6172, %v6177
        %v6188 = vadd.f32 %v6124, %v6178
        %v6189 = vadd.f32 %v6125, %v6179
        %v6190 = vadd.f32 %v6126, %v6180
        %v6191 = vadd.f32 %v6127, %v6181
        %v6192 = vadd.f32 %v6128, %v6182
        %v6193 = vadd.f32 %v6129, %v6183
        %v6194 = vadd.f32 %v6130, %v6184
        %v6195 = vadd.f32 %v6131, %v6185
        %v6196 = vadd.f32 %v6132, %v6186
        %v6197 = vadd.f32 %v6133, %v6187
        %v6199 = vlaneseq
        %v6200 = vshrl.u32 %v6199, 7
        %v6201 = vsub.s32 0, %v6200
        %v6202 = vrot.slane %v713, %v6201
        %v6204 = vadd.f32 %v6188, %v6202
        %v6205 = vadd.f32 %v6189, %v6202
        %v6206 = vadd.f32 %v6190, %v6202
        %v6207 = vadd.f32 %v6191, %v6202
        %v6208 = vadd.f32 %v6192, %v6202
        %v6209 = vadd.f32 %v6193, %v6202
        %v6210 = vadd.f32 %v6194, %v6202
        %v6211 = vadd.f32 %v6195, %v6202
        %v6212 = vadd.f32 %v6196, %v6202
        %v6213 = vadd.f32 %v6197, %v6202
        %v6214 = vmax.f32 %v6204, 0.0
        %v6215 = vmax.f32 %v6205, 0.0
        %v6216 = vmax.f32 %v6206, 0.0
        %v6217 = vmax.f32 %v6207, 0.0
        %v6218 = vmax.f32 %v6208, 0.0
        %v6219 = vmax.f32 %v6209, 0.0
        %v6220 = vmax.f32 %v6210, 0.0
        %v6221 = vmax.f32 %v6211, 0.0
        %v6222 = vmax.f32 %v6212, 0.0
        %v6223 = vmax.f32 %v6213, 0.0
        %v6224 = vmul.f32 %v6214, %v6068
        %v6225 = vmul.f32 %v6215, %v6069
        %v6226 = vmul.f32 %v6216, %v6068
        %v6227 = vmul.f32 %v6217, %v6069
        %v6228 = vmul.f32 %v6218, %v6068
        %v6229 = vmul.f32 %v6219, %v6069
        %v6230 = vmul.f32 %v6220, %v6068
        %v6231 = vmul.f32 %v6221, %v6069
        %v6232 = vmul.f32 %v6222, %v6068
        %v6233 = vmul.f32 %v6223, %v6069
        %v6234 = vsel %vm1784, %v6224, 0.0
        %v6235 = vsel %vm1786, %v6225, 0.0
        %v6236 = vadd.f32 %v6234, %v6235
        %v6237 = vrot.slane %v6236, 4
        %v6238 = vadd.f32 %v6236, %v6237
        %v6239 = vrot.slane %v6238, 2
        %v6240 = vadd.f32 %v6238, %v6239
        %v6241 = vrot.slane %v6240, 1
        %v6242 = vadd.f32 %v6240, %v6241
        %v6243 = vsel %vm1784, %v6226, 0.0
        %v6244 = vsel %vm1786, %v6227, 0.0
        %v6245 = vadd.f32 %v6243, %v6244
        %v6246 = vrot.slane %v6245, 4
        %v6247 = vadd.f32 %v6245, %v6246
        %v6248 = vrot.slane %v6247, 2
        %v6249 = vadd.f32 %v6247, %v6248
        %v6250 = vrot.slane %v6249, 1
        %v6251 = vadd.f32 %v6249, %v6250
        %v6252 = vsel %vm1784, %v6228, 0.0
        %v6253 = vsel %vm1786, %v6229, 0.0
        %v6254 = vadd.f32 %v6252, %v6253
        %v6255 = vrot.slane %v6254, 4
        %v6256 = vadd.f32 %v6254, %v6255
        %v6257 = vrot.slane %v6256, 2
        %v6258 = vadd.f32 %v6256, %v6257
        %v6259 = vrot.slane %v6258, 1
        %v6260 = vadd.f32 %v6258, %v6259
        %v6261 = vsel %vm1784, %v6230, 0.0
        %v6262 = vsel %vm1786, %v6231, 0.0
        %v6263 = vadd.f32 %v6261, %v6262
        %v6264 = vrot.slane %v6263, 4
        %v6265 = vadd.f32 %v6263, %v6264
        %v6266 = vrot.slane %v6265, 2
        %v6267 = vadd.f32 %v6265, %v6266
        %v6268 = vrot.slane %v6267, 1
        %v6269 = vadd.f32 %v6267, %v6268
        %v6270 = vsel %vm1784, %v6232, 0.0
        %v6271 = vsel %vm1786, %v6233, 0.0
        %v6272 = vadd.f32 %v6270, %v6271
        %v6273 = vrot.slane %v6272, 4
        %v6274 = vadd.f32 %v6272, %v6273
        %v6275 = vrot.slane %v6274, 2
        %v6276 = vadd.f32 %v6274, %v6275
        %v6277 = vrot.slane %v6276, 1
        %v6278 = vadd.f32 %v6276, %v6277
        %v6284 = vsel %vm1906, %v6251, %v6242
        %v6285 = vsel %vm1908, %v6260, %v6284
        %v6286 = vsel %vm1910, %v6269, %v6285
        %v6287 = vsel %vm1912, %v6278, %v6286
        %vm6289 = vcmask 520192
        %6290 = vst.msk [vmem:[#allocation3] sm:$0x1f] %vm6289, %v6287
        %v6291 = vld [vmem:[%s1962] sm:$0xff]
        %v6292 = vld [vmem:[%s1962 + $0x8] sm:$0xf]
        %v6293 = vmul.f32 %v6291, 3.1415927
        %v6294 = vmul.f32 %v6292, 3.1415927
        %v6295 = vand.u32 2147483647, %v6293
        %vm6296 = vcmp.le.f32.partialorder %v6295, 0.7853982
        %vm6297 = vcmp.lt.s32.totalorder %v6293, 0
        %v6298 = vand.u32 %v6293, 2139095040
        %v6299 = vshrl.u32 %v6298, 23
        %v6300 = vsub.s32 %v6299, 127
        %v6301 = vand.u32 2147483647, %v6293
        %v6302 = vand.u32 %v6301, 8388607
        %v6303 = vor.u32 %v6302, 8388608
        %v6304 = vsub.s32 0, %v6303
        %v6305 = vadd.s32 %v6300, 1
        %vm6306 = vcmp.gt.s32.totalorder %v6305, 0
        %v6307 = vsel %vm6306, %v6305, 0
        %v6308 = vshrl.u32 %v6307, 5
        %v6309 = vand.u32 %v6307, 31
        %v6310 = vsub.s32 32, %v6309
        %v6311 = vshrl.u32 683565275, %v6310
        %v6312 = vshll.u32 683565275, %v6309
        %v6313 = vshrl.u32 2475754826, %v6310
        %v6314 = vor.u32 %v6312, %v6313
        %v6315 = vshll.u32 2475754826, %v6309
        %v6316 = vshrl.u32 2131351028, %v6310
        %v6317 = vor.u32 %v6315, %v6316
        %v6318 = vshll.u32 2131351028, %v6309
        %v6319 = vshrl.u32 2102212464, %v6310
        %v6320 = vor.u32 %v6318, %v6319
        %v6321 = vshll.u32 2102212464, %v6309
        %v6322 = vshrl.u32 920167782, %v6310
        %v6323 = vor.u32 %v6321, %v6322
        %v6324 = vshll.u32 920167782, %v6309
        %v6325 = vshrl.u32 1326507024, %v6310
        %v6326 = vor.u32 %v6324, %v6325
        %vm6327 = vcmp.lt.s32.totalorder %v6308, 1
        %vm6328 = vcmp.lt.s32.totalorder %v6308, 2
        %vm6329 = vcmp.lt.s32.totalorder %v6308, 3
        %vm6330 = vcmp.lt.s32.totalorder %v6308, 4
        %v6331 = vsel %vm6327, %v6311, %v6314
        %v6332 = vsel %vm6330, %v6320, 2102212464
        %v6333 = vsel %vm6329, %v6317, %v6332
        %v6334 = vsel %vm6328, %v6331, %v6333
        %v6335 = vsel %vm6327, %v6314, %v6317
        %v6336 = vsel %vm6330, %v6323, 920167782
        %v6337 = vsel %vm6329, %v6320, %v6336
        %v6338 = vsel %vm6328, %v6335, %v6337
        %v6339 = vsel %vm6327, %v6317, %v6320
        %v6340 = vsel %vm6330, %v6326, 1326507024
        %v6341 = vsel %vm6329, %v6323, %v6340
        %v6342 = vsel %vm6328, %v6339, %v6341
        %v6343 = vshll.u32 %v6303, 8
        %v6344 = vmul.u32.u64.compose %v6343, %v6342
        %v6345 = vextract.low.u32 %v6344
        %v6346 = vextract.high.u32 %v6344
        %v6347 = vmul.u32.u64.compose %v6343, %v6338
        %v6348 = vextract.low.u32 %v6347
        %v6349 = vextract.high.u32 %v6347
        %v6350 = vmul.u32 %v6343, %v6334
        %v6351 = vadd.s32 %v6346, %v6348
        %vm6352 = vc.u32 %v6346, %v6348
        %v6353 = vadd.s32 %v6349, 1
        %v6354 = vsel %vm6352, %v6353, %v6349
        %v6355 = vadd.s32 %v6350, %v6354
        %v6356 = vadd.s32 %v6355, 536870912
        %v6357 = vshrl.u32 %v6356, 30
        %v6358 = vshll.u32 %v6357, 30
        %v6359 = vsub.s32 %v6355, %v6358
        %vm6360 = vcmp.lt.s32.totalorder %v6359, 0
        %v6361 = vsub.s32 0, %v6359
        %v6362 = vsel %vm6360, %v6361, %v6359
        %v6363 = vclz %v6362
        %v6364 = vsub.s32 %v6363, 2
        %vm6365 = vcmp.gt.s32.totalorder 0, %v6364
        %v6366 = vsel %vm6365, 0, %v6364
        %v6367 = vsub.s32 32, %v6366
        %v6368 = vshll.u32 %v6359, %v6366
        %v6369 = vshrl.u32 %v6351, %v6367
        %v6370 = vor.u32 %v6368, %v6369
        %v6371 = vsub.s32 4294967266, %v6366
        %v6372 = vadd.s32 %v6371, 127
        %v6373 = vshll.u32 %v6372, 23
        %v6374 = vor.u32 4788187, %v6373
        %v6375 = vand.u32 2147483647, %v6374
        %v6377 = vcvt.s32.f32 %v6370
        %v6378 = vmul.f32 %v6377, %v6375
        %v6379 = vxor.u32 %v6378, 2147483648
        %v6380 = vsel %vm6297, %v6379, %v6378
        %v6381 = vsub.s32 4, %v6357
        %v6382 = vsel %vm6297, %v6381, %v6357
        %v6383 = vsel %vm6296, %v6293, %v6380
        %v6384 = vsel %vm6296, 0, %v6382
        %v6385 = vcosq.f32.pop %v6383
        %v6386 = vsinq.f32.pop %v6383
        %vm6387 = vweird.f32 %v6293
        %v6388 = vadd.s32 %v6384, 3
        %v6389 = vand.u32 %v6388, 3
        %vm6390 = vcmp.lt.s32.totalorder %v6389, 2
        %vm6391 = vcmp.eq.s32.totalorder %v6389, 0
        %v6392 = vxor.u32 %v6386, 2147483648
        %v6393 = vsel %vm6391, %v6385, %v6392
        %vm6394 = vcmp.eq.s32.totalorder %v6389, 2
        %v6395 = vxor.u32 %v6385, 2147483648
        %v6396 = vsel %vm6394, %v6395, %v6386
        %v6397 = vsel %vm6390, %v6393, %v6396
        %v6398 = vsel %vm6387, nan, %v6397
        %v6399 = vand.u32 2147483647, %v6294
        %vm6400 = vcmp.le.f32.partialorder %v6399, 0.7853982
        %vm6401 = vcmp.lt.s32.totalorder %v6294, 0
        %v6402 = vand.u32 %v6294, 2139095040
        %v6403 = vshrl.u32 %v6402, 23
        %v6404 = vsub.s32 %v6403, 127
        %v6405 = vand.u32 2147483647, %v6294
        %v6406 = vand.u32 %v6405, 8388607
        %v6407 = vor.u32 %v6406, 8388608
        %v6408 = vsub.s32 0, %v6407
        %v6409 = vadd.s32 %v6404, 1
        %vm6410 = vcmp.gt.s32.totalorder %v6409, 0
        %v6411 = vsel %vm6410, %v6409, 0
        %v6412 = vshrl.u32 %v6411, 5
        %v6413 = vand.u32 %v6411, 31
        %v6414 = vsub.s32 32, %v6413
        %v6415 = vshrl.u32 683565275, %v6414
        %v6416 = vshll.u32 683565275, %v6413
        %v6417 = vshrl.u32 2475754826, %v6414
        %v6418 = vor.u32 %v6416, %v6417
        %v6419 = vshll.u32 2475754826, %v6413
        %v6420 = vshrl.u32 2131351028, %v6414
        %v6421 = vor.u32 %v6419, %v6420
        %v6422 = vshll.u32 2131351028, %v6413
        %v6423 = vshrl.u32 2102212464, %v6414
        %v6424 = vor.u32 %v6422, %v6423
        %v6425 = vshll.u32 2102212464, %v6413
        %v6426 = vshrl.u32 920167782, %v6414
        %v6427 = vor.u32 %v6425, %v6426
        %v6428 = vshll.u32 920167782, %v6413
        %v6429 = vshrl.u32 1326507024, %v6414
        %v6430 = vor.u32 %v6428, %v6429
        %vm6431 = vcmp.lt.s32.totalorder %v6412, 1
        %vm6432 = vcmp.lt.s32.totalorder %v6412, 2
        %vm6433 = vcmp.lt.s32.totalorder %v6412, 3
        %vm6434 = vcmp.lt.s32.totalorder %v6412, 4
        %v6435 = vsel %vm6431, %v6415, %v6418
        %v6436 = vsel %vm6434, %v6424, 2102212464
        %v6437 = vsel %vm6433, %v6421, %v6436
        %v6438 = vsel %vm6432, %v6435, %v6437
        %v6439 = vsel %vm6431, %v6418, %v6421
        %v6440 = vsel %vm6434, %v6427, 920167782
        %v6441 = vsel %vm6433, %v6424, %v6440
        %v6442 = vsel %vm6432, %v6439, %v6441
        %v6443 = vsel %vm6431, %v6421, %v6424
        %v6444 = vsel %vm6434, %v6430, 1326507024
        %v6445 = vsel %vm6433, %v6427, %v6444
        %v6446 = vsel %vm6432, %v6443, %v6445
        %v6447 = vshll.u32 %v6407, 8
        %v6448 = vmul.u32.u64.compose %v6447, %v6446
        %v6449 = vextract.low.u32 %v6448
        %v6450 = vextract.high.u32 %v6448
        %v6451 = vmul.u32.u64.compose %v6447, %v6442
        %v6452 = vextract.low.u32 %v6451
        %v6453 = vextract.high.u32 %v6451
        %v6454 = vmul.u32 %v6447, %v6438
        %v6455 = vadd.s32 %v6450, %v6452
        %vm6456 = vc.u32 %v6450, %v6452
        %v6457 = vadd.s32 %v6453, 1
        %v6458 = vsel %vm6456, %v6457, %v6453
        %v6459 = vadd.s32 %v6454, %v6458
        %v6460 = vadd.s32 %v6459, 536870912
        %v6461 = vshrl.u32 %v6460, 30
        %v6462 = vshll.u32 %v6461, 30
        %v6463 = vsub.s32 %v6459, %v6462
        %vm6464 = vcmp.lt.s32.totalorder %v6463, 0
        %v6465 = vsub.s32 0, %v6463
        %v6466 = vsel %vm6464, %v6465, %v6463
        %v6467 = vclz %v6466
        %v6468 = vsub.s32 %v6467, 2
        %vm6469 = vcmp.gt.s32.totalorder 0, %v6468
        %v6470 = vsel %vm6469, 0, %v6468
        %v6471 = vsub.s32 32, %v6470
        %v6472 = vshll.u32 %v6463, %v6470
        %v6473 = vshrl.u32 %v6455, %v6471
        %v6474 = vor.u32 %v6472, %v6473
        %v6475 = vsub.s32 4294967266, %v6470
        %v6476 = vadd.s32 %v6475, 127
        %v6477 = vshll.u32 %v6476, 23
        %v6478 = vor.u32 4788187, %v6477
        %v6479 = vand.u32 2147483647, %v6478
        %v6481 = vcvt.s32.f32 %v6474
        %v6482 = vmul.f32 %v6481, %v6479
        %v6483 = vxor.u32 %v6482, 2147483648
        %v6484 = vsel %vm6401, %v6483, %v6482
        %v6485 = vsub.s32 4, %v6461
        %v6486 = vsel %vm6401, %v6485, %v6461
        %v6487 = vsel %vm6400, %v6294, %v6484
        %v6488 = vsel %vm6400, 0, %v6486
        %v6489 = vcosq.f32.pop %v6487
        %v6490 = vsinq.f32.pop %v6487
        %vm6491 = vweird.f32 %v6294
        %v6492 = vadd.s32 %v6488, 3
        %v6493 = vand.u32 %v6492, 3
        %vm6494 = vcmp.lt.s32.totalorder %v6493, 2
        %vm6495 = vcmp.eq.s32.totalorder %v6493, 0
        %v6496 = vxor.u32 %v6490, 2147483648
        %v6497 = vsel %vm6495, %v6489, %v6496
        %vm6498 = vcmp.eq.s32.totalorder %v6493, 2
        %v6499 = vxor.u32 %v6489, 2147483648
        %v6500 = vsel %vm6498, %v6499, %v6490
        %v6501 = vsel %vm6494, %v6497, %v6500
        %v6502 = vsel %vm6491, nan, %v6501
        %6504 = vset.pattern.permute.xlu0 3
        %6505 = vperm.xlu0 %6504, %v6398
        %v6506 = vpop.permute.xlu0 %6505
        %6509 = vset.pattern.permute.xlu0 3
        %6510 = vperm.xlu0 %6509, %v6502
        %v6511 = vpop.permute.xlu0 %6510
        %v6513 = vmul.f32 %v6506, %v964
        %v6514 = vmul.f32 %v6511, %v964
        %v6515 = vand.u32 2147483647, %v6293
        %vm6516 = vcmp.le.f32.partialorder %v6515, 0.7853982
        %vm6517 = vcmp.lt.s32.totalorder %v6293, 0
        %v6518 = vand.u32 %v6293, 2139095040
        %v6519 = vshrl.u32 %v6518, 23
        %v6520 = vsub.s32 %v6519, 127
        %v6521 = vand.u32 2147483647, %v6293
        %v6522 = vand.u32 %v6521, 8388607
        %v6523 = vor.u32 %v6522, 8388608
        %v6524 = vsub.s32 0, %v6523
        %v6525 = vadd.s32 %v6520, 1
        %vm6526 = vcmp.gt.s32.totalorder %v6525, 0
        %v6527 = vsel %vm6526, %v6525, 0
        %v6528 = vshrl.u32 %v6527, 5
        %v6529 = vand.u32 %v6527, 31
        %v6530 = vsub.s32 32, %v6529
        %v6531 = vshrl.u32 683565275, %v6530
        %v6532 = vshll.u32 683565275, %v6529
        %v6533 = vshrl.u32 2475754826, %v6530
        %v6534 = vor.u32 %v6532, %v6533
        %v6535 = vshll.u32 2475754826, %v6529
        %v6536 = vshrl.u32 2131351028, %v6530
        %v6537 = vor.u32 %v6535, %v6536
        %v6538 = vshll.u32 2131351028, %v6529
        %v6539 = vshrl.u32 2102212464, %v6530
        %v6540 = vor.u32 %v6538, %v6539
        %v6541 = vshll.u32 2102212464, %v6529
        %v6542 = vshrl.u32 920167782, %v6530
        %v6543 = vor.u32 %v6541, %v6542
        %v6544 = vshll.u32 920167782, %v6529
        %v6545 = vshrl.u32 1326507024, %v6530
        %v6546 = vor.u32 %v6544, %v6545
        %vm6547 = vcmp.lt.s32.totalorder %v6528, 1
        %vm6548 = vcmp.lt.s32.totalorder %v6528, 2
        %vm6549 = vcmp.lt.s32.totalorder %v6528, 3
        %vm6550 = vcmp.lt.s32.totalorder %v6528, 4
        %v6551 = vsel %vm6547, %v6531, %v6534
        %v6552 = vsel %vm6550, %v6540, 2102212464
        %v6553 = vsel %vm6549, %v6537, %v6552
        %v6554 = vsel %vm6548, %v6551, %v6553
        %v6555 = vsel %vm6547, %v6534, %v6537
        %v6556 = vsel %vm6550, %v6543, 920167782
        %v6557 = vsel %vm6549, %v6540, %v6556
        %v6558 = vsel %vm6548, %v6555, %v6557
        %v6559 = vsel %vm6547, %v6537, %v6540
        %v6560 = vsel %vm6550, %v6546, 1326507024
        %v6561 = vsel %vm6549, %v6543, %v6560
        %v6562 = vsel %vm6548, %v6559, %v6561
        %v6563 = vshll.u32 %v6523, 8
        %v6564 = vmul.u32.u64.compose %v6563, %v6562
        %v6565 = vextract.low.u32 %v6564
        %v6566 = vextract.high.u32 %v6564
        %v6567 = vmul.u32.u64.compose %v6563, %v6558
        %v6568 = vextract.low.u32 %v6567
        %v6569 = vextract.high.u32 %v6567
        %v6570 = vmul.u32 %v6563, %v6554
        %v6571 = vadd.s32 %v6566, %v6568
        %vm6572 = vc.u32 %v6566, %v6568
        %v6573 = vadd.s32 %v6569, 1
        %v6574 = vsel %vm6572, %v6573, %v6569
        %v6575 = vadd.s32 %v6570, %v6574
        %v6576 = vadd.s32 %v6575, 536870912
        %v6577 = vshrl.u32 %v6576, 30
        %v6578 = vshll.u32 %v6577, 30
        %v6579 = vsub.s32 %v6575, %v6578
        %vm6580 = vcmp.lt.s32.totalorder %v6579, 0
        %v6581 = vsub.s32 0, %v6579
        %v6582 = vsel %vm6580, %v6581, %v6579
        %v6583 = vclz %v6582
        %v6584 = vsub.s32 %v6583, 2
        %vm6585 = vcmp.gt.s32.totalorder 0, %v6584
        %v6586 = vsel %vm6585, 0, %v6584
        %v6587 = vsub.s32 32, %v6586
        %v6588 = vshll.u32 %v6579, %v6586
        %v6589 = vshrl.u32 %v6571, %v6587
        %v6590 = vor.u32 %v6588, %v6589
        %v6591 = vsub.s32 4294967266, %v6586
        %v6592 = vadd.s32 %v6591, 127
        %v6593 = vshll.u32 %v6592, 23
        %v6594 = vor.u32 4788187, %v6593
        %v6595 = vand.u32 2147483647, %v6594
        %v6597 = vcvt.s32.f32 %v6590
        %v6598 = vmul.f32 %v6597, %v6595
        %v6599 = vxor.u32 %v6598, 2147483648
        %v6600 = vsel %vm6517, %v6599, %v6598
        %v6601 = vsub.s32 4, %v6577
        %v6602 = vsel %vm6517, %v6601, %v6577
        %v6603 = vsel %vm6516, %v6293, %v6600
        %v6604 = vsel %vm6516, 0, %v6602
        %v6605 = vcosq.f32.pop %v6603
        %v6606 = vsinq.f32.pop %v6603
        %vm6607 = vweird.f32 %v6293
        %v6608 = vand.u32 %v6604, 3
        %vm6609 = vcmp.lt.s32.totalorder %v6608, 2
        %vm6610 = vcmp.eq.s32.totalorder %v6608, 0
        %v6611 = vxor.u32 %v6606, 2147483648
        %v6612 = vsel %vm6610, %v6605, %v6611
        %vm6613 = vcmp.eq.s32.totalorder %v6608, 2
        %v6614 = vxor.u32 %v6605, 2147483648
        %v6615 = vsel %vm6613, %v6614, %v6606
        %v6616 = vsel %vm6609, %v6612, %v6615
        %v6617 = vsel %vm6607, nan, %v6616
        %v6618 = vand.u32 2147483647, %v6294
        %vm6619 = vcmp.le.f32.partialorder %v6618, 0.7853982
        %vm6620 = vcmp.lt.s32.totalorder %v6294, 0
        %v6621 = vand.u32 %v6294, 2139095040
        %v6622 = vshrl.u32 %v6621, 23
        %v6623 = vsub.s32 %v6622, 127
        %v6624 = vand.u32 2147483647, %v6294
        %v6625 = vand.u32 %v6624, 8388607
        %v6626 = vor.u32 %v6625, 8388608
        %v6627 = vsub.s32 0, %v6626
        %v6628 = vadd.s32 %v6623, 1
        %vm6629 = vcmp.gt.s32.totalorder %v6628, 0
        %v6630 = vsel %vm6629, %v6628, 0
        %v6631 = vshrl.u32 %v6630, 5
        %v6632 = vand.u32 %v6630, 31
        %v6633 = vsub.s32 32, %v6632
        %v6634 = vshrl.u32 683565275, %v6633
        %v6635 = vshll.u32 683565275, %v6632
        %v6636 = vshrl.u32 2475754826, %v6633
        %v6637 = vor.u32 %v6635, %v6636
        %v6638 = vshll.u32 2475754826, %v6632
        %v6639 = vshrl.u32 2131351028, %v6633
        %v6640 = vor.u32 %v6638, %v6639
        %v6641 = vshll.u32 2131351028, %v6632
        %v6642 = vshrl.u32 2102212464, %v6633
        %v6643 = vor.u32 %v6641, %v6642
        %v6644 = vshll.u32 2102212464, %v6632
        %v6645 = vshrl.u32 920167782, %v6633
        %v6646 = vor.u32 %v6644, %v6645
        %v6647 = vshll.u32 920167782, %v6632
        %v6648 = vshrl.u32 1326507024, %v6633
        %v6649 = vor.u32 %v6647, %v6648
        %vm6650 = vcmp.lt.s32.totalorder %v6631, 1
        %vm6651 = vcmp.lt.s32.totalorder %v6631, 2
        %vm6652 = vcmp.lt.s32.totalorder %v6631, 3
        %vm6653 = vcmp.lt.s32.totalorder %v6631, 4
        %v6654 = vsel %vm6650, %v6634, %v6637
        %v6655 = vsel %vm6653, %v6643, 2102212464
        %v6656 = vsel %vm6652, %v6640, %v6655
        %v6657 = vsel %vm6651, %v6654, %v6656
        %v6658 = vsel %vm6650, %v6637, %v6640
        %v6659 = vsel %vm6653, %v6646, 920167782
        %v6660 = vsel %vm6652, %v6643, %v6659
        %v6661 = vsel %vm6651, %v6658, %v6660
        %v6662 = vsel %vm6650, %v6640, %v6643
        %v6663 = vsel %vm6653, %v6649, 1326507024
        %v6664 = vsel %vm6652, %v6646, %v6663
        %v6665 = vsel %vm6651, %v6662, %v6664
        %v6666 = vshll.u32 %v6626, 8
        %v6667 = vmul.u32.u64.compose %v6666, %v6665
        %v6668 = vextract.low.u32 %v6667
        %v6669 = vextract.high.u32 %v6667
        %v6670 = vmul.u32.u64.compose %v6666, %v6661
        %v6671 = vextract.low.u32 %v6670
        %v6672 = vextract.high.u32 %v6670
        %v6673 = vmul.u32 %v6666, %v6657
        %v6674 = vadd.s32 %v6669, %v6671
        %vm6675 = vc.u32 %v6669, %v6671
        %v6676 = vadd.s32 %v6672, 1
        %v6677 = vsel %vm6675, %v6676, %v6672
        %v6678 = vadd.s32 %v6673, %v6677
        %v6679 = vadd.s32 %v6678, 536870912
        %v6680 = vshrl.u32 %v6679, 30
        %v6681 = vshll.u32 %v6680, 30
        %v6682 = vsub.s32 %v6678, %v6681
        %vm6683 = vcmp.lt.s32.totalorder %v6682, 0
        %v6684 = vsub.s32 0, %v6682
        %v6685 = vsel %vm6683, %v6684, %v6682
        %v6686 = vclz %v6685
        %v6687 = vsub.s32 %v6686, 2
        %vm6688 = vcmp.gt.s32.totalorder 0, %v6687
        %v6689 = vsel %vm6688, 0, %v6687
        %v6690 = vsub.s32 32, %v6689
        %v6691 = vshll.u32 %v6682, %v6689
        %v6692 = vshrl.u32 %v6674, %v6690
        %v6693 = vor.u32 %v6691, %v6692
        %v6694 = vsub.s32 4294967266, %v6689
        %v6695 = vadd.s32 %v6694, 127
        %v6696 = vshll.u32 %v6695, 23
        %v6697 = vor.u32 4788187, %v6696
        %v6698 = vand.u32 2147483647, %v6697
        %v6700 = vcvt.s32.f32 %v6693
        %v6701 = vmul.f32 %v6700, %v6698
        %v6702 = vxor.u32 %v6701, 2147483648
        %v6703 = vsel %vm6620, %v6702, %v6701
        %v6704 = vsub.s32 4, %v6680
        %v6705 = vsel %vm6620, %v6704, %v6680
        %v6706 = vsel %vm6619, %v6294, %v6703
        %v6707 = vsel %vm6619, 0, %v6705
        %v6708 = vcosq.f32.pop %v6706
        %v6709 = vsinq.f32.pop %v6706
        %vm6710 = vweird.f32 %v6294
        %v6711 = vand.u32 %v6707, 3
        %vm6712 = vcmp.lt.s32.totalorder %v6711, 2
        %vm6713 = vcmp.eq.s32.totalorder %v6711, 0
        %v6714 = vxor.u32 %v6709, 2147483648
        %v6715 = vsel %vm6713, %v6708, %v6714
        %vm6716 = vcmp.eq.s32.totalorder %v6711, 2
        %v6717 = vxor.u32 %v6708, 2147483648
        %v6718 = vsel %vm6716, %v6717, %v6709
        %v6719 = vsel %vm6712, %v6715, %v6718
        %v6720 = vsel %vm6710, nan, %v6719
        %6722 = vset.pattern.permute.xlu0 3
        %6723 = vperm.xlu0 %6722, %v6617
        %v6724 = vpop.permute.xlu0 %6723
        %6727 = vset.pattern.permute.xlu0 3
        %6728 = vperm.xlu0 %6727, %v6720
        %v6729 = vpop.permute.xlu0 %6728
        %v6731 = vmul.f32 %v6724, %v1186
        %v6732 = vmul.f32 %v6729, %v1186
        %v6733 = vadd.f32 %v6513, %v6731
        %v6734 = vadd.f32 %v6514, %v6732
        %v6735 = vadd.f32 %v6733, %v1195
        %v6736 = vadd.f32 %v6734, %v1195
        %v6737 = vmul.f32 %v731, %v6291
        %v6738 = vmul.f32 %v732, %v6292
        %v6739 = vadd.f32 %v6737, %v5971
        %v6740 = vadd.f32 %v6738, %v5972
        %v6742 = vcombine.high %v6291, %v6291
        %v6744 = vunpack.c.l.s4 1966171168
        %v6745 = vunpack.c.0.s8 %v6744
        %v6746 = vlaneseq
        %v6747 = vshrl.u32 %v6746, 7
        %v6748 = vsub.s32 %v6745, %v6747
        %v6749 = vrot.slane %v6291, %v6748
        %v6751 = vunpack.c.l.s4 1966171168
        %v6752 = vunpack.c.0.s8 %v6751
        %v6753 = vlaneseq
        %v6754 = vshrl.u32 %v6753, 7
        %v6755 = vsub.s32 %v6752, %v6754
        %v6756 = vrot.slane %v6742, %v6755
        %v6757 = vcombine.high %v6749, %v6749
        %v6758 = vcombine.high %v6756, %v6756
        %v6760 = vunpack.c.l.s4 1966171168
        %v6761 = vunpack.c.0.s8 %v6760
        %v6762 = vlaneseq
        %v6763 = vshrl.u32 %v6762, 7
        %v6764 = vsub.s32 %v6761, %v6763
        %v6765 = vrot.slane %v6756, %v6764
        %v6767 = vunpack.c.l.s4 1966171168
        %v6768 = vunpack.c.0.s8 %v6767
        %v6769 = vlaneseq
        %v6770 = vshrl.u32 %v6769, 7
        %v6771 = vsub.s32 %v6768, %v6770
        %v6772 = vrot.slane %v6757, %v6771
        %v6774 = vunpack.c.l.s4 1966171168
        %v6775 = vunpack.c.0.s8 %v6774
        %v6776 = vlaneseq
        %v6777 = vshrl.u32 %v6776, 7
        %v6778 = vsub.s32 %v6775, %v6777
        %v6779 = vrot.slane %v6758, %v6778
        %v6780 = vcombine.high %v6765, %v6765
        %v6781 = vcombine.high %v6772, %v6772
        %v6782 = vcombine.high %v6779, %v6779
        %v6783 = vlaneseq
        %v6784 = vshrl.u32 %v6783, 7
        %v6785 = vsub.s32 0, %v6784
        %v6786 = vrot.slane %v6781, %v6785
        %v6787 = vlaneseq
        %v6788 = vshrl.u32 %v6787, 7
        %v6789 = vsub.s32 0, %v6788
        %v6790 = vrot.slane %v6765, %v6789
        %v6791 = vlaneseq
        %v6792 = vshrl.u32 %v6791, 7
        %v6793 = vsub.s32 0, %v6792
        %v6794 = vrot.slane %v6779, %v6793
        %v6795 = vlaneseq
        %v6796 = vshrl.u32 %v6795, 7
        %v6797 = vsub.s32 0, %v6796
        %v6798 = vrot.slane %v6780, %v6797
        %v6799 = vlaneseq
        %v6800 = vshrl.u32 %v6799, 7
        %v6801 = vsub.s32 0, %v6800
        %v6802 = vrot.slane %v6782, %v6801
        %v6808 = vsub.f32 %v6291, %v6786
        %v6809 = vsub.f32 %v6292, %v6786
        %v6810 = vsub.f32 %v6291, %v6790
        %v6811 = vsub.f32 %v6292, %v6790
        %v6812 = vsub.f32 %v6291, %v6794
        %v6813 = vsub.f32 %v6292, %v6794
        %v6814 = vsub.f32 %v6291, %v6798
        %v6815 = vsub.f32 %v6292, %v6798
        %v6816 = vsub.f32 %v6291, %v6802
        %v6817 = vsub.f32 %v6292, %v6802
        %v6818 = vld [vmem:[#allocation2 + $0xc] sm:$0xff]
        %v6819 = vld [vmem:[#allocation2 + $0x14] sm:$0xf]
        %v6820 = vmul.f32 %v731, %v6735
        %v6821 = vmul.f32 %v732, %v6736
        %v6822 = vadd.f32 %v6818, %v6820
        %v6823 = vadd.f32 %v6819, %v6821
        %6825 = vset.pattern.permute.xlu0 2
        %6826 = vperm.xlu0 %6825, %v6739
        %v6827 = vpop.permute.xlu0 %6826
        %6830 = vset.pattern.permute.xlu0 2
        %6831 = vperm.xlu0 %6830, %v6740
        %v6832 = vpop.permute.xlu0 %6831
        %v6834 = vmul.f32 %v6822, %v6827
        %v6835 = vmul.f32 %v6823, %v6832
        %6837 = vset.pattern.permute.xlu0 0
        %6838 = vperm.xlu0 %6837, %v6808
        %v6839 = vpop.permute.xlu0 %6838
        %6842 = vset.pattern.permute.xlu0 0
        %6843 = vperm.xlu0 %6842, %v6809
        %v6844 = vpop.permute.xlu0 %6843
        %6847 = vset.pattern.permute.xlu0 0
        %6848 = vperm.xlu0 %6847, %v6810
        %v6849 = vpop.permute.xlu0 %6848
        %6852 = vset.pattern.permute.xlu0 0
        %6853 = vperm.xlu0 %6852, %v6811
        %v6854 = vpop.permute.xlu0 %6853
        %6857 = vset.pattern.permute.xlu0 0
        %6858 = vperm.xlu0 %6857, %v6812
        %v6859 = vpop.permute.xlu0 %6858
        %6862 = vset.pattern.permute.xlu0 0
        %6863 = vperm.xlu0 %6862, %v6813
        %v6864 = vpop.permute.xlu0 %6863
        %6867 = vset.pattern.permute.xlu0 0
        %6868 = vperm.xlu0 %6867, %v6814
        %v6869 = vpop.permute.xlu0 %6868
        %6872 = vset.pattern.permute.xlu0 0
        %6873 = vperm.xlu0 %6872, %v6815
        %v6874 = vpop.permute.xlu0 %6873
        %6877 = vset.pattern.permute.xlu0 0
        %6878 = vperm.xlu0 %6877, %v6816
        %v6879 = vpop.permute.xlu0 %6878
        %6882 = vset.pattern.permute.xlu0 0
        %6883 = vperm.xlu0 %6882, %v6817
        %v6884 = vpop.permute.xlu0 %6883
        %v6886 = vmul.f32 %v6839, %v6123
        %v6887 = vmul.f32 %v6844, %v6123
        %v6888 = vmul.f32 %v6849, %v6123
        %v6889 = vmul.f32 %v6854, %v6123
        %v6890 = vmul.f32 %v6859, %v6123
        %v6891 = vmul.f32 %v6864, %v6123
        %v6892 = vmul.f32 %v6869, %v6123
        %v6893 = vmul.f32 %v6874, %v6123
        %v6894 = vmul.f32 %v6879, %v6123
        %v6895 = vmul.f32 %v6884, %v6123
        %6896 = vset.pattern.permute.xlu0 1
        %6897 = vperm.xlu0 %6896, %v6808
        %v6898 = vpop.permute.xlu0 %6897
        %6900 = vset.pattern.permute.xlu0 1
        %6901 = vperm.xlu0 %6900, %v6809
        %v6902 = vpop.permute.xlu0 %6901
        %6904 = vset.pattern.permute.xlu0 1
        %6905 = vperm.xlu0 %6904, %v6810
        %v6906 = vpop.permute.xlu0 %6905
        %6908 = vset.pattern.permute.xlu0 1
        %6909 = vperm.xlu0 %6908, %v6811
        %v6910 = vpop.permute.xlu0 %6909
        %6912 = vset.pattern.permute.xlu0 1
        %6913 = vperm.xlu0 %6912, %v6812
        %v6914 = vpop.permute.xlu0 %6913
        %6916 = vset.pattern.permute.xlu0 1
        %6917 = vperm.xlu0 %6916, %v6813
        %v6918 = vpop.permute.xlu0 %6917
        %6920 = vset.pattern.permute.xlu0 1
        %6921 = vperm.xlu0 %6920, %v6814
        %v6922 = vpop.permute.xlu0 %6921
        %6924 = vset.pattern.permute.xlu0 1
        %6925 = vperm.xlu0 %6924, %v6815
        %v6926 = vpop.permute.xlu0 %6925
        %6928 = vset.pattern.permute.xlu0 1
        %6929 = vperm.xlu0 %6928, %v6816
        %v6930 = vpop.permute.xlu0 %6929
        %6932 = vset.pattern.permute.xlu0 1
        %6933 = vperm.xlu0 %6932, %v6817
        %v6934 = vpop.permute.xlu0 %6933
        %v6936 = vmul.f32 %v6898, %v6177
        %v6937 = vmul.f32 %v6902, %v6177
        %v6938 = vmul.f32 %v6906, %v6177
        %v6939 = vmul.f32 %v6910, %v6177
        %v6940 = vmul.f32 %v6914, %v6177
        %v6941 = vmul.f32 %v6918, %v6177
        %v6942 = vmul.f32 %v6922, %v6177
        %v6943 = vmul.f32 %v6926, %v6177
        %v6944 = vmul.f32 %v6930, %v6177
        %v6945 = vmul.f32 %v6934, %v6177
        %v6946 = vadd.f32 %v6886, %v6936
        %v6947 = vadd.f32 %v6887, %v6937
        %v6948 = vadd.f32 %v6888, %v6938
        %v6949 = vadd.f32 %v6889, %v6939
        %v6950 = vadd.f32 %v6890, %v6940
        %v6951 = vadd.f32 %v6891, %v6941
        %v6952 = vadd.f32 %v6892, %v6942
        %v6953 = vadd.f32 %v6893, %v6943
        %v6954 = vadd.f32 %v6894, %v6944
        %v6955 = vadd.f32 %v6895, %v6945
        %v6956 = vadd.f32 %v6946, %v6202
        %v6957 = vadd.f32 %v6947, %v6202
        %v6958 = vadd.f32 %v6948, %v6202
        %v6959 = vadd.f32 %v6949, %v6202
        %v6960 = vadd.f32 %v6950, %v6202
        %v6961 = vadd.f32 %v6951, %v6202
        %v6962 = vadd.f32 %v6952, %v6202
        %v6963 = vadd.f32 %v6953, %v6202
        %v6964 = vadd.f32 %v6954, %v6202
        %v6965 = vadd.f32 %v6955, %v6202
        %v6966 = vmax.f32 %v6956, 0.0
        %v6967 = vmax.f32 %v6957, 0.0
        %v6968 = vmax.f32 %v6958, 0.0
        %v6969 = vmax.f32 %v6959, 0.0
        %v6970 = vmax.f32 %v6960, 0.0
        %v6971 = vmax.f32 %v6961, 0.0
        %v6972 = vmax.f32 %v6962, 0.0
        %v6973 = vmax.f32 %v6963, 0.0
        %v6974 = vmax.f32 %v6964, 0.0
        %v6975 = vmax.f32 %v6965, 0.0
        %v6976 = vmul.f32 %v6966, %v6834
        %v6977 = vmul.f32 %v6967, %v6835
        %v6978 = vmul.f32 %v6968, %v6834
        %v6979 = vmul.f32 %v6969, %v6835
        %v6980 = vmul.f32 %v6970, %v6834
        %v6981 = vmul.f32 %v6971, %v6835
        %v6982 = vmul.f32 %v6972, %v6834
        %v6983 = vmul.f32 %v6973, %v6835
        %v6984 = vmul.f32 %v6974, %v6834
        %v6985 = vmul.f32 %v6975, %v6835
        %v6986 = vsel %vm1784, %v6976, 0.0
        %v6987 = vsel %vm1786, %v6977, 0.0
        %v6988 = vadd.f32 %v6986, %v6987
        %v6989 = vrot.slane %v6988, 4
        %v6990 = vadd.f32 %v6988, %v6989
        %v6991 = vrot.slane %v6990, 2
        %v6992 = vadd.f32 %v6990, %v6991
        %v6993 = vrot.slane %v6992, 1
        %v6994 = vadd.f32 %v6992, %v6993
        %v6995 = vsel %vm1784, %v6978, 0.0
        %v6996 = vsel %vm1786, %v6979, 0.0
        %v6997 = vadd.f32 %v6995, %v6996
        %v6998 = vrot.slane %v6997, 4
        %v6999 = vadd.f32 %v6997, %v6998
        %v7000 = vrot.slane %v6999, 2
        %v7001 = vadd.f32 %v6999, %v7000
        %v7002 = vrot.slane %v7001, 1
        %v7003 = vadd.f32 %v7001, %v7002
        %v7004 = vsel %vm1784, %v6980, 0.0
        %v7005 = vsel %vm1786, %v6981, 0.0
        %v7006 = vadd.f32 %v7004, %v7005
        %v7007 = vrot.slane %v7006, 4
        %v7008 = vadd.f32 %v7006, %v7007
        %v7009 = vrot.slane %v7008, 2
        %v7010 = vadd.f32 %v7008, %v7009
        %v7011 = vrot.slane %v7010, 1
        %v7012 = vadd.f32 %v7010, %v7011
        %v7013 = vsel %vm1784, %v6982, 0.0
        %v7014 = vsel %vm1786, %v6983, 0.0
        %v7015 = vadd.f32 %v7013, %v7014
        %v7016 = vrot.slane %v7015, 4
        %v7017 = vadd.f32 %v7015, %v7016
        %v7018 = vrot.slane %v7017, 2
        %v7019 = vadd.f32 %v7017, %v7018
        %v7020 = vrot.slane %v7019, 1
        %v7021 = vadd.f32 %v7019, %v7020
        %v7022 = vsel %vm1784, %v6984, 0.0
        %v7023 = vsel %vm1786, %v6985, 0.0
        %v7024 = vadd.f32 %v7022, %v7023
        %v7025 = vrot.slane %v7024, 4
        %v7026 = vadd.f32 %v7024, %v7025
        %v7027 = vrot.slane %v7026, 2
        %v7028 = vadd.f32 %v7026, %v7027
        %v7029 = vrot.slane %v7028, 1
        %v7030 = vadd.f32 %v7028, %v7029
        %v7036 = vsel %vm1906, %v7003, %v6994
        %v7037 = vsel %vm1908, %v7012, %v7036
        %v7038 = vsel %vm1910, %v7021, %v7037
        %v7039 = vsel %vm1912, %v7030, %v7038
        %7041 = vst.msk [vmem:[#allocation3 + $0x5] sm:$0x1f] %vm6289, %v7039
        %v7042 = vld [vmem:[%s3107] sm:$0xff]
        %v7043 = vld [vmem:[%s3107 + $0x8] sm:$0xf]
        %v7044 = vmul.f32 %v7042, 3.1415927
        %v7045 = vmul.f32 %v7043, 3.1415927
        %v7046 = vand.u32 2147483647, %v7044
        %vm7047 = vcmp.le.f32.partialorder %v7046, 0.7853982
        %vm7048 = vcmp.lt.s32.totalorder %v7044, 0
        %v7049 = vand.u32 %v7044, 2139095040
        %v7050 = vshrl.u32 %v7049, 23
        %v7051 = vsub.s32 %v7050, 127
        %v7052 = vand.u32 2147483647, %v7044
        %v7053 = vand.u32 %v7052, 8388607
        %v7054 = vor.u32 %v7053, 8388608
        %v7055 = vsub.s32 0, %v7054
        %v7056 = vadd.s32 %v7051, 1
        %vm7057 = vcmp.gt.s32.totalorder %v7056, 0
        %v7058 = vsel %vm7057, %v7056, 0
        %v7059 = vshrl.u32 %v7058, 5
        %v7060 = vand.u32 %v7058, 31
        %v7061 = vsub.s32 32, %v7060
        %v7062 = vshrl.u32 683565275, %v7061
        %v7063 = vshll.u32 683565275, %v7060
        %v7064 = vshrl.u32 2475754826, %v7061
        %v7065 = vor.u32 %v7063, %v7064
        %v7066 = vshll.u32 2475754826, %v7060
        %v7067 = vshrl.u32 2131351028, %v7061
        %v7068 = vor.u32 %v7066, %v7067
        %v7069 = vshll.u32 2131351028, %v7060
        %v7070 = vshrl.u32 2102212464, %v7061
        %v7071 = vor.u32 %v7069, %v7070
        %v7072 = vshll.u32 2102212464, %v7060
        %v7073 = vshrl.u32 920167782, %v7061
        %v7074 = vor.u32 %v7072, %v7073
        %v7075 = vshll.u32 920167782, %v7060
        %v7076 = vshrl.u32 1326507024, %v7061
        %v7077 = vor.u32 %v7075, %v7076
        %vm7078 = vcmp.lt.s32.totalorder %v7059, 1
        %vm7079 = vcmp.lt.s32.totalorder %v7059, 2
        %vm7080 = vcmp.lt.s32.totalorder %v7059, 3
        %vm7081 = vcmp.lt.s32.totalorder %v7059, 4
        %v7082 = vsel %vm7078, %v7062, %v7065
        %v7083 = vsel %vm7081, %v7071, 2102212464
        %v7084 = vsel %vm7080, %v7068, %v7083
        %v7085 = vsel %vm7079, %v7082, %v7084
        %v7086 = vsel %vm7078, %v7065, %v7068
        %v7087 = vsel %vm7081, %v7074, 920167782
        %v7088 = vsel %vm7080, %v7071, %v7087
        %v7089 = vsel %vm7079, %v7086, %v7088
        %v7090 = vsel %vm7078, %v7068, %v7071
        %v7091 = vsel %vm7081, %v7077, 1326507024
        %v7092 = vsel %vm7080, %v7074, %v7091
        %v7093 = vsel %vm7079, %v7090, %v7092
        %v7094 = vshll.u32 %v7054, 8
        %v7095 = vmul.u32.u64.compose %v7094, %v7093
        %v7096 = vextract.low.u32 %v7095
        %v7097 = vextract.high.u32 %v7095
        %v7098 = vmul.u32.u64.compose %v7094, %v7089
        %v7099 = vextract.low.u32 %v7098
        %v7100 = vextract.high.u32 %v7098
        %v7101 = vmul.u32 %v7094, %v7085
        %v7102 = vadd.s32 %v7097, %v7099
        %vm7103 = vc.u32 %v7097, %v7099
        %v7104 = vadd.s32 %v7100, 1
        %v7105 = vsel %vm7103, %v7104, %v7100
        %v7106 = vadd.s32 %v7101, %v7105
        %v7107 = vadd.s32 %v7106, 536870912
        %v7108 = vshrl.u32 %v7107, 30
        %v7109 = vshll.u32 %v7108, 30
        %v7110 = vsub.s32 %v7106, %v7109
        %vm7111 = vcmp.lt.s32.totalorder %v7110, 0
        %v7112 = vsub.s32 0, %v7110
        %v7113 = vsel %vm7111, %v7112, %v7110
        %v7114 = vclz %v7113
        %v7115 = vsub.s32 %v7114, 2
        %vm7116 = vcmp.gt.s32.totalorder 0, %v7115
        %v7117 = vsel %vm7116, 0, %v7115
        %v7118 = vsub.s32 32, %v7117
        %v7119 = vshll.u32 %v7110, %v7117
        %v7120 = vshrl.u32 %v7102, %v7118
        %v7121 = vor.u32 %v7119, %v7120
        %v7122 = vsub.s32 4294967266, %v7117
        %v7123 = vadd.s32 %v7122, 127
        %v7124 = vshll.u32 %v7123, 23
        %v7125 = vor.u32 4788187, %v7124
        %v7126 = vand.u32 2147483647, %v7125
        %v7128 = vcvt.s32.f32 %v7121
        %v7129 = vmul.f32 %v7128, %v7126
        %v7130 = vxor.u32 %v7129, 2147483648
        %v7131 = vsel %vm7048, %v7130, %v7129
        %v7132 = vsub.s32 4, %v7108
        %v7133 = vsel %vm7048, %v7132, %v7108
        %v7134 = vsel %vm7047, %v7044, %v7131
        %v7135 = vsel %vm7047, 0, %v7133
        %v7136 = vcosq.f32.pop %v7134
        %v7137 = vsinq.f32.pop %v7134
        %vm7138 = vweird.f32 %v7044
        %v7139 = vadd.s32 %v7135, 3
        %v7140 = vand.u32 %v7139, 3
        %vm7141 = vcmp.lt.s32.totalorder %v7140, 2
        %vm7142 = vcmp.eq.s32.totalorder %v7140, 0
        %v7143 = vxor.u32 %v7137, 2147483648
        %v7144 = vsel %vm7142, %v7136, %v7143
        %vm7145 = vcmp.eq.s32.totalorder %v7140, 2
        %v7146 = vxor.u32 %v7136, 2147483648
        %v7147 = vsel %vm7145, %v7146, %v7137
        %v7148 = vsel %vm7141, %v7144, %v7147
        %v7149 = vsel %vm7138, nan, %v7148
        %v7150 = vand.u32 2147483647, %v7045
        %vm7151 = vcmp.le.f32.partialorder %v7150, 0.7853982
        %vm7152 = vcmp.lt.s32.totalorder %v7045, 0
        %v7153 = vand.u32 %v7045, 2139095040
        %v7154 = vshrl.u32 %v7153, 23
        %v7155 = vsub.s32 %v7154, 127
        %v7156 = vand.u32 2147483647, %v7045
        %v7157 = vand.u32 %v7156, 8388607
        %v7158 = vor.u32 %v7157, 8388608
        %v7159 = vsub.s32 0, %v7158
        %v7160 = vadd.s32 %v7155, 1
        %vm7161 = vcmp.gt.s32.totalorder %v7160, 0
        %v7162 = vsel %vm7161, %v7160, 0
        %v7163 = vshrl.u32 %v7162, 5
        %v7164 = vand.u32 %v7162, 31
        %v7165 = vsub.s32 32, %v7164
        %v7166 = vshrl.u32 683565275, %v7165
        %v7167 = vshll.u32 683565275, %v7164
        %v7168 = vshrl.u32 2475754826, %v7165
        %v7169 = vor.u32 %v7167, %v7168
        %v7170 = vshll.u32 2475754826, %v7164
        %v7171 = vshrl.u32 2131351028, %v7165
        %v7172 = vor.u32 %v7170, %v7171
        %v7173 = vshll.u32 2131351028, %v7164
        %v7174 = vshrl.u32 2102212464, %v7165
        %v7175 = vor.u32 %v7173, %v7174
        %v7176 = vshll.u32 2102212464, %v7164
        %v7177 = vshrl.u32 920167782, %v7165
        %v7178 = vor.u32 %v7176, %v7177
        %v7179 = vshll.u32 920167782, %v7164
        %v7180 = vshrl.u32 1326507024, %v7165
        %v7181 = vor.u32 %v7179, %v7180
        %vm7182 = vcmp.lt.s32.totalorder %v7163, 1
        %vm7183 = vcmp.lt.s32.totalorder %v7163, 2
        %vm7184 = vcmp.lt.s32.totalorder %v7163, 3
        %vm7185 = vcmp.lt.s32.totalorder %v7163, 4
        %v7186 = vsel %vm7182, %v7166, %v7169
        %v7187 = vsel %vm7185, %v7175, 2102212464
        %v7188 = vsel %vm7184, %v7172, %v7187
        %v7189 = vsel %vm7183, %v7186, %v7188
        %v7190 = vsel %vm7182, %v7169, %v7172
        %v7191 = vsel %vm7185, %v7178, 920167782
        %v7192 = vsel %vm7184, %v7175, %v7191
        %v7193 = vsel %vm7183, %v7190, %v7192
        %v7194 = vsel %vm7182, %v7172, %v7175
        %v7195 = vsel %vm7185, %v7181, 1326507024
        %v7196 = vsel %vm7184, %v7178, %v7195
        %v7197 = vsel %vm7183, %v7194, %v7196
        %v7198 = vshll.u32 %v7158, 8
        %v7199 = vmul.u32.u64.compose %v7198, %v7197
        %v7200 = vextract.low.u32 %v7199
        %v7201 = vextract.high.u32 %v7199
        %v7202 = vmul.u32.u64.compose %v7198, %v7193
        %v7203 = vextract.low.u32 %v7202
        %v7204 = vextract.high.u32 %v7202
        %v7205 = vmul.u32 %v7198, %v7189
        %v7206 = vadd.s32 %v7201, %v7203
        %vm7207 = vc.u32 %v7201, %v7203
        %v7208 = vadd.s32 %v7204, 1
        %v7209 = vsel %vm7207, %v7208, %v7204
        %v7210 = vadd.s32 %v7205, %v7209
        %v7211 = vadd.s32 %v7210, 536870912
        %v7212 = vshrl.u32 %v7211, 30
        %v7213 = vshll.u32 %v7212, 30
        %v7214 = vsub.s32 %v7210, %v7213
        %vm7215 = vcmp.lt.s32.totalorder %v7214, 0
        %v7216 = vsub.s32 0, %v7214
        %v7217 = vsel %vm7215, %v7216, %v7214
        %v7218 = vclz %v7217
        %v7219 = vsub.s32 %v7218, 2
        %vm7220 = vcmp.gt.s32.totalorder 0, %v7219
        %v7221 = vsel %vm7220, 0, %v7219
        %v7222 = vsub.s32 32, %v7221
        %v7223 = vshll.u32 %v7214, %v7221
        %v7224 = vshrl.u32 %v7206, %v7222
        %v7225 = vor.u32 %v7223, %v7224
        %v7226 = vsub.s32 4294967266, %v7221
        %v7227 = vadd.s32 %v7226, 127
        %v7228 = vshll.u32 %v7227, 23
        %v7229 = vor.u32 4788187, %v7228
        %v7230 = vand.u32 2147483647, %v7229
        %v7232 = vcvt.s32.f32 %v7225
        %v7233 = vmul.f32 %v7232, %v7230
        %v7234 = vxor.u32 %v7233, 2147483648
        %v7235 = vsel %vm7152, %v7234, %v7233
        %v7236 = vsub.s32 4, %v7212
        %v7237 = vsel %vm7152, %v7236, %v7212
        %v7238 = vsel %vm7151, %v7045, %v7235
        %v7239 = vsel %vm7151, 0, %v7237
        %v7240 = vcosq.f32.pop %v7238
        %v7241 = vsinq.f32.pop %v7238
        %vm7242 = vweird.f32 %v7045
        %v7243 = vadd.s32 %v7239, 3
        %v7244 = vand.u32 %v7243, 3
        %vm7245 = vcmp.lt.s32.totalorder %v7244, 2
        %vm7246 = vcmp.eq.s32.totalorder %v7244, 0
        %v7247 = vxor.u32 %v7241, 2147483648
        %v7248 = vsel %vm7246, %v7240, %v7247
        %vm7249 = vcmp.eq.s32.totalorder %v7244, 2
        %v7250 = vxor.u32 %v7240, 2147483648
        %v7251 = vsel %vm7249, %v7250, %v7241
        %v7252 = vsel %vm7245, %v7248, %v7251
        %v7253 = vsel %vm7242, nan, %v7252
        %7255 = vset.pattern.permute.xlu0 3
        %7256 = vperm.xlu0 %7255, %v7149
        %v7257 = vpop.permute.xlu0 %7256
        %7260 = vset.pattern.permute.xlu0 3
        %7261 = vperm.xlu0 %7260, %v7253
        %v7262 = vpop.permute.xlu0 %7261
        %v7264 = vmul.f32 %v7257, %v964
        %v7265 = vmul.f32 %v7262, %v964
        %v7266 = vand.u32 2147483647, %v7044
        %vm7267 = vcmp.le.f32.partialorder %v7266, 0.7853982
        %vm7268 = vcmp.lt.s32.totalorder %v7044, 0
        %v7269 = vand.u32 %v7044, 2139095040
        %v7270 = vshrl.u32 %v7269, 23
        %v7271 = vsub.s32 %v7270, 127
        %v7272 = vand.u32 2147483647, %v7044
        %v7273 = vand.u32 %v7272, 8388607
        %v7274 = vor.u32 %v7273, 8388608
        %v7275 = vsub.s32 0, %v7274
        %v7276 = vadd.s32 %v7271, 1
        %vm7277 = vcmp.gt.s32.totalorder %v7276, 0
        %v7278 = vsel %vm7277, %v7276, 0
        %v7279 = vshrl.u32 %v7278, 5
        %v7280 = vand.u32 %v7278, 31
        %v7281 = vsub.s32 32, %v7280
        %v7282 = vshrl.u32 683565275, %v7281
        %v7283 = vshll.u32 683565275, %v7280
        %v7284 = vshrl.u32 2475754826, %v7281
        %v7285 = vor.u32 %v7283, %v7284
        %v7286 = vshll.u32 2475754826, %v7280
        %v7287 = vshrl.u32 2131351028, %v7281
        %v7288 = vor.u32 %v7286, %v7287
        %v7289 = vshll.u32 2131351028, %v7280
        %v7290 = vshrl.u32 2102212464, %v7281
        %v7291 = vor.u32 %v7289, %v7290
        %v7292 = vshll.u32 2102212464, %v7280
        %v7293 = vshrl.u32 920167782, %v7281
        %v7294 = vor.u32 %v7292, %v7293
        %v7295 = vshll.u32 920167782, %v7280
        %v7296 = vshrl.u32 1326507024, %v7281
        %v7297 = vor.u32 %v7295, %v7296
        %vm7298 = vcmp.lt.s32.totalorder %v7279, 1
        %vm7299 = vcmp.lt.s32.totalorder %v7279, 2
        %vm7300 = vcmp.lt.s32.totalorder %v7279, 3
        %vm7301 = vcmp.lt.s32.totalorder %v7279, 4
        %v7302 = vsel %vm7298, %v7282, %v7285
        %v7303 = vsel %vm7301, %v7291, 2102212464
        %v7304 = vsel %vm7300, %v7288, %v7303
        %v7305 = vsel %vm7299, %v7302, %v7304
        %v7306 = vsel %vm7298, %v7285, %v7288
        %v7307 = vsel %vm7301, %v7294, 920167782
        %v7308 = vsel %vm7300, %v7291, %v7307
        %v7309 = vsel %vm7299, %v7306, %v7308
        %v7310 = vsel %vm7298, %v7288, %v7291
        %v7311 = vsel %vm7301, %v7297, 1326507024
        %v7312 = vsel %vm7300, %v7294, %v7311
        %v7313 = vsel %vm7299, %v7310, %v7312
        %v7314 = vshll.u32 %v7274, 8
        %v7315 = vmul.u32.u64.compose %v7314, %v7313
        %v7316 = vextract.low.u32 %v7315
        %v7317 = vextract.high.u32 %v7315
        %v7318 = vmul.u32.u64.compose %v7314, %v7309
        %v7319 = vextract.low.u32 %v7318
        %v7320 = vextract.high.u32 %v7318
        %v7321 = vmul.u32 %v7314, %v7305
        %v7322 = vadd.s32 %v7317, %v7319
        %vm7323 = vc.u32 %v7317, %v7319
        %v7324 = vadd.s32 %v7320, 1
        %v7325 = vsel %vm7323, %v7324, %v7320
        %v7326 = vadd.s32 %v7321, %v7325
        %v7327 = vadd.s32 %v7326, 536870912
        %v7328 = vshrl.u32 %v7327, 30
        %v7329 = vshll.u32 %v7328, 30
        %v7330 = vsub.s32 %v7326, %v7329
        %vm7331 = vcmp.lt.s32.totalorder %v7330, 0
        %v7332 = vsub.s32 0, %v7330
        %v7333 = vsel %vm7331, %v7332, %v7330
        %v7334 = vclz %v7333
        %v7335 = vsub.s32 %v7334, 2
        %vm7336 = vcmp.gt.s32.totalorder 0, %v7335
        %v7337 = vsel %vm7336, 0, %v7335
        %v7338 = vsub.s32 32, %v7337
        %v7339 = vshll.u32 %v7330, %v7337
        %v7340 = vshrl.u32 %v7322, %v7338
        %v7341 = vor.u32 %v7339, %v7340
        %v7342 = vsub.s32 4294967266, %v7337
        %v7343 = vadd.s32 %v7342, 127
        %v7344 = vshll.u32 %v7343, 23
        %v7345 = vor.u32 4788187, %v7344
        %v7346 = vand.u32 2147483647, %v7345
        %v7348 = vcvt.s32.f32 %v7341
        %v7349 = vmul.f32 %v7348, %v7346
        %v7350 = vxor.u32 %v7349, 2147483648
        %v7351 = vsel %vm7268, %v7350, %v7349
        %v7352 = vsub.s32 4, %v7328
        %v7353 = vsel %vm7268, %v7352, %v7328
        %v7354 = vsel %vm7267, %v7044, %v7351
        %v7355 = vsel %vm7267, 0, %v7353
        %v7356 = vcosq.f32.pop %v7354
        %v7357 = vsinq.f32.pop %v7354
        %vm7358 = vweird.f32 %v7044
        %v7359 = vand.u32 %v7355, 3
        %vm7360 = vcmp.lt.s32.totalorder %v7359, 2
        %vm7361 = vcmp.eq.s32.totalorder %v7359, 0
        %v7362 = vxor.u32 %v7357, 2147483648
        %v7363 = vsel %vm7361, %v7356, %v7362
        %vm7364 = vcmp.eq.s32.totalorder %v7359, 2
        %v7365 = vxor.u32 %v7356, 2147483648
        %v7366 = vsel %vm7364, %v7365, %v7357
        %v7367 = vsel %vm7360, %v7363, %v7366
        %v7368 = vsel %vm7358, nan, %v7367
        %v7369 = vand.u32 2147483647, %v7045
        %vm7370 = vcmp.le.f32.partialorder %v7369, 0.7853982
        %vm7371 = vcmp.lt.s32.totalorder %v7045, 0
        %v7372 = vand.u32 %v7045, 2139095040
        %v7373 = vshrl.u32 %v7372, 23
        %v7374 = vsub.s32 %v7373, 127
        %v7375 = vand.u32 2147483647, %v7045
        %v7376 = vand.u32 %v7375, 8388607
        %v7377 = vor.u32 %v7376, 8388608
        %v7378 = vsub.s32 0, %v7377
        %v7379 = vadd.s32 %v7374, 1
        %vm7380 = vcmp.gt.s32.totalorder %v7379, 0
        %v7381 = vsel %vm7380, %v7379, 0
        %v7382 = vshrl.u32 %v7381, 5
        %v7383 = vand.u32 %v7381, 31
        %v7384 = vsub.s32 32, %v7383
        %v7385 = vshrl.u32 683565275, %v7384
        %v7386 = vshll.u32 683565275, %v7383
        %v7387 = vshrl.u32 2475754826, %v7384
        %v7388 = vor.u32 %v7386, %v7387
        %v7389 = vshll.u32 2475754826, %v7383
        %v7390 = vshrl.u32 2131351028, %v7384
        %v7391 = vor.u32 %v7389, %v7390
        %v7392 = vshll.u32 2131351028, %v7383
        %v7393 = vshrl.u32 2102212464, %v7384
        %v7394 = vor.u32 %v7392, %v7393
        %v7395 = vshll.u32 2102212464, %v7383
        %v7396 = vshrl.u32 920167782, %v7384
        %v7397 = vor.u32 %v7395, %v7396
        %v7398 = vshll.u32 920167782, %v7383
        %v7399 = vshrl.u32 1326507024, %v7384
        %v7400 = vor.u32 %v7398, %v7399
        %vm7401 = vcmp.lt.s32.totalorder %v7382, 1
        %vm7402 = vcmp.lt.s32.totalorder %v7382, 2
        %vm7403 = vcmp.lt.s32.totalorder %v7382, 3
        %vm7404 = vcmp.lt.s32.totalorder %v7382, 4
        %v7405 = vsel %vm7401, %v7385, %v7388
        %v7406 = vsel %vm7404, %v7394, 2102212464
        %v7407 = vsel %vm7403, %v7391, %v7406
        %v7408 = vsel %vm7402, %v7405, %v7407
        %v7409 = vsel %vm7401, %v7388, %v7391
        %v7410 = vsel %vm7404, %v7397, 920167782
        %v7411 = vsel %vm7403, %v7394, %v7410
        %v7412 = vsel %vm7402, %v7409, %v7411
        %v7413 = vsel %vm7401, %v7391, %v7394
        %v7414 = vsel %vm7404, %v7400, 1326507024
        %v7415 = vsel %vm7403, %v7397, %v7414
        %v7416 = vsel %vm7402, %v7413, %v7415
        %v7417 = vshll.u32 %v7377, 8
        %v7418 = vmul.u32.u64.compose %v7417, %v7416
        %v7419 = vextract.low.u32 %v7418
        %v7420 = vextract.high.u32 %v7418
        %v7421 = vmul.u32.u64.compose %v7417, %v7412
        %v7422 = vextract.low.u32 %v7421
        %v7423 = vextract.high.u32 %v7421
        %v7424 = vmul.u32 %v7417, %v7408
        %v7425 = vadd.s32 %v7420, %v7422
        %vm7426 = vc.u32 %v7420, %v7422
        %v7427 = vadd.s32 %v7423, 1
        %v7428 = vsel %vm7426, %v7427, %v7423
        %v7429 = vadd.s32 %v7424, %v7428
        %v7430 = vadd.s32 %v7429, 536870912
        %v7431 = vshrl.u32 %v7430, 30
        %v7432 = vshll.u32 %v7431, 30
        %v7433 = vsub.s32 %v7429, %v7432
        %vm7434 = vcmp.lt.s32.totalorder %v7433, 0
        %v7435 = vsub.s32 0, %v7433
        %v7436 = vsel %vm7434, %v7435, %v7433
        %v7437 = vclz %v7436
        %v7438 = vsub.s32 %v7437, 2
        %vm7439 = vcmp.gt.s32.totalorder 0, %v7438
        %v7440 = vsel %vm7439, 0, %v7438
        %v7441 = vsub.s32 32, %v7440
        %v7442 = vshll.u32 %v7433, %v7440
        %v7443 = vshrl.u32 %v7425, %v7441
        %v7444 = vor.u32 %v7442, %v7443
        %v7445 = vsub.s32 4294967266, %v7440
        %v7446 = vadd.s32 %v7445, 127
        %v7447 = vshll.u32 %v7446, 23
        %v7448 = vor.u32 4788187, %v7447
        %v7449 = vand.u32 2147483647, %v7448
        %v7451 = vcvt.s32.f32 %v7444
        %v7452 = vmul.f32 %v7451, %v7449
        %v7453 = vxor.u32 %v7452, 2147483648
        %v7454 = vsel %vm7371, %v7453, %v7452
        %v7455 = vsub.s32 4, %v7431
        %v7456 = vsel %vm7371, %v7455, %v7431
        %v7457 = vsel %vm7370, %v7045, %v7454
        %v7458 = vsel %vm7370, 0, %v7456
        %v7459 = vcosq.f32.pop %v7457
        %v7460 = vsinq.f32.pop %v7457
        %vm7461 = vweird.f32 %v7045
        %v7462 = vand.u32 %v7458, 3
        %vm7463 = vcmp.lt.s32.totalorder %v7462, 2
        %vm7464 = vcmp.eq.s32.totalorder %v7462, 0
        %v7465 = vxor.u32 %v7460, 2147483648
        %v7466 = vsel %vm7464, %v7459, %v7465
        %vm7467 = vcmp.eq.s32.totalorder %v7462, 2
        %v7468 = vxor.u32 %v7459, 2147483648
        %v7469 = vsel %vm7467, %v7468, %v7460
        %v7470 = vsel %vm7463, %v7466, %v7469
        %v7471 = vsel %vm7461, nan, %v7470
        %7473 = vset.pattern.permute.xlu0 3
        %7474 = vperm.xlu0 %7473, %v7368
        %v7475 = vpop.permute.xlu0 %7474
        %7478 = vset.pattern.permute.xlu0 3
        %7479 = vperm.xlu0 %7478, %v7471
        %v7480 = vpop.permute.xlu0 %7479
        %v7482 = vmul.f32 %v7475, %v1186
        %v7483 = vmul.f32 %v7480, %v1186
        %v7484 = vadd.f32 %v7264, %v7482
        %v7485 = vadd.f32 %v7265, %v7483
        %v7486 = vadd.f32 %v7484, %v1195
        %v7487 = vadd.f32 %v7485, %v1195
        %v7488 = vmul.f32 %v731, %v7042
        %v7489 = vmul.f32 %v732, %v7043
        %v7490 = vadd.f32 %v7488, %v5971
        %v7491 = vadd.f32 %v7489, %v5972
        %v7493 = vcombine.high %v7042, %v7042
        %v7495 = vunpack.c.l.s4 1966171168
        %v7496 = vunpack.c.0.s8 %v7495
        %v7497 = vlaneseq
        %v7498 = vshrl.u32 %v7497, 7
        %v7499 = vsub.s32 %v7496, %v7498
        %v7500 = vrot.slane %v7042, %v7499
        %v7502 = vunpack.c.l.s4 1966171168
        %v7503 = vunpack.c.0.s8 %v7502
        %v7504 = vlaneseq
        %v7505 = vshrl.u32 %v7504, 7
        %v7506 = vsub.s32 %v7503, %v7505
        %v7507 = vrot.slane %v7493, %v7506
        %v7508 = vcombine.high %v7500, %v7500
        %v7509 = vcombine.high %v7507, %v7507
        %v7511 = vunpack.c.l.s4 1966171168
        %v7512 = vunpack.c.0.s8 %v7511
        %v7513 = vlaneseq
        %v7514 = vshrl.u32 %v7513, 7
        %v7515 = vsub.s32 %v7512, %v7514
        %v7516 = vrot.slane %v7507, %v7515
        %v7518 = vunpack.c.l.s4 1966171168
        %v7519 = vunpack.c.0.s8 %v7518
        %v7520 = vlaneseq
        %v7521 = vshrl.u32 %v7520, 7
        %v7522 = vsub.s32 %v7519, %v7521
        %v7523 = vrot.slane %v7508, %v7522
        %v7525 = vunpack.c.l.s4 1966171168
        %v7526 = vunpack.c.0.s8 %v7525
        %v7527 = vlaneseq
        %v7528 = vshrl.u32 %v7527, 7
        %v7529 = vsub.s32 %v7526, %v7528
        %v7530 = vrot.slane %v7509, %v7529
        %v7531 = vcombine.high %v7516, %v7516
        %v7532 = vcombine.high %v7523, %v7523
        %v7533 = vcombine.high %v7530, %v7530
        %v7534 = vlaneseq
        %v7535 = vshrl.u32 %v7534, 7
        %v7536 = vsub.s32 0, %v7535
        %v7537 = vrot.slane %v7532, %v7536
        %v7538 = vlaneseq
        %v7539 = vshrl.u32 %v7538, 7
        %v7540 = vsub.s32 0, %v7539
        %v7541 = vrot.slane %v7516, %v7540
        %v7542 = vlaneseq
        %v7543 = vshrl.u32 %v7542, 7
        %v7544 = vsub.s32 0, %v7543
        %v7545 = vrot.slane %v7530, %v7544
        %v7546 = vlaneseq
        %v7547 = vshrl.u32 %v7546, 7
        %v7548 = vsub.s32 0, %v7547
        %v7549 = vrot.slane %v7531, %v7548
        %v7550 = vlaneseq
        %v7551 = vshrl.u32 %v7550, 7
        %v7552 = vsub.s32 0, %v7551
        %v7553 = vrot.slane %v7533, %v7552
        %v7559 = vsub.f32 %v7042, %v7537
        %v7560 = vsub.f32 %v7043, %v7537
        %v7561 = vsub.f32 %v7042, %v7541
        %v7562 = vsub.f32 %v7043, %v7541
        %v7563 = vsub.f32 %v7042, %v7545
        %v7564 = vsub.f32 %v7043, %v7545
        %v7565 = vsub.f32 %v7042, %v7549
        %v7566 = vsub.f32 %v7043, %v7549
        %v7567 = vsub.f32 %v7042, %v7553
        %v7568 = vsub.f32 %v7043, %v7553
        %v7569 = vld [vmem:[#allocation2 + $0x18] sm:$0xff]
        %v7570 = vld [vmem:[#allocation2 + $0x20] sm:$0xf]
        %v7571 = vmul.f32 %v731, %v7486
        %v7572 = vmul.f32 %v732, %v7487
        %v7573 = vadd.f32 %v7569, %v7571
        %v7574 = vadd.f32 %v7570, %v7572
        %7576 = vset.pattern.permute.xlu0 2
        %7577 = vperm.xlu0 %7576, %v7490
        %v7578 = vpop.permute.xlu0 %7577
        %7581 = vset.pattern.permute.xlu0 2
        %7582 = vperm.xlu0 %7581, %v7491
        %v7583 = vpop.permute.xlu0 %7582
        %v7585 = vmul.f32 %v7573, %v7578
        %v7586 = vmul.f32 %v7574, %v7583
        %7588 = vset.pattern.permute.xlu0 0
        %7589 = vperm.xlu0 %7588, %v7559
        %v7590 = vpop.permute.xlu0 %7589
        %7593 = vset.pattern.permute.xlu0 0
        %7594 = vperm.xlu0 %7593, %v7560
        %v7595 = vpop.permute.xlu0 %7594
        %7598 = vset.pattern.permute.xlu0 0
        %7599 = vperm.xlu0 %7598, %v7561
        %v7600 = vpop.permute.xlu0 %7599
        %7603 = vset.pattern.permute.xlu0 0
        %7604 = vperm.xlu0 %7603, %v7562
        %v7605 = vpop.permute.xlu0 %7604
        %7608 = vset.pattern.permute.xlu0 0
        %7609 = vperm.xlu0 %7608, %v7563
        %v7610 = vpop.permute.xlu0 %7609
        %7613 = vset.pattern.permute.xlu0 0
        %7614 = vperm.xlu0 %7613, %v7564
        %v7615 = vpop.permute.xlu0 %7614
        %7618 = vset.pattern.permute.xlu0 0
        %7619 = vperm.xlu0 %7618, %v7565
        %v7620 = vpop.permute.xlu0 %7619
        %7623 = vset.pattern.permute.xlu0 0
        %7624 = vperm.xlu0 %7623, %v7566
        %v7625 = vpop.permute.xlu0 %7624
        %7628 = vset.pattern.permute.xlu0 0
        %7629 = vperm.xlu0 %7628, %v7567
        %v7630 = vpop.permute.xlu0 %7629
        %7633 = vset.pattern.permute.xlu0 0
        %7634 = vperm.xlu0 %7633, %v7568
        %v7635 = vpop.permute.xlu0 %7634
        %v7637 = vmul.f32 %v7590, %v6123
        %v7638 = vmul.f32 %v7595, %v6123
        %v7639 = vmul.f32 %v7600, %v6123
        %v7640 = vmul.f32 %v7605, %v6123
        %v7641 = vmul.f32 %v7610, %v6123
        %v7642 = vmul.f32 %v7615, %v6123
        %v7643 = vmul.f32 %v7620, %v6123
        %v7644 = vmul.f32 %v7625, %v6123
        %v7645 = vmul.f32 %v7630, %v6123
        %v7646 = vmul.f32 %v7635, %v6123
        %7647 = vset.pattern.permute.xlu0 1
        %7648 = vperm.xlu0 %7647, %v7559
        %v7649 = vpop.permute.xlu0 %7648
        %7651 = vset.pattern.permute.xlu0 1
        %7652 = vperm.xlu0 %7651, %v7560
        %v7653 = vpop.permute.xlu0 %7652
        %7655 = vset.pattern.permute.xlu0 1
        %7656 = vperm.xlu0 %7655, %v7561
        %v7657 = vpop.permute.xlu0 %7656
        %7659 = vset.pattern.permute.xlu0 1
        %7660 = vperm.xlu0 %7659, %v7562
        %v7661 = vpop.permute.xlu0 %7660
        %7663 = vset.pattern.permute.xlu0 1
        %7664 = vperm.xlu0 %7663, %v7563
        %v7665 = vpop.permute.xlu0 %7664
        %7667 = vset.pattern.permute.xlu0 1
        %7668 = vperm.xlu0 %7667, %v7564
        %v7669 = vpop.permute.xlu0 %7668
        %7671 = vset.pattern.permute.xlu0 1
        %7672 = vperm.xlu0 %7671, %v7565
        %v7673 = vpop.permute.xlu0 %7672
        %7675 = vset.pattern.permute.xlu0 1
        %7676 = vperm.xlu0 %7675, %v7566
        %v7677 = vpop.permute.xlu0 %7676
        %7679 = vset.pattern.permute.xlu0 1
        %7680 = vperm.xlu0 %7679, %v7567
        %v7681 = vpop.permute.xlu0 %7680
        %7683 = vset.pattern.permute.xlu0 1
        %7684 = vperm.xlu0 %7683, %v7568
        %v7685 = vpop.permute.xlu0 %7684
        %v7687 = vmul.f32 %v7649, %v6177
        %v7688 = vmul.f32 %v7653, %v6177
        %v7689 = vmul.f32 %v7657, %v6177
        %v7690 = vmul.f32 %v7661, %v6177
        %v7691 = vmul.f32 %v7665, %v6177
        %v7692 = vmul.f32 %v7669, %v6177
        %v7693 = vmul.f32 %v7673, %v6177
        %v7694 = vmul.f32 %v7677, %v6177
        %v7695 = vmul.f32 %v7681, %v6177
        %v7696 = vmul.f32 %v7685, %v6177
        %v7697 = vadd.f32 %v7637, %v7687
        %v7698 = vadd.f32 %v7638, %v7688
        %v7699 = vadd.f32 %v7639, %v7689
        %v7700 = vadd.f32 %v7640, %v7690
        %v7701 = vadd.f32 %v7641, %v7691
        %v7702 = vadd.f32 %v7642, %v7692
        %v7703 = vadd.f32 %v7643, %v7693
        %v7704 = vadd.f32 %v7644, %v7694
        %v7705 = vadd.f32 %v7645, %v7695
        %v7706 = vadd.f32 %v7646, %v7696
        %v7707 = vadd.f32 %v7697, %v6202
        %v7708 = vadd.f32 %v7698, %v6202
        %v7709 = vadd.f32 %v7699, %v6202
        %v7710 = vadd.f32 %v7700, %v6202
        %v7711 = vadd.f32 %v7701, %v6202
        %v7712 = vadd.f32 %v7702, %v6202
        %v7713 = vadd.f32 %v7703, %v6202
        %v7714 = vadd.f32 %v7704, %v6202
        %v7715 = vadd.f32 %v7705, %v6202
        %v7716 = vadd.f32 %v7706, %v6202
        %v7717 = vmax.f32 %v7707, 0.0
        %v7718 = vmax.f32 %v7708, 0.0
        %v7719 = vmax.f32 %v7709, 0.0
        %v7720 = vmax.f32 %v7710, 0.0
        %v7721 = vmax.f32 %v7711, 0.0
        %v7722 = vmax.f32 %v7712, 0.0
        %v7723 = vmax.f32 %v7713, 0.0
        %v7724 = vmax.f32 %v7714, 0.0
        %v7725 = vmax.f32 %v7715, 0.0
        %v7726 = vmax.f32 %v7716, 0.0
        %v7727 = vmul.f32 %v7717, %v7585
        %v7728 = vmul.f32 %v7718, %v7586
        %v7729 = vmul.f32 %v7719, %v7585
        %v7730 = vmul.f32 %v7720, %v7586
        %v7731 = vmul.f32 %v7721, %v7585
        %v7732 = vmul.f32 %v7722, %v7586
        %v7733 = vmul.f32 %v7723, %v7585
        %v7734 = vmul.f32 %v7724, %v7586
        %v7735 = vmul.f32 %v7725, %v7585
        %v7736 = vmul.f32 %v7726, %v7586
        %v7737 = vsel %vm1784, %v7727, 0.0
        %v7738 = vsel %vm1786, %v7728, 0.0
        %v7739 = vadd.f32 %v7737, %v7738
        %v7740 = vrot.slane %v7739, 4
        %v7741 = vadd.f32 %v7739, %v7740
        %v7742 = vrot.slane %v7741, 2
        %v7743 = vadd.f32 %v7741, %v7742
        %v7744 = vrot.slane %v7743, 1
        %v7745 = vadd.f32 %v7743, %v7744
        %v7746 = vsel %vm1784, %v7729, 0.0
        %v7747 = vsel %vm1786, %v7730, 0.0
        %v7748 = vadd.f32 %v7746, %v7747
        %v7749 = vrot.slane %v7748, 4
        %v7750 = vadd.f32 %v7748, %v7749
        %v7751 = vrot.slane %v7750, 2
        %v7752 = vadd.f32 %v7750, %v7751
        %v7753 = vrot.slane %v7752, 1
        %v7754 = vadd.f32 %v7752, %v7753
        %v7755 = vsel %vm1784, %v7731, 0.0
        %v7756 = vsel %vm1786, %v7732, 0.0
        %v7757 = vadd.f32 %v7755, %v7756
        %v7758 = vrot.slane %v7757, 4
        %v7759 = vadd.f32 %v7757, %v7758
        %v7760 = vrot.slane %v7759, 2
        %v7761 = vadd.f32 %v7759, %v7760
        %v7762 = vrot.slane %v7761, 1
        %v7763 = vadd.f32 %v7761, %v7762
        %v7764 = vsel %vm1784, %v7733, 0.0
        %v7765 = vsel %vm1786, %v7734, 0.0
        %v7766 = vadd.f32 %v7764, %v7765
        %v7767 = vrot.slane %v7766, 4
        %v7768 = vadd.f32 %v7766, %v7767
        %v7769 = vrot.slane %v7768, 2
        %v7770 = vadd.f32 %v7768, %v7769
        %v7771 = vrot.slane %v7770, 1
        %v7772 = vadd.f32 %v7770, %v7771
        %v7773 = vsel %vm1784, %v7735, 0.0
        %v7774 = vsel %vm1786, %v7736, 0.0
        %v7775 = vadd.f32 %v7773, %v7774
        %v7776 = vrot.slane %v7775, 4
        %v7777 = vadd.f32 %v7775, %v7776
        %v7778 = vrot.slane %v7777, 2
        %v7779 = vadd.f32 %v7777, %v7778
        %v7780 = vrot.slane %v7779, 1
        %v7781 = vadd.f32 %v7779, %v7780
        %v7787 = vsel %vm1906, %v7754, %v7745
        %v7788 = vsel %vm1908, %v7763, %v7787
        %v7789 = vsel %vm1910, %v7772, %v7788
        %v7790 = vsel %vm1912, %v7781, %v7789
        %7792 = vst.msk [vmem:[#allocation3 + $0xa] sm:$0x1f] %vm6289, %v7790
        %v7793 = vld [vmem:[%s4252] sm:$0xff]
        %v7794 = vld [vmem:[%s4252 + $0x8] sm:$0xf]
        %v7795 = vmul.f32 %v7793, 3.1415927
        %v7796 = vmul.f32 %v7794, 3.1415927
        %v7797 = vand.u32 2147483647, %v7795
        %vm7798 = vcmp.le.f32.partialorder %v7797, 0.7853982
        %vm7799 = vcmp.lt.s32.totalorder %v7795, 0
        %v7800 = vand.u32 %v7795, 2139095040
        %v7801 = vshrl.u32 %v7800, 23
        %v7802 = vsub.s32 %v7801, 127
        %v7803 = vand.u32 2147483647, %v7795
        %v7804 = vand.u32 %v7803, 8388607
        %v7805 = vor.u32 %v7804, 8388608
        %v7806 = vsub.s32 0, %v7805
        %v7807 = vadd.s32 %v7802, 1
        %vm7808 = vcmp.gt.s32.totalorder %v7807, 0
        %v7809 = vsel %vm7808, %v7807, 0
        %v7810 = vshrl.u32 %v7809, 5
        %v7811 = vand.u32 %v7809, 31
        %v7812 = vsub.s32 32, %v7811
        %v7813 = vshrl.u32 683565275, %v7812
        %v7814 = vshll.u32 683565275, %v7811
        %v7815 = vshrl.u32 2475754826, %v7812
        %v7816 = vor.u32 %v7814, %v7815
        %v7817 = vshll.u32 2475754826, %v7811
        %v7818 = vshrl.u32 2131351028, %v7812
        %v7819 = vor.u32 %v7817, %v7818
        %v7820 = vshll.u32 2131351028, %v7811
        %v7821 = vshrl.u32 2102212464, %v7812
        %v7822 = vor.u32 %v7820, %v7821
        %v7823 = vshll.u32 2102212464, %v7811
        %v7824 = vshrl.u32 920167782, %v7812
        %v7825 = vor.u32 %v7823, %v7824
        %v7826 = vshll.u32 920167782, %v7811
        %v7827 = vshrl.u32 1326507024, %v7812
        %v7828 = vor.u32 %v7826, %v7827
        %vm7829 = vcmp.lt.s32.totalorder %v7810, 1
        %vm7830 = vcmp.lt.s32.totalorder %v7810, 2
        %vm7831 = vcmp.lt.s32.totalorder %v7810, 3
        %vm7832 = vcmp.lt.s32.totalorder %v7810, 4
        %v7833 = vsel %vm7829, %v7813, %v7816
        %v7834 = vsel %vm7832, %v7822, 2102212464
        %v7835 = vsel %vm7831, %v7819, %v7834
        %v7836 = vsel %vm7830, %v7833, %v7835
        %v7837 = vsel %vm7829, %v7816, %v7819
        %v7838 = vsel %vm7832, %v7825, 920167782
        %v7839 = vsel %vm7831, %v7822, %v7838
        %v7840 = vsel %vm7830, %v7837, %v7839
        %v7841 = vsel %vm7829, %v7819, %v7822
        %v7842 = vsel %vm7832, %v7828, 1326507024
        %v7843 = vsel %vm7831, %v7825, %v7842
        %v7844 = vsel %vm7830, %v7841, %v7843
        %v7845 = vshll.u32 %v7805, 8
        %v7846 = vmul.u32.u64.compose %v7845, %v7844
        %v7847 = vextract.low.u32 %v7846
        %v7848 = vextract.high.u32 %v7846
        %v7849 = vmul.u32.u64.compose %v7845, %v7840
        %v7850 = vextract.low.u32 %v7849
        %v7851 = vextract.high.u32 %v7849
        %v7852 = vmul.u32 %v7845, %v7836
        %v7853 = vadd.s32 %v7848, %v7850
        %vm7854 = vc.u32 %v7848, %v7850
        %v7855 = vadd.s32 %v7851, 1
        %v7856 = vsel %vm7854, %v7855, %v7851
        %v7857 = vadd.s32 %v7852, %v7856
        %v7858 = vadd.s32 %v7857, 536870912
        %v7859 = vshrl.u32 %v7858, 30
        %v7860 = vshll.u32 %v7859, 30
        %v7861 = vsub.s32 %v7857, %v7860
        %vm7862 = vcmp.lt.s32.totalorder %v7861, 0
        %v7863 = vsub.s32 0, %v7861
        %v7864 = vsel %vm7862, %v7863, %v7861
        %v7865 = vclz %v7864
        %v7866 = vsub.s32 %v7865, 2
        %vm7867 = vcmp.gt.s32.totalorder 0, %v7866
        %v7868 = vsel %vm7867, 0, %v7866
        %v7869 = vsub.s32 32, %v7868
        %v7870 = vshll.u32 %v7861, %v7868
        %v7871 = vshrl.u32 %v7853, %v7869
        %v7872 = vor.u32 %v7870, %v7871
        %v7873 = vsub.s32 4294967266, %v7868
        %v7874 = vadd.s32 %v7873, 127
        %v7875 = vshll.u32 %v7874, 23
        %v7876 = vor.u32 4788187, %v7875
        %v7877 = vand.u32 2147483647, %v7876
        %v7879 = vcvt.s32.f32 %v7872
        %v7880 = vmul.f32 %v7879, %v7877
        %v7881 = vxor.u32 %v7880, 2147483648
        %v7882 = vsel %vm7799, %v7881, %v7880
        %v7883 = vsub.s32 4, %v7859
        %v7884 = vsel %vm7799, %v7883, %v7859
        %v7885 = vsel %vm7798, %v7795, %v7882
        %v7886 = vsel %vm7798, 0, %v7884
        %v7887 = vcosq.f32.pop %v7885
        %v7888 = vsinq.f32.pop %v7885
        %vm7889 = vweird.f32 %v7795
        %v7890 = vadd.s32 %v7886, 3
        %v7891 = vand.u32 %v7890, 3
        %vm7892 = vcmp.lt.s32.totalorder %v7891, 2
        %vm7893 = vcmp.eq.s32.totalorder %v7891, 0
        %v7894 = vxor.u32 %v7888, 2147483648
        %v7895 = vsel %vm7893, %v7887, %v7894
        %vm7896 = vcmp.eq.s32.totalorder %v7891, 2
        %v7897 = vxor.u32 %v7887, 2147483648
        %v7898 = vsel %vm7896, %v7897, %v7888
        %v7899 = vsel %vm7892, %v7895, %v7898
        %v7900 = vsel %vm7889, nan, %v7899
        %v7901 = vand.u32 2147483647, %v7796
        %vm7902 = vcmp.le.f32.partialorder %v7901, 0.7853982
        %vm7903 = vcmp.lt.s32.totalorder %v7796, 0
        %v7904 = vand.u32 %v7796, 2139095040
        %v7905 = vshrl.u32 %v7904, 23
        %v7906 = vsub.s32 %v7905, 127
        %v7907 = vand.u32 2147483647, %v7796
        %v7908 = vand.u32 %v7907, 8388607
        %v7909 = vor.u32 %v7908, 8388608
        %v7910 = vsub.s32 0, %v7909
        %v7911 = vadd.s32 %v7906, 1
        %vm7912 = vcmp.gt.s32.totalorder %v7911, 0
        %v7913 = vsel %vm7912, %v7911, 0
        %v7914 = vshrl.u32 %v7913, 5
        %v7915 = vand.u32 %v7913, 31
        %v7916 = vsub.s32 32, %v7915
        %v7917 = vshrl.u32 683565275, %v7916
        %v7918 = vshll.u32 683565275, %v7915
        %v7919 = vshrl.u32 2475754826, %v7916
        %v7920 = vor.u32 %v7918, %v7919
        %v7921 = vshll.u32 2475754826, %v7915
        %v7922 = vshrl.u32 2131351028, %v7916
        %v7923 = vor.u32 %v7921, %v7922
        %v7924 = vshll.u32 2131351028, %v7915
        %v7925 = vshrl.u32 2102212464, %v7916
        %v7926 = vor.u32 %v7924, %v7925
        %v7927 = vshll.u32 2102212464, %v7915
        %v7928 = vshrl.u32 920167782, %v7916
        %v7929 = vor.u32 %v7927, %v7928
        %v7930 = vshll.u32 920167782, %v7915
        %v7931 = vshrl.u32 1326507024, %v7916
        %v7932 = vor.u32 %v7930, %v7931
        %vm7933 = vcmp.lt.s32.totalorder %v7914, 1
        %vm7934 = vcmp.lt.s32.totalorder %v7914, 2
        %vm7935 = vcmp.lt.s32.totalorder %v7914, 3
        %vm7936 = vcmp.lt.s32.totalorder %v7914, 4
        %v7937 = vsel %vm7933, %v7917, %v7920
        %v7938 = vsel %vm7936, %v7926, 2102212464
        %v7939 = vsel %vm7935, %v7923, %v7938
        %v7940 = vsel %vm7934, %v7937, %v7939
        %v7941 = vsel %vm7933, %v7920, %v7923
        %v7942 = vsel %vm7936, %v7929, 920167782
        %v7943 = vsel %vm7935, %v7926, %v7942
        %v7944 = vsel %vm7934, %v7941, %v7943
        %v7945 = vsel %vm7933, %v7923, %v7926
        %v7946 = vsel %vm7936, %v7932, 1326507024
        %v7947 = vsel %vm7935, %v7929, %v7946
        %v7948 = vsel %vm7934, %v7945, %v7947
        %v7949 = vshll.u32 %v7909, 8
        %v7950 = vmul.u32.u64.compose %v7949, %v7948
        %v7951 = vextract.low.u32 %v7950
        %v7952 = vextract.high.u32 %v7950
        %v7953 = vmul.u32.u64.compose %v7949, %v7944
        %v7954 = vextract.low.u32 %v7953
        %v7955 = vextract.high.u32 %v7953
        %v7956 = vmul.u32 %v7949, %v7940
        %v7957 = vadd.s32 %v7952, %v7954
        %vm7958 = vc.u32 %v7952, %v7954
        %v7959 = vadd.s32 %v7955, 1
        %v7960 = vsel %vm7958, %v7959, %v7955
        %v7961 = vadd.s32 %v7956, %v7960
        %v7962 = vadd.s32 %v7961, 536870912
        %v7963 = vshrl.u32 %v7962, 30
        %v7964 = vshll.u32 %v7963, 30
        %v7965 = vsub.s32 %v7961, %v7964
        %vm7966 = vcmp.lt.s32.totalorder %v7965, 0
        %v7967 = vsub.s32 0, %v7965
        %v7968 = vsel %vm7966, %v7967, %v7965
        %v7969 = vclz %v7968
        %v7970 = vsub.s32 %v7969, 2
        %vm7971 = vcmp.gt.s32.totalorder 0, %v7970
        %v7972 = vsel %vm7971, 0, %v7970
        %v7973 = vsub.s32 32, %v7972
        %v7974 = vshll.u32 %v7965, %v7972
        %v7975 = vshrl.u32 %v7957, %v7973
        %v7976 = vor.u32 %v7974, %v7975
        %v7977 = vsub.s32 4294967266, %v7972
        %v7978 = vadd.s32 %v7977, 127
        %v7979 = vshll.u32 %v7978, 23
        %v7980 = vor.u32 4788187, %v7979
        %v7981 = vand.u32 2147483647, %v7980
        %v7983 = vcvt.s32.f32 %v7976
        %v7984 = vmul.f32 %v7983, %v7981
        %v7985 = vxor.u32 %v7984, 2147483648
        %v7986 = vsel %vm7903, %v7985, %v7984
        %v7987 = vsub.s32 4, %v7963
        %v7988 = vsel %vm7903, %v7987, %v7963
        %v7989 = vsel %vm7902, %v7796, %v7986
        %v7990 = vsel %vm7902, 0, %v7988
        %v7991 = vcosq.f32.pop %v7989
        %v7992 = vsinq.f32.pop %v7989
        %vm7993 = vweird.f32 %v7796
        %v7994 = vadd.s32 %v7990, 3
        %v7995 = vand.u32 %v7994, 3
        %vm7996 = vcmp.lt.s32.totalorder %v7995, 2
        %vm7997 = vcmp.eq.s32.totalorder %v7995, 0
        %v7998 = vxor.u32 %v7992, 2147483648
        %v7999 = vsel %vm7997, %v7991, %v7998
        %vm8000 = vcmp.eq.s32.totalorder %v7995, 2
        %v8001 = vxor.u32 %v7991, 2147483648
        %v8002 = vsel %vm8000, %v8001, %v7992
        %v8003 = vsel %vm7996, %v7999, %v8002
        %v8004 = vsel %vm7993, nan, %v8003
        %8006 = vset.pattern.permute.xlu0 3
        %8007 = vperm.xlu0 %8006, %v7900
        %v8008 = vpop.permute.xlu0 %8007
        %8011 = vset.pattern.permute.xlu0 3
        %8012 = vperm.xlu0 %8011, %v8004
        %v8013 = vpop.permute.xlu0 %8012
        %v8015 = vmul.f32 %v8008, %v964
        %v8016 = vmul.f32 %v8013, %v964
        %v8017 = vand.u32 2147483647, %v7795
        %vm8018 = vcmp.le.f32.partialorder %v8017, 0.7853982
        %vm8019 = vcmp.lt.s32.totalorder %v7795, 0
        %v8020 = vand.u32 %v7795, 2139095040
        %v8021 = vshrl.u32 %v8020, 23
        %v8022 = vsub.s32 %v8021, 127
        %v8023 = vand.u32 2147483647, %v7795
        %v8024 = vand.u32 %v8023, 8388607
        %v8025 = vor.u32 %v8024, 8388608
        %v8026 = vsub.s32 0, %v8025
        %v8027 = vadd.s32 %v8022, 1
        %vm8028 = vcmp.gt.s32.totalorder %v8027, 0
        %v8029 = vsel %vm8028, %v8027, 0
        %v8030 = vshrl.u32 %v8029, 5
        %v8031 = vand.u32 %v8029, 31
        %v8032 = vsub.s32 32, %v8031
        %v8033 = vshrl.u32 683565275, %v8032
        %v8034 = vshll.u32 683565275, %v8031
        %v8035 = vshrl.u32 2475754826, %v8032
        %v8036 = vor.u32 %v8034, %v8035
        %v8037 = vshll.u32 2475754826, %v8031
        %v8038 = vshrl.u32 2131351028, %v8032
        %v8039 = vor.u32 %v8037, %v8038
        %v8040 = vshll.u32 2131351028, %v8031
        %v8041 = vshrl.u32 2102212464, %v8032
        %v8042 = vor.u32 %v8040, %v8041
        %v8043 = vshll.u32 2102212464, %v8031
        %v8044 = vshrl.u32 920167782, %v8032
        %v8045 = vor.u32 %v8043, %v8044
        %v8046 = vshll.u32 920167782, %v8031
        %v8047 = vshrl.u32 1326507024, %v8032
        %v8048 = vor.u32 %v8046, %v8047
        %vm8049 = vcmp.lt.s32.totalorder %v8030, 1
        %vm8050 = vcmp.lt.s32.totalorder %v8030, 2
        %vm8051 = vcmp.lt.s32.totalorder %v8030, 3
        %vm8052 = vcmp.lt.s32.totalorder %v8030, 4
        %v8053 = vsel %vm8049, %v8033, %v8036
        %v8054 = vsel %vm8052, %v8042, 2102212464
        %v8055 = vsel %vm8051, %v8039, %v8054
        %v8056 = vsel %vm8050, %v8053, %v8055
        %v8057 = vsel %vm8049, %v8036, %v8039
        %v8058 = vsel %vm8052, %v8045, 920167782
        %v8059 = vsel %vm8051, %v8042, %v8058
        %v8060 = vsel %vm8050, %v8057, %v8059
        %v8061 = vsel %vm8049, %v8039, %v8042
        %v8062 = vsel %vm8052, %v8048, 1326507024
        %v8063 = vsel %vm8051, %v8045, %v8062
        %v8064 = vsel %vm8050, %v8061, %v8063
        %v8065 = vshll.u32 %v8025, 8
        %v8066 = vmul.u32.u64.compose %v8065, %v8064
        %v8067 = vextract.low.u32 %v8066
        %v8068 = vextract.high.u32 %v8066
        %v8069 = vmul.u32.u64.compose %v8065, %v8060
        %v8070 = vextract.low.u32 %v8069
        %v8071 = vextract.high.u32 %v8069
        %v8072 = vmul.u32 %v8065, %v8056
        %v8073 = vadd.s32 %v8068, %v8070
        %vm8074 = vc.u32 %v8068, %v8070
        %v8075 = vadd.s32 %v8071, 1
        %v8076 = vsel %vm8074, %v8075, %v8071
        %v8077 = vadd.s32 %v8072, %v8076
        %v8078 = vadd.s32 %v8077, 536870912
        %v8079 = vshrl.u32 %v8078, 30
        %v8080 = vshll.u32 %v8079, 30
        %v8081 = vsub.s32 %v8077, %v8080
        %vm8082 = vcmp.lt.s32.totalorder %v8081, 0
        %v8083 = vsub.s32 0, %v8081
        %v8084 = vsel %vm8082, %v8083, %v8081
        %v8085 = vclz %v8084
        %v8086 = vsub.s32 %v8085, 2
        %vm8087 = vcmp.gt.s32.totalorder 0, %v8086
        %v8088 = vsel %vm8087, 0, %v8086
        %v8089 = vsub.s32 32, %v8088
        %v8090 = vshll.u32 %v8081, %v8088
        %v8091 = vshrl.u32 %v8073, %v8089
        %v8092 = vor.u32 %v8090, %v8091
        %v8093 = vsub.s32 4294967266, %v8088
        %v8094 = vadd.s32 %v8093, 127
        %v8095 = vshll.u32 %v8094, 23
        %v8096 = vor.u32 4788187, %v8095
        %v8097 = vand.u32 2147483647, %v8096
        %v8099 = vcvt.s32.f32 %v8092
        %v8100 = vmul.f32 %v8099, %v8097
        %v8101 = vxor.u32 %v8100, 2147483648
        %v8102 = vsel %vm8019, %v8101, %v8100
        %v8103 = vsub.s32 4, %v8079
        %v8104 = vsel %vm8019, %v8103, %v8079
        %v8105 = vsel %vm8018, %v7795, %v8102
        %v8106 = vsel %vm8018, 0, %v8104
        %v8107 = vcosq.f32.pop %v8105
        %v8108 = vsinq.f32.pop %v8105
        %vm8109 = vweird.f32 %v7795
        %v8110 = vand.u32 %v8106, 3
        %vm8111 = vcmp.lt.s32.totalorder %v8110, 2
        %vm8112 = vcmp.eq.s32.totalorder %v8110, 0
        %v8113 = vxor.u32 %v8108, 2147483648
        %v8114 = vsel %vm8112, %v8107, %v8113
        %vm8115 = vcmp.eq.s32.totalorder %v8110, 2
        %v8116 = vxor.u32 %v8107, 2147483648
        %v8117 = vsel %vm8115, %v8116, %v8108
        %v8118 = vsel %vm8111, %v8114, %v8117
        %v8119 = vsel %vm8109, nan, %v8118
        %v8120 = vand.u32 2147483647, %v7796
        %vm8121 = vcmp.le.f32.partialorder %v8120, 0.7853982
        %vm8122 = vcmp.lt.s32.totalorder %v7796, 0
        %v8123 = vand.u32 %v7796, 2139095040
        %v8124 = vshrl.u32 %v8123, 23
        %v8125 = vsub.s32 %v8124, 127
        %v8126 = vand.u32 2147483647, %v7796
        %v8127 = vand.u32 %v8126, 8388607
        %v8128 = vor.u32 %v8127, 8388608
        %v8129 = vsub.s32 0, %v8128
        %v8130 = vadd.s32 %v8125, 1
        %vm8131 = vcmp.gt.s32.totalorder %v8130, 0
        %v8132 = vsel %vm8131, %v8130, 0
        %v8133 = vshrl.u32 %v8132, 5
        %v8134 = vand.u32 %v8132, 31
        %v8135 = vsub.s32 32, %v8134
        %v8136 = vshrl.u32 683565275, %v8135
        %v8137 = vshll.u32 683565275, %v8134
        %v8138 = vshrl.u32 2475754826, %v8135
        %v8139 = vor.u32 %v8137, %v8138
        %v8140 = vshll.u32 2475754826, %v8134
        %v8141 = vshrl.u32 2131351028, %v8135
        %v8142 = vor.u32 %v8140, %v8141
        %v8143 = vshll.u32 2131351028, %v8134
        %v8144 = vshrl.u32 2102212464, %v8135
        %v8145 = vor.u32 %v8143, %v8144
        %v8146 = vshll.u32 2102212464, %v8134
        %v8147 = vshrl.u32 920167782, %v8135
        %v8148 = vor.u32 %v8146, %v8147
        %v8149 = vshll.u32 920167782, %v8134
        %v8150 = vshrl.u32 1326507024, %v8135
        %v8151 = vor.u32 %v8149, %v8150
        %vm8152 = vcmp.lt.s32.totalorder %v8133, 1
        %vm8153 = vcmp.lt.s32.totalorder %v8133, 2
        %vm8154 = vcmp.lt.s32.totalorder %v8133, 3
        %vm8155 = vcmp.lt.s32.totalorder %v8133, 4
        %v8156 = vsel %vm8152, %v8136, %v8139
        %v8157 = vsel %vm8155, %v8145, 2102212464
        %v8158 = vsel %vm8154, %v8142, %v8157
        %v8159 = vsel %vm8153, %v8156, %v8158
        %v8160 = vsel %vm8152, %v8139, %v8142
        %v8161 = vsel %vm8155, %v8148, 920167782
        %v8162 = vsel %vm8154, %v8145, %v8161
        %v8163 = vsel %vm8153, %v8160, %v8162
        %v8164 = vsel %vm8152, %v8142, %v8145
        %v8165 = vsel %vm8155, %v8151, 1326507024
        %v8166 = vsel %vm8154, %v8148, %v8165
        %v8167 = vsel %vm8153, %v8164, %v8166
        %v8168 = vshll.u32 %v8128, 8
        %v8169 = vmul.u32.u64.compose %v8168, %v8167
        %v8170 = vextract.low.u32 %v8169
        %v8171 = vextract.high.u32 %v8169
        %v8172 = vmul.u32.u64.compose %v8168, %v8163
        %v8173 = vextract.low.u32 %v8172
        %v8174 = vextract.high.u32 %v8172
        %v8175 = vmul.u32 %v8168, %v8159
        %v8176 = vadd.s32 %v8171, %v8173
        %vm8177 = vc.u32 %v8171, %v8173
        %v8178 = vadd.s32 %v8174, 1
        %v8179 = vsel %vm8177, %v8178, %v8174
        %v8180 = vadd.s32 %v8175, %v8179
        %v8181 = vadd.s32 %v8180, 536870912
        %v8182 = vshrl.u32 %v8181, 30
        %v8183 = vshll.u32 %v8182, 30
        %v8184 = vsub.s32 %v8180, %v8183
        %vm8185 = vcmp.lt.s32.totalorder %v8184, 0
        %v8186 = vsub.s32 0, %v8184
        %v8187 = vsel %vm8185, %v8186, %v8184
        %v8188 = vclz %v8187
        %v8189 = vsub.s32 %v8188, 2
        %vm8190 = vcmp.gt.s32.totalorder 0, %v8189
        %v8191 = vsel %vm8190, 0, %v8189
        %v8192 = vsub.s32 32, %v8191
        %v8193 = vshll.u32 %v8184, %v8191
        %v8194 = vshrl.u32 %v8176, %v8192
        %v8195 = vor.u32 %v8193, %v8194
        %v8196 = vsub.s32 4294967266, %v8191
        %v8197 = vadd.s32 %v8196, 127
        %v8198 = vshll.u32 %v8197, 23
        %v8199 = vor.u32 4788187, %v8198
        %v8200 = vand.u32 2147483647, %v8199
        %v8202 = vcvt.s32.f32 %v8195
        %v8203 = vmul.f32 %v8202, %v8200
        %v8204 = vxor.u32 %v8203, 2147483648
        %v8205 = vsel %vm8122, %v8204, %v8203
        %v8206 = vsub.s32 4, %v8182
        %v8207 = vsel %vm8122, %v8206, %v8182
        %v8208 = vsel %vm8121, %v7796, %v8205
        %v8209 = vsel %vm8121, 0, %v8207
        %v8210 = vcosq.f32.pop %v8208
        %v8211 = vsinq.f32.pop %v8208
        %vm8212 = vweird.f32 %v7796
        %v8213 = vand.u32 %v8209, 3
        %vm8214 = vcmp.lt.s32.totalorder %v8213, 2
        %vm8215 = vcmp.eq.s32.totalorder %v8213, 0
        %v8216 = vxor.u32 %v8211, 2147483648
        %v8217 = vsel %vm8215, %v8210, %v8216
        %vm8218 = vcmp.eq.s32.totalorder %v8213, 2
        %v8219 = vxor.u32 %v8210, 2147483648
        %v8220 = vsel %vm8218, %v8219, %v8211
        %v8221 = vsel %vm8214, %v8217, %v8220
        %v8222 = vsel %vm8212, nan, %v8221
        %8224 = vset.pattern.permute.xlu0 3
        %8225 = vperm.xlu0 %8224, %v8119
        %v8226 = vpop.permute.xlu0 %8225
        %8229 = vset.pattern.permute.xlu0 3
        %8230 = vperm.xlu0 %8229, %v8222
        %v8231 = vpop.permute.xlu0 %8230
        %v8233 = vmul.f32 %v8226, %v1186
        %v8234 = vmul.f32 %v8231, %v1186
        %v8235 = vadd.f32 %v8015, %v8233
        %v8236 = vadd.f32 %v8016, %v8234
        %v8237 = vadd.f32 %v8235, %v1195
        %v8238 = vadd.f32 %v8236, %v1195
        %v8239 = vmul.f32 %v731, %v7793
        %v8240 = vmul.f32 %v732, %v7794
        %v8241 = vadd.f32 %v8239, %v5971
        %v8242 = vadd.f32 %v8240, %v5972
        %v8244 = vcombine.high %v7793, %v7793
        %v8246 = vunpack.c.l.s4 1966171168
        %v8247 = vunpack.c.0.s8 %v8246
        %v8248 = vlaneseq
        %v8249 = vshrl.u32 %v8248, 7
        %v8250 = vsub.s32 %v8247, %v8249
        %v8251 = vrot.slane %v7793, %v8250
        %v8253 = vunpack.c.l.s4 1966171168
        %v8254 = vunpack.c.0.s8 %v8253
        %v8255 = vlaneseq
        %v8256 = vshrl.u32 %v8255, 7
        %v8257 = vsub.s32 %v8254, %v8256
        %v8258 = vrot.slane %v8244, %v8257
        %v8259 = vcombine.high %v8251, %v8251
        %v8260 = vcombine.high %v8258, %v8258
        %v8262 = vunpack.c.l.s4 1966171168
        %v8263 = vunpack.c.0.s8 %v8262
        %v8264 = vlaneseq
        %v8265 = vshrl.u32 %v8264, 7
        %v8266 = vsub.s32 %v8263, %v8265
        %v8267 = vrot.slane %v8258, %v8266
        %v8269 = vunpack.c.l.s4 1966171168
        %v8270 = vunpack.c.0.s8 %v8269
        %v8271 = vlaneseq
        %v8272 = vshrl.u32 %v8271, 7
        %v8273 = vsub.s32 %v8270, %v8272
        %v8274 = vrot.slane %v8259, %v8273
        %v8276 = vunpack.c.l.s4 1966171168
        %v8277 = vunpack.c.0.s8 %v8276
        %v8278 = vlaneseq
        %v8279 = vshrl.u32 %v8278, 7
        %v8280 = vsub.s32 %v8277, %v8279
        %v8281 = vrot.slane %v8260, %v8280
        %v8282 = vcombine.high %v8267, %v8267
        %v8283 = vcombine.high %v8274, %v8274
        %v8284 = vcombine.high %v8281, %v8281
        %v8285 = vlaneseq
        %v8286 = vshrl.u32 %v8285, 7
        %v8287 = vsub.s32 0, %v8286
        %v8288 = vrot.slane %v8283, %v8287
        %v8289 = vlaneseq
        %v8290 = vshrl.u32 %v8289, 7
        %v8291 = vsub.s32 0, %v8290
        %v8292 = vrot.slane %v8267, %v8291
        %v8293 = vlaneseq
        %v8294 = vshrl.u32 %v8293, 7
        %v8295 = vsub.s32 0, %v8294
        %v8296 = vrot.slane %v8281, %v8295
        %v8297 = vlaneseq
        %v8298 = vshrl.u32 %v8297, 7
        %v8299 = vsub.s32 0, %v8298
        %v8300 = vrot.slane %v8282, %v8299
        %v8301 = vlaneseq
        %v8302 = vshrl.u32 %v8301, 7
        %v8303 = vsub.s32 0, %v8302
        %v8304 = vrot.slane %v8284, %v8303
        %v8310 = vsub.f32 %v7793, %v8288
        %v8311 = vsub.f32 %v7794, %v8288
        %v8312 = vsub.f32 %v7793, %v8292
        %v8313 = vsub.f32 %v7794, %v8292
        %v8314 = vsub.f32 %v7793, %v8296
        %v8315 = vsub.f32 %v7794, %v8296
        %v8316 = vsub.f32 %v7793, %v8300
        %v8317 = vsub.f32 %v7794, %v8300
        %v8318 = vsub.f32 %v7793, %v8304
        %v8319 = vsub.f32 %v7794, %v8304
        %v8320 = vld [vmem:[#allocation2 + $0x24] sm:$0xff]
        %v8321 = vld [vmem:[#allocation2 + $0x2c] sm:$0xf]
        %v8322 = vmul.f32 %v731, %v8237
        %v8323 = vmul.f32 %v732, %v8238
        %v8324 = vadd.f32 %v8320, %v8322
        %v8325 = vadd.f32 %v8321, %v8323
        %8327 = vset.pattern.permute.xlu0 2
        %8328 = vperm.xlu0 %8327, %v8241
        %v8329 = vpop.permute.xlu0 %8328
        %8332 = vset.pattern.permute.xlu0 2
        %8333 = vperm.xlu0 %8332, %v8242
        %v8334 = vpop.permute.xlu0 %8333
        %v8336 = vmul.f32 %v8324, %v8329
        %v8337 = vmul.f32 %v8325, %v8334
        %8339 = vset.pattern.permute.xlu0 0
        %8340 = vperm.xlu0 %8339, %v8310
        %v8341 = vpop.permute.xlu0 %8340
        %8344 = vset.pattern.permute.xlu0 0
        %8345 = vperm.xlu0 %8344, %v8311
        %v8346 = vpop.permute.xlu0 %8345
        %8349 = vset.pattern.permute.xlu0 0
        %8350 = vperm.xlu0 %8349, %v8312
        %v8351 = vpop.permute.xlu0 %8350
        %8354 = vset.pattern.permute.xlu0 0
        %8355 = vperm.xlu0 %8354, %v8313
        %v8356 = vpop.permute.xlu0 %8355
        %8359 = vset.pattern.permute.xlu0 0
        %8360 = vperm.xlu0 %8359, %v8314
        %v8361 = vpop.permute.xlu0 %8360
        %8364 = vset.pattern.permute.xlu0 0
        %8365 = vperm.xlu0 %8364, %v8315
        %v8366 = vpop.permute.xlu0 %8365
        %8369 = vset.pattern.permute.xlu0 0
        %8370 = vperm.xlu0 %8369, %v8316
        %v8371 = vpop.permute.xlu0 %8370
        %8374 = vset.pattern.permute.xlu0 0
        %8375 = vperm.xlu0 %8374, %v8317
        %v8376 = vpop.permute.xlu0 %8375
        %8379 = vset.pattern.permute.xlu0 0
        %8380 = vperm.xlu0 %8379, %v8318
        %v8381 = vpop.permute.xlu0 %8380
        %8384 = vset.pattern.permute.xlu0 0
        %8385 = vperm.xlu0 %8384, %v8319
        %v8386 = vpop.permute.xlu0 %8385
        %v8388 = vmul.f32 %v8341, %v6123
        %v8389 = vmul.f32 %v8346, %v6123
        %v8390 = vmul.f32 %v8351, %v6123
        %v8391 = vmul.f32 %v8356, %v6123
        %v8392 = vmul.f32 %v8361, %v6123
        %v8393 = vmul.f32 %v8366, %v6123
        %v8394 = vmul.f32 %v8371, %v6123
        %v8395 = vmul.f32 %v8376, %v6123
        %v8396 = vmul.f32 %v8381, %v6123
        %v8397 = vmul.f32 %v8386, %v6123
        %8398 = vset.pattern.permute.xlu0 1
        %8399 = vperm.xlu0 %8398, %v8310
        %v8400 = vpop.permute.xlu0 %8399
        %8402 = vset.pattern.permute.xlu0 1
        %8403 = vperm.xlu0 %8402, %v8311
        %v8404 = vpop.permute.xlu0 %8403
        %8406 = vset.pattern.permute.xlu0 1
        %8407 = vperm.xlu0 %8406, %v8312
        %v8408 = vpop.permute.xlu0 %8407
        %8410 = vset.pattern.permute.xlu0 1
        %8411 = vperm.xlu0 %8410, %v8313
        %v8412 = vpop.permute.xlu0 %8411
        %8414 = vset.pattern.permute.xlu0 1
        %8415 = vperm.xlu0 %8414, %v8314
        %v8416 = vpop.permute.xlu0 %8415
        %8418 = vset.pattern.permute.xlu0 1
        %8419 = vperm.xlu0 %8418, %v8315
        %v8420 = vpop.permute.xlu0 %8419
        %8422 = vset.pattern.permute.xlu0 1
        %8423 = vperm.xlu0 %8422, %v8316
        %v8424 = vpop.permute.xlu0 %8423
        %8426 = vset.pattern.permute.xlu0 1
        %8427 = vperm.xlu0 %8426, %v8317
        %v8428 = vpop.permute.xlu0 %8427
        %8430 = vset.pattern.permute.xlu0 1
        %8431 = vperm.xlu0 %8430, %v8318
        %v8432 = vpop.permute.xlu0 %8431
        %8434 = vset.pattern.permute.xlu0 1
        %8435 = vperm.xlu0 %8434, %v8319
        %v8436 = vpop.permute.xlu0 %8435
        %v8438 = vmul.f32 %v8400, %v6177
        %v8439 = vmul.f32 %v8404, %v6177
        %v8440 = vmul.f32 %v8408, %v6177
        %v8441 = vmul.f32 %v8412, %v6177
        %v8442 = vmul.f32 %v8416, %v6177
        %v8443 = vmul.f32 %v8420, %v6177
        %v8444 = vmul.f32 %v8424, %v6177
        %v8445 = vmul.f32 %v8428, %v6177
        %v8446 = vmul.f32 %v8432, %v6177
        %v8447 = vmul.f32 %v8436, %v6177
        %v8448 = vadd.f32 %v8388, %v8438
        %v8449 = vadd.f32 %v8389, %v8439
        %v8450 = vadd.f32 %v8390, %v8440
        %v8451 = vadd.f32 %v8391, %v8441
        %v8452 = vadd.f32 %v8392, %v8442
        %v8453 = vadd.f32 %v8393, %v8443
        %v8454 = vadd.f32 %v8394, %v8444
        %v8455 = vadd.f32 %v8395, %v8445
        %v8456 = vadd.f32 %v8396, %v8446
        %v8457 = vadd.f32 %v8397, %v8447
        %v8458 = vadd.f32 %v8448, %v6202
        %v8459 = vadd.f32 %v8449, %v6202
        %v8460 = vadd.f32 %v8450, %v6202
        %v8461 = vadd.f32 %v8451, %v6202
        %v8462 = vadd.f32 %v8452, %v6202
        %v8463 = vadd.f32 %v8453, %v6202
        %v8464 = vadd.f32 %v8454, %v6202
        %v8465 = vadd.f32 %v8455, %v6202
        %v8466 = vadd.f32 %v8456, %v6202
        %v8467 = vadd.f32 %v8457, %v6202
        %v8468 = vmax.f32 %v8458, 0.0
        %v8469 = vmax.f32 %v8459, 0.0
        %v8470 = vmax.f32 %v8460, 0.0
        %v8471 = vmax.f32 %v8461, 0.0
        %v8472 = vmax.f32 %v8462, 0.0
        %v8473 = vmax.f32 %v8463, 0.0
        %v8474 = vmax.f32 %v8464, 0.0
        %v8475 = vmax.f32 %v8465, 0.0
        %v8476 = vmax.f32 %v8466, 0.0
        %v8477 = vmax.f32 %v8467, 0.0
        %v8478 = vmul.f32 %v8468, %v8336
        %v8479 = vmul.f32 %v8469, %v8337
        %v8480 = vmul.f32 %v8470, %v8336
        %v8481 = vmul.f32 %v8471, %v8337
        %v8482 = vmul.f32 %v8472, %v8336
        %v8483 = vmul.f32 %v8473, %v8337
        %v8484 = vmul.f32 %v8474, %v8336
        %v8485 = vmul.f32 %v8475, %v8337
        %v8486 = vmul.f32 %v8476, %v8336
        %v8487 = vmul.f32 %v8477, %v8337
        %v8488 = vsel %vm1784, %v8478, 0.0
        %v8489 = vsel %vm1786, %v8479, 0.0
        %v8490 = vadd.f32 %v8488, %v8489
        %v8491 = vrot.slane %v8490, 4
        %v8492 = vadd.f32 %v8490, %v8491
        %v8493 = vrot.slane %v8492, 2
        %v8494 = vadd.f32 %v8492, %v8493
        %v8495 = vrot.slane %v8494, 1
        %v8496 = vadd.f32 %v8494, %v8495
        %v8497 = vsel %vm1784, %v8480, 0.0
        %v8498 = vsel %vm1786, %v8481, 0.0
        %v8499 = vadd.f32 %v8497, %v8498
        %v8500 = vrot.slane %v8499, 4
        %v8501 = vadd.f32 %v8499, %v8500
        %v8502 = vrot.slane %v8501, 2
        %v8503 = vadd.f32 %v8501, %v8502
        %v8504 = vrot.slane %v8503, 1
        %v8505 = vadd.f32 %v8503, %v8504
        %v8506 = vsel %vm1784, %v8482, 0.0
        %v8507 = vsel %vm1786, %v8483, 0.0
        %v8508 = vadd.f32 %v8506, %v8507
        %v8509 = vrot.slane %v8508, 4
        %v8510 = vadd.f32 %v8508, %v8509
        %v8511 = vrot.slane %v8510, 2
        %v8512 = vadd.f32 %v8510, %v8511
        %v8513 = vrot.slane %v8512, 1
        %v8514 = vadd.f32 %v8512, %v8513
        %v8515 = vsel %vm1784, %v8484, 0.0
        %v8516 = vsel %vm1786, %v8485, 0.0
        %v8517 = vadd.f32 %v8515, %v8516
        %v8518 = vrot.slane %v8517, 4
        %v8519 = vadd.f32 %v8517, %v8518
        %v8520 = vrot.slane %v8519, 2
        %v8521 = vadd.f32 %v8519, %v8520
        %v8522 = vrot.slane %v8521, 1
        %v8523 = vadd.f32 %v8521, %v8522
        %v8524 = vsel %vm1784, %v8486, 0.0
        %v8525 = vsel %vm1786, %v8487, 0.0
        %v8526 = vadd.f32 %v8524, %v8525
        %v8527 = vrot.slane %v8526, 4
        %v8528 = vadd.f32 %v8526, %v8527
        %v8529 = vrot.slane %v8528, 2
        %v8530 = vadd.f32 %v8528, %v8529
        %v8531 = vrot.slane %v8530, 1
        %v8532 = vadd.f32 %v8530, %v8531
        %v8538 = vsel %vm1906, %v8505, %v8496
        %v8539 = vsel %vm1908, %v8514, %v8538
        %v8540 = vsel %vm1910, %v8523, %v8539
        %v8541 = vsel %vm1912, %v8532, %v8540
        %8543 = vst.msk [vmem:[#allocation3 + $0xf] sm:$0x1f] %vm6289, %v8541
        %v8544 = vld [vmem:[#allocation3] sm:$0xff]
        %v8545 = vld [vmem:[#allocation3 + $0x8] sm:$0xff]
        %v8546 = vld [vmem:[#allocation3 + $0x10] sm:$0xf]
        %v8547 = vpack.c.bf16 %v8545, %v8544
        %v8548 = vpack.c.bf16 %v8546, %v8546
        %v8549 = vld [vmem:[%s14] sm:$0xf]
        %v8550 = vld [vmem:[%s14 + $0x4] sm:$0xf]
        %v8551 = vld [vmem:[%s14 + $0x8] sm:$0xf]
        %v8552 = vld [vmem:[%s14 + $0xc] sm:$0xf]
        %v8553 = vld [vmem:[%s14 + $0x10] sm:$0xf]
        %v8554 = vld [vmem:[%s14 + $0x14] sm:$0xf]
        %v8555 = vld [vmem:[%s14 + $0x18] sm:$0xf]
        %v8556 = vld [vmem:[%s14 + $0x1c] sm:$0xf]
        %v8557 = vld [vmem:[%s15] sm:$0x1]
        %v8559 = vlaneseq
        %v8560 = vshrl.u32 %v8559, 7
        %v8561 = vsub.s32 0, %v8560
        %v8562 = vrot.slane %v8557, %v8561
        %v8572 = vunpack.c.l.b16 %v8549
        %v8573 = vunpack.c.l.b16 %v8550
        %v8574 = vunpack.c.l.b16 %v8551
        %v8575 = vunpack.c.l.b16 %v8552
        %v8576 = vunpack.c.l.b16 %v8553
        %v8577 = vunpack.c.l.b16 %v8554
        %v8578 = vunpack.c.l.b16 %v8555
        %v8579 = vunpack.c.l.b16 %v8556
        %v8580 = vpack.c.b16 %v8573, %v8572
        %v8581 = vpack.c.b16 %v8575, %v8574
        %v8582 = vpack.c.b16 %v8577, %v8576
        %v8583 = vpack.c.b16 %v8579, %v8578
        %v8589 = vsel %vm1784, %v8547, 0
        %v8592 = vsel %vm1784, %v8548, 0
        %8594 = vmatprep.subr.bf16.mxu0 0
        %8595 = vmatpush1.bf16.msra.mxu0 %v8580
        %8596 = vmatprep.subr.bf16.mxu0 0
        %8597 = vmatpush1.bf16.msra.mxu0 %v8581
        %8598 = vmatprep.subr.bf16.mxu0 0
        %8599 = vmatpush1.bf16.msra.mxu0 %v8582
        %8600 = vmatprep.subr.bf16.mxu0 0
        %8601 = vmatpush1.bf16.msra.mxu0 %v8583
        %8602 = vmatprep.subr.bf16.mxu0 0
        %8603 = vmatpush1.bf16.msra.mxu0 0
        %8604 = vmatprep.subr.bf16.mxu0 0
        %8605 = vmatpush1.bf16.msra.mxu0 0
        %8606 = vmatprep.subr.bf16.mxu0 0
        %8607 = vmatpush1.bf16.msra.mxu0 0
        %8608 = vmatprep.subr.bf16.mxu0 0
        %8609 = vmatpush1.bf16.msra.mxu0 0
        %8610 = vmatprep.subr.bf16.mxu0 0
        %8611 = vmatpush1.bf16.msra.mxu0 0
        %8612 = vmatprep.subr.bf16.mxu0 0
        %8613 = vmatpush1.bf16.msra.mxu0 0
        %8614 = vmatprep.subr.bf16.mxu0 0
        %8615 = vmatpush1.bf16.msra.mxu0 0
        %8616 = vmatprep.subr.bf16.mxu0 0
        %8617 = vmatpush1.bf16.msra.mxu0 0
        %8618 = vmatprep.subr.bf16.mxu0 0
        %8619 = vmatpush1.bf16.msra.mxu0 0
        %8620 = vmatprep.subr.bf16.mxu0 0
        %8621 = vmatpush1.bf16.msra.mxu0 0
        %8622 = vmatprep.subr.bf16.mxu0 0
        %8623 = vmatpush1.bf16.msra.mxu0 0
        %8624 = vmatprep.subr.bf16.mxu0 0
        %8625 = vmatpush1.bf16.msra.mxu0 0
        %8626 = vmatprep.mubr.bf16.mxu0 0
        %8627 = vmatmul.mubr.bf16.gmra.mrb[0].mxu0 %v8589
        %v8628 = vpop.f32.mrb[0].mxu0
        %v8629 = vadd.f32 %v8562, %v8628
        %v8630 = vpop.f32.mrb[0].mxu0
        %v8631 = vpop.f32.mrb[0].mxu0
        %v8632 = vadd.f32 %v8562, %v8631
        %v8633 = vpop.f32.mrb[0].mxu0
        %8634 = vmatprep.mubr.bf16.mxu0 0
        %8635 = vmatmul.mubr.bf16.gmra.mrb[0].mxu0 %v8592
        %v8636 = vpop.f32.mrb[0].mxu0
        %v8637 = vadd.f32 %v8562, %v8636
        %v8638 = vpop.f32.mrb[0].mxu0
        %v8639 = vpop.f32.mrb[0].mxu0
        %v8640 = vpop.f32.mrb[0].mxu0
        %8641 = vdwg.mxu0
        %v8642 = vmax.f32 %v8629, 0.0
        %v8643 = vmax.f32 %v8632, 0.0
        %v8644 = vmax.f32 %v8637, 0.0
        %v8645 = vld [vmem:[#allocation5] sm:$0xff]
        %v8646 = vld [vmem:[#allocation5 + $0x8] sm:$0xff]
        %v8647 = vld [vmem:[#allocation5 + $0x10] sm:$0xf]
        %8649 = vset.pattern.permute.xlu0 0
        %8650 = vperm.xlu0 %8649, %v8645
        %v8651 = vpop.permute.xlu0 %8650
        %8654 = vset.pattern.permute.xlu0 0
        %8655 = vperm.xlu0 %8654, %v8646
        %v8656 = vpop.permute.xlu0 %8655
        %8659 = vset.pattern.permute.xlu0 0
        %8660 = vperm.xlu0 %8659, %v8647
        %v8661 = vpop.permute.xlu0 %8660
        %v8663 = vmul.f32 %v8642, %v8651
        %v8664 = vmul.f32 %v8643, %v8656
        %v8665 = vmul.f32 %v8644, %v8661
        %v8666 = vld [vmem:[#allocation4] sm:$0xff]
        %v8667 = vld [vmem:[#allocation4 + $0x8] sm:$0xff]
        %v8668 = vld [vmem:[#allocation4 + $0x10] sm:$0xf]
        %v8669 = vadd.f32 %v8663, %v8666
        %v8670 = vadd.f32 %v8664, %v8667
        %v8671 = vadd.f32 %v8665, %v8668
        %v8672 = vpack.c.bf16 %v8670, %v8669
        %v8673 = vpack.c.bf16 %v8671, %v8671
        %v8674 = vld [vmem:[%s16] sm:$0xff]
        %v8675 = vld [vmem:[%s16 + $0x8] sm:$0xff]
        %v8676 = vld [vmem:[%s16 + $0x10] sm:$0xff]
        %v8677 = vld [vmem:[%s16 + $0x18] sm:$0xff]
        %v8678 = vld [vmem:[%s16 + $0x20] sm:$0xff]
        %v8679 = vld [vmem:[%s16 + $0x28] sm:$0xff]
        %v8680 = vld [vmem:[%s16 + $0x30] sm:$0xff]
        %v8681 = vld [vmem:[%s16 + $0x38] sm:$0xff]
        %v8682 = vld [vmem:[%s16 + $0x40] sm:$0xff]
        %v8683 = vld [vmem:[%s16 + $0x48] sm:$0xff]
        %v8684 = vld [vmem:[%s16 + $0x50] sm:$0xff]
        %v8685 = vld [vmem:[%s16 + $0x58] sm:$0xff]
        %v8686 = vld [vmem:[%s16 + $0x60] sm:$0xff]
        %v8687 = vld [vmem:[%s16 + $0x68] sm:$0xff]
        %v8688 = vld [vmem:[%s16 + $0x70] sm:$0xff]
        %v8689 = vld [vmem:[%s16 + $0x78] sm:$0xff]
        %v8690 = vld [vmem:[%s17] sm:$0xf]
        %v8692 = vlaneseq
        %v8693 = vshrl.u32 %v8692, 7
        %v8694 = vsub.s32 0, %v8693
        %v8695 = vrot.slane %v8690, %v8694
        %v8696 = vlaneseq
        %v8697 = vshrl.u32 %v8696, 7
        %v8698 = vsub.s32 1, %v8697
        %v8699 = vrot.slane %v8690, %v8698
        %v8700 = vlaneseq
        %v8701 = vshrl.u32 %v8700, 7
        %v8702 = vsub.s32 2, %v8701
        %v8703 = vrot.slane %v8690, %v8702
        %v8704 = vlaneseq
        %v8705 = vshrl.u32 %v8704, 7
        %v8706 = vsub.s32 3, %v8705
        %v8707 = vrot.slane %v8690, %v8706
        %v8728 = vunpack.c.l.b16 %v8674
        %v8729 = vunpack.c.h.b16 %v8674
        %v8730 = vunpack.c.l.b16 %v8675
        %v8731 = vunpack.c.h.b16 %v8675
        %v8732 = vunpack.c.l.b16 %v8676
        %v8733 = vunpack.c.h.b16 %v8676
        %v8734 = vunpack.c.l.b16 %v8677
        %v8735 = vunpack.c.h.b16 %v8677
        %v8736 = vunpack.c.l.b16 %v8678
        %v8737 = vunpack.c.h.b16 %v8678
        %v8738 = vunpack.c.l.b16 %v8679
        %v8739 = vunpack.c.h.b16 %v8679
        %v8740 = vunpack.c.l.b16 %v8680
        %v8741 = vunpack.c.h.b16 %v8680
        %v8742 = vunpack.c.l.b16 %v8681
        %v8743 = vunpack.c.h.b16 %v8681
        %v8744 = vunpack.c.l.b16 %v8682
        %v8745 = vunpack.c.h.b16 %v8682
        %v8746 = vunpack.c.l.b16 %v8683
        %v8747 = vunpack.c.h.b16 %v8683
        %v8748 = vunpack.c.l.b16 %v8684
        %v8749 = vunpack.c.h.b16 %v8684
        %v8750 = vunpack.c.l.b16 %v8685
        %v8751 = vunpack.c.h.b16 %v8685
        %v8752 = vunpack.c.l.b16 %v8686
        %v8753 = vunpack.c.h.b16 %v8686
        %v8754 = vunpack.c.l.b16 %v8687
        %v8755 = vunpack.c.h.b16 %v8687
        %v8756 = vunpack.c.l.b16 %v8688
        %v8757 = vunpack.c.h.b16 %v8688
        %v8758 = vunpack.c.l.b16 %v8689
        %v8759 = vunpack.c.h.b16 %v8689
        %v8760 = vpack.c.b16 %v8732, %v8728
        %v8761 = vpack.c.b16 %v8733, %v8729
        %v8762 = vpack.c.b16 %v8734, %v8730
        %v8763 = vpack.c.b16 %v8735, %v8731
        %v8764 = vpack.c.b16 %v8740, %v8736
        %v8765 = vpack.c.b16 %v8741, %v8737
        %v8766 = vpack.c.b16 %v8742, %v8738
        %v8767 = vpack.c.b16 %v8743, %v8739
        %v8768 = vpack.c.b16 %v8748, %v8744
        %v8769 = vpack.c.b16 %v8749, %v8745
        %v8770 = vpack.c.b16 %v8750, %v8746
        %v8771 = vpack.c.b16 %v8751, %v8747
        %v8772 = vpack.c.b16 %v8756, %v8752
        %v8773 = vpack.c.b16 %v8757, %v8753
        %v8774 = vpack.c.b16 %v8758, %v8754
        %v8775 = vpack.c.b16 %v8759, %v8755
        %v8793 = vsel %vm1784, %v8672, 0
        %v8796 = vsel %vm1784, %v8673, 0
        %8798 = vmatprep.subr.bf16.mxu0 %v8761
        %8799 = vmatpush1.bf16.msra.mxu0 %v8760
        %8800 = vmatprep.subr.bf16.mxu0 %v8765
        %8801 = vmatpush1.bf16.msra.mxu0 %v8764
        %8802 = vmatprep.subr.bf16.mxu0 %v8769
        %8803 = vmatpush1.bf16.msra.mxu0 %v8768
        %8804 = vmatprep.subr.bf16.mxu0 %v8773
        %8805 = vmatpush1.bf16.msra.mxu0 %v8772
        %8806 = vmatprep.subr.bf16.mxu0 0
        %8807 = vmatpush1.bf16.msra.mxu0 0
        %8808 = vmatprep.subr.bf16.mxu0 0
        %8809 = vmatpush1.bf16.msra.mxu0 0
        %8810 = vmatprep.subr.bf16.mxu0 0
        %8811 = vmatpush1.bf16.msra.mxu0 0
        %8812 = vmatprep.subr.bf16.mxu0 0
        %8813 = vmatpush1.bf16.msra.mxu0 0
        %8814 = vmatprep.subr.bf16.mxu0 0
        %8815 = vmatpush1.bf16.msra.mxu0 0
        %8816 = vmatprep.subr.bf16.mxu0 0
        %8817 = vmatpush1.bf16.msra.mxu0 0
        %8818 = vmatprep.subr.bf16.mxu0 0
        %8819 = vmatpush1.bf16.msra.mxu0 0
        %8820 = vmatprep.subr.bf16.mxu0 0
        %8821 = vmatpush1.bf16.msra.mxu0 0
        %8822 = vmatprep.subr.bf16.mxu0 0
        %8823 = vmatpush1.bf16.msra.mxu0 0
        %8824 = vmatprep.subr.bf16.mxu0 0
        %8825 = vmatpush1.bf16.msra.mxu0 0
        %8826 = vmatprep.subr.bf16.mxu0 0
        %8827 = vmatpush1.bf16.msra.mxu0 0
        %8828 = vmatprep.subr.bf16.mxu0 0
        %8829 = vmatpush1.bf16.msra.mxu0 0
        %8830 = vmatprep.mubr.bf16.mxu0 0
        %8831 = vmatmul.mubr.bf16.gmra.mrb[0].mxu0 %v8793
        %v8832 = vpop.f32.mrb[0].mxu0
        %v8833 = vadd.f32 %v8695, %v8832
        %v8834 = vpop.f32.mrb[0].mxu0
        %v8835 = vadd.f32 %v8699, %v8834
        %v8836 = vpop.f32.mrb[0].mxu0
        %v8837 = vadd.f32 %v8695, %v8836
        %v8838 = vpop.f32.mrb[0].mxu0
        %v8839 = vadd.f32 %v8699, %v8838
        %8840 = vmatprep.mubr.bf16.mxu0 0
        %8841 = vmatmul.mubr.bf16.gmra.mrb[0].mxu0 %v8796
        %v8842 = vpop.f32.mrb[0].mxu0
        %v8843 = vadd.f32 %v8695, %v8842
        %v8844 = vpop.f32.mrb[0].mxu0
        %v8845 = vadd.f32 %v8699, %v8844
        %v8846 = vpop.f32.mrb[0].mxu0
        %v8847 = vpop.f32.mrb[0].mxu0
        %8848 = vdwg.mxu0
        %8849 = vmatprep.subr.bf16.mxu0 %v8763
        %8850 = vmatpush1.bf16.msra.mxu0 %v8762
        %8851 = vmatprep.subr.bf16.mxu0 %v8767
        %8852 = vmatpush1.bf16.msra.mxu0 %v8766
        %8853 = vmatprep.subr.bf16.mxu0 %v8771
        %8854 = vmatpush1.bf16.msra.mxu0 %v8770
        %8855 = vmatprep.subr.bf16.mxu0 %v8775
        %8856 = vmatpush1.bf16.msra.mxu0 %v8774
        %8857 = vmatprep.subr.bf16.mxu0 0
        %8858 = vmatpush1.bf16.msra.mxu0 0
        %8859 = vmatprep.subr.bf16.mxu0 0
        %8860 = vmatpush1.bf16.msra.mxu0 0
        %8861 = vmatprep.subr.bf16.mxu0 0
        %8862 = vmatpush1.bf16.msra.mxu0 0
        %8863 = vmatprep.subr.bf16.mxu0 0
        %8864 = vmatpush1.bf16.msra.mxu0 0
        %8865 = vmatprep.subr.bf16.mxu0 0
        %8866 = vmatpush1.bf16.msra.mxu0 0
        %8867 = vmatprep.subr.bf16.mxu0 0
        %8868 = vmatpush1.bf16.msra.mxu0 0
        %8869 = vmatprep.subr.bf16.mxu0 0
        %8870 = vmatpush1.bf16.msra.mxu0 0
        %8871 = vmatprep.subr.bf16.mxu0 0
        %8872 = vmatpush1.bf16.msra.mxu0 0
        %8873 = vmatprep.subr.bf16.mxu0 0
        %8874 = vmatpush1.bf16.msra.mxu0 0
        %8875 = vmatprep.subr.bf16.mxu0 0
        %8876 = vmatpush1.bf16.msra.mxu0 0
        %8877 = vmatprep.subr.bf16.mxu0 0
        %8878 = vmatpush1.bf16.msra.mxu0 0
        %8879 = vmatprep.subr.bf16.mxu0 0
        %8880 = vmatpush1.bf16.msra.mxu0 0
        %8881 = vmatprep.mubr.bf16.mxu0 0
        %8882 = vmatmul.mubr.bf16.gmra.mrb[0].mxu0 %v8793
        %v8883 = vpop.f32.mrb[0].mxu0
        %v8884 = vadd.f32 %v8703, %v8883
        %v8885 = vpop.f32.mrb[0].mxu0
        %v8886 = vadd.f32 %v8707, %v8885
        %v8887 = vpop.f32.mrb[0].mxu0
        %v8888 = vadd.f32 %v8703, %v8887
        %v8889 = vpop.f32.mrb[0].mxu0
        %v8890 = vadd.f32 %v8707, %v8889
        %8891 = vmatprep.mubr.bf16.mxu0 0
        %8892 = vmatmul.mubr.bf16.gmra.mrb[0].mxu0 %v8796
        %v8893 = vpop.f32.mrb[0].mxu0
        %v8894 = vadd.f32 %v8703, %v8893
        %v8895 = vpop.f32.mrb[0].mxu0
        %v8896 = vadd.f32 %v8707, %v8895
        %v8897 = vpop.f32.mrb[0].mxu0
        %v8898 = vpop.f32.mrb[0].mxu0
        %8899 = vdwg.mxu0
        %v8900 = vmax.f32 %v8833, 0.0
        %v8901 = vmax.f32 %v8835, 0.0
        %v8902 = vmax.f32 %v8884, 0.0
        %v8903 = vmax.f32 %v8886, 0.0
        %v8904 = vmax.f32 %v8837, 0.0
        %v8905 = vmax.f32 %v8839, 0.0
        %v8906 = vmax.f32 %v8888, 0.0
        %v8907 = vmax.f32 %v8890, 0.0
        %v8908 = vmax.f32 %v8843, 0.0
        %v8909 = vmax.f32 %v8845, 0.0
        %v8910 = vmax.f32 %v8894, 0.0
        %v8911 = vmax.f32 %v8896, 0.0
        %v8912 = vpack.c.bf16 %v8904, %v8900
        %v8913 = vpack.c.bf16 %v8905, %v8901
        %v8914 = vpack.c.bf16 %v8906, %v8902
        %v8915 = vpack.c.bf16 %v8907, %v8903
        %v8916 = vpack.c.bf16 %v8908, %v8908
        %v8917 = vpack.c.bf16 %v8909, %v8909
        %v8918 = vpack.c.bf16 %v8910, %v8910
        %v8919 = vpack.c.bf16 %v8911, %v8911
        %v8920 = vld [vmem:[#allocation7] sm:$0xff]
        %v8921 = vld [vmem:[#allocation7 + $0x8] sm:$0xff]
        %v8922 = vld [vmem:[#allocation7 + $0x10] sm:$0xff]
        %v8923 = vld [vmem:[#allocation7 + $0x18] sm:$0xff]
        %v8924 = vld [vmem:[#allocation7 + $0x20] sm:$0xff]
        %v8925 = vld [vmem:[#allocation7 + $0x28] sm:$0xff]
        %v8926 = vld [vmem:[#allocation7 + $0x30] sm:$0xff]
        %v8927 = vld [vmem:[#allocation7 + $0x38] sm:$0xff]
        %v8928 = vld [vmem:[#allocation7 + $0x40] sm:$0xff]
        %v8929 = vld [vmem:[#allocation7 + $0x48] sm:$0xff]
        %v8930 = vld [vmem:[#allocation7 + $0x50] sm:$0xff]
        %v8931 = vld [vmem:[#allocation7 + $0x58] sm:$0xff]
        %v8932 = vld [vmem:[#allocation7 + $0x60] sm:$0xff]
        %v8933 = vld [vmem:[#allocation7 + $0x68] sm:$0xff]
        %v8934 = vld [vmem:[#allocation7 + $0x70] sm:$0xff]
        %v8935 = vld [vmem:[#allocation7 + $0x78] sm:$0xff]
        %v8936 = vld [vmem:[#allocation7 + $0x80] sm:$0xff]
        %v8937 = vld [vmem:[#allocation7 + $0x88] sm:$0xff]
        %v8938 = vld [vmem:[#allocation7 + $0x90] sm:$0xff]
        %v8939 = vld [vmem:[#allocation7 + $0x98] sm:$0xff]
        %v8940 = vld [vmem:[#allocation7 + $0xa0] sm:$0xff]
        %v8941 = vld [vmem:[#allocation7 + $0xa8] sm:$0xff]
        %v8942 = vld [vmem:[#allocation7 + $0xb0] sm:$0xff]
        %v8943 = vld [vmem:[#allocation7 + $0xb8] sm:$0xff]
        %v8944 = vld [vmem:[#allocation7 + $0xc0] sm:$0xff]
        %v8945 = vld [vmem:[#allocation7 + $0xc8] sm:$0xff]
        %v8946 = vld [vmem:[#allocation7 + $0xd0] sm:$0xff]
        %v8947 = vld [vmem:[#allocation7 + $0xd8] sm:$0xff]
        %v8948 = vld [vmem:[#allocation7 + $0xe0] sm:$0xff]
        %v8949 = vld [vmem:[#allocation7 + $0xe8] sm:$0xff]
        %v8950 = vld [vmem:[#allocation7 + $0xf0] sm:$0xff]
        %v8951 = vld [vmem:[#allocation7 + $0xf8] sm:$0xff]
        %v8952 = vld [vmem:[#allocation7 + $0x100] sm:$0xff]
        %v8953 = vld [vmem:[#allocation7 + $0x108] sm:$0xff]
        %v8954 = vld [vmem:[#allocation7 + $0x110] sm:$0xff]
        %v8955 = vld [vmem:[#allocation7 + $0x118] sm:$0xff]
        %v8956 = vld [vmem:[#allocation7 + $0x120] sm:$0xff]
        %v8957 = vld [vmem:[#allocation7 + $0x128] sm:$0xff]
        %v8958 = vld [vmem:[#allocation7 + $0x130] sm:$0xff]
        %v8959 = vld [vmem:[#allocation7 + $0x138] sm:$0xff]
        %v8960 = vld [vmem:[#allocation7 + $0x140] sm:$0xff]
        %v8961 = vld [vmem:[#allocation7 + $0x148] sm:$0xff]
        %v8962 = vld [vmem:[#allocation7 + $0x150] sm:$0xff]
        %v8963 = vld [vmem:[#allocation7 + $0x158] sm:$0xff]
        %v8964 = vld [vmem:[#allocation7 + $0x160] sm:$0xff]
        %v8965 = vld [vmem:[#allocation7 + $0x168] sm:$0xff]
        %v8966 = vld [vmem:[#allocation7 + $0x170] sm:$0xff]
        %v8967 = vld [vmem:[#allocation7 + $0x178] sm:$0xff]
        %v8968 = vld [vmem:[#allocation7 + $0x180] sm:$0xff]
        %v8969 = vld [vmem:[#allocation7 + $0x188] sm:$0xff]
        %v8970 = vld [vmem:[#allocation7 + $0x190] sm:$0xff]
        %v8971 = vld [vmem:[#allocation7 + $0x198] sm:$0xff]
        %v8972 = vld [vmem:[#allocation7 + $0x1a0] sm:$0xff]
        %v8973 = vld [vmem:[#allocation7 + $0x1a8] sm:$0xff]
        %v8974 = vld [vmem:[#allocation7 + $0x1b0] sm:$0xff]
        %v8975 = vld [vmem:[#allocation7 + $0x1b8] sm:$0xff]
        %v8976 = vld [vmem:[#allocation7 + $0x1c0] sm:$0xff]
        %v8977 = vld [vmem:[#allocation7 + $0x1c8] sm:$0xff]
        %v8978 = vld [vmem:[#allocation7 + $0x1d0] sm:$0xff]
        %v8979 = vld [vmem:[#allocation7 + $0x1d8] sm:$0xff]
        %v8980 = vld [vmem:[#allocation7 + $0x1e0] sm:$0xff]
        %v8981 = vld [vmem:[#allocation7 + $0x1e8] sm:$0xff]
        %v8982 = vld [vmem:[#allocation7 + $0x1f0] sm:$0xff]
        %v8983 = vld [vmem:[#allocation7 + $0x1f8] sm:$0xff]
        %v8984 = vld [vmem:[#allocation7 + $0x200] sm:$0xff]
        %v8985 = vld [vmem:[#allocation7 + $0x208] sm:$0xff]
        %v8986 = vld [vmem:[#allocation7 + $0x210] sm:$0xff]
        %v8987 = vld [vmem:[#allocation7 + $0x218] sm:$0xff]
        %v8988 = vld [vmem:[#allocation7 + $0x220] sm:$0xff]
        %v8989 = vld [vmem:[#allocation7 + $0x228] sm:$0xff]
        %v8990 = vld [vmem:[#allocation7 + $0x230] sm:$0xff]
        %v8991 = vld [vmem:[#allocation7 + $0x238] sm:$0xff]
        %v8992 = vld [vmem:[#allocation7 + $0x240] sm:$0xff]
        %v8993 = vld [vmem:[#allocation7 + $0x248] sm:$0xff]
        %v8994 = vld [vmem:[#allocation7 + $0x250] sm:$0xff]
        %v8995 = vld [vmem:[#allocation7 + $0x258] sm:$0xff]
        %v8996 = vld [vmem:[#allocation7 + $0x260] sm:$0xff]
        %v8997 = vld [vmem:[#allocation7 + $0x268] sm:$0xff]
        %v8998 = vld [vmem:[#allocation7 + $0x270] sm:$0xff]
        %v8999 = vld [vmem:[#allocation7 + $0x278] sm:$0xff]
        %v9000 = vld [vmem:[#allocation7 + $0x280] sm:$0xff]
        %v9001 = vld [vmem:[#allocation7 + $0x288] sm:$0xff]
        %v9002 = vld [vmem:[#allocation7 + $0x290] sm:$0xff]
        %v9003 = vld [vmem:[#allocation7 + $0x298] sm:$0xff]
        %v9004 = vld [vmem:[#allocation7 + $0x2a0] sm:$0xff]
        %v9005 = vld [vmem:[#allocation7 + $0x2a8] sm:$0xff]
        %v9006 = vld [vmem:[#allocation7 + $0x2b0] sm:$0xff]
        %v9007 = vld [vmem:[#allocation7 + $0x2b8] sm:$0xff]
        %v9008 = vld [vmem:[#allocation7 + $0x2c0] sm:$0xff]
        %v9009 = vld [vmem:[#allocation7 + $0x2c8] sm:$0xff]
        %v9010 = vld [vmem:[#allocation7 + $0x2d0] sm:$0xff]
        %v9011 = vld [vmem:[#allocation7 + $0x2d8] sm:$0xff]
        %v9012 = vld [vmem:[#allocation7 + $0x2e0] sm:$0xff]
        %v9013 = vld [vmem:[#allocation7 + $0x2e8] sm:$0xff]
        %v9014 = vld [vmem:[#allocation7 + $0x2f0] sm:$0xff]
        %v9015 = vld [vmem:[#allocation7 + $0x2f8] sm:$0xff]
        %v9016 = vld [vmem:[#allocation7 + $0x300] sm:$0xff]
        %v9017 = vld [vmem:[#allocation7 + $0x308] sm:$0xff]
        %v9018 = vld [vmem:[#allocation7 + $0x310] sm:$0xff]
        %v9019 = vld [vmem:[#allocation7 + $0x318] sm:$0xff]
        %v9020 = vld [vmem:[#allocation7 + $0x320] sm:$0xff]
        %v9021 = vld [vmem:[#allocation7 + $0x328] sm:$0xff]
        %v9022 = vld [vmem:[#allocation7 + $0x330] sm:$0xff]
        %v9023 = vld [vmem:[#allocation7 + $0x338] sm:$0xff]
        %v9024 = vld [vmem:[#allocation7 + $0x340] sm:$0xff]
        %v9025 = vld [vmem:[#allocation7 + $0x348] sm:$0xff]
        %v9026 = vld [vmem:[#allocation7 + $0x350] sm:$0xff]
        %v9027 = vld [vmem:[#allocation7 + $0x358] sm:$0xff]
        %v9028 = vld [vmem:[#allocation7 + $0x360] sm:$0xff]
        %v9029 = vld [vmem:[#allocation7 + $0x368] sm:$0xff]
        %v9030 = vld [vmem:[#allocation7 + $0x370] sm:$0xff]
        %v9031 = vld [vmem:[#allocation7 + $0x378] sm:$0xff]
        %v9032 = vld [vmem:[#allocation7 + $0x380] sm:$0xff]
        %v9033 = vld [vmem:[#allocation7 + $0x388] sm:$0xff]
        %v9034 = vld [vmem:[#allocation7 + $0x390] sm:$0xff]
        %v9035 = vld [vmem:[#allocation7 + $0x398] sm:$0xff]
        %v9036 = vld [vmem:[#allocation7 + $0x3a0] sm:$0xff]
        %v9037 = vld [vmem:[#allocation7 + $0x3a8] sm:$0xff]
        %v9038 = vld [vmem:[#allocation7 + $0x3b0] sm:$0xff]
        %v9039 = vld [vmem:[#allocation7 + $0x3b8] sm:$0xff]
        %v9040 = vld [vmem:[#allocation7 + $0x3c0] sm:$0xff]
        %v9041 = vld [vmem:[#allocation7 + $0x3c8] sm:$0xff]
        %v9042 = vld [vmem:[#allocation7 + $0x3d0] sm:$0xff]
        %v9043 = vld [vmem:[#allocation7 + $0x3d8] sm:$0xff]
        %v9044 = vld [vmem:[#allocation7 + $0x3e0] sm:$0xff]
        %v9045 = vld [vmem:[#allocation7 + $0x3e8] sm:$0xff]
        %v9046 = vld [vmem:[#allocation7 + $0x3f0] sm:$0xff]
        %v9047 = vld [vmem:[#allocation7 + $0x3f8] sm:$0xff]
        %v9048 = vld [vmem:[%s19] sm:$0xf]
        %v9050 = vlaneseq
        %v9051 = vshrl.u32 %v9050, 7
        %v9052 = vsub.s32 0, %v9051
        %v9053 = vrot.slane %v9048, %v9052
        %v9054 = vlaneseq
        %v9055 = vshrl.u32 %v9054, 7
        %v9056 = vsub.s32 1, %v9055
        %v9057 = vrot.slane %v9048, %v9056
        %v9058 = vlaneseq
        %v9059 = vshrl.u32 %v9058, 7
        %v9060 = vsub.s32 2, %v9059
        %v9061 = vrot.slane %v9048, %v9060
        %v9062 = vlaneseq
        %v9063 = vshrl.u32 %v9062, 7
        %v9064 = vsub.s32 3, %v9063
        %v9065 = vrot.slane %v9048, %v9064
        %v9198 = vunpack.c.l.b16 %v8920
        %v9199 = vunpack.c.h.b16 %v8920
        %v9200 = vunpack.c.l.b16 %v8921
        %v9201 = vunpack.c.h.b16 %v8921
        %v9202 = vunpack.c.l.b16 %v8922
        %v9203 = vunpack.c.h.b16 %v8922
        %v9204 = vunpack.c.l.b16 %v8923
        %v9205 = vunpack.c.h.b16 %v8923
        %v9206 = vunpack.c.l.b16 %v8924
        %v9207 = vunpack.c.h.b16 %v8924
        %v9208 = vunpack.c.l.b16 %v8925
        %v9209 = vunpack.c.h.b16 %v8925
        %v9210 = vunpack.c.l.b16 %v8926
        %v9211 = vunpack.c.h.b16 %v8926
        %v9212 = vunpack.c.l.b16 %v8927
        %v9213 = vunpack.c.h.b16 %v8927
        %v9214 = vunpack.c.l.b16 %v8928
        %v9215 = vunpack.c.h.b16 %v8928
        %v9216 = vunpack.c.l.b16 %v8929
        %v9217 = vunpack.c.h.b16 %v8929
        %v9218 = vunpack.c.l.b16 %v8930
        %v9219 = vunpack.c.h.b16 %v8930
        %v9220 = vunpack.c.l.b16 %v8931
        %v9221 = vunpack.c.h.b16 %v8931
        %v9222 = vunpack.c.l.b16 %v8932
        %v9223 = vunpack.c.h.b16 %v8932
        %v9224 = vunpack.c.l.b16 %v8933
        %v9225 = vunpack.c.h.b16 %v8933
        %v9226 = vunpack.c.l.b16 %v8934
        %v9227 = vunpack.c.h.b16 %v8934
        %v9228 = vunpack.c.l.b16 %v8935
        %v9229 = vunpack.c.h.b16 %v8935
        %v9230 = vunpack.c.l.b16 %v8936
        %v9231 = vunpack.c.h.b16 %v8936
        %v9232 = vunpack.c.l.b16 %v8937
        %v9233 = vunpack.c.h.b16 %v8937
        %v9234 = vunpack.c.l.b16 %v8938
        %v9235 = vunpack.c.h.b16 %v8938
        %v9236 = vunpack.c.l.b16 %v8939
        %v9237 = vunpack.c.h.b16 %v8939
        %v9238 = vunpack.c.l.b16 %v8940
        %v9239 = vunpack.c.h.b16 %v8940
        %v9240 = vunpack.c.l.b16 %v8941
        %v9241 = vunpack.c.h.b16 %v8941
        %v9242 = vunpack.c.l.b16 %v8942
        %v9243 = vunpack.c.h.b16 %v8942
        %v9244 = vunpack.c.l.b16 %v8943
        %v9245 = vunpack.c.h.b16 %v8943
        %v9246 = vunpack.c.l.b16 %v8944
        %v9247 = vunpack.c.h.b16 %v8944
        %v9248 = vunpack.c.l.b16 %v8945
        %v9249 = vunpack.c.h.b16 %v8945
        %v9250 = vunpack.c.l.b16 %v8946
        %v9251 = vunpack.c.h.b16 %v8946
        %v9252 = vunpack.c.l.b16 %v8947
        %v9253 = vunpack.c.h.b16 %v8947
        %v9254 = vunpack.c.l.b16 %v8948
        %v9255 = vunpack.c.h.b16 %v8948
        %v9256 = vunpack.c.l.b16 %v8949
        %v9257 = vunpack.c.h.b16 %v8949
        %v9258 = vunpack.c.l.b16 %v8950
        %v9259 = vunpack.c.h.b16 %v8950
        %v9260 = vunpack.c.l.b16 %v8951
        %v9261 = vunpack.c.h.b16 %v8951
        %v9262 = vunpack.c.l.b16 %v8952
        %v9263 = vunpack.c.h.b16 %v8952
        %v9264 = vunpack.c.l.b16 %v8953
        %v9265 = vunpack.c.h.b16 %v8953
        %v9266 = vunpack.c.l.b16 %v8954
        %v9267 = vunpack.c.h.b16 %v8954
        %v9268 = vunpack.c.l.b16 %v8955
        %v9269 = vunpack.c.h.b16 %v8955
        %v9270 = vunpack.c.l.b16 %v8956
        %v9271 = vunpack.c.h.b16 %v8956
        %v9272 = vunpack.c.l.b16 %v8957
        %v9273 = vunpack.c.h.b16 %v8957
        %v9274 = vunpack.c.l.b16 %v8958
        %v9275 = vunpack.c.h.b16 %v8958
        %v9276 = vunpack.c.l.b16 %v8959
        %v9277 = vunpack.c.h.b16 %v8959
        %v9278 = vunpack.c.l.b16 %v8960
        %v9279 = vunpack.c.h.b16 %v8960
        %v9280 = vunpack.c.l.b16 %v8961
        %v9281 = vunpack.c.h.b16 %v8961
        %v9282 = vunpack.c.l.b16 %v8962
        %v9283 = vunpack.c.h.b16 %v8962
        %v9284 = vunpack.c.l.b16 %v8963
        %v9285 = vunpack.c.h.b16 %v8963
        %v9286 = vunpack.c.l.b16 %v8964
        %v9287 = vunpack.c.h.b16 %v8964
        %v9288 = vunpack.c.l.b16 %v8965
        %v9289 = vunpack.c.h.b16 %v8965
        %v9290 = vunpack.c.l.b16 %v8966
        %v9291 = vunpack.c.h.b16 %v8966
        %v9292 = vunpack.c.l.b16 %v8967
        %v9293 = vunpack.c.h.b16 %v8967
        %v9294 = vunpack.c.l.b16 %v8968
        %v9295 = vunpack.c.h.b16 %v8968
        %v9296 = vunpack.c.l.b16 %v8969
        %v9297 = vunpack.c.h.b16 %v8969
        %v9298 = vunpack.c.l.b16 %v8970
        %v9299 = vunpack.c.h.b16 %v8970
        %v9300 = vunpack.c.l.b16 %v8971
        %v9301 = vunpack.c.h.b16 %v8971
        %v9302 = vunpack.c.l.b16 %v8972
        %v9303 = vunpack.c.h.b16 %v8972
        %v9304 = vunpack.c.l.b16 %v8973
        %v9305 = vunpack.c.h.b16 %v8973
        %v9306 = vunpack.c.l.b16 %v8974
        %v9307 = vunpack.c.h.b16 %v8974
        %v9308 = vunpack.c.l.b16 %v8975
        %v9309 = vunpack.c.h.b16 %v8975
        %v9310 = vunpack.c.l.b16 %v8976
        %v9311 = vunpack.c.h.b16 %v8976
        %v9312 = vunpack.c.l.b16 %v8977
        %v9313 = vunpack.c.h.b16 %v8977
        %v9314 = vunpack.c.l.b16 %v8978
        %v9315 = vunpack.c.h.b16 %v8978
        %v9316 = vunpack.c.l.b16 %v8979
        %v9317 = vunpack.c.h.b16 %v8979
        %v9318 = vunpack.c.l.b16 %v8980
        %v9319 = vunpack.c.h.b16 %v8980
        %v9320 = vunpack.c.l.b16 %v8981
        %v9321 = vunpack.c.h.b16 %v8981
        %v9322 = vunpack.c.l.b16 %v8982
        %v9323 = vunpack.c.h.b16 %v8982
        %v9324 = vunpack.c.l.b16 %v8983
        %v9325 = vunpack.c.h.b16 %v8983
        %v9326 = vunpack.c.l.b16 %v8984
        %v9327 = vunpack.c.h.b16 %v8984
        %v9328 = vunpack.c.l.b16 %v8985
        %v9329 = vunpack.c.h.b16 %v8985
        %v9330 = vunpack.c.l.b16 %v8986
        %v9331 = vunpack.c.h.b16 %v8986
        %v9332 = vunpack.c.l.b16 %v8987
        %v9333 = vunpack.c.h.b16 %v8987
        %v9334 = vunpack.c.l.b16 %v8988
        %v9335 = vunpack.c.h.b16 %v8988
        %v9336 = vunpack.c.l.b16 %v8989
        %v9337 = vunpack.c.h.b16 %v8989
        %v9338 = vunpack.c.l.b16 %v8990
        %v9339 = vunpack.c.h.b16 %v8990
        %v9340 = vunpack.c.l.b16 %v8991
        %v9341 = vunpack.c.h.b16 %v8991
        %v9342 = vunpack.c.l.b16 %v8992
        %v9343 = vunpack.c.h.b16 %v8992
        %v9344 = vunpack.c.l.b16 %v8993
        %v9345 = vunpack.c.h.b16 %v8993
        %v9346 = vunpack.c.l.b16 %v8994
        %v9347 = vunpack.c.h.b16 %v8994
        %v9348 = vunpack.c.l.b16 %v8995
        %v9349 = vunpack.c.h.b16 %v8995
        %v9350 = vunpack.c.l.b16 %v8996
        %v9351 = vunpack.c.h.b16 %v8996
        %v9352 = vunpack.c.l.b16 %v8997
        %v9353 = vunpack.c.h.b16 %v8997
        %v9354 = vunpack.c.l.b16 %v8998
        %v9355 = vunpack.c.h.b16 %v8998
        %v9356 = vunpack.c.l.b16 %v8999
        %v9357 = vunpack.c.h.b16 %v8999
        %v9358 = vunpack.c.l.b16 %v9000
        %v9359 = vunpack.c.h.b16 %v9000
        %v9360 = vunpack.c.l.b16 %v9001
        %v9361 = vunpack.c.h.b16 %v9001
        %v9362 = vunpack.c.l.b16 %v9002
        %v9363 = vunpack.c.h.b16 %v9002
        %v9364 = vunpack.c.l.b16 %v9003
        %v9365 = vunpack.c.h.b16 %v9003
        %v9366 = vunpack.c.l.b16 %v9004
        %v9367 = vunpack.c.h.b16 %v9004
        %v9368 = vunpack.c.l.b16 %v9005
        %v9369 = vunpack.c.h.b16 %v9005
        %v9370 = vunpack.c.l.b16 %v9006
        %v9371 = vunpack.c.h.b16 %v9006
        %v9372 = vunpack.c.l.b16 %v9007
        %v9373 = vunpack.c.h.b16 %v9007
        %v9374 = vunpack.c.l.b16 %v9008
        %v9375 = vunpack.c.h.b16 %v9008
        %v9376 = vunpack.c.l.b16 %v9009
        %v9377 = vunpack.c.h.b16 %v9009
        %v9378 = vunpack.c.l.b16 %v9010
        %v9379 = vunpack.c.h.b16 %v9010
        %v9380 = vunpack.c.l.b16 %v9011
        %v9381 = vunpack.c.h.b16 %v9011
        %v9382 = vunpack.c.l.b16 %v9012
        %v9383 = vunpack.c.h.b16 %v9012
        %v9384 = vunpack.c.l.b16 %v9013
        %v9385 = vunpack.c.h.b16 %v9013
        %v9386 = vunpack.c.l.b16 %v9014
        %v9387 = vunpack.c.h.b16 %v9014
        %v9388 = vunpack.c.l.b16 %v9015
        %v9389 = vunpack.c.h.b16 %v9015
        %v9390 = vunpack.c.l.b16 %v9016
        %v9391 = vunpack.c.h.b16 %v9016
        %v9392 = vunpack.c.l.b16 %v9017
        %v9393 = vunpack.c.h.b16 %v9017
        %v9394 = vunpack.c.l.b16 %v9018
        %v9395 = vunpack.c.h.b16 %v9018
        %v9396 = vunpack.c.l.b16 %v9019
        %v9397 = vunpack.c.h.b16 %v9019
        %v9398 = vunpack.c.l.b16 %v9020
        %v9399 = vunpack.c.h.b16 %v9020
        %v9400 = vunpack.c.l.b16 %v9021
        %v9401 = vunpack.c.h.b16 %v9021
        %v9402 = vunpack.c.l.b16 %v9022
        %v9403 = vunpack.c.h.b16 %v9022
        %v9404 = vunpack.c.l.b16 %v9023
        %v9405 = vunpack.c.h.b16 %v9023
        %v9406 = vunpack.c.l.b16 %v9024
        %v9407 = vunpack.c.h.b16 %v9024
        %v9408 = vunpack.c.l.b16 %v9025
        %v9409 = vunpack.c.h.b16 %v9025
        %v9410 = vunpack.c.l.b16 %v9026
        %v9411 = vunpack.c.h.b16 %v9026
        %v9412 = vunpack.c.l.b16 %v9027
        %v9413 = vunpack.c.h.b16 %v9027
        %v9414 = vunpack.c.l.b16 %v9028
        %v9415 = vunpack.c.h.b16 %v9028
        %v9416 = vunpack.c.l.b16 %v9029
        %v9417 = vunpack.c.h.b16 %v9029
        %v9418 = vunpack.c.l.b16 %v9030
        %v9419 = vunpack.c.h.b16 %v9030
        %v9420 = vunpack.c.l.b16 %v9031
        %v9421 = vunpack.c.h.b16 %v9031
        %v9422 = vunpack.c.l.b16 %v9032
        %v9423 = vunpack.c.h.b16 %v9032
        %v9424 = vunpack.c.l.b16 %v9033
        %v9425 = vunpack.c.h.b16 %v9033
        %v9426 = vunpack.c.l.b16 %v9034
        %v9427 = vunpack.c.h.b16 %v9034
        %v9428 = vunpack.c.l.b16 %v9035
        %v9429 = vunpack.c.h.b16 %v9035
        %v9430 = vunpack.c.l.b16 %v9036
        %v9431 = vunpack.c.h.b16 %v9036
        %v9432 = vunpack.c.l.b16 %v9037
        %v9433 = vunpack.c.h.b16 %v9037
        %v9434 = vunpack.c.l.b16 %v9038
        %v9435 = vunpack.c.h.b16 %v9038
        %v9436 = vunpack.c.l.b16 %v9039
        %v9437 = vunpack.c.h.b16 %v9039
        %v9438 = vunpack.c.l.b16 %v9040
        %v9439 = vunpack.c.h.b16 %v9040
        %v9440 = vunpack.c.l.b16 %v9041
        %v9441 = vunpack.c.h.b16 %v9041
        %v9442 = vunpack.c.l.b16 %v9042
        %v9443 = vunpack.c.h.b16 %v9042
        %v9444 = vunpack.c.l.b16 %v9043
        %v9445 = vunpack.c.h.b16 %v9043
        %v9446 = vunpack.c.l.b16 %v9044
        %v9447 = vunpack.c.h.b16 %v9044
        %v9448 = vunpack.c.l.b16 %v9045
        %v9449 = vunpack.c.h.b16 %v9045
        %v9450 = vunpack.c.l.b16 %v9046
        %v9451 = vunpack.c.h.b16 %v9046
        %v9452 = vunpack.c.l.b16 %v9047
        %v9453 = vunpack.c.h.b16 %v9047
        %v9454 = vpack.c.b16 %v9202, %v9198
        %v9455 = vpack.c.b16 %v9203, %v9199
        %v9456 = vpack.c.b16 %v9204, %v9200
        %v9457 = vpack.c.b16 %v9205, %v9201
        %v9458 = vpack.c.b16 %v9210, %v9206
        %v9459 = vpack.c.b16 %v9211, %v9207
        %v9460 = vpack.c.b16 %v9212, %v9208
        %v9461 = vpack.c.b16 %v9213, %v9209
        %v9462 = vpack.c.b16 %v9218, %v9214
        %v9463 = vpack.c.b16 %v9219, %v9215
        %v9464 = vpack.c.b16 %v9220, %v9216
        %v9465 = vpack.c.b16 %v9221, %v9217
        %v9466 = vpack.c.b16 %v9226, %v9222
        %v9467 = vpack.c.b16 %v9227, %v9223
        %v9468 = vpack.c.b16 %v9228, %v9224
        %v9469 = vpack.c.b16 %v9229, %v9225
        %v9470 = vpack.c.b16 %v9234, %v9230
        %v9471 = vpack.c.b16 %v9235, %v9231
        %v9472 = vpack.c.b16 %v9236, %v9232
        %v9473 = vpack.c.b16 %v9237, %v9233
        %v9474 = vpack.c.b16 %v9242, %v9238
        %v9475 = vpack.c.b16 %v9243, %v9239
        %v9476 = vpack.c.b16 %v9244, %v9240
        %v9477 = vpack.c.b16 %v9245, %v9241
        %v9478 = vpack.c.b16 %v9250, %v9246
        %v9479 = vpack.c.b16 %v9251, %v9247
        %v9480 = vpack.c.b16 %v9252, %v9248
        %v9481 = vpack.c.b16 %v9253, %v9249
        %v9482 = vpack.c.b16 %v9258, %v9254
        %v9483 = vpack.c.b16 %v9259, %v9255
        %v9484 = vpack.c.b16 %v9260, %v9256
        %v9485 = vpack.c.b16 %v9261, %v9257
        %v9486 = vpack.c.b16 %v9266, %v9262
        %v9487 = vpack.c.b16 %v9267, %v9263
        %v9488 = vpack.c.b16 %v9268, %v9264
        %v9489 = vpack.c.b16 %v9269, %v9265
        %v9490 = vpack.c.b16 %v9274, %v9270
        %v9491 = vpack.c.b16 %v9275, %v9271
        %v9492 = vpack.c.b16 %v9276, %v9272
        %v9493 = vpack.c.b16 %v9277, %v9273
        %v9494 = vpack.c.b16 %v9282, %v9278
        %v9495 = vpack.c.b16 %v9283, %v9279
        %v9496 = vpack.c.b16 %v9284, %v9280
        %v9497 = vpack.c.b16 %v9285, %v9281
        %v9498 = vpack.c.b16 %v9290, %v9286
        %v9499 = vpack.c.b16 %v9291, %v9287
        %v9500 = vpack.c.b16 %v9292, %v9288
        %v9501 = vpack.c.b16 %v9293, %v9289
        %v9502 = vpack.c.b16 %v9298, %v9294
        %v9503 = vpack.c.b16 %v9299, %v9295
        %v9504 = vpack.c.b16 %v9300, %v9296
        %v9505 = vpack.c.b16 %v9301, %v9297
        %v9506 = vpack.c.b16 %v9306, %v9302
        %v9507 = vpack.c.b16 %v9307, %v9303
        %v9508 = vpack.c.b16 %v9308, %v9304
        %v9509 = vpack.c.b16 %v9309, %v9305
        %v9510 = vpack.c.b16 %v9314, %v9310
        %v9511 = vpack.c.b16 %v9315, %v9311
        %v9512 = vpack.c.b16 %v9316, %v9312
        %v9513 = vpack.c.b16 %v9317, %v9313
        %v9514 = vpack.c.b16 %v9322, %v9318
        %v9515 = vpack.c.b16 %v9323, %v9319
        %v9516 = vpack.c.b16 %v9324, %v9320
        %v9517 = vpack.c.b16 %v9325, %v9321
        %v9518 = vpack.c.b16 %v9330, %v9326
        %v9519 = vpack.c.b16 %v9331, %v9327
        %v9520 = vpack.c.b16 %v9332, %v9328
        %v9521 = vpack.c.b16 %v9333, %v9329
        %v9522 = vpack.c.b16 %v9338, %v9334
        %v9523 = vpack.c.b16 %v9339, %v9335
        %v9524 = vpack.c.b16 %v9340, %v9336
        %v9525 = vpack.c.b16 %v9341, %v9337
        %v9526 = vpack.c.b16 %v9346, %v9342
        %v9527 = vpack.c.b16 %v9347, %v9343
        %v9528 = vpack.c.b16 %v9348, %v9344
        %v9529 = vpack.c.b16 %v9349, %v9345
        %v9530 = vpack.c.b16 %v9354, %v9350
        %v9531 = vpack.c.b16 %v9355, %v9351
        %v9532 = vpack.c.b16 %v9356, %v9352
        %v9533 = vpack.c.b16 %v9357, %v9353
        %v9534 = vpack.c.b16 %v9362, %v9358
        %v9535 = vpack.c.b16 %v9363, %v9359
        %v9536 = vpack.c.b16 %v9364, %v9360
        %v9537 = vpack.c.b16 %v9365, %v9361
        %v9538 = vpack.c.b16 %v9370, %v9366
        %v9539 = vpack.c.b16 %v9371, %v9367
        %v9540 = vpack.c.b16 %v9372, %v9368
        %v9541 = vpack.c.b16 %v9373, %v9369
        %v9542 = vpack.c.b16 %v9378, %v9374
        %v9543 = vpack.c.b16 %v9379, %v9375
        %v9544 = vpack.c.b16 %v9380, %v9376
        %v9545 = vpack.c.b16 %v9381, %v9377
        %v9546 = vpack.c.b16 %v9386, %v9382
        %v9547 = vpack.c.b16 %v9387, %v9383
        %v9548 = vpack.c.b16 %v9388, %v9384
        %v9549 = vpack.c.b16 %v9389, %v9385
        %v9550 = vpack.c.b16 %v9394, %v9390
        %v9551 = vpack.c.b16 %v9395, %v9391
        %v9552 = vpack.c.b16 %v9396, %v9392
        %v9553 = vpack.c.b16 %v9397, %v9393
        %v9554 = vpack.c.b16 %v9402, %v9398
        %v9555 = vpack.c.b16 %v9403, %v9399
        %v9556 = vpack.c.b16 %v9404, %v9400
        %v9557 = vpack.c.b16 %v9405, %v9401
        %v9558 = vpack.c.b16 %v9410, %v9406
        %v9559 = vpack.c.b16 %v9411, %v9407
        %v9560 = vpack.c.b16 %v9412, %v9408
        %v9561 = vpack.c.b16 %v9413, %v9409
        %v9562 = vpack.c.b16 %v9418, %v9414
        %v9563 = vpack.c.b16 %v9419, %v9415
        %v9564 = vpack.c.b16 %v9420, %v9416
        %v9565 = vpack.c.b16 %v9421, %v9417
        %v9566 = vpack.c.b16 %v9426, %v9422
        %v9567 = vpack.c.b16 %v9427, %v9423
        %v9568 = vpack.c.b16 %v9428, %v9424
        %v9569 = vpack.c.b16 %v9429, %v9425
        %v9570 = vpack.c.b16 %v9434, %v9430
        %v9571 = vpack.c.b16 %v9435, %v9431
        %v9572 = vpack.c.b16 %v9436, %v9432
        %v9573 = vpack.c.b16 %v9437, %v9433
        %v9574 = vpack.c.b16 %v9442, %v9438
        %v9575 = vpack.c.b16 %v9443, %v9439
        %v9576 = vpack.c.b16 %v9444, %v9440
        %v9577 = vpack.c.b16 %v9445, %v9441
        %v9578 = vpack.c.b16 %v9450, %v9446
        %v9579 = vpack.c.b16 %v9451, %v9447
        %v9580 = vpack.c.b16 %v9452, %v9448
        %v9581 = vpack.c.b16 %v9453, %v9449
        %9710 = vmatprep.subr.bf16.mxu0 %v9455
        %9711 = vmatpush1.bf16.msra.mxu0 %v9454
        %9712 = vmatprep.subr.bf16.mxu0 %v9459
        %9713 = vmatpush1.bf16.msra.mxu0 %v9458
        %9714 = vmatprep.subr.bf16.mxu0 %v9463
        %9715 = vmatpush1.bf16.msra.mxu0 %v9462
        %9716 = vmatprep.subr.bf16.mxu0 %v9467
        %9717 = vmatpush1.bf16.msra.mxu0 %v9466
        %9718 = vmatprep.subr.bf16.mxu0 %v9471
        %9719 = vmatpush1.bf16.msra.mxu0 %v9470
        %9720 = vmatprep.subr.bf16.mxu0 %v9475
        %9721 = vmatpush1.bf16.msra.mxu0 %v9474
        %9722 = vmatprep.subr.bf16.mxu0 %v9479
        %9723 = vmatpush1.bf16.msra.mxu0 %v9478
        %9724 = vmatprep.subr.bf16.mxu0 %v9483
        %9725 = vmatpush1.bf16.msra.mxu0 %v9482
        %9726 = vmatprep.subr.bf16.mxu0 %v9487
        %9727 = vmatpush1.bf16.msra.mxu0 %v9486
        %9728 = vmatprep.subr.bf16.mxu0 %v9491
        %9729 = vmatpush1.bf16.msra.mxu0 %v9490
        %9730 = vmatprep.subr.bf16.mxu0 %v9495
        %9731 = vmatpush1.bf16.msra.mxu0 %v9494
        %9732 = vmatprep.subr.bf16.mxu0 %v9499
        %9733 = vmatpush1.bf16.msra.mxu0 %v9498
        %9734 = vmatprep.subr.bf16.mxu0 %v9503
        %9735 = vmatpush1.bf16.msra.mxu0 %v9502
        %9736 = vmatprep.subr.bf16.mxu0 %v9507
        %9737 = vmatpush1.bf16.msra.mxu0 %v9506
        %9738 = vmatprep.subr.bf16.mxu0 %v9511
        %9739 = vmatpush1.bf16.msra.mxu0 %v9510
        %9740 = vmatprep.subr.bf16.mxu0 %v9515
        %9741 = vmatpush1.bf16.msra.mxu0 %v9514
        %9742 = vmatprep.mubr.bf16.mxu0 %v8913
        %9743 = vmatmul.mubr.bf16.gmra.mrb[0].mxu0 %v8912
        %v9744 = vpop.f32.mrb[0].mxu0
        %v9745 = vadd.f32 %v9053, %v9744
        %v9746 = vpop.f32.mrb[0].mxu0
        %v9747 = vadd.f32 %v9057, %v9746
        %v9748 = vpop.f32.mrb[0].mxu0
        %v9749 = vadd.f32 %v9053, %v9748
        %v9750 = vpop.f32.mrb[0].mxu0
        %v9751 = vadd.f32 %v9057, %v9750
        %9752 = vmatprep.mubr.bf16.mxu0 %v8917
        %9753 = vmatmul.mubr.bf16.gmra.mrb[0].mxu0 %v8916
        %v9754 = vpop.f32.mrb[0].mxu0
        %v9755 = vadd.f32 %v9053, %v9754
        %v9756 = vpop.f32.mrb[0].mxu0
        %v9757 = vadd.f32 %v9057, %v9756
        %v9758 = vpop.f32.mrb[0].mxu0
        %v9759 = vpop.f32.mrb[0].mxu0
        %9760 = vdwg.mxu0
        %9761 = vmatprep.subr.bf16.mxu0 %v9519
        %9762 = vmatpush1.bf16.msra.mxu0 %v9518
        %9763 = vmatprep.subr.bf16.mxu0 %v9523
        %9764 = vmatpush1.bf16.msra.mxu0 %v9522
        %9765 = vmatprep.subr.bf16.mxu0 %v9527
        %9766 = vmatpush1.bf16.msra.mxu0 %v9526
        %9767 = vmatprep.subr.bf16.mxu0 %v9531
        %9768 = vmatpush1.bf16.msra.mxu0 %v9530
        %9769 = vmatprep.subr.bf16.mxu0 %v9535
        %9770 = vmatpush1.bf16.msra.mxu0 %v9534
        %9771 = vmatprep.subr.bf16.mxu0 %v9539
        %9772 = vmatpush1.bf16.msra.mxu0 %v9538
        %9773 = vmatprep.subr.bf16.mxu0 %v9543
        %9774 = vmatpush1.bf16.msra.mxu0 %v9542
        %9775 = vmatprep.subr.bf16.mxu0 %v9547
        %9776 = vmatpush1.bf16.msra.mxu0 %v9546
        %9777 = vmatprep.subr.bf16.mxu0 %v9551
        %9778 = vmatpush1.bf16.msra.mxu0 %v9550
        %9779 = vmatprep.subr.bf16.mxu0 %v9555
        %9780 = vmatpush1.bf16.msra.mxu0 %v9554
        %9781 = vmatprep.subr.bf16.mxu0 %v9559
        %9782 = vmatpush1.bf16.msra.mxu0 %v9558
        %9783 = vmatprep.subr.bf16.mxu0 %v9563
        %9784 = vmatpush1.bf16.msra.mxu0 %v9562
        %9785 = vmatprep.subr.bf16.mxu0 %v9567
        %9786 = vmatpush1.bf16.msra.mxu0 %v9566
        %9787 = vmatprep.subr.bf16.mxu0 %v9571
        %9788 = vmatpush1.bf16.msra.mxu0 %v9570
        %9789 = vmatprep.subr.bf16.mxu0 %v9575
        %9790 = vmatpush1.bf16.msra.mxu0 %v9574
        %9791 = vmatprep.subr.bf16.mxu0 %v9579
        %9792 = vmatpush1.bf16.msra.mxu0 %v9578
        %9793 = vmatprep.mubr.bf16.mxu0 %v8915
        %9794 = vmatmul.mubr.bf16.gmra.mrb[0].mxu0 %v8914
        %v9795 = vpop.f32.mrb[0].mxu0
        %v9796 = vadd.f32 %v9745, %v9795
        %v9797 = vpop.f32.mrb[0].mxu0
        %v9798 = vadd.f32 %v9747, %v9797
        %v9799 = vpop.f32.mrb[0].mxu0
        %v9800 = vadd.f32 %v9749, %v9799
        %v9801 = vpop.f32.mrb[0].mxu0
        %v9802 = vadd.f32 %v9751, %v9801
        %9803 = vmatprep.mubr.bf16.mxu0 %v8919
        %9804 = vmatmul.mubr.bf16.gmra.mrb[0].mxu0 %v8918
        %v9805 = vpop.f32.mrb[0].mxu0
        %v9806 = vadd.f32 %v9755, %v9805
        %v9807 = vpop.f32.mrb[0].mxu0
        %v9808 = vadd.f32 %v9757, %v9807
        %v9809 = vpop.f32.mrb[0].mxu0
        %v9810 = vpop.f32.mrb[0].mxu0
        %9811 = vdwg.mxu0
        %9812 = vmatprep.subr.bf16.mxu0 %v9457
        %9813 = vmatpush1.bf16.msra.mxu0 %v9456
        %9814 = vmatprep.subr.bf16.mxu0 %v9461
        %9815 = vmatpush1.bf16.msra.mxu0 %v9460
        %9816 = vmatprep.subr.bf16.mxu0 %v9465
        %9817 = vmatpush1.bf16.msra.mxu0 %v9464
        %9818 = vmatprep.subr.bf16.mxu0 %v9469
        %9819 = vmatpush1.bf16.msra.mxu0 %v9468
        %9820 = vmatprep.subr.bf16.mxu0 %v9473
        %9821 = vmatpush1.bf16.msra.mxu0 %v9472
        %9822 = vmatprep.subr.bf16.mxu0 %v9477
        %9823 = vmatpush1.bf16.msra.mxu0 %v9476
        %9824 = vmatprep.subr.bf16.mxu0 %v9481
        %9825 = vmatpush1.bf16.msra.mxu0 %v9480
        %9826 = vmatprep.subr.bf16.mxu0 %v9485
        %9827 = vmatpush1.bf16.msra.mxu0 %v9484
        %9828 = vmatprep.subr.bf16.mxu0 %v9489
        %9829 = vmatpush1.bf16.msra.mxu0 %v9488
        %9830 = vmatprep.subr.bf16.mxu0 %v9493
        %9831 = vmatpush1.bf16.msra.mxu0 %v9492
        %9832 = vmatprep.subr.bf16.mxu0 %v9497
        %9833 = vmatpush1.bf16.msra.mxu0 %v9496
        %9834 = vmatprep.subr.bf16.mxu0 %v9501
        %9835 = vmatpush1.bf16.msra.mxu0 %v9500
        %9836 = vmatprep.subr.bf16.mxu0 %v9505
        %9837 = vmatpush1.bf16.msra.mxu0 %v9504
        %9838 = vmatprep.subr.bf16.mxu0 %v9509
        %9839 = vmatpush1.bf16.msra.mxu0 %v9508
        %9840 = vmatprep.subr.bf16.mxu0 %v9513
        %9841 = vmatpush1.bf16.msra.mxu0 %v9512
        %9842 = vmatprep.subr.bf16.mxu0 %v9517
        %9843 = vmatpush1.bf16.msra.mxu0 %v9516
        %9844 = vmatprep.mubr.bf16.mxu0 %v8913
        %9845 = vmatmul.mubr.bf16.gmra.mrb[0].mxu0 %v8912
        %v9846 = vpop.f32.mrb[0].mxu0
        %v9847 = vadd.f32 %v9061, %v9846
        %v9848 = vpop.f32.mrb[0].mxu0
        %v9849 = vadd.f32 %v9065, %v9848
        %v9850 = vpop.f32.mrb[0].mxu0
        %v9851 = vadd.f32 %v9061, %v9850
        %v9852 = vpop.f32.mrb[0].mxu0
        %v9853 = vadd.f32 %v9065, %v9852
        %9854 = vmatprep.mubr.bf16.mxu0 %v8917
        %9855 = vmatmul.mubr.bf16.gmra.mrb[0].mxu0 %v8916
        %v9856 = vpop.f32.mrb[0].mxu0
        %v9857 = vadd.f32 %v9061, %v9856
        %v9858 = vpop.f32.mrb[0].mxu0
        %v9859 = vadd.f32 %v9065, %v9858
        %v9860 = vpop.f32.mrb[0].mxu0
        %v9861 = vpop.f32.mrb[0].mxu0
        %9862 = vdwg.mxu0
        %9863 = vmatprep.subr.bf16.mxu0 %v9521
        %9864 = vmatpush1.bf16.msra.mxu0 %v9520
        %9865 = vmatprep.subr.bf16.mxu0 %v9525
        %9866 = vmatpush1.bf16.msra.mxu0 %v9524
        %9867 = vmatprep.subr.bf16.mxu0 %v9529
        %9868 = vmatpush1.bf16.msra.mxu0 %v9528
        %9869 = vmatprep.subr.bf16.mxu0 %v9533
        %9870 = vmatpush1.bf16.msra.mxu0 %v9532
        %9871 = vmatprep.subr.bf16.mxu0 %v9537
        %9872 = vmatpush1.bf16.msra.mxu0 %v9536
        %9873 = vmatprep.subr.bf16.mxu0 %v9541
        %9874 = vmatpush1.bf16.msra.mxu0 %v9540
        %9875 = vmatprep.subr.bf16.mxu0 %v9545
        %9876 = vmatpush1.bf16.msra.mxu0 %v9544
        %9877 = vmatprep.subr.bf16.mxu0 %v9549
        %9878 = vmatpush1.bf16.msra.mxu0 %v9548
        %9879 = vmatprep.subr.bf16.mxu0 %v9553
        %9880 = vmatpush1.bf16.msra.mxu0 %v9552
        %9881 = vmatprep.subr.bf16.mxu0 %v9557
        %9882 = vmatpush1.bf16.msra.mxu0 %v9556
        %9883 = vmatprep.subr.bf16.mxu0 %v9561
        %9884 = vmatpush1.bf16.msra.mxu0 %v9560
        %9885 = vmatprep.subr.bf16.mxu0 %v9565
        %9886 = vmatpush1.bf16.msra.mxu0 %v9564
        %9887 = vmatprep.subr.bf16.mxu0 %v9569
        %9888 = vmatpush1.bf16.msra.mxu0 %v9568
        %9889 = vmatprep.subr.bf16.mxu0 %v9573
        %9890 = vmatpush1.bf16.msra.mxu0 %v9572
        %9891 = vmatprep.subr.bf16.mxu0 %v9577
        %9892 = vmatpush1.bf16.msra.mxu0 %v9576
        %9893 = vmatprep.subr.bf16.mxu0 %v9581
        %9894 = vmatpush1.bf16.msra.mxu0 %v9580
        %9895 = vmatprep.mubr.bf16.mxu0 %v8915
        %9896 = vmatmul.mubr.bf16.gmra.mrb[0].mxu0 %v8914
        %v9897 = vpop.f32.mrb[0].mxu0
        %v9898 = vadd.f32 %v9847, %v9897
        %v9899 = vpop.f32.mrb[0].mxu0
        %v9900 = vadd.f32 %v9849, %v9899
        %v9901 = vpop.f32.mrb[0].mxu0
        %v9902 = vadd.f32 %v9851, %v9901
        %v9903 = vpop.f32.mrb[0].mxu0
        %v9904 = vadd.f32 %v9853, %v9903
        %9905 = vmatprep.mubr.bf16.mxu0 %v8919
        %9906 = vmatmul.mubr.bf16.gmra.mrb[0].mxu0 %v8918
        %v9907 = vpop.f32.mrb[0].mxu0
        %v9908 = vadd.f32 %v9857, %v9907
        %v9909 = vpop.f32.mrb[0].mxu0
        %v9910 = vadd.f32 %v9859, %v9909
        %v9911 = vpop.f32.mrb[0].mxu0
        %v9912 = vpop.f32.mrb[0].mxu0
        %9913 = vdwg.mxu0
        %v9914 = vmax.f32 %v9796, 0.0
        %v9915 = vmax.f32 %v9798, 0.0
        %v9916 = vmax.f32 %v9898, 0.0
        %v9917 = vmax.f32 %v9900, 0.0
        %v9918 = vmax.f32 %v9800, 0.0
        %v9919 = vmax.f32 %v9802, 0.0
        %v9920 = vmax.f32 %v9902, 0.0
        %v9921 = vmax.f32 %v9904, 0.0
        %v9922 = vmax.f32 %v9806, 0.0
        %v9923 = vmax.f32 %v9808, 0.0
        %v9924 = vmax.f32 %v9908, 0.0
        %v9925 = vmax.f32 %v9910, 0.0
        %v9926 = vld [vmem:[%s20] sm:$0xf]
        %v9928 = vlaneseq
        %v9929 = vshrl.u32 %v9928, 7
        %v9930 = vsub.s32 0, %v9929
        %v9931 = vrot.slane %v9926, %v9930
        %v9932 = vlaneseq
        %v9933 = vshrl.u32 %v9932, 7
        %v9934 = vsub.s32 1, %v9933
        %v9935 = vrot.slane %v9926, %v9934
        %v9936 = vlaneseq
        %v9937 = vshrl.u32 %v9936, 7
        %v9938 = vsub.s32 2, %v9937
        %v9939 = vrot.slane %v9926, %v9938
        %v9940 = vlaneseq
        %v9941 = vshrl.u32 %v9940, 7
        %v9942 = vsub.s32 3, %v9941
        %v9943 = vrot.slane %v9926, %v9942
        %v9948 = vmul.f32 %v9914, %v9931
        %v9949 = vmul.f32 %v9915, %v9935
        %v9950 = vmul.f32 %v9916, %v9939
        %v9951 = vmul.f32 %v9917, %v9943
        %v9952 = vmul.f32 %v9918, %v9931
        %v9953 = vmul.f32 %v9919, %v9935
        %v9954 = vmul.f32 %v9920, %v9939
        %v9955 = vmul.f32 %v9921, %v9943
        %v9956 = vmul.f32 %v9922, %v9931
        %v9957 = vmul.f32 %v9923, %v9935
        %v9958 = vmul.f32 %v9924, %v9939
        %v9959 = vmul.f32 %v9925, %v9943
        %v9960 = vadd.f32 %v9948, %v9949
        %v9961 = vadd.f32 %v9960, %v9950
        %v9962 = vadd.f32 %v9961, %v9951
        %9963 = vadd.xlane.f32.xlu0 %v9962
        %v9964 = vpop.xlane.xlu0 %9963
        %v9965 = vadd.f32 %v9952, %v9953
        %v9966 = vadd.f32 %v9965, %v9954
        %v9967 = vadd.f32 %v9966, %v9955
        %9968 = vadd.xlane.f32.xlu0 %v9967
        %v9969 = vpop.xlane.xlu0 %9968
        %vm9970 = vcmask 1043456
        %v9971 = vsel %vm9970, %v9956, 0.0
        %v9972 = vsel %vm9970, %v9957, 0.0
        %v9973 = vadd.f32 %v9971, %v9972
        %v9974 = vsel %vm9970, %v9958, 0.0
        %v9975 = vadd.f32 %v9973, %v9974
        %v9976 = vsel %vm9970, %v9959, 0.0
        %v9977 = vadd.f32 %v9975, %v9976
        %9978 = vadd.xlane.f32.xlu0 %v9977
        %v9979 = vpop.xlane.xlu0 %9978
        %v9980 = vld [vmem:[#allocation6] sm:$0x1]
        %9982 = vset.pattern.permute.xlu0 0
        %9983 = vperm.xlu0 %9982, %v9980
        %v9984 = vpop.permute.xlu0 %9983
        %v9986 = vlaneseq
        %v9987 = vshrl.u32 %v9986, 7
        %v9988 = vsub.s32 0, %v9987
        %v9989 = vrot.slane %v9984, %v9988
        %v9990 = vadd.f32 %v9964, %v9989
        %v9991 = vadd.f32 %v9969, %v9989
        %v9992 = vadd.f32 %v9979, %v9989
        %v9996 = vlaneseq
        %v9997 = vand.u32 %v9996, 127
        %v9998 = vlaneseq
        %v9999 = vshrl.u32 %v9998, 7
        %v10000 = vsub.s32 %v9997, %v9999
        %v10001 = vrot.slane %v9990, %v10000
        %v10002 = vadd.s32 %v9997, 4294967288
        %v10003 = vlaneseq
        %v10004 = vshrl.u32 %v10003, 7
        %v10005 = vsub.s32 %v10002, %v10004
        %v10006 = vrot.slane %v9991, %v10005
        %vm10007 = vcmask 130112
        %v10008 = vsel %vm10007, %v10006, %v10001
        %v10009 = vadd.s32 %v9997, 4294967280
        %v10010 = vlaneseq
        %v10011 = vshrl.u32 %v10010, 7
        %v10012 = vsub.s32 %v10009, %v10011
        %v10013 = vrot.slane %v9992, %v10012
        %vm10014 = vcmask 195712
        %v10015 = vsel %vm10014, %v10013, %v10008
        %vm10017 = vcmask 155648
        %10018 = vst.msk [vmem:[%s701] sm:$0x1] %vm10017, %v10015
        %p10019 = scmp.lt.s32.totalorder %s36, 1
        %s10020 = scalar_select %p10019, %s36, 1
        %s10021 = scalar_lea.vmem %s22, %s10020
        // Predicated region
        $region113: #{prey_critic_forward.1} parent=107 // pred_check
          %p10022 = pneg %p521
        $region114: #{prey_critic_forward.1} parent=107 // pred_check_branch
          %10024 = sbr.rel (%p10022) target = $region116
        $region115: #{prey_critic_forward.1} parent=107 // pred_region
          _
        $region116: #{prey_critic_forward.1} parent=107 // pred_fallthru
          _
      $region108: #{prey_critic_forward.1} parent=5 // pred_fallthru
        _
      %p10025 = scmp.le.s32.totalorder 2, %s31
      // Predicated region
      $region117: #{prey_critic_forward.1} parent=5 // pred_check
        %p10026 = pneg %p10025
      $region118: #{prey_critic_forward.1} parent=5 // pred_check_branch
        %10028 = sbr.rel (%p10026) target = $region120
      $region119: #{prey_critic_forward.1} parent=5 // pred_region
        %s10029 = ssub.s32 %s31, 2
        // Predicated region
        $region121: #{prey_critic_forward.1} parent=119 // pred_check
          %p10030 = pneg %p527
        $region122: #{prey_critic_forward.1} parent=119 // pred_check_branch
          %10032 = sbr.rel (%p10030) target = $region124
        $region123: #{prey_critic_forward.1} parent=119 // pred_region
          %p10033 = scmp.lt.s32.totalorder %s37, 1
          %s10034 = scalar_select %p10033, %s37, 1
          %s10035 = scalar_lea.vmem %s22, %s10034
        $region124: #{prey_critic_forward.1} parent=119 // pred_fallthru
          _
      $region120: #{prey_critic_forward.1} parent=5 // pred_fallthru
        _
    $region6: #{prey_critic_forward.1} parent=1 // loop_footer
      %s35 = sadd.s32 1, %s31
    $region7: #{prey_critic_forward.1} parent=1 // loop_footer_branch
      %30 = sbr.rel target = $region3
    $region8: #{prey_critic_forward.1} parent=1 // loop_exit
      _
    %10036 = vsyncpa [#allocation8], 1
    %s10037 = scalar_lea.sflag [#allocation8], 1
    %10038 = vsyncpa %s10037, 1

</llo_original>
